<compile_context>
chip_gen: v7x
topology: tpu7x:2x2x1
jax: 0.10.0
libtpu: 0.0.40
codegen_flags: <defaults>
</compile_context>

<pallas_src>
import jax
import jax.numpy as jnp
from jax.experimental import pallas as pl
from jax.experimental.pallas import tpu as pltpu

EPS = 1e-5
LANES = 128


def _round_up(x, m):
    return (x + m - 1) // m * m


# --------------------------- kernels ---------------------------------------
def conv3x3_kernel(x_ref, w_ref, o_ref, sum_ref, ssq_ref, acc_ref):
    """One (TH, W) row-tile of a 3x3 'same' conv + BN partial statistics.

    x_ref   : (TH+2, Wt, Cin_p)    bf16  zero-padded input tile (halo included)
    w_ref   : (3, Cin_p, 3*Cout_p) bf16  packed weight: w[kh, ci, kw*Cout_p+co]
    o_ref   : (TH, W, Cout_p)            raw (pre-BN) conv output tile
    sum_ref : (1, Cout_p)          f32   per-tile sum of conv outputs
    ssq_ref : (1, Cout_p)          f32   per-tile sum of squares
    acc_ref : (TH*Wt, 3*Cout_p)    f32   VMEM scratch accumulator
    """
    thp2, wt, cinp = x_ref.shape
    th = thp2 - 2
    w_out = o_ref.shape[1]
    coutp = o_ref.shape[-1]
    m = th * wt

    # 3 MXU dots (one per kh); each emits all three kw taps at once.
    for kh in range(3):
        lhs = x_ref[kh:kh + th].reshape(m, cinp)      # layout-preserving merge
        contrib = jnp.dot(lhs, w_ref[kh], preferred_element_type=jnp.float32)
        if kh == 0:
            acc_ref[...] = contrib
        else:
            acc_ref[...] += contrib

    acc = acc_ref[...].reshape(th, wt, 3 * coutp)
    # Combine the three kw taps with shifted adds (VPU).
    y = (acc[:, 0:w_out, 0:coutp]
         + acc[:, 1:w_out + 1, coutp:2 * coutp]
         + acc[:, 2:w_out + 2, 2 * coutp:3 * coutp])   # (TH, W, Cout_p) f32

    o_ref[...] = y.astype(o_ref.dtype)
    sum_ref[...] = jnp.sum(jnp.sum(y, axis=0), axis=0, keepdims=True)
    ssq_ref[...] = jnp.sum(jnp.sum(y * y, axis=0), axis=0, keepdims=True)


def bn_relu_kernel(x_ref, scale_ref, offset_ref, o_ref):
    """y = relu(x * scale + offset) with per-channel scale/offset (f32 math)."""
    x = x_ref[...].astype(jnp.float32)                 # (TH, W, C_p)
    s = scale_ref[...].reshape(1, 1, -1)
    b = offset_ref[...].reshape(1, 1, -1)
    o_ref[...] = jnp.maximum(x * s + b, 0.0).astype(o_ref.dtype)


# --------------------------- pallas wrappers --------------------------------
def _conv3x3_pass(x_nhwc, w_packed, th, raw_dtype):
    """x: (N, H, W, Cin_p) -> (raw conv (N,H,W,Cout_p), channel sum, channel sumsq)."""
    n, h, w, cinp = x_nhwc.shape
    coutp = w_packed.shape[-1] // 3
    assert h % th == 0, (h, th)
    nt = h // th
    wt = _round_up(w + 2, 8)        # sublane-friendly padded width

    # pad=1 top/bottom/left + extra zero columns on the right up to Wt.
    xp = jnp.pad(x_nhwc, ((0, 0), (1, 1), (1, wt - w - 1), (0, 0)))
    # Non-overlapping halo row-tiles: (N, nT, TH+2, Wt, Cin_p).
    # TODO(synk): for very large H, build the halo in-kernel with manual DMA
    # instead of materializing the (TH+2)/TH-duplicated tiles in HBM.
    tiles = jnp.stack([xp[:, t * th:t * th + th + 2] for t in range(nt)], axis=1)

    conv_raw, psum, pssq = pl.pallas_call(
        conv3x3_kernel,
        grid=(n, nt),
        in_specs=[
            pl.BlockSpec((None, None, th + 2, wt, cinp),
                         lambda i, t: (i, t, 0, 0, 0)),
            pl.BlockSpec((3, cinp, 3 * coutp), lambda i, t: (0, 0, 0)),
        ],
        out_specs=(
            pl.BlockSpec((None, th, w, coutp), lambda i, t: (i, t, 0, 0)),
            pl.BlockSpec((None, None, 1, coutp), lambda i, t: (i, t, 0, 0)),
            pl.BlockSpec((None, None, 1, coutp), lambda i, t: (i, t, 0, 0)),
        ),
        out_shape=(
            jax.ShapeDtypeStruct((n, h, w, coutp), raw_dtype),
            jax.ShapeDtypeStruct((n, nt, 1, coutp), jnp.float32),
            jax.ShapeDtypeStruct((n, nt, 1, coutp), jnp.float32),
        ),
        scratch_shapes=[pltpu.VMEM((th * wt, 3 * coutp), jnp.float32)],
        compiler_params=pltpu.CompilerParams(
            dimension_semantics=("parallel", "parallel"),
            vmem_limit_bytes=32 * 1024 * 1024),
    )(tiles, w_packed)

    return conv_raw, jnp.sum(psum, axis=(0, 1, 2)), jnp.sum(pssq, axis=(0, 1, 2))


def _bn_relu_pass(conv_raw, scale, offset, th, out_dtype):
    n, h, w, cp = conv_raw.shape
    nt = h // th
    return pl.pallas_call(
        bn_relu_kernel,
        grid=(n, nt),
        in_specs=[
            pl.BlockSpec((None, th, w, cp), lambda i, t: (i, t, 0, 0)),
            pl.BlockSpec((1, cp), lambda i, t: (0, 0)),
            pl.BlockSpec((1, cp), lambda i, t: (0, 0)),
        ],
        out_specs=pl.BlockSpec((None, th, w, cp), lambda i, t: (i, t, 0, 0)),
        out_shape=jax.ShapeDtypeStruct((n, h, w, cp), out_dtype),
        compiler_params=pltpu.CompilerParams(
            dimension_semantics=("parallel", "parallel"),
            vmem_limit_bytes=32 * 1024 * 1024),
    )(conv_raw, scale.reshape(1, cp), offset.reshape(1, cp))


def _bn_scale_offset(total_sum, total_ssq, count, gamma_p, beta_p):
    """Tiny per-channel finalize (plain JAX): training-mode, biased variance."""
    mean = total_sum / count
    var = jnp.maximum(total_ssq / count - mean * mean, 0.0)
    scale = gamma_p * jax.lax.rsqrt(var + EPS)
    offset = beta_p - mean * scale
    return scale, offset


def conv_block_forward(x_nchw, pparams, th=8):
    n, cin, h, w = x_nchw.shape
    cinp = _round_up(cin, LANES)

    # NCHW -> NHWC once; channel-pad to lane width; bf16 for the MXU path.
    x = jnp.transpose(x_nchw, (0, 2, 3, 1)).astype(jnp.float32)
    x = jnp.pad(x, ((0, 0), (0, 0), (0, 0), (0, cinp - cin))).astype(jnp.bfloat16)

    # conv1 -> global BN1 -> ReLU   (intermediate kept NHWC / bf16)
    raw1, s1, q1 = _conv3x3_pass(x, pparams["w1_packed"], th, jnp.bfloat16)
    sc1, of1 = _bn_scale_offset(s1, q1, n * h * w,
                                pparams["g1_p"], pparams["beta1_p"])
    act1 = _bn_relu_pass(raw1, sc1, of1, th, jnp.bfloat16)

    # conv2 -> global BN2 -> ReLU   (final raw kept f32 for precision)
    raw2, s2, q2 = _conv3x3_pass(act1, pparams["w2_packed"], th, jnp.float32)
    sc2, of2 = _bn_scale_offset(s2, q2, n * h * w,
                                pparams["g2_p"], pparams["beta2_p"])
    act2 = _bn_relu_pass(raw2, sc2, of2, th, jnp.float32)

    # strip channel padding, back to NCHW
    return jnp.transpose(act2[..., :pparams["out_channels"]], (0, 3, 1, 2))


# --------------------------- parameters -------------------------------------
def make_params(key, in_c, mid_c, out_c):
    ks = jax.random.split(key, 8)
    w1 = 0.1 * jax.random.normal(ks[0], (mid_c, in_c, 3, 3), jnp.float32)   # OIHW
    b1 = 0.1 * jax.random.normal(ks[1], (mid_c,), jnp.float32)
    g1 = 1.0 + 0.1 * jax.random.normal(ks[2], (mid_c,), jnp.float32)
    be1 = 0.1 * jax.random.normal(ks[3], (mid_c,), jnp.float32)
    w2 = 0.1 * jax.random.normal(ks[4], (out_c, mid_c, 3, 3), jnp.float32)  # OIHW
    b2 = 0.1 * jax.random.normal(ks[5], (out_c,), jnp.float32)
    g2 = 1.0 + 0.1 * jax.random.normal(ks[6], (out_c,), jnp.float32)
    be2 = 0.1 * jax.random.normal(ks[7], (out_c,), jnp.float32)
    return {"w1_oihw": w1, "b1": b1, "g1": g1, "beta1": be1,
            "w2_oihw": w2, "b2": b2, "g2": g2, "beta2": be2}


def _pack_weight(w_oihw, cin_p, cout_p):
    cout, cin, _, _ = w_oihw.shape
    w = jnp.transpose(w_oihw, (2, 3, 1, 0))                                  # HWIO
    w = jnp.pad(w, ((0, 0), (0, 0), (0, cin_p - cin), (0, cout_p - cout)))
    # (kh, kw, ci, co) -> (kh, ci, kw, co) -> (kh, ci, kw*Cout_p + co)
    w = jnp.transpose(w, (0, 2, 1, 3)).reshape(3, cin_p, 3 * cout_p)
    return w.astype(jnp.bfloat16)


def prepare_pallas_params(p):
    mid_c, in_c = p["w1_oihw"].shape[:2]
    out_c = p["w2_oihw"].shape[0]
    in_p, mid_p, out_p = (_round_up(c, LANES) for c in (in_c, mid_c, out_c))
    # NOTE: conv biases b1/b2 are intentionally unused — a per-channel constant
    # is exactly cancelled by the training-mode BN mean subtraction.
    return {
        "w1_packed": _pack_weight(p["w1_oihw"], in_p, mid_p),
        "g1_p": jnp.pad(p["g1"], (0, mid_p - mid_c)),
        "beta1_p": jnp.pad(p["beta1"], (0, mid_p - mid_c)),
        "w2_packed": _pack_weight(p["w2_oihw"], mid_p, out_p),
        "g2_p": jnp.pad(p["g2"], (0, out_p - out_c)),
        "beta2_p": jnp.pad(p["beta2"], (0, out_p - out_c)),
        "out_channels": out_c,
    }


# --------------------------- pure-JAX reference ------------------------------
def _ref_conv_bn_relu(x_nchw, w_oihw, b, g, beta):
    y = jax.lax.conv_general_dilated(
        x_nchw, w_oihw, window_strides=(1, 1), padding="SAME",
        dimension_numbers=("NCHW", "OIHW", "NCHW"))
    y = y + b[None, :, None, None]
    mean = jnp.mean(y, axis=(0, 2, 3), keepdims=True)
    var = jnp.mean((y - mean) ** 2, axis=(0, 2, 3), keepdims=True)  # biased
    y = (y - mean) * jax.lax.rsqrt(var + EPS) * g[None, :, None, None] \
        + beta[None, :, None, None]
    return jnp.maximum(y, 0.0)


def conv_block_reference(x_nchw, p):
    y = _ref_conv_bn_relu(x_nchw, p["w1_oihw"], p["b1"], p["g1"], p["beta1"])
    y = _ref_conv_bn_relu(y, p["w2_oihw"], p["b2"], p["g2"], p["beta2"])
    return y


# --------------------------- demo / check -----------------------------------
if __name__ == "__main__":
    key = jax.random.PRNGKey(0)
    k_x, k_p = jax.random.split(key)

    N, Cin, Cmid, Cout, H, W = 2, 4, 8, 4, 16, 16
    x = jax.random.normal(k_x, (N, Cin, H, W), jnp.float32)   # NCHW like PyTorch
    params = make_params(k_p, Cin, Cmid, Cout)
    pparams = prepare_pallas_params(params)

    fwd = jax.jit(lambda xx: conv_block_forward(xx, pparams, th=8))
    out = jax.block_until_ready(fwd(x))
    ref = jax.block_until_ready(conv_block_reference(x, params))

    assert out.shape == (N, Cout, H, W), out.shape
    err = float(jnp.max(jnp.abs(out - ref)))
    # bf16 MXU inputs + bf16 conv1->conv2 intermediate => slightly looser than f32.
    assert err < 2e-2, f"max abs err {err}"
    print("KERNEL_OK")
</pallas_src>

<mosaic_0001>
module attributes {stable_mosaic.version = 11 : i64} {
  func.func @conv3x3_kernel(%arg0: i32, %arg1: i32, %arg2: memref<1x1x10x24x128xbf16, #tpu.memory_space<vmem>>, %arg3: memref<3x128x384xbf16, #tpu.memory_space<vmem>>, %arg4: memref<1x8x16x128xbf16, #tpu.memory_space<vmem>>, %arg5: memref<1x1x1x128xf32, #tpu.memory_space<vmem>>, %arg6: memref<1x1x1x128xf32, #tpu.memory_space<vmem>>, %arg7: memref<192x384xf32, #tpu.memory_space<vmem>>) attributes {dimension_semantics = [#tpu.dimension_semantics<parallel>, #tpu.dimension_semantics<parallel>], iteration_bounds = array<i64: 2, 2>, scalar_prefetch = 0 : i64, scratch_operands = 1 : i64, tpu.core_type = #tpu.core_type<tc>, window_params = [{transform_indices = @transform_0, window_bounds = array<i64: 1, 1, 10, 24, 128>}, {pipeline_mode = #tpu.pipeline_mode<synchronous>, transform_indices = @transform_1, window_bounds = array<i64: 3, 128, 384>}, {transform_indices = @transform_2, window_bounds = array<i64: 1, 8, 16, 128>}, {transform_indices = @transform_3, window_bounds = array<i64: 1, 1, 1, 128>}, {transform_indices = @transform_4, window_bounds = array<i64: 1, 1, 1, 128>}]} {
    %c0 = arith.constant 0 : index
    %c0_0 = arith.constant 0 : index
    %c0_1 = arith.constant 0 : index
    %c0_2 = arith.constant 0 : index
    %c0_3 = arith.constant 0 : index
    %0 = vector.load %arg2[%c0, %c0_0, %c0_1, %c0_2, %c0_3] : memref<1x1x10x24x128xbf16, #tpu.memory_space<vmem>>, vector<1x1x8x24x128xbf16>
    %1 = vector.shape_cast %0 : vector<1x1x8x24x128xbf16> to vector<8x24x128xbf16>
    %2 = vector.shape_cast %1 : vector<8x24x128xbf16> to vector<192x128xbf16>
    %c0_4 = arith.constant 0 : index
    %c0_5 = arith.constant 0 : index
    %c0_6 = arith.constant 0 : index
    %3 = vector.load %arg3[%c0_4, %c0_5, %c0_6] : memref<3x128x384xbf16, #tpu.memory_space<vmem>>, vector<1x128x384xbf16>
    %4 = vector.shape_cast %3 : vector<1x128x384xbf16> to vector<128x384xbf16>
    %cst = arith.constant dense<0.000000e+00> : vector<192x384xf32>
    %5 = tpu.matmul %2, %4, %cst {dimension_numbers = #tpu.dot_dimension_numbers<[1], [0], [0], [1], [0, 0, 1, 1], [], []>} : vector<192x128xbf16>, vector<128x384xbf16>, vector<192x384xf32> -> vector<192x384xf32>
    %c0_7 = arith.constant 0 : index
    %c0_8 = arith.constant 0 : index
    %6 = vector.load %arg7[%c0_7, %c0_8] : memref<192x384xf32, #tpu.memory_space<vmem>>, vector<192x384xf32>
    tpu.vector_store %arg7[%c0_7, %c0_8], %5 {strides = array<i32>} : memref<192x384xf32, #tpu.memory_space<vmem>>, vector<192x384xf32>,
    %c0_9 = arith.constant 0 : index
    %c0_10 = arith.constant 0 : index
    %c1 = arith.constant 1 : index
    %c0_11 = arith.constant 0 : index
    %c0_12 = arith.constant 0 : index
    %7 = vector.load %arg2[%c0_9, %c0_10, %c1, %c0_11, %c0_12] : memref<1x1x10x24x128xbf16, #tpu.memory_space<vmem>>, vector<1x1x8x24x128xbf16>
    %8 = vector.shape_cast %7 : vector<1x1x8x24x128xbf16> to vector<8x24x128xbf16>
    %9 = vector.shape_cast %8 : vector<8x24x128xbf16> to vector<192x128xbf16>
    %c1_13 = arith.constant 1 : index
    %c0_14 = arith.constant 0 : index
    %c0_15 = arith.constant 0 : index
    %10 = vector.load %arg3[%c1_13, %c0_14, %c0_15] : memref<3x128x384xbf16, #tpu.memory_space<vmem>>, vector<1x128x384xbf16>
    %11 = vector.shape_cast %10 : vector<1x128x384xbf16> to vector<128x384xbf16>
    %cst_16 = arith.constant dense<0.000000e+00> : vector<192x384xf32>
    %12 = tpu.matmul %9, %11, %cst_16 {dimension_numbers = #tpu.dot_dimension_numbers<[1], [0], [0], [1], [0, 0, 1, 1], [], []>} : vector<192x128xbf16>, vector<128x384xbf16>, vector<192x384xf32> -> vector<192x384xf32>
    %c0_17 = arith.constant 0 : index
    %c0_18 = arith.constant 0 : index
    %13 = vector.load %arg7[%c0_17, %c0_18] : memref<192x384xf32, #tpu.memory_space<vmem>>, vector<192x384xf32>
    %14 = arith.addf %13, %12 : vector<192x384xf32>
    %c0_19 = arith.constant 0 : index
    %c0_20 = arith.constant 0 : index
    %15 = vector.load %arg7[%c0_19, %c0_20] : memref<192x384xf32, #tpu.memory_space<vmem>>, vector<192x384xf32>
    tpu.vector_store %arg7[%c0_19, %c0_20], %14 {strides = array<i32>} : memref<192x384xf32, #tpu.memory_space<vmem>>, vector<192x384xf32>,
    %c0_21 = arith.constant 0 : index
    %c0_22 = arith.constant 0 : index
    %c2 = arith.constant 2 : index
    %c0_23 = arith.constant 0 : index
    %c0_24 = arith.constant 0 : index
    %16 = vector.load %arg2[%c0_21, %c0_22, %c2, %c0_23, %c0_24] : memref<1x1x10x24x128xbf16, #tpu.memory_space<vmem>>, vector<1x1x8x24x128xbf16>
    %17 = vector.shape_cast %16 : vector<1x1x8x24x128xbf16> to vector<8x24x128xbf16>
    %18 = vector.shape_cast %17 : vector<8x24x128xbf16> to vector<192x128xbf16>
    %c2_25 = arith.constant 2 : index
    %c0_26 = arith.constant 0 : index
    %c0_27 = arith.constant 0 : index
    %19 = vector.load %arg3[%c2_25, %c0_26, %c0_27] : memref<3x128x384xbf16, #tpu.memory_space<vmem>>, vector<1x128x384xbf16>
    %20 = vector.shape_cast %19 : vector<1x128x384xbf16> to vector<128x384xbf16>
    %cst_28 = arith.constant dense<0.000000e+00> : vector<192x384xf32>
    %21 = tpu.matmul %18, %20, %cst_28 {dimension_numbers = #tpu.dot_dimension_numbers<[1], [0], [0], [1], [0, 0, 1, 1], [], []>} : vector<192x128xbf16>, vector<128x384xbf16>, vector<192x384xf32> -> vector<192x384xf32>
    %c0_29 = arith.constant 0 : index
    %c0_30 = arith.constant 0 : index
    %22 = vector.load %arg7[%c0_29, %c0_30] : memref<192x384xf32, #tpu.memory_space<vmem>>, vector<192x384xf32>
    %23 = arith.addf %22, %21 : vector<192x384xf32>
    %c0_31 = arith.constant 0 : index
    %c0_32 = arith.constant 0 : index
    %24 = vector.load %arg7[%c0_31, %c0_32] : memref<192x384xf32, #tpu.memory_space<vmem>>, vector<192x384xf32>
    tpu.vector_store %arg7[%c0_31, %c0_32], %23 {strides = array<i32>} : memref<192x384xf32, #tpu.memory_space<vmem>>, vector<192x384xf32>,
    %c0_33 = arith.constant 0 : index
    %c0_34 = arith.constant 0 : index
    %25 = vector.load %arg7[%c0_33, %c0_34] : memref<192x384xf32, #tpu.memory_space<vmem>>, vector<192x384xf32>
    %26 = vector.shape_cast %25 : vector<192x384xf32> to vector<8x24x384xf32>
    %27 = vector.extract_strided_slice %26 {offsets = [0, 0, 0], sizes = [8, 16, 128], strides = [1, 1, 1]} : vector<8x24x384xf32> to vector<8x16x128xf32>
    %28 = vector.extract_strided_slice %26 {offsets = [0, 1, 128], sizes = [8, 16, 128], strides = [1, 1, 1]} : vector<8x24x384xf32> to vector<8x16x128xf32>
    %29 = arith.addf %27, %28 : vector<8x16x128xf32>
    %30 = vector.extract_strided_slice %26 {offsets = [0, 2, 256], sizes = [8, 16, 128], strides = [1, 1, 1]} : vector<8x24x384xf32> to vector<8x16x128xf32>
    %31 = arith.addf %29, %30 : vector<8x16x128xf32>
    %32 = arith.truncf %31 : vector<8x16x128xf32> to vector<8x16x128xbf16>
    %c0_35 = arith.constant 0 : index
    %c0_36 = arith.constant 0 : index
    %c0_37 = arith.constant 0 : index
    %c0_38 = arith.constant 0 : index
    %33 = vector.load %arg4[%c0_35, %c0_36, %c0_37, %c0_38] : memref<1x8x16x128xbf16, #tpu.memory_space<vmem>>, vector<1x8x16x128xbf16>
    %34 = vector.shape_cast %33 : vector<1x8x16x128xbf16> to vector<8x16x128xbf16>
    %35 = vector.shape_cast %32 : vector<8x16x128xbf16> to vector<1x8x16x128xbf16>
    tpu.vector_store %arg4[%c0_35, %c0_36, %c0_37, %c0_38], %35 {strides = array<i32>} : memref<1x8x16x128xbf16, #tpu.memory_space<vmem>>, vector<1x8x16x128xbf16>,
    %cst_39 = arith.constant dense<0.000000e+00> : vector<16x128xf32>
    %36 = vector.multi_reduction <add>, %31, %cst_39 [0] : vector<8x16x128xf32> to vector<16x128xf32>
    %cst_40 = arith.constant dense<0.000000e+00> : vector<128xf32>
    %37 = vector.multi_reduction <add>, %36, %cst_40 [0] : vector<16x128xf32> to vector<128xf32>
    %38 = vector.shape_cast %37 : vector<128xf32> to vector<1x128xf32>
    %c0_41 = arith.constant 0 : index
    %c0_42 = arith.constant 0 : index
    %c0_43 = arith.constant 0 : index
    %c0_44 = arith.constant 0 : index
    %39 = vector.load %arg5[%c0_41, %c0_42, %c0_43, %c0_44] : memref<1x1x1x128xf32, #tpu.memory_space<vmem>>, vector<1x1x1x128xf32>
    %40 = vector.shape_cast %39 : vector<1x1x1x128xf32> to vector<1x128xf32>
    %41 = vector.shape_cast %38 : vector<1x128xf32> to vector<1x1x1x128xf32>
    tpu.vector_store %arg5[%c0_41, %c0_42, %c0_43, %c0_44], %41 {strides = array<i32>} : memref<1x1x1x128xf32, #tpu.memory_space<vmem>>, vector<1x1x1x128xf32>,
    %42 = arith.mulf %31, %31 : vector<8x16x128xf32>
    %cst_45 = arith.constant dense<0.000000e+00> : vector<16x128xf32>
    %43 = vector.multi_reduction <add>, %42, %cst_45 [0] : vector<8x16x128xf32> to vector<16x128xf32>
    %cst_46 = arith.constant dense<0.000000e+00> : vector<128xf32>
    %44 = vector.multi_reduction <add>, %43, %cst_46 [0] : vector<16x128xf32> to vector<128xf32>
    %45 = vector.shape_cast %44 : vector<128xf32> to vector<1x128xf32>
    %c0_47 = arith.constant 0 : index
    %c0_48 = arith.constant 0 : index
    %c0_49 = arith.constant 0 : index
    %c0_50 = arith.constant 0 : index
    %46 = vector.load %arg6[%c0_47, %c0_48, %c0_49, %c0_50] : memref<1x1x1x128xf32, #tpu.memory_space<vmem>>, vector<1x1x1x128xf32>
    %47 = vector.shape_cast %46 : vector<1x1x1x128xf32> to vector<1x128xf32>
    %48 = vector.shape_cast %45 : vector<1x128xf32> to vector<1x1x1x128xf32>
    tpu.vector_store %arg6[%c0_47, %c0_48, %c0_49, %c0_50], %48 {strides = array<i32>} : memref<1x1x1x128xf32, #tpu.memory_space<vmem>>, vector<1x1x1x128xf32>,
    return
  }
  func.func @transform_0(%arg0: i32, %arg1: i32) -> (i32, i32, i32, i32, i32) {
    %c0_i32 = arith.constant 0 : i32
    %c0_i32_0 = arith.constant 0 : i32
    %c0_i32_1 = arith.constant 0 : i32
    %c0_i32_2 = arith.constant 0 : i32
    return %arg0, %arg1, %c0_i32, %c0_i32_0, %c0_i32_1 : i32, i32, i32, i32, i32
  }
  func.func @transform_1(%arg0: i32, %arg1: i32) -> (i32, i32, i32) {
    %c0_i32 = arith.constant 0 : i32
    %c0_i32_0 = arith.constant 0 : i32
    %c0_i32_1 = arith.constant 0 : i32
    %c0_i32_2 = arith.constant 0 : i32
    return %c0_i32, %c0_i32_0, %c0_i32_1 : i32, i32, i32
  }
  func.func @transform_2(%arg0: i32, %arg1: i32) -> (i32, i32, i32, i32) {
    %c0_i32 = arith.constant 0 : i32
    %c0_i32_0 = arith.constant 0 : i32
    %c0_i32_1 = arith.constant 0 : i32
    return %arg0, %arg1, %c0_i32, %c0_i32_0 : i32, i32, i32, i32
  }
  func.func @transform_3(%arg0: i32, %arg1: i32) -> (i32, i32, i32, i32) {
    %c0_i32 = arith.constant 0 : i32
    %c0_i32_0 = arith.constant 0 : i32
    %c0_i32_1 = arith.constant 0 : i32
    return %arg0, %arg1, %c0_i32, %c0_i32_0 : i32, i32, i32, i32
  }
  func.func @transform_4(%arg0: i32, %arg1: i32) -> (i32, i32, i32, i32) {
    %c0_i32 = arith.constant 0 : i32
    %c0_i32_0 = arith.constant 0 : i32
    %c0_i32_1 = arith.constant 0 : i32
    return %arg0, %arg1, %c0_i32, %c0_i32_0 : i32, i32, i32, i32
  }
}

module attributes {stable_mosaic.version = 11 : i64} {
  func.func @bn_relu_kernel(%arg0: i32, %arg1: i32, %arg2: memref<1x8x16x128xbf16, #tpu.memory_space<vmem>>, %arg3: memref<1x128xf32, #tpu.memory_space<vmem>>, %arg4: memref<1x128xf32, #tpu.memory_space<vmem>>, %arg5: memref<1x8x16x128xbf16, #tpu.memory_space<vmem>>) attributes {dimension_semantics = [#tpu.dimension_semantics<parallel>, #tpu.dimension_semantics<parallel>], iteration_bounds = array<i64: 2, 2>, scalar_prefetch = 0 : i64, scratch_operands = 0 : i64, tpu.core_type = #tpu.core_type<tc>, window_params = [{transform_indices = @transform_0, window_bounds = array<i64: 1, 8, 16, 128>}, {pipeline_mode = #tpu.pipeline_mode<synchronous>, transform_indices = @transform_1, window_bounds = array<i64: 1, 128>}, {pipeline_mode = #tpu.pipeline_mode<synchronous>, transform_indices = @transform_2, window_bounds = array<i64: 1, 128>}, {transform_indices = @transform_3, window_bounds = array<i64: 1, 8, 16, 128>}]} {
    %c0 = arith.constant 0 : index
    %c0_0 = arith.constant 0 : index
    %c0_1 = arith.constant 0 : index
    %c0_2 = arith.constant 0 : index
    %0 = vector.load %arg2[%c0, %c0_0, %c0_1, %c0_2] : memref<1x8x16x128xbf16, #tpu.memory_space<vmem>>, vector<1x8x16x128xbf16>
    %1 = vector.shape_cast %0 : vector<1x8x16x128xbf16> to vector<8x16x128xbf16>
    %2 = arith.extf %1 : vector<8x16x128xbf16> to vector<8x16x128xf32>
    %c0_3 = arith.constant 0 : index
    %c0_4 = arith.constant 0 : index
    %3 = vector.load %arg3[%c0_3, %c0_4] : memref<1x128xf32, #tpu.memory_space<vmem>>, vector<1x128xf32>
    %4 = vector.shape_cast %3 : vector<1x128xf32> to vector<1x1x128xf32>
    %c0_5 = arith.constant 0 : index
    %c0_6 = arith.constant 0 : index
    %5 = vector.load %arg4[%c0_5, %c0_6] : memref<1x128xf32, #tpu.memory_space<vmem>>, vector<1x128xf32>
    %6 = vector.shape_cast %5 : vector<1x128xf32> to vector<1x1x128xf32>
    %7 = vector.broadcast %4 : vector<1x1x128xf32> to vector<8x16x128xf32>
    %8 = arith.mulf %2, %7 : vector<8x16x128xf32>
    %9 = vector.broadcast %6 : vector<1x1x128xf32> to vector<8x16x128xf32>
    %10 = arith.addf %8, %9 : vector<8x16x128xf32>
    %cst = arith.constant 0.000000e+00 : f32
    %11 = vector.broadcast %cst : f32 to vector<8x16x128xf32>
    %12 = arith.maximumf %10, %11 : vector<8x16x128xf32>
    %13 = arith.truncf %12 : vector<8x16x128xf32> to vector<8x16x128xbf16>
    %c0_7 = arith.constant 0 : index
    %c0_8 = arith.constant 0 : index
    %c0_9 = arith.constant 0 : index
    %c0_10 = arith.constant 0 : index
    %14 = vector.load %arg5[%c0_7, %c0_8, %c0_9, %c0_10] : memref<1x8x16x128xbf16, #tpu.memory_space<vmem>>, vector<1x8x16x128xbf16>
    %15 = vector.shape_cast %14 : vector<1x8x16x128xbf16> to vector<8x16x128xbf16>
    %16 = vector.shape_cast %13 : vector<8x16x128xbf16> to vector<1x8x16x128xbf16>
    tpu.vector_store %arg5[%c0_7, %c0_8, %c0_9, %c0_10], %16 {strides = array<i32>} : memref<1x8x16x128xbf16, #tpu.memory_space<vmem>>, vector<1x8x16x128xbf16>,
    return
  }
  func.func @transform_0(%arg0: i32, %arg1: i32) -> (i32, i32, i32, i32) {
    %c0_i32 = arith.constant 0 : i32
    %c0_i32_0 = arith.constant 0 : i32
    %c0_i32_1 = arith.constant 0 : i32
    return %arg0, %arg1, %c0_i32, %c0_i32_0 : i32, i32, i32, i32
  }
  func.func @transform_1(%arg0: i32, %arg1: i32) -> (i32, i32) {
    %c0_i32 = arith.constant 0 : i32
    %c0_i32_0 = arith.constant 0 : i32
    %c0_i32_1 = arith.constant 0 : i32
    return %c0_i32, %c0_i32_0 : i32, i32
  }
  func.func @transform_2(%arg0: i32, %arg1: i32) -> (i32, i32) {
    %c0_i32 = arith.constant 0 : i32
    %c0_i32_0 = arith.constant 0 : i32
    %c0_i32_1 = arith.constant 0 : i32
    return %c0_i32, %c0_i32_0 : i32, i32
  }
  func.func @transform_3(%arg0: i32, %arg1: i32) -> (i32, i32, i32, i32) {
    %c0_i32 = arith.constant 0 : i32
    %c0_i32_0 = arith.constant 0 : i32
    %c0_i32_1 = arith.constant 0 : i32
    return %arg0, %arg1, %c0_i32, %c0_i32_0 : i32, i32, i32, i32
  }
}

module attributes {stable_mosaic.version = 11 : i64} {
  func.func @conv3x3_kernel(%arg0: i32, %arg1: i32, %arg2: memref<1x1x10x24x128xbf16, #tpu.memory_space<vmem>>, %arg3: memref<3x128x384xbf16, #tpu.memory_space<vmem>>, %arg4: memref<1x8x16x128xf32, #tpu.memory_space<vmem>>, %arg5: memref<1x1x1x128xf32, #tpu.memory_space<vmem>>, %arg6: memref<1x1x1x128xf32, #tpu.memory_space<vmem>>, %arg7: memref<192x384xf32, #tpu.memory_space<vmem>>) attributes {dimension_semantics = [#tpu.dimension_semantics<parallel>, #tpu.dimension_semantics<parallel>], iteration_bounds = array<i64: 2, 2>, scalar_prefetch = 0 : i64, scratch_operands = 1 : i64, tpu.core_type = #tpu.core_type<tc>, window_params = [{transform_indices = @transform_0, window_bounds = array<i64: 1, 1, 10, 24, 128>}, {pipeline_mode = #tpu.pipeline_mode<synchronous>, transform_indices = @transform_1, window_bounds = array<i64: 3, 128, 384>}, {transform_indices = @transform_2, window_bounds = array<i64: 1, 8, 16, 128>}, {transform_indices = @transform_3, window_bounds = array<i64: 1, 1, 1, 128>}, {transform_indices = @transform_4, window_bounds = array<i64: 1, 1, 1, 128>}]} {
    %c0 = arith.constant 0 : index
    %c0_0 = arith.constant 0 : index
    %c0_1 = arith.constant 0 : index
    %c0_2 = arith.constant 0 : index
    %c0_3 = arith.constant 0 : index
    %0 = vector.load %arg2[%c0, %c0_0, %c0_1, %c0_2, %c0_3] : memref<1x1x10x24x128xbf16, #tpu.memory_space<vmem>>, vector<1x1x8x24x128xbf16>
    %1 = vector.shape_cast %0 : vector<1x1x8x24x128xbf16> to vector<8x24x128xbf16>
    %2 = vector.shape_cast %1 : vector<8x24x128xbf16> to vector<192x128xbf16>
    %c0_4 = arith.constant 0 : index
    %c0_5 = arith.constant 0 : index
    %c0_6 = arith.constant 0 : index
    %3 = vector.load %arg3[%c0_4, %c0_5, %c0_6] : memref<3x128x384xbf16, #tpu.memory_space<vmem>>, vector<1x128x384xbf16>
    %4 = vector.shape_cast %3 : vector<1x128x384xbf16> to vector<128x384xbf16>
    %cst = arith.constant dense<0.000000e+00> : vector<192x384xf32>
    %5 = tpu.matmul %2, %4, %cst {dimension_numbers = #tpu.dot_dimension_numbers<[1], [0], [0], [1], [0, 0, 1, 1], [], []>} : vector<192x128xbf16>, vector<128x384xbf16>, vector<192x384xf32> -> vector<192x384xf32>
    %c0_7 = arith.constant 0 : index
    %c0_8 = arith.constant 0 : index
    %6 = vector.load %arg7[%c0_7, %c0_8] : memref<192x384xf32, #tpu.memory_space<vmem>>, vector<192x384xf32>
    tpu.vector_store %arg7[%c0_7, %c0_8], %5 {strides = array<i32>} : memref<192x384xf32, #tpu.memory_space<vmem>>, vector<192x384xf32>,
    %c0_9 = arith.constant 0 : index
    %c0_10 = arith.constant 0 : index
    %c1 = arith.constant 1 : index
    %c0_11 = arith.constant 0 : index
    %c0_12 = arith.constant 0 : index
    %7 = vector.load %arg2[%c0_9, %c0_10, %c1, %c0_11, %c0_12] : memref<1x1x10x24x128xbf16, #tpu.memory_space<vmem>>, vector<1x1x8x24x128xbf16>
    %8 = vector.shape_cast %7 : vector<1x1x8x24x128xbf16> to vector<8x24x128xbf16>
    %9 = vector.shape_cast %8 : vector<8x24x128xbf16> to vector<192x128xbf16>
    %c1_13 = arith.constant 1 : index
    %c0_14 = arith.constant 0 : index
    %c0_15 = arith.constant 0 : index
    %10 = vector.load %arg3[%c1_13, %c0_14, %c0_15] : memref<3x128x384xbf16, #tpu.memory_space<vmem>>, vector<1x128x384xbf16>
    %11 = vector.shape_cast %10 : vector<1x128x384xbf16> to vector<128x384xbf16>
    %cst_16 = arith.constant dense<0.000000e+00> : vector<192x384xf32>
    %12 = tpu.matmul %9, %11, %cst_16 {dimension_numbers = #tpu.dot_dimension_numbers<[1], [0], [0], [1], [0, 0, 1, 1], [], []>} : vector<192x128xbf16>, vector<128x384xbf16>, vector<192x384xf32> -> vector<192x384xf32>
    %c0_17 = arith.constant 0 : index
    %c0_18 = arith.constant 0 : index
    %13 = vector.load %arg7[%c0_17, %c0_18] : memref<192x384xf32, #tpu.memory_space<vmem>>, vector<192x384xf32>
    %14 = arith.addf %13, %12 : vector<192x384xf32>
    %c0_19 = arith.constant 0 : index
    %c0_20 = arith.constant 0 : index
    %15 = vector.load %arg7[%c0_19, %c0_20] : memref<192x384xf32, #tpu.memory_space<vmem>>, vector<192x384xf32>
    tpu.vector_store %arg7[%c0_19, %c0_20], %14 {strides = array<i32>} : memref<192x384xf32, #tpu.memory_space<vmem>>, vector<192x384xf32>,
    %c0_21 = arith.constant 0 : index
    %c0_22 = arith.constant 0 : index
    %c2 = arith.constant 2 : index
    %c0_23 = arith.constant 0 : index
    %c0_24 = arith.constant 0 : index
    %16 = vector.load %arg2[%c0_21, %c0_22, %c2, %c0_23, %c0_24] : memref<1x1x10x24x128xbf16, #tpu.memory_space<vmem>>, vector<1x1x8x24x128xbf16>
    %17 = vector.shape_cast %16 : vector<1x1x8x24x128xbf16> to vector<8x24x128xbf16>
    %18 = vector.shape_cast %17 : vector<8x24x128xbf16> to vector<192x128xbf16>
    %c2_25 = arith.constant 2 : index
    %c0_26 = arith.constant 0 : index
    %c0_27 = arith.constant 0 : index
    %19 = vector.load %arg3[%c2_25, %c0_26, %c0_27] : memref<3x128x384xbf16, #tpu.memory_space<vmem>>, vector<1x128x384xbf16>
    %20 = vector.shape_cast %19 : vector<1x128x384xbf16> to vector<128x384xbf16>
    %cst_28 = arith.constant dense<0.000000e+00> : vector<192x384xf32>
    %21 = tpu.matmul %18, %20, %cst_28 {dimension_numbers = #tpu.dot_dimension_numbers<[1], [0], [0], [1], [0, 0, 1, 1], [], []>} : vector<192x128xbf16>, vector<128x384xbf16>, vector<192x384xf32> -> vector<192x384xf32>
    %c0_29 = arith.constant 0 : index
    %c0_30 = arith.constant 0 : index
    %22 = vector.load %arg7[%c0_29, %c0_30] : memref<192x384xf32, #tpu.memory_space<vmem>>, vector<192x384xf32>
    %23 = arith.addf %22, %21 : vector<192x384xf32>
    %c0_31 = arith.constant 0 : index
    %c0_32 = arith.constant 0 : index
    %24 = vector.load %arg7[%c0_31, %c0_32] : memref<192x384xf32, #tpu.memory_space<vmem>>, vector<192x384xf32>
    tpu.vector_store %arg7[%c0_31, %c0_32], %23 {strides = array<i32>} : memref<192x384xf32, #tpu.memory_space<vmem>>, vector<192x384xf32>,
    %c0_33 = arith.constant 0 : index
    %c0_34 = arith.constant 0 : index
    %25 = vector.load %arg7[%c0_33, %c0_34] : memref<192x384xf32, #tpu.memory_space<vmem>>, vector<192x384xf32>
    %26 = vector.shape_cast %25 : vector<192x384xf32> to vector<8x24x384xf32>
    %27 = vector.extract_strided_slice %26 {offsets = [0, 0, 0], sizes = [8, 16, 128], strides = [1, 1, 1]} : vector<8x24x384xf32> to vector<8x16x128xf32>
    %28 = vector.extract_strided_slice %26 {offsets = [0, 1, 128], sizes = [8, 16, 128], strides = [1, 1, 1]} : vector<8x24x384xf32> to vector<8x16x128xf32>
    %29 = arith.addf %27, %28 : vector<8x16x128xf32>
    %30 = vector.extract_strided_slice %26 {offsets = [0, 2, 256], sizes = [8, 16, 128], strides = [1, 1, 1]} : vector<8x24x384xf32> to vector<8x16x128xf32>
    %31 = arith.addf %29, %30 : vector<8x16x128xf32>
    %c0_35 = arith.constant 0 : index
    %c0_36 = arith.constant 0 : index
    %c0_37 = arith.constant 0 : index
    %c0_38 = arith.constant 0 : index
    %32 = vector.load %arg4[%c0_35, %c0_36, %c0_37, %c0_38] : memref<1x8x16x128xf32, #tpu.memory_space<vmem>>, vector<1x8x16x128xf32>
    %33 = vector.shape_cast %32 : vector<1x8x16x128xf32> to vector<8x16x128xf32>
    %34 = vector.shape_cast %31 : vector<8x16x128xf32> to vector<1x8x16x128xf32>
    tpu.vector_store %arg4[%c0_35, %c0_36, %c0_37, %c0_38], %34 {strides = array<i32>} : memref<1x8x16x128xf32, #tpu.memory_space<vmem>>, vector<1x8x16x128xf32>,
    %cst_39 = arith.constant dense<0.000000e+00> : vector<16x128xf32>
    %35 = vector.multi_reduction <add>, %31, %cst_39 [0] : vector<8x16x128xf32> to vector<16x128xf32>
    %cst_40 = arith.constant dense<0.000000e+00> : vector<128xf32>
    %36 = vector.multi_reduction <add>, %35, %cst_40 [0] : vector<16x128xf32> to vector<128xf32>
    %37 = vector.shape_cast %36 : vector<128xf32> to vector<1x128xf32>
    %c0_41 = arith.constant 0 : index
    %c0_42 = arith.constant 0 : index
    %c0_43 = arith.constant 0 : index
    %c0_44 = arith.constant 0 : index
    %38 = vector.load %arg5[%c0_41, %c0_42, %c0_43, %c0_44] : memref<1x1x1x128xf32, #tpu.memory_space<vmem>>, vector<1x1x1x128xf32>
    %39 = vector.shape_cast %38 : vector<1x1x1x128xf32> to vector<1x128xf32>
    %40 = vector.shape_cast %37 : vector<1x128xf32> to vector<1x1x1x128xf32>
    tpu.vector_store %arg5[%c0_41, %c0_42, %c0_43, %c0_44], %40 {strides = array<i32>} : memref<1x1x1x128xf32, #tpu.memory_space<vmem>>, vector<1x1x1x128xf32>,
    %41 = arith.mulf %31, %31 : vector<8x16x128xf32>
    %cst_45 = arith.constant dense<0.000000e+00> : vector<16x128xf32>
    %42 = vector.multi_reduction <add>, %41, %cst_45 [0] : vector<8x16x128xf32> to vector<16x128xf32>
    %cst_46 = arith.constant dense<0.000000e+00> : vector<128xf32>
    %43 = vector.multi_reduction <add>, %42, %cst_46 [0] : vector<16x128xf32> to vector<128xf32>
    %44 = vector.shape_cast %43 : vector<128xf32> to vector<1x128xf32>
    %c0_47 = arith.constant 0 : index
    %c0_48 = arith.constant 0 : index
    %c0_49 = arith.constant 0 : index
    %c0_50 = arith.constant 0 : index
    %45 = vector.load %arg6[%c0_47, %c0_48, %c0_49, %c0_50] : memref<1x1x1x128xf32, #tpu.memory_space<vmem>>, vector<1x1x1x128xf32>
    %46 = vector.shape_cast %45 : vector<1x1x1x128xf32> to vector<1x128xf32>
    %47 = vector.shape_cast %44 : vector<1x128xf32> to vector<1x1x1x128xf32>
    tpu.vector_store %arg6[%c0_47, %c0_48, %c0_49, %c0_50], %47 {strides = array<i32>} : memref<1x1x1x128xf32, #tpu.memory_space<vmem>>, vector<1x1x1x128xf32>,
    return
  }
  func.func @transform_0(%arg0: i32, %arg1: i32) -> (i32, i32, i32, i32, i32) {
    %c0_i32 = arith.constant 0 : i32
    %c0_i32_0 = arith.constant 0 : i32
    %c0_i32_1 = arith.constant 0 : i32
    %c0_i32_2 = arith.constant 0 : i32
    return %arg0, %arg1, %c0_i32, %c0_i32_0, %c0_i32_1 : i32, i32, i32, i32, i32
  }
  func.func @transform_1(%arg0: i32, %arg1: i32) -> (i32, i32, i32) {
    %c0_i32 = arith.constant 0 : i32
    %c0_i32_0 = arith.constant 0 : i32
    %c0_i32_1 = arith.constant 0 : i32
    %c0_i32_2 = arith.constant 0 : i32
    return %c0_i32, %c0_i32_0, %c0_i32_1 : i32, i32, i32
  }
  func.func @transform_2(%arg0: i32, %arg1: i32) -> (i32, i32, i32, i32) {
    %c0_i32 = arith.constant 0 : i32
    %c0_i32_0 = arith.constant 0 : i32
    %c0_i32_1 = arith.constant 0 : i32
    return %arg0, %arg1, %c0_i32, %c0_i32_0 : i32, i32, i32, i32
  }
  func.func @transform_3(%arg0: i32, %arg1: i32) -> (i32, i32, i32, i32) {
    %c0_i32 = arith.constant 0 : i32
    %c0_i32_0 = arith.constant 0 : i32
    %c0_i32_1 = arith.constant 0 : i32
    return %arg0, %arg1, %c0_i32, %c0_i32_0 : i32, i32, i32, i32
  }
  func.func @transform_4(%arg0: i32, %arg1: i32) -> (i32, i32, i32, i32) {
    %c0_i32 = arith.constant 0 : i32
    %c0_i32_0 = arith.constant 0 : i32
    %c0_i32_1 = arith.constant 0 : i32
    return %arg0, %arg1, %c0_i32, %c0_i32_0 : i32, i32, i32, i32
  }
}

module attributes {stable_mosaic.version = 11 : i64} {
  func.func @bn_relu_kernel(%arg0: i32, %arg1: i32, %arg2: memref<1x8x16x128xf32, #tpu.memory_space<vmem>>, %arg3: memref<1x128xf32, #tpu.memory_space<vmem>>, %arg4: memref<1x128xf32, #tpu.memory_space<vmem>>, %arg5: memref<1x8x16x128xf32, #tpu.memory_space<vmem>>) attributes {dimension_semantics = [#tpu.dimension_semantics<parallel>, #tpu.dimension_semantics<parallel>], iteration_bounds = array<i64: 2, 2>, scalar_prefetch = 0 : i64, scratch_operands = 0 : i64, tpu.core_type = #tpu.core_type<tc>, window_params = [{transform_indices = @transform_0, window_bounds = array<i64: 1, 8, 16, 128>}, {pipeline_mode = #tpu.pipeline_mode<synchronous>, transform_indices = @transform_1, window_bounds = array<i64: 1, 128>}, {pipeline_mode = #tpu.pipeline_mode<synchronous>, transform_indices = @transform_2, window_bounds = array<i64: 1, 128>}, {transform_indices = @transform_3, window_bounds = array<i64: 1, 8, 16, 128>}]} {
    %c0 = arith.constant 0 : index
    %c0_0 = arith.constant 0 : index
    %c0_1 = arith.constant 0 : index
    %c0_2 = arith.constant 0 : index
    %0 = vector.load %arg2[%c0, %c0_0, %c0_1, %c0_2] : memref<1x8x16x128xf32, #tpu.memory_space<vmem>>, vector<1x8x16x128xf32>
    %1 = vector.shape_cast %0 : vector<1x8x16x128xf32> to vector<8x16x128xf32>
    %c0_3 = arith.constant 0 : index
    %c0_4 = arith.constant 0 : index
    %2 = vector.load %arg3[%c0_3, %c0_4] : memref<1x128xf32, #tpu.memory_space<vmem>>, vector<1x128xf32>
    %3 = vector.shape_cast %2 : vector<1x128xf32> to vector<1x1x128xf32>
    %c0_5 = arith.constant 0 : index
    %c0_6 = arith.constant 0 : index
    %4 = vector.load %arg4[%c0_5, %c0_6] : memref<1x128xf32, #tpu.memory_space<vmem>>, vector<1x128xf32>
    %5 = vector.shape_cast %4 : vector<1x128xf32> to vector<1x1x128xf32>
    %6 = vector.broadcast %3 : vector<1x1x128xf32> to vector<8x16x128xf32>
    %7 = arith.mulf %1, %6 : vector<8x16x128xf32>
    %8 = vector.broadcast %5 : vector<1x1x128xf32> to vector<8x16x128xf32>
    %9 = arith.addf %7, %8 : vector<8x16x128xf32>
    %cst = arith.constant 0.000000e+00 : f32
    %10 = vector.broadcast %cst : f32 to vector<8x16x128xf32>
    %11 = arith.maximumf %9, %10 : vector<8x16x128xf32>
    %c0_7 = arith.constant 0 : index
    %c0_8 = arith.constant 0 : index
    %c0_9 = arith.constant 0 : index
    %c0_10 = arith.constant 0 : index
    %12 = vector.load %arg5[%c0_7, %c0_8, %c0_9, %c0_10] : memref<1x8x16x128xf32, #tpu.memory_space<vmem>>, vector<1x8x16x128xf32>
    %13 = vector.shape_cast %12 : vector<1x8x16x128xf32> to vector<8x16x128xf32>
    %14 = vector.shape_cast %11 : vector<8x16x128xf32> to vector<1x8x16x128xf32>
    tpu.vector_store %arg5[%c0_7, %c0_8, %c0_9, %c0_10], %14 {strides = array<i32>} : memref<1x8x16x128xf32, #tpu.memory_space<vmem>>, vector<1x8x16x128xf32>,
    return
  }
  func.func @transform_0(%arg0: i32, %arg1: i32) -> (i32, i32, i32, i32) {
    %c0_i32 = arith.constant 0 : i32
    %c0_i32_0 = arith.constant 0 : i32
    %c0_i32_1 = arith.constant 0 : i32
    return %arg0, %arg1, %c0_i32, %c0_i32_0 : i32, i32, i32, i32
  }
  func.func @transform_1(%arg0: i32, %arg1: i32) -> (i32, i32) {
    %c0_i32 = arith.constant 0 : i32
    %c0_i32_0 = arith.constant 0 : i32
    %c0_i32_1 = arith.constant 0 : i32
    return %c0_i32, %c0_i32_0 : i32, i32
  }
  func.func @transform_2(%arg0: i32, %arg1: i32) -> (i32, i32) {
    %c0_i32 = arith.constant 0 : i32
    %c0_i32_0 = arith.constant 0 : i32
    %c0_i32_1 = arith.constant 0 : i32
    return %c0_i32, %c0_i32_0 : i32, i32
  }
  func.func @transform_3(%arg0: i32, %arg1: i32) -> (i32, i32, i32, i32) {
    %c0_i32 = arith.constant 0 : i32
    %c0_i32_0 = arith.constant 0 : i32
    %c0_i32_1 = arith.constant 0 : i32
    return %arg0, %arg1, %c0_i32, %c0_i32_0 : i32, i32, i32, i32
  }
}

</mosaic_0001>

<llo_original>
// kernel: _lambda_.5
$region0: #{_lambda_.5}
  #allocation0 [shape = 'u32[]', space=smem, size = 0x4, offset = 0x4, fixed_abs, tag = 'smem constant byte address 0x4 - core index']
  #allocation1 [shape = 'u32[144,128]{1,0:T(1,128)}', space=vmem, size = 0x12000, scoped, tag = 'internal scratch']
  %s0 = inlined_call_operand.vmem [shape: bf16[2,16,16,128], index: 0, kind: input, shape index: {}]
  %s1 = inlined_call_operand.vmem [shape: f32[1,128], index: 1, kind: input, shape index: {}]
  %s2 = inlined_call_operand.vmem [shape: f32[1,128], index: 2, kind: input, shape index: {}]
  %s3 = inlined_call_operand.vmem [shape: bf16[2,16,16,128], index: 3, kind: output, shape index: {}]
  %s4 = sld [smem:[#allocation0]]
  $region45: #{_lambda_.5} parent=0
    _
  %s6 = ssub.s32 1, %s4
  %s7 = scalar_select 0, %s6, %s4
  loop: start=0, step=1, limit=6
  $region2: #{_lambda_.5} parent=0 // loop_pre_header
    _
  $region3: #{_lambda_.5} parent=0 // loop_header
    %s9 = sphi 0, %s13
    %p10 = scmp.ge.s32.totalorder %s9, 6
    %s16 = sphi 0, %s28
    %s17 = sphi 0, %s24
    %s18 = sphi 0, %s16
    %s19 = sphi 0, %s17
    %s20 = sphi 0, %s18
    %s21 = sphi 0, %s19
    %s33 = sphi 0, %s35
    %s36 = sphi 0, %s33
    %s37 = sphi 0, %s36
    %s53 = sphi 0, %s37
    %s57 = sphi 0, %s57
    %s59 = sphi 0, %s57
    %s60 = sphi 0, %s59
    %s74 = sphi 0, %s60
    %s78 = sphi 0, %s78
    %s80 = sphi 0, %s78
    %s81 = sphi 0, %s80
    %s95 = sphi 0, %s81
    %s103 = sphi 0, %s105
    %s106 = sphi 0, %s103
    %s107 = sphi 0, %s106
    %s123 = sphi 0, %s107
  $region4: #{_lambda_.5} parent=0 // loop_header_branch
    %12 = sbr.rel (%p10) target = $region8
  $region5: #{_lambda_.5} parent=0 // loop_body
    %s14 = ssub.s32 %s9, 1
    %s15 = ssub.s32 %s9, 2
    %s22 = sadd.s32 1, %s17
    %p23 = scmp.ge.s32.totalorder %s22, 2
    %s24 = scalar_select %p23, 0, %s22
    %s25 = sadd.s32 1, %s16
    %s26 = scalar_select %p23, %s25, %s16
    %p27 = scmp.ge.s32.totalorder %s26, 2
    %s28 = scalar_select %p27, 0, %s26
    %s29 = ssub.s32 %s16, %s28
    %s30 = ssub.s32 %s17, %s24
    %s31 = sor.u32 %s29, %s30
    %p32 = scmp.eq.s32.totalorder %s31, 0
    %s34 = sadd.s32 %s33, 1
    %s35 = scalar_select %p32, %s33, %s34
    %p38 = pneg %p32
    %p39 = scmp.eq.s32.totalorder %s9, 3
    %p40 = por %p38, %p39
    %p41 = scmp.ne.s32.totalorder %s33, %s36
    %p42 = scmp.eq.s32.totalorder %s9, 0
    %p43 = por %p41, %p42
    %p44 = scmp.ne.s32.totalorder %s33, %s36
    %p45 = scmp.eq.s32.totalorder %s14, 3
    %p46 = por %p44, %p45
    %p47 = scmp.ne.s32.totalorder %s36, %s37
    %p48 = scmp.eq.s32.totalorder %s14, 0
    %p49 = por %p47, %p48
    %p50 = scmp.ne.s32.totalorder %s36, %s37
    %p51 = scmp.eq.s32.totalorder %s15, 3
    %p52 = por %p50, %p51
    %p54 = scmp.ne.s32.totalorder %s37, %s53
    %p55 = scmp.eq.s32.totalorder %s15, 0
    %p56 = por %p54, %p55
    %s58 = sadd.s32 %s57, 1
    %p61 = scmp.eq.s32.totalorder %s9, 3
    %p62 = scmp.ne.s32.totalorder %s57, %s59
    %p63 = scmp.eq.s32.totalorder %s9, 0
    %p64 = por %p62, %p63
    %p65 = scmp.ne.s32.totalorder %s57, %s59
    %p66 = scmp.eq.s32.totalorder %s14, 3
    %p67 = por %p65, %p66
    %p68 = scmp.ne.s32.totalorder %s59, %s60
    %p69 = scmp.eq.s32.totalorder %s14, 0
    %p70 = por %p68, %p69
    %p71 = scmp.ne.s32.totalorder %s59, %s60
    %p72 = scmp.eq.s32.totalorder %s15, 3
    %p73 = por %p71, %p72
    %p75 = scmp.ne.s32.totalorder %s60, %s74
    %p76 = scmp.eq.s32.totalorder %s15, 0
    %p77 = por %p75, %p76
    %s79 = sadd.s32 %s78, 1
    %p82 = scmp.eq.s32.totalorder %s9, 3
    %p83 = scmp.ne.s32.totalorder %s78, %s80
    %p84 = scmp.eq.s32.totalorder %s9, 0
    %p85 = por %p83, %p84
    %p86 = scmp.ne.s32.totalorder %s78, %s80
    %p87 = scmp.eq.s32.totalorder %s14, 3
    %p88 = por %p86, %p87
    %p89 = scmp.ne.s32.totalorder %s80, %s81
    %p90 = scmp.eq.s32.totalorder %s14, 0
    %p91 = por %p89, %p90
    %p92 = scmp.ne.s32.totalorder %s80, %s81
    %p93 = scmp.eq.s32.totalorder %s15, 3
    %p94 = por %p92, %p93
    %p96 = scmp.ne.s32.totalorder %s81, %s95
    %p97 = scmp.eq.s32.totalorder %s15, 0
    %p98 = por %p96, %p97
    %s99 = ssub.s32 %s16, %s28
    %s100 = ssub.s32 %s17, %s24
    %s101 = sor.u32 %s99, %s100
    %p102 = scmp.eq.s32.totalorder %s101, 0
    %s104 = sadd.s32 %s103, 1
    %s105 = scalar_select %p102, %s103, %s104
    %p108 = pneg %p102
    %p109 = scmp.eq.s32.totalorder %s9, 3
    %p110 = por %p108, %p109
    %p111 = scmp.ne.s32.totalorder %s103, %s106
    %p112 = scmp.eq.s32.totalorder %s9, 0
    %p113 = por %p111, %p112
    %p114 = scmp.ne.s32.totalorder %s103, %s106
    %p115 = scmp.eq.s32.totalorder %s14, 3
    %p116 = por %p114, %p115
    %p117 = scmp.ne.s32.totalorder %s106, %s107
    %p118 = scmp.eq.s32.totalorder %s14, 0
    %p119 = por %p117, %p118
    %p120 = scmp.ne.s32.totalorder %s106, %s107
    %p121 = scmp.eq.s32.totalorder %s15, 3
    %p122 = por %p120, %p121
    %p124 = scmp.ne.s32.totalorder %s107, %s123
    %p125 = scmp.eq.s32.totalorder %s15, 0
    %p126 = por %p124, %p125
    %p127 = scmp.le.s32.totalorder 1, %s9
    %p128 = scmp.lt.s32.totalorder %s9, 5
    %p129 = pnand %p127, %p128
    %p130 = pneg %p129
    // Predicated region
    $region9: #{_lambda_.5} parent=5 // pred_check
      _
    $region10: #{_lambda_.5} parent=5 // pred_check_branch
      %132 = sbr.rel (%p129) target = $region12
    $region11: #{_lambda_.5} parent=5 // pred_region
      %s133 = ssub.s32 %s9, 1
      // Predicated region
      $region13: #{_lambda_.5} parent=11 // pred_check
        %p134 = pneg %p70
      $region14: #{_lambda_.5} parent=11 // pred_check_branch
        %136 = sbr.rel (%p134) target = $region16
      $region15: #{_lambda_.5} parent=11 // pred_region
        _
      $region16: #{_lambda_.5} parent=11 // pred_fallthru
        _
      // Predicated region
      $region17: #{_lambda_.5} parent=11 // pred_check
        %p137 = pneg %p91
      $region18: #{_lambda_.5} parent=11 // pred_check_branch
        %139 = sbr.rel (%p137) target = $region20
      $region19: #{_lambda_.5} parent=11 // pred_region
        _
      $region20: #{_lambda_.5} parent=11 // pred_fallthru
        _
    $region12: #{_lambda_.5} parent=5 // pred_fallthru
      _
    %p140 = scmp.lt.s32.totalorder %s9, 4
    // Predicated region
    $region21: #{_lambda_.5} parent=5 // pred_check
      %p141 = pneg %p140
    $region22: #{_lambda_.5} parent=5 // pred_check_branch
      %143 = sbr.rel (%p141) target = $region24
    $region23: #{_lambda_.5} parent=5 // pred_region
      // Predicated region
      $region25: #{_lambda_.5} parent=23 // pred_check
        %p144 = pneg %p43
      $region26: #{_lambda_.5} parent=23 // pred_check_branch
        %146 = sbr.rel (%p144) target = $region28
      $region27: #{_lambda_.5} parent=23 // pred_region
        %s147 = smul.u32 8, %s17
        %p148 = scmp.lt.s32.totalorder %s16, 1
        %s149 = scalar_select %p148, %s16, 1
        %p150 = scmp.lt.s32.totalorder %s147, 15
        %s151 = scalar_select %p150, %s147, 15
        %s152 = smul.addr %s151, 2
        %s153 = smul.addr %s149, 32
        %s154 = sadd.s32 %s152, %s153
        %s155 = smul.addr %s154, 4
        %s156 = scalar_lea.vmem %s0, %s155
        %s157 = smul.u32 8, %s17
      $region28: #{_lambda_.5} parent=23 // pred_fallthru
        _
    $region24: #{_lambda_.5} parent=5 // pred_fallthru
      _
    %p158 = scmp.le.s32.totalorder 1, %s9
    %p159 = scmp.lt.s32.totalorder %s9, 5
    %p160 = pnand %p158, %p159
    %p161 = pneg %p160
    // Predicated region
    $region29: #{_lambda_.5} parent=5 // pred_check
      _
    $region30: #{_lambda_.5} parent=5 // pred_check_branch
      %163 = sbr.rel (%p160) target = $region32
    $region31: #{_lambda_.5} parent=5 // pred_region
      %s164 = ssub.s32 %s9, 1
      %s165 = smul.u32 8, %s19
      %p166 = scmp.lt.s32.totalorder %s18, 1
      %s167 = scalar_select %p166, %s18, 1
      %p168 = scmp.lt.s32.totalorder %s165, 15
      %s169 = scalar_select %p168, %s165, 15
      %s170 = smul.addr %s169, 2
      %s171 = smul.addr %s167, 32
      %s172 = sadd.s32 %s170, %s171
      %s173 = smul.addr %s172, 4
      %s174 = scalar_lea.vmem %s0, %s173
      %p175 = pneg %p49
      %p176 = pneg %p46
      %p177 = pneg %p70
      %p178 = pneg %p67
      %p179 = pneg %p91
      %p180 = pneg %p88
      %p181 = pneg %p119
      %p182 = pneg %p116
      %s183 = smul.u32 8, %s19
      %p184 = scmp.lt.s32.totalorder %s18, 1
      %s185 = scalar_select %p184, %s18, 1
      %p186 = scmp.lt.s32.totalorder %s183, 15
      %s187 = scalar_select %p186, %s183, 15
      %s188 = smul.addr %s187, 2
      %s189 = smul.addr %s185, 32
      %s190 = sadd.s32 %s188, %s189
      %s191 = smul.addr %s190, 4
      %s192 = scalar_lea.vmem %s3, %s191
      %s193 = smul.u32 8, %s19
      %p194 = scmp.lt.s32.totalorder %s18, 1
      %s195 = scalar_select %p194, %s18, 1
      %p196 = scmp.lt.s32.totalorder %s193, 15
      %s197 = scalar_select %p196, %s193, 15
      %s198 = smul.addr %s197, 2
      %s199 = smul.addr %s195, 32
      %s200 = sadd.s32 %s198, %s199
      %s201 = smul.addr %s200, 4
      %s202 = scalar_lea.vmem %s0, %s201
      %s203 = smul.u32 8, %s19
      %s204 = smul.u32 8, %s19
      %p205 = scmp.lt.s32.totalorder %s18, 1
      %s206 = scalar_select %p205, %s18, 1
      %p207 = scmp.lt.s32.totalorder %s204, 15
      %s208 = scalar_select %p207, %s204, 15
      %s209 = smul.addr %s208, 2
      %s210 = smul.addr %s206, 32
      %s211 = sadd.s32 %s209, %s210
      %s212 = smul.addr %s211, 4
      %s213 = scalar_lea.vmem %s3, %s212
      %s214 = smul.u32 8, %s19
      %v215 = vld [vmem:[%s202] sm:$0xf]
      %v216 = vld [vmem:[%s202 + $0x4] sm:$0xf]
      %v217 = vld [vmem:[%s202 + $0x8] sm:$0xf]
      %v218 = vld [vmem:[%s202 + $0xc] sm:$0xf]
      %v219 = vld [vmem:[%s202 + $0x10] sm:$0xf]
      %v220 = vld [vmem:[%s202 + $0x14] sm:$0xf]
      %v221 = vld [vmem:[%s202 + $0x18] sm:$0xf]
      %v222 = vld [vmem:[%s202 + $0x1c] sm:$0xf]
      %v223 = vld [vmem:[%s202 + $0x20] sm:$0xf]
      %v224 = vld [vmem:[%s202 + $0x24] sm:$0xf]
      %v225 = vld [vmem:[%s202 + $0x28] sm:$0xf]
      %v226 = vld [vmem:[%s202 + $0x2c] sm:$0xf]
      %v227 = vld [vmem:[%s202 + $0x30] sm:$0xf]
      %v228 = vld [vmem:[%s202 + $0x34] sm:$0xf]
      %v229 = vld [vmem:[%s202 + $0x38] sm:$0xf]
      %v230 = vld [vmem:[%s202 + $0x3c] sm:$0xf]
      %v231 = vunpack.c.l.bf16 %v215
      %v232 = vunpack.c.l.bf16 %v216
      %v233 = vunpack.c.l.bf16 %v217
      %v234 = vunpack.c.l.bf16 %v218
      %v235 = vunpack.c.l.bf16 %v219
      %v236 = vunpack.c.l.bf16 %v220
      %v237 = vunpack.c.l.bf16 %v221
      %v238 = vunpack.c.l.bf16 %v222
      %v239 = vunpack.c.l.bf16 %v223
      %v240 = vunpack.c.l.bf16 %v224
      %v241 = vunpack.c.l.bf16 %v225
      %v242 = vunpack.c.l.bf16 %v226
      %v243 = vunpack.c.l.bf16 %v227
      %v244 = vunpack.c.l.bf16 %v228
      %v245 = vunpack.c.l.bf16 %v229
      %v246 = vunpack.c.l.bf16 %v230
      %v247 = vld [vmem:[%s1] sm:$0x1]
      %v248 = vld [vmem:[%s2] sm:$0x1]
      %v250 = vlaneseq
      %v251 = vshrl.u32 %v250, 7
      %v252 = vsub.s32 0, %v251
      %v253 = vrot.slane %v247, %v252
      %v255 = vmul.f32 %v231, %v253
      %v256 = vmul.f32 %v232, %v253
      %v257 = vmul.f32 %v233, %v253
      %v258 = vmul.f32 %v234, %v253
      %v259 = vmul.f32 %v235, %v253
      %v260 = vmul.f32 %v236, %v253
      %v261 = vmul.f32 %v237, %v253
      %v262 = vmul.f32 %v238, %v253
      %v263 = vmul.f32 %v239, %v253
      %v264 = vmul.f32 %v240, %v253
      %v265 = vmul.f32 %v241, %v253
      %v266 = vmul.f32 %v242, %v253
      %v267 = vmul.f32 %v243, %v253
      %v268 = vmul.f32 %v244, %v253
      %v269 = vmul.f32 %v245, %v253
      %v270 = vmul.f32 %v246, %v253
      %v272 = vlaneseq
      %v273 = vshrl.u32 %v272, 7
      %v274 = vsub.s32 0, %v273
      %v275 = vrot.slane %v248, %v274
      %v277 = vadd.f32 %v255, %v275
      %v278 = vadd.f32 %v256, %v275
      %v279 = vadd.f32 %v257, %v275
      %v280 = vadd.f32 %v258, %v275
      %v281 = vadd.f32 %v259, %v275
      %v282 = vadd.f32 %v260, %v275
      %v283 = vadd.f32 %v261, %v275
      %v284 = vadd.f32 %v262, %v275
      %v285 = vadd.f32 %v263, %v275
      %v286 = vadd.f32 %v264, %v275
      %v287 = vadd.f32 %v265, %v275
      %v288 = vadd.f32 %v266, %v275
      %v289 = vadd.f32 %v267, %v275
      %v290 = vadd.f32 %v268, %v275
      %v291 = vadd.f32 %v269, %v275
      %v292 = vadd.f32 %v270, %v275
      %v293 = vmax.f32 %v277, 0.0
      %v294 = vmax.f32 %v278, 0.0
      %v295 = vmax.f32 %v279, 0.0
      %v296 = vmax.f32 %v280, 0.0
      %v297 = vmax.f32 %v281, 0.0
      %v298 = vmax.f32 %v282, 0.0
      %v299 = vmax.f32 %v283, 0.0
      %v300 = vmax.f32 %v284, 0.0
      %v301 = vmax.f32 %v285, 0.0
      %v302 = vmax.f32 %v286, 0.0
      %v303 = vmax.f32 %v287, 0.0
      %v304 = vmax.f32 %v288, 0.0
      %v305 = vmax.f32 %v289, 0.0
      %v306 = vmax.f32 %v290, 0.0
      %v307 = vmax.f32 %v291, 0.0
      %v308 = vmax.f32 %v292, 0.0
      %v309 = vpack.c.bf16 %v294, %v293
      %v310 = vpack.c.bf16 %v296, %v295
      %v311 = vpack.c.bf16 %v298, %v297
      %v312 = vpack.c.bf16 %v300, %v299
      %v313 = vpack.c.bf16 %v302, %v301
      %v314 = vpack.c.bf16 %v304, %v303
      %v315 = vpack.c.bf16 %v306, %v305
      %v316 = vpack.c.bf16 %v308, %v307
      %v325 = vunpack.c.l.b16 %v309
      %v326 = vunpack.c.h.b16 %v309
      %v327 = vunpack.c.l.b16 %v310
      %v328 = vunpack.c.h.b16 %v310
      %v329 = vunpack.c.l.b16 %v311
      %v330 = vunpack.c.h.b16 %v311
      %v331 = vunpack.c.l.b16 %v312
      %v332 = vunpack.c.h.b16 %v312
      %v333 = vunpack.c.l.b16 %v313
      %v334 = vunpack.c.h.b16 %v313
      %v335 = vunpack.c.l.b16 %v314
      %v336 = vunpack.c.h.b16 %v314
      %v337 = vunpack.c.l.b16 %v315
      %v338 = vunpack.c.h.b16 %v315
      %v339 = vunpack.c.l.b16 %v316
      %v340 = vunpack.c.h.b16 %v316
      %v341 = vpack.c.b16 %v325, %v325
      %v342 = vpack.c.b16 %v326, %v326
      %v343 = vpack.c.b16 %v327, %v327
      %v344 = vpack.c.b16 %v328, %v328
      %v345 = vpack.c.b16 %v329, %v329
      %v346 = vpack.c.b16 %v330, %v330
      %v347 = vpack.c.b16 %v331, %v331
      %v348 = vpack.c.b16 %v332, %v332
      %v349 = vpack.c.b16 %v333, %v333
      %v350 = vpack.c.b16 %v334, %v334
      %v351 = vpack.c.b16 %v335, %v335
      %v352 = vpack.c.b16 %v336, %v336
      %v353 = vpack.c.b16 %v337, %v337
      %v354 = vpack.c.b16 %v338, %v338
      %v355 = vpack.c.b16 %v339, %v339
      %v356 = vpack.c.b16 %v340, %v340
      %373 = vst [vmem:[%s213] sm:$0xf] %v341
      %374 = vst [vmem:[%s213 + $0x4] sm:$0xf] %v342
      %375 = vst [vmem:[%s213 + $0x8] sm:$0xf] %v343
      %376 = vst [vmem:[%s213 + $0xc] sm:$0xf] %v344
      %377 = vst [vmem:[%s213 + $0x10] sm:$0xf] %v345
      %378 = vst [vmem:[%s213 + $0x14] sm:$0xf] %v346
      %379 = vst [vmem:[%s213 + $0x18] sm:$0xf] %v347
      %380 = vst [vmem:[%s213 + $0x1c] sm:$0xf] %v348
      %381 = vst [vmem:[%s213 + $0x20] sm:$0xf] %v349
      %382 = vst [vmem:[%s213 + $0x24] sm:$0xf] %v350
      %383 = vst [vmem:[%s213 + $0x28] sm:$0xf] %v351
      %384 = vst [vmem:[%s213 + $0x2c] sm:$0xf] %v352
      %385 = vst [vmem:[%s213 + $0x30] sm:$0xf] %v353
      %386 = vst [vmem:[%s213 + $0x34] sm:$0xf] %v354
      %387 = vst [vmem:[%s213 + $0x38] sm:$0xf] %v355
      %388 = vst [vmem:[%s213 + $0x3c] sm:$0xf] %v356
      %s389 = smul.u32 8, %s19
      %p390 = scmp.lt.s32.totalorder %s18, 1
      %s391 = scalar_select %p390, %s18, 1
      %p392 = scmp.lt.s32.totalorder %s389, 15
      %s393 = scalar_select %p392, %s389, 15
      %s394 = smul.addr %s393, 2
      %s395 = smul.addr %s391, 32
      %s396 = sadd.s32 %s394, %s395
      %s397 = smul.addr %s396, 4
      %s398 = scalar_lea.vmem %s3, %s397
      // Predicated region
      $region33: #{_lambda_.5} parent=31 // pred_check
        %p399 = pneg %p116
      $region34: #{_lambda_.5} parent=31 // pred_check_branch
        %401 = sbr.rel (%p399) target = $region36
      $region35: #{_lambda_.5} parent=31 // pred_region
        %s402 = smul.u32 8, %s19
      $region36: #{_lambda_.5} parent=31 // pred_fallthru
        _
    $region32: #{_lambda_.5} parent=5 // pred_fallthru
      _
    %p403 = scmp.le.s32.totalorder 2, %s9
    // Predicated region
    $region37: #{_lambda_.5} parent=5 // pred_check
      %p404 = pneg %p403
    $region38: #{_lambda_.5} parent=5 // pred_check_branch
      %406 = sbr.rel (%p404) target = $region40
    $region39: #{_lambda_.5} parent=5 // pred_region
      %s407 = ssub.s32 %s9, 2
      // Predicated region
      $region41: #{_lambda_.5} parent=39 // pred_check
        %p408 = pneg %p122
      $region42: #{_lambda_.5} parent=39 // pred_check_branch
        %410 = sbr.rel (%p408) target = $region44
      $region43: #{_lambda_.5} parent=39 // pred_region
        %s411 = smul.u32 8, %s21
        %p412 = scmp.lt.s32.totalorder %s20, 1
        %s413 = scalar_select %p412, %s20, 1
        %p414 = scmp.lt.s32.totalorder %s411, 15
        %s415 = scalar_select %p414, %s411, 15
        %s416 = smul.addr %s415, 2
        %s417 = smul.addr %s413, 32
        %s418 = sadd.s32 %s416, %s417
        %s419 = smul.addr %s418, 4
        %s420 = scalar_lea.vmem %s3, %s419
      $region44: #{_lambda_.5} parent=39 // pred_fallthru
        _
    $region40: #{_lambda_.5} parent=5 // pred_fallthru
      _
  $region6: #{_lambda_.5} parent=0 // loop_footer
    %s13 = sadd.s32 1, %s9
  $region7: #{_lambda_.5} parent=0 // loop_footer_branch
    %8 = sbr.rel target = $region3
  $region8: #{_lambda_.5} parent=0 // loop_exit
    _

// kernel: _lambda_.7
$region0: #{_lambda_.7}
  #allocation0 [shape = 'u32[]', space=smem, size = 0x4, offset = 0x4, fixed_abs, tag = 'smem constant byte address 0x4 - core index']
  #allocation1 [shape = 'u32[144,128]{1,0:T(1,128)}', space=vmem, size = 0x12000, scoped, tag = 'internal scratch']
  %s0 = inlined_call_operand.vmem [shape: f32[2,16,16,128], index: 0, kind: input, shape index: {}]
  %s1 = inlined_call_operand.vmem [shape: f32[1,128], index: 1, kind: input, shape index: {}]
  %s2 = inlined_call_operand.vmem [shape: f32[1,128], index: 2, kind: input, shape index: {}]
  %s3 = inlined_call_operand.vmem [shape: f32[2,16,16,128], index: 3, kind: output, shape index: {}]
  %s4 = sld [smem:[#allocation0]]
  $region45: #{_lambda_.7} parent=0
    _
  %s6 = ssub.s32 1, %s4
  %s7 = scalar_select 0, %s6, %s4
  loop: start=0, step=1, limit=6
  $region2: #{_lambda_.7} parent=0 // loop_pre_header
    _
  $region3: #{_lambda_.7} parent=0 // loop_header
    %s9 = sphi 0, %s13
    %p10 = scmp.ge.s32.totalorder %s9, 6
    %s16 = sphi 0, %s28
    %s17 = sphi 0, %s24
    %s18 = sphi 0, %s16
    %s19 = sphi 0, %s17
    %s20 = sphi 0, %s18
    %s21 = sphi 0, %s19
    %s33 = sphi 0, %s35
    %s36 = sphi 0, %s33
    %s37 = sphi 0, %s36
    %s53 = sphi 0, %s37
    %s57 = sphi 0, %s57
    %s59 = sphi 0, %s57
    %s60 = sphi 0, %s59
    %s74 = sphi 0, %s60
    %s78 = sphi 0, %s78
    %s80 = sphi 0, %s78
    %s81 = sphi 0, %s80
    %s95 = sphi 0, %s81
    %s103 = sphi 0, %s105
    %s106 = sphi 0, %s103
    %s107 = sphi 0, %s106
    %s123 = sphi 0, %s107
  $region4: #{_lambda_.7} parent=0 // loop_header_branch
    %12 = sbr.rel (%p10) target = $region8
  $region5: #{_lambda_.7} parent=0 // loop_body
    %s14 = ssub.s32 %s9, 1
    %s15 = ssub.s32 %s9, 2
    %s22 = sadd.s32 1, %s17
    %p23 = scmp.ge.s32.totalorder %s22, 2
    %s24 = scalar_select %p23, 0, %s22
    %s25 = sadd.s32 1, %s16
    %s26 = scalar_select %p23, %s25, %s16
    %p27 = scmp.ge.s32.totalorder %s26, 2
    %s28 = scalar_select %p27, 0, %s26
    %s29 = ssub.s32 %s16, %s28
    %s30 = ssub.s32 %s17, %s24
    %s31 = sor.u32 %s29, %s30
    %p32 = scmp.eq.s32.totalorder %s31, 0
    %s34 = sadd.s32 %s33, 1
    %s35 = scalar_select %p32, %s33, %s34
    %p38 = pneg %p32
    %p39 = scmp.eq.s32.totalorder %s9, 3
    %p40 = por %p38, %p39
    %p41 = scmp.ne.s32.totalorder %s33, %s36
    %p42 = scmp.eq.s32.totalorder %s9, 0
    %p43 = por %p41, %p42
    %p44 = scmp.ne.s32.totalorder %s33, %s36
    %p45 = scmp.eq.s32.totalorder %s14, 3
    %p46 = por %p44, %p45
    %p47 = scmp.ne.s32.totalorder %s36, %s37
    %p48 = scmp.eq.s32.totalorder %s14, 0
    %p49 = por %p47, %p48
    %p50 = scmp.ne.s32.totalorder %s36, %s37
    %p51 = scmp.eq.s32.totalorder %s15, 3
    %p52 = por %p50, %p51
    %p54 = scmp.ne.s32.totalorder %s37, %s53
    %p55 = scmp.eq.s32.totalorder %s15, 0
    %p56 = por %p54, %p55
    %s58 = sadd.s32 %s57, 1
    %p61 = scmp.eq.s32.totalorder %s9, 3
    %p62 = scmp.ne.s32.totalorder %s57, %s59
    %p63 = scmp.eq.s32.totalorder %s9, 0
    %p64 = por %p62, %p63
    %p65 = scmp.ne.s32.totalorder %s57, %s59
    %p66 = scmp.eq.s32.totalorder %s14, 3
    %p67 = por %p65, %p66
    %p68 = scmp.ne.s32.totalorder %s59, %s60
    %p69 = scmp.eq.s32.totalorder %s14, 0
    %p70 = por %p68, %p69
    %p71 = scmp.ne.s32.totalorder %s59, %s60
    %p72 = scmp.eq.s32.totalorder %s15, 3
    %p73 = por %p71, %p72
    %p75 = scmp.ne.s32.totalorder %s60, %s74
    %p76 = scmp.eq.s32.totalorder %s15, 0
    %p77 = por %p75, %p76
    %s79 = sadd.s32 %s78, 1
    %p82 = scmp.eq.s32.totalorder %s9, 3
    %p83 = scmp.ne.s32.totalorder %s78, %s80
    %p84 = scmp.eq.s32.totalorder %s9, 0
    %p85 = por %p83, %p84
    %p86 = scmp.ne.s32.totalorder %s78, %s80
    %p87 = scmp.eq.s32.totalorder %s14, 3
    %p88 = por %p86, %p87
    %p89 = scmp.ne.s32.totalorder %s80, %s81
    %p90 = scmp.eq.s32.totalorder %s14, 0
    %p91 = por %p89, %p90
    %p92 = scmp.ne.s32.totalorder %s80, %s81
    %p93 = scmp.eq.s32.totalorder %s15, 3
    %p94 = por %p92, %p93
    %p96 = scmp.ne.s32.totalorder %s81, %s95
    %p97 = scmp.eq.s32.totalorder %s15, 0
    %p98 = por %p96, %p97
    %s99 = ssub.s32 %s16, %s28
    %s100 = ssub.s32 %s17, %s24
    %s101 = sor.u32 %s99, %s100
    %p102 = scmp.eq.s32.totalorder %s101, 0
    %s104 = sadd.s32 %s103, 1
    %s105 = scalar_select %p102, %s103, %s104
    %p108 = pneg %p102
    %p109 = scmp.eq.s32.totalorder %s9, 3
    %p110 = por %p108, %p109
    %p111 = scmp.ne.s32.totalorder %s103, %s106
    %p112 = scmp.eq.s32.totalorder %s9, 0
    %p113 = por %p111, %p112
    %p114 = scmp.ne.s32.totalorder %s103, %s106
    %p115 = scmp.eq.s32.totalorder %s14, 3
    %p116 = por %p114, %p115
    %p117 = scmp.ne.s32.totalorder %s106, %s107
    %p118 = scmp.eq.s32.totalorder %s14, 0
    %p119 = por %p117, %p118
    %p120 = scmp.ne.s32.totalorder %s106, %s107
    %p121 = scmp.eq.s32.totalorder %s15, 3
    %p122 = por %p120, %p121
    %p124 = scmp.ne.s32.totalorder %s107, %s123
    %p125 = scmp.eq.s32.totalorder %s15, 0
    %p126 = por %p124, %p125
    %p127 = scmp.le.s32.totalorder 1, %s9
    %p128 = scmp.lt.s32.totalorder %s9, 5
    %p129 = pnand %p127, %p128
    %p130 = pneg %p129
    // Predicated region
    $region9: #{_lambda_.7} parent=5 // pred_check
      _
    $region10: #{_lambda_.7} parent=5 // pred_check_branch
      %132 = sbr.rel (%p129) target = $region12
    $region11: #{_lambda_.7} parent=5 // pred_region
      %s133 = ssub.s32 %s9, 1
      // Predicated region
      $region13: #{_lambda_.7} parent=11 // pred_check
        %p134 = pneg %p70
      $region14: #{_lambda_.7} parent=11 // pred_check_branch
        %136 = sbr.rel (%p134) target = $region16
      $region15: #{_lambda_.7} parent=11 // pred_region
        _
      $region16: #{_lambda_.7} parent=11 // pred_fallthru
        _
      // Predicated region
      $region17: #{_lambda_.7} parent=11 // pred_check
        %p137 = pneg %p91
      $region18: #{_lambda_.7} parent=11 // pred_check_branch
        %139 = sbr.rel (%p137) target = $region20
      $region19: #{_lambda_.7} parent=11 // pred_region
        _
      $region20: #{_lambda_.7} parent=11 // pred_fallthru
        _
    $region12: #{_lambda_.7} parent=5 // pred_fallthru
      _
    %p140 = scmp.lt.s32.totalorder %s9, 4
    // Predicated region
    $region21: #{_lambda_.7} parent=5 // pred_check
      %p141 = pneg %p140
    $region22: #{_lambda_.7} parent=5 // pred_check_branch
      %143 = sbr.rel (%p141) target = $region24
    $region23: #{_lambda_.7} parent=5 // pred_region
      // Predicated region
      $region25: #{_lambda_.7} parent=23 // pred_check
        %p144 = pneg %p43
      $region26: #{_lambda_.7} parent=23 // pred_check_branch
        %146 = sbr.rel (%p144) target = $region28
      $region27: #{_lambda_.7} parent=23 // pred_region
        %s147 = smul.u32 8, %s17
        %p148 = scmp.lt.s32.totalorder %s16, 1
        %s149 = scalar_select %p148, %s16, 1
        %p150 = scmp.lt.s32.totalorder %s147, 15
        %s151 = scalar_select %p150, %s147, 15
        %s152 = smul.addr %s151, 2
        %s153 = smul.addr %s149, 32
        %s154 = sadd.s32 %s152, %s153
        %s155 = smul.addr %s154, 8
        %s156 = scalar_lea.vmem %s0, %s155
        %s157 = smul.u32 8, %s17
      $region28: #{_lambda_.7} parent=23 // pred_fallthru
        _
    $region24: #{_lambda_.7} parent=5 // pred_fallthru
      _
    %p158 = scmp.le.s32.totalorder 1, %s9
    %p159 = scmp.lt.s32.totalorder %s9, 5
    %p160 = pnand %p158, %p159
    %p161 = pneg %p160
    // Predicated region
    $region29: #{_lambda_.7} parent=5 // pred_check
      _
    $region30: #{_lambda_.7} parent=5 // pred_check_branch
      %163 = sbr.rel (%p160) target = $region32
    $region31: #{_lambda_.7} parent=5 // pred_region
      %s164 = ssub.s32 %s9, 1
      %s165 = smul.u32 8, %s19
      %p166 = scmp.lt.s32.totalorder %s18, 1
      %s167 = scalar_select %p166, %s18, 1
      %p168 = scmp.lt.s32.totalorder %s165, 15
      %s169 = scalar_select %p168, %s165, 15
      %s170 = smul.addr %s169, 2
      %s171 = smul.addr %s167, 32
      %s172 = sadd.s32 %s170, %s171
      %s173 = smul.addr %s172, 8
      %s174 = scalar_lea.vmem %s0, %s173
      %p175 = pneg %p49
      %p176 = pneg %p46
      %p177 = pneg %p70
      %p178 = pneg %p67
      %p179 = pneg %p91
      %p180 = pneg %p88
      %p181 = pneg %p119
      %p182 = pneg %p116
      %s183 = smul.u32 8, %s19
      %p184 = scmp.lt.s32.totalorder %s18, 1
      %s185 = scalar_select %p184, %s18, 1
      %p186 = scmp.lt.s32.totalorder %s183, 15
      %s187 = scalar_select %p186, %s183, 15
      %s188 = smul.addr %s187, 2
      %s189 = smul.addr %s185, 32
      %s190 = sadd.s32 %s188, %s189
      %s191 = smul.addr %s190, 8
      %s192 = scalar_lea.vmem %s3, %s191
      %s193 = smul.u32 8, %s19
      %p194 = scmp.lt.s32.totalorder %s18, 1
      %s195 = scalar_select %p194, %s18, 1
      %p196 = scmp.lt.s32.totalorder %s193, 15
      %s197 = scalar_select %p196, %s193, 15
      %s198 = smul.addr %s197, 2
      %s199 = smul.addr %s195, 32
      %s200 = sadd.s32 %s198, %s199
      %s201 = smul.addr %s200, 8
      %s202 = scalar_lea.vmem %s0, %s201
      %s203 = smul.u32 8, %s19
      %s204 = smul.u32 8, %s19
      %p205 = scmp.lt.s32.totalorder %s18, 1
      %s206 = scalar_select %p205, %s18, 1
      %p207 = scmp.lt.s32.totalorder %s204, 15
      %s208 = scalar_select %p207, %s204, 15
      %s209 = smul.addr %s208, 2
      %s210 = smul.addr %s206, 32
      %s211 = sadd.s32 %s209, %s210
      %s212 = smul.addr %s211, 8
      %s213 = scalar_lea.vmem %s3, %s212
      %s214 = smul.u32 8, %s19
      %v215 = vld [vmem:[%s202] sm:$0xff]
      %v216 = vld [vmem:[%s202 + $0x8] sm:$0xff]
      %v217 = vld [vmem:[%s202 + $0x10] sm:$0xff]
      %v218 = vld [vmem:[%s202 + $0x18] sm:$0xff]
      %v219 = vld [vmem:[%s202 + $0x20] sm:$0xff]
      %v220 = vld [vmem:[%s202 + $0x28] sm:$0xff]
      %v221 = vld [vmem:[%s202 + $0x30] sm:$0xff]
      %v222 = vld [vmem:[%s202 + $0x38] sm:$0xff]
      %v223 = vld [vmem:[%s202 + $0x40] sm:$0xff]
      %v224 = vld [vmem:[%s202 + $0x48] sm:$0xff]
      %v225 = vld [vmem:[%s202 + $0x50] sm:$0xff]
      %v226 = vld [vmem:[%s202 + $0x58] sm:$0xff]
      %v227 = vld [vmem:[%s202 + $0x60] sm:$0xff]
      %v228 = vld [vmem:[%s202 + $0x68] sm:$0xff]
      %v229 = vld [vmem:[%s202 + $0x70] sm:$0xff]
      %v230 = vld [vmem:[%s202 + $0x78] sm:$0xff]
      %v231 = vld [vmem:[%s1] sm:$0x1]
      %v232 = vld [vmem:[%s2] sm:$0x1]
      %v234 = vlaneseq
      %v235 = vshrl.u32 %v234, 7
      %v236 = vsub.s32 0, %v235
      %v237 = vrot.slane %v231, %v236
      %v239 = vmul.f32 %v215, %v237
      %v240 = vmul.f32 %v216, %v237
      %v241 = vmul.f32 %v217, %v237
      %v242 = vmul.f32 %v218, %v237
      %v243 = vmul.f32 %v219, %v237
      %v244 = vmul.f32 %v220, %v237
      %v245 = vmul.f32 %v221, %v237
      %v246 = vmul.f32 %v222, %v237
      %v247 = vmul.f32 %v223, %v237
      %v248 = vmul.f32 %v224, %v237
      %v249 = vmul.f32 %v225, %v237
      %v250 = vmul.f32 %v226, %v237
      %v251 = vmul.f32 %v227, %v237
      %v252 = vmul.f32 %v228, %v237
      %v253 = vmul.f32 %v229, %v237
      %v254 = vmul.f32 %v230, %v237
      %v256 = vlaneseq
      %v257 = vshrl.u32 %v256, 7
      %v258 = vsub.s32 0, %v257
      %v259 = vrot.slane %v232, %v258
      %v261 = vadd.f32 %v239, %v259
      %v262 = vadd.f32 %v240, %v259
      %v263 = vadd.f32 %v241, %v259
      %v264 = vadd.f32 %v242, %v259
      %v265 = vadd.f32 %v243, %v259
      %v266 = vadd.f32 %v244, %v259
      %v267 = vadd.f32 %v245, %v259
      %v268 = vadd.f32 %v246, %v259
      %v269 = vadd.f32 %v247, %v259
      %v270 = vadd.f32 %v248, %v259
      %v271 = vadd.f32 %v249, %v259
      %v272 = vadd.f32 %v250, %v259
      %v273 = vadd.f32 %v251, %v259
      %v274 = vadd.f32 %v252, %v259
      %v275 = vadd.f32 %v253, %v259
      %v276 = vadd.f32 %v254, %v259
      %v277 = vmax.f32 %v261, 0.0
      %v278 = vmax.f32 %v262, 0.0
      %v279 = vmax.f32 %v263, 0.0
      %v280 = vmax.f32 %v264, 0.0
      %v281 = vmax.f32 %v265, 0.0
      %v282 = vmax.f32 %v266, 0.0
      %v283 = vmax.f32 %v267, 0.0
      %v284 = vmax.f32 %v268, 0.0
      %v285 = vmax.f32 %v269, 0.0
      %v286 = vmax.f32 %v270, 0.0
      %v287 = vmax.f32 %v271, 0.0
      %v288 = vmax.f32 %v272, 0.0
      %v289 = vmax.f32 %v273, 0.0
      %v290 = vmax.f32 %v274, 0.0
      %v291 = vmax.f32 %v275, 0.0
      %v292 = vmax.f32 %v276, 0.0
      %293 = vst [vmem:[%s213] sm:$0xff] %v277
      %294 = vst [vmem:[%s213 + $0x8] sm:$0xff] %v278
      %295 = vst [vmem:[%s213 + $0x10] sm:$0xff] %v279
      %296 = vst [vmem:[%s213 + $0x18] sm:$0xff] %v280
      %297 = vst [vmem:[%s213 + $0x20] sm:$0xff] %v281
      %298 = vst [vmem:[%s213 + $0x28] sm:$0xff] %v282
      %299 = vst [vmem:[%s213 + $0x30] sm:$0xff] %v283
      %300 = vst [vmem:[%s213 + $0x38] sm:$0xff] %v284
      %301 = vst [vmem:[%s213 + $0x40] sm:$0xff] %v285
      %302 = vst [vmem:[%s213 + $0x48] sm:$0xff] %v286
      %303 = vst [vmem:[%s213 + $0x50] sm:$0xff] %v287
      %304 = vst [vmem:[%s213 + $0x58] sm:$0xff] %v288
      %305 = vst [vmem:[%s213 + $0x60] sm:$0xff] %v289
      %306 = vst [vmem:[%s213 + $0x68] sm:$0xff] %v290
      %307 = vst [vmem:[%s213 + $0x70] sm:$0xff] %v291
      %308 = vst [vmem:[%s213 + $0x78] sm:$0xff] %v292
      %s309 = smul.u32 8, %s19
      %p310 = scmp.lt.s32.totalorder %s18, 1
      %s311 = scalar_select %p310, %s18, 1
      %p312 = scmp.lt.s32.totalorder %s309, 15
      %s313 = scalar_select %p312, %s309, 15
      %s314 = smul.addr %s313, 2
      %s315 = smul.addr %s311, 32
      %s316 = sadd.s32 %s314, %s315
      %s317 = smul.addr %s316, 8
      %s318 = scalar_lea.vmem %s3, %s317
      // Predicated region
      $region33: #{_lambda_.7} parent=31 // pred_check
        %p319 = pneg %p116
      $region34: #{_lambda_.7} parent=31 // pred_check_branch
        %321 = sbr.rel (%p319) target = $region36
      $region35: #{_lambda_.7} parent=31 // pred_region
        %s322 = smul.u32 8, %s19
      $region36: #{_lambda_.7} parent=31 // pred_fallthru
        _
    $region32: #{_lambda_.7} parent=5 // pred_fallthru
      _
    %p323 = scmp.le.s32.totalorder 2, %s9
    // Predicated region
    $region37: #{_lambda_.7} parent=5 // pred_check
      %p324 = pneg %p323
    $region38: #{_lambda_.7} parent=5 // pred_check_branch
      %326 = sbr.rel (%p324) target = $region40
    $region39: #{_lambda_.7} parent=5 // pred_region
      %s327 = ssub.s32 %s9, 2
      // Predicated region
      $region41: #{_lambda_.7} parent=39 // pred_check
        %p328 = pneg %p122
      $region42: #{_lambda_.7} parent=39 // pred_check_branch
        %330 = sbr.rel (%p328) target = $region44
      $region43: #{_lambda_.7} parent=39 // pred_region
        %s331 = smul.u32 8, %s21
        %p332 = scmp.lt.s32.totalorder %s20, 1
        %s333 = scalar_select %p332, %s20, 1
        %p334 = scmp.lt.s32.totalorder %s331, 15
        %s335 = scalar_select %p334, %s331, 15
        %s336 = smul.addr %s335, 2
        %s337 = smul.addr %s333, 32
        %s338 = sadd.s32 %s336, %s337
        %s339 = smul.addr %s338, 8
        %s340 = scalar_lea.vmem %s3, %s339
      $region44: #{_lambda_.7} parent=39 // pred_fallthru
        _
    $region40: #{_lambda_.7} parent=5 // pred_fallthru
      _
  $region6: #{_lambda_.7} parent=0 // loop_footer
    %s13 = sadd.s32 1, %s9
  $region7: #{_lambda_.7} parent=0 // loop_footer_branch
    %8 = sbr.rel target = $region3
  $region8: #{_lambda_.7} parent=0 // loop_exit
    _

// kernel: _lambda_.6
$region0: #{_lambda_.6}
  #allocation0 [shape = 'u32[]', space=smem, size = 0x4, offset = 0x4, fixed_abs, tag = 'smem constant byte address 0x4 - core index']
  #allocation1 [shape = 'u32[144,128]{1,0:T(1,128)}', space=vmem, size = 0x12000, scoped, tag = 'internal scratch']
  #allocation2 [shape = 'f32[192,384]{1,0:T(8,128)}', space=vmem, size = 0x48000, scoped, tag = 'scratch operand']
  %s0 = inlined_call_operand.vmem [shape: bf16[2,2,10,24,128], index: 0, kind: input, shape index: {}]
  %s1 = inlined_call_operand.vmem [shape: bf16[3,128,384], index: 1, kind: input, shape index: {}]
  %s2 = inlined_call_operand.vmem [shape: f32[2,16,16,128], index: 2, kind: output, shape index: {0}]
  %s3 = inlined_call_operand.vmem [shape: f32[2,2,1,128], index: 3, kind: output, shape index: {1}]
  %s4 = inlined_call_operand.vmem [shape: f32[2,2,1,128], index: 4, kind: output, shape index: {2}]
  %5 = xla_tuple %s2, %s3, %s4
  %s6 = sld [smem:[#allocation0]]
  $region57: #{_lambda_.6} parent=0
    _
  %s8 = ssub.s32 1, %s6
  %s9 = scalar_select 0, %s8, %s6
  loop: start=0, step=1, limit=6
  $region2: #{_lambda_.6} parent=0 // loop_pre_header
    _
  $region3: #{_lambda_.6} parent=0 // loop_header
    %s11 = sphi 0, %s15
    %p12 = scmp.ge.s32.totalorder %s11, 6
    %s18 = sphi 0, %s30
    %s19 = sphi 0, %s26
    %s20 = sphi 0, %s18
    %s21 = sphi 0, %s19
    %s22 = sphi 0, %s20
    %s23 = sphi 0, %s21
    %s35 = sphi 0, %s37
    %s38 = sphi 0, %s35
    %s39 = sphi 0, %s38
    %s55 = sphi 0, %s39
    %s59 = sphi 0, %s59
    %s61 = sphi 0, %s59
    %s62 = sphi 0, %s61
    %s76 = sphi 0, %s62
    %s84 = sphi 0, %s86
    %s87 = sphi 0, %s84
    %s88 = sphi 0, %s87
    %s104 = sphi 0, %s88
    %s112 = sphi 0, %s114
    %s115 = sphi 0, %s112
    %s116 = sphi 0, %s115
    %s132 = sphi 0, %s116
    %s140 = sphi 0, %s142
    %s143 = sphi 0, %s140
    %s144 = sphi 0, %s143
    %s160 = sphi 0, %s144
  $region4: #{_lambda_.6} parent=0 // loop_header_branch
    %14 = sbr.rel (%p12) target = $region8
  $region5: #{_lambda_.6} parent=0 // loop_body
    %s16 = ssub.s32 %s11, 1
    %s17 = ssub.s32 %s11, 2
    %s24 = sadd.s32 1, %s19
    %p25 = scmp.ge.s32.totalorder %s24, 2
    %s26 = scalar_select %p25, 0, %s24
    %s27 = sadd.s32 1, %s18
    %s28 = scalar_select %p25, %s27, %s18
    %p29 = scmp.ge.s32.totalorder %s28, 2
    %s30 = scalar_select %p29, 0, %s28
    %s31 = ssub.s32 %s18, %s30
    %s32 = ssub.s32 %s19, %s26
    %s33 = sor.u32 %s31, %s32
    %p34 = scmp.eq.s32.totalorder %s33, 0
    %s36 = sadd.s32 %s35, 1
    %s37 = scalar_select %p34, %s35, %s36
    %p40 = pneg %p34
    %p41 = scmp.eq.s32.totalorder %s11, 3
    %p42 = por %p40, %p41
    %p43 = scmp.ne.s32.totalorder %s35, %s38
    %p44 = scmp.eq.s32.totalorder %s11, 0
    %p45 = por %p43, %p44
    %p46 = scmp.ne.s32.totalorder %s35, %s38
    %p47 = scmp.eq.s32.totalorder %s16, 3
    %p48 = por %p46, %p47
    %p49 = scmp.ne.s32.totalorder %s38, %s39
    %p50 = scmp.eq.s32.totalorder %s16, 0
    %p51 = por %p49, %p50
    %p52 = scmp.ne.s32.totalorder %s38, %s39
    %p53 = scmp.eq.s32.totalorder %s17, 3
    %p54 = por %p52, %p53
    %p56 = scmp.ne.s32.totalorder %s39, %s55
    %p57 = scmp.eq.s32.totalorder %s17, 0
    %p58 = por %p56, %p57
    %s60 = sadd.s32 %s59, 1
    %p63 = scmp.eq.s32.totalorder %s11, 3
    %p64 = scmp.ne.s32.totalorder %s59, %s61
    %p65 = scmp.eq.s32.totalorder %s11, 0
    %p66 = por %p64, %p65
    %p67 = scmp.ne.s32.totalorder %s59, %s61
    %p68 = scmp.eq.s32.totalorder %s16, 3
    %p69 = por %p67, %p68
    %p70 = scmp.ne.s32.totalorder %s61, %s62
    %p71 = scmp.eq.s32.totalorder %s16, 0
    %p72 = por %p70, %p71
    %p73 = scmp.ne.s32.totalorder %s61, %s62
    %p74 = scmp.eq.s32.totalorder %s17, 3
    %p75 = por %p73, %p74
    %p77 = scmp.ne.s32.totalorder %s62, %s76
    %p78 = scmp.eq.s32.totalorder %s17, 0
    %p79 = por %p77, %p78
    %s80 = ssub.s32 %s18, %s30
    %s81 = ssub.s32 %s19, %s26
    %s82 = sor.u32 %s80, %s81
    %p83 = scmp.eq.s32.totalorder %s82, 0
    %s85 = sadd.s32 %s84, 1
    %s86 = scalar_select %p83, %s84, %s85
    %p89 = pneg %p83
    %p90 = scmp.eq.s32.totalorder %s11, 3
    %p91 = por %p89, %p90
    %p92 = scmp.ne.s32.totalorder %s84, %s87
    %p93 = scmp.eq.s32.totalorder %s11, 0
    %p94 = por %p92, %p93
    %p95 = scmp.ne.s32.totalorder %s84, %s87
    %p96 = scmp.eq.s32.totalorder %s16, 3
    %p97 = por %p95, %p96
    %p98 = scmp.ne.s32.totalorder %s87, %s88
    %p99 = scmp.eq.s32.totalorder %s16, 0
    %p100 = por %p98, %p99
    %p101 = scmp.ne.s32.totalorder %s87, %s88
    %p102 = scmp.eq.s32.totalorder %s17, 3
    %p103 = por %p101, %p102
    %p105 = scmp.ne.s32.totalorder %s88, %s104
    %p106 = scmp.eq.s32.totalorder %s17, 0
    %p107 = por %p105, %p106
    %s108 = ssub.s32 %s18, %s30
    %s109 = ssub.s32 %s19, %s26
    %s110 = sor.u32 %s108, %s109
    %p111 = scmp.eq.s32.totalorder %s110, 0
    %s113 = sadd.s32 %s112, 1
    %s114 = scalar_select %p111, %s112, %s113
    %p117 = pneg %p111
    %p118 = scmp.eq.s32.totalorder %s11, 3
    %p119 = por %p117, %p118
    %p120 = scmp.ne.s32.totalorder %s112, %s115
    %p121 = scmp.eq.s32.totalorder %s11, 0
    %p122 = por %p120, %p121
    %p123 = scmp.ne.s32.totalorder %s112, %s115
    %p124 = scmp.eq.s32.totalorder %s16, 3
    %p125 = por %p123, %p124
    %p126 = scmp.ne.s32.totalorder %s115, %s116
    %p127 = scmp.eq.s32.totalorder %s16, 0
    %p128 = por %p126, %p127
    %p129 = scmp.ne.s32.totalorder %s115, %s116
    %p130 = scmp.eq.s32.totalorder %s17, 3
    %p131 = por %p129, %p130
    %p133 = scmp.ne.s32.totalorder %s116, %s132
    %p134 = scmp.eq.s32.totalorder %s17, 0
    %p135 = por %p133, %p134
    %s136 = ssub.s32 %s18, %s30
    %s137 = ssub.s32 %s19, %s26
    %s138 = sor.u32 %s136, %s137
    %p139 = scmp.eq.s32.totalorder %s138, 0
    %s141 = sadd.s32 %s140, 1
    %s142 = scalar_select %p139, %s140, %s141
    %p145 = pneg %p139
    %p146 = scmp.eq.s32.totalorder %s11, 3
    %p147 = por %p145, %p146
    %p148 = scmp.ne.s32.totalorder %s140, %s143
    %p149 = scmp.eq.s32.totalorder %s11, 0
    %p150 = por %p148, %p149
    %p151 = scmp.ne.s32.totalorder %s140, %s143
    %p152 = scmp.eq.s32.totalorder %s16, 3
    %p153 = por %p151, %p152
    %p154 = scmp.ne.s32.totalorder %s143, %s144
    %p155 = scmp.eq.s32.totalorder %s16, 0
    %p156 = por %p154, %p155
    %p157 = scmp.ne.s32.totalorder %s143, %s144
    %p158 = scmp.eq.s32.totalorder %s17, 3
    %p159 = por %p157, %p158
    %p161 = scmp.ne.s32.totalorder %s144, %s160
    %p162 = scmp.eq.s32.totalorder %s17, 0
    %p163 = por %p161, %p162
    %p164 = scmp.le.s32.totalorder 1, %s11
    %p165 = scmp.lt.s32.totalorder %s11, 5
    %p166 = pnand %p164, %p165
    %p167 = pneg %p166
    // Predicated region
    $region9: #{_lambda_.6} parent=5 // pred_check
      _
    $region10: #{_lambda_.6} parent=5 // pred_check_branch
      %169 = sbr.rel (%p166) target = $region12
    $region11: #{_lambda_.6} parent=5 // pred_region
      %s170 = ssub.s32 %s11, 1
      // Predicated region
      $region13: #{_lambda_.6} parent=11 // pred_check
        %p171 = pneg %p72
      $region14: #{_lambda_.6} parent=11 // pred_check_branch
        %173 = sbr.rel (%p171) target = $region16
      $region15: #{_lambda_.6} parent=11 // pred_region
        _
      $region16: #{_lambda_.6} parent=11 // pred_fallthru
        _
    $region12: #{_lambda_.6} parent=5 // pred_fallthru
      _
    %p174 = scmp.lt.s32.totalorder %s11, 4
    // Predicated region
    $region17: #{_lambda_.6} parent=5 // pred_check
      %p175 = pneg %p174
    $region18: #{_lambda_.6} parent=5 // pred_check_branch
      %177 = sbr.rel (%p175) target = $region20
    $region19: #{_lambda_.6} parent=5 // pred_region
      // Predicated region
      $region21: #{_lambda_.6} parent=19 // pred_check
        %p178 = pneg %p45
      $region22: #{_lambda_.6} parent=19 // pred_check_branch
        %180 = sbr.rel (%p178) target = $region24
      $region23: #{_lambda_.6} parent=19 // pred_region
        %p181 = scmp.lt.s32.totalorder %s18, 1
        %s182 = scalar_select %p181, %s18, 1
        %p183 = scmp.lt.s32.totalorder %s19, 1
        %s184 = scalar_select %p183, %s19, 1
        %s185 = smul.addr %s184, 30
        %s186 = smul.addr %s182, 60
        %s187 = sadd.s32 %s185, %s186
        %s188 = smul.addr %s187, 4
        %s189 = scalar_lea.vmem %s0, %s188
      $region24: #{_lambda_.6} parent=19 // pred_fallthru
        _
    $region20: #{_lambda_.6} parent=5 // pred_fallthru
      _
    %p190 = scmp.le.s32.totalorder 1, %s11
    %p191 = scmp.lt.s32.totalorder %s11, 5
    %p192 = pnand %p190, %p191
    %p193 = pneg %p192
    // Predicated region
    $region25: #{_lambda_.6} parent=5 // pred_check
      _
    $region26: #{_lambda_.6} parent=5 // pred_check_branch
      %195 = sbr.rel (%p192) target = $region28
    $region27: #{_lambda_.6} parent=5 // pred_region
      %s196 = ssub.s32 %s11, 1
      %p197 = scmp.lt.s32.totalorder %s20, 1
      %s198 = scalar_select %p197, %s20, 1
      %p199 = scmp.lt.s32.totalorder %s21, 1
      %s200 = scalar_select %p199, %s21, 1
      %s201 = smul.addr %s200, 30
      %s202 = smul.addr %s198, 60
      %s203 = sadd.s32 %s201, %s202
      %s204 = smul.addr %s203, 4
      %s205 = scalar_lea.vmem %s0, %s204
      %p206 = pneg %p51
      %p207 = pneg %p48
      %p208 = pneg %p72
      %p209 = pneg %p69
      %p210 = pneg %p100
      %p211 = pneg %p97
      %s212 = smul.u32 8, %s21
      %p213 = scmp.lt.s32.totalorder %s20, 1
      %s214 = scalar_select %p213, %s20, 1
      %p215 = scmp.lt.s32.totalorder %s212, 15
      %s216 = scalar_select %p215, %s212, 15
      %s217 = smul.addr %s216, 2
      %s218 = smul.addr %s214, 32
      %s219 = sadd.s32 %s217, %s218
      %s220 = smul.addr %s219, 8
      %s221 = scalar_lea.vmem %s2, %s220
      %p222 = pneg %p128
      %p223 = pneg %p125
      %p224 = scmp.lt.s32.totalorder %s20, 1
      %s225 = scalar_select %p224, %s20, 1
      %p226 = scmp.lt.s32.totalorder %s21, 1
      %s227 = scalar_select %p226, %s21, 1
      %s228 = smul.addr %s225, 2
      %s229 = sadd.s32 %s227, %s228
      %s230 = scalar_lea.vmem %s3, %s229
      %p231 = pneg %p156
      %p232 = pneg %p153
      %p233 = scmp.lt.s32.totalorder %s20, 1
      %s234 = scalar_select %p233, %s20, 1
      %p235 = scmp.lt.s32.totalorder %s21, 1
      %s236 = scalar_select %p235, %s21, 1
      %s237 = smul.addr %s234, 2
      %s238 = sadd.s32 %s236, %s237
      %s239 = scalar_lea.vmem %s4, %s238
      %p240 = scmp.lt.s32.totalorder %s20, 1
      %s241 = scalar_select %p240, %s20, 1
      %p242 = scmp.lt.s32.totalorder %s21, 1
      %s243 = scalar_select %p242, %s21, 1
      %s244 = smul.addr %s243, 30
      %s245 = smul.addr %s241, 60
      %s246 = sadd.s32 %s244, %s245
      %s247 = smul.addr %s246, 4
      %s248 = scalar_lea.vmem %s0, %s247
      %s249 = smul.u32 8, %s21
      %p250 = scmp.lt.s32.totalorder %s20, 1
      %s251 = scalar_select %p250, %s20, 1
      %p252 = scmp.lt.s32.totalorder %s249, 15
      %s253 = scalar_select %p252, %s249, 15
      %s254 = smul.addr %s253, 2
      %s255 = smul.addr %s251, 32
      %s256 = sadd.s32 %s254, %s255
      %s257 = smul.addr %s256, 8
      %s258 = scalar_lea.vmem %s2, %s257
      %s259 = smul.u32 8, %s21
      %p260 = scmp.lt.s32.totalorder %s20, 1
      %s261 = scalar_select %p260, %s20, 1
      %p262 = scmp.lt.s32.totalorder %s21, 1
      %s263 = scalar_select %p262, %s21, 1
      %s264 = smul.addr %s261, 2
      %s265 = sadd.s32 %s263, %s264
      %s266 = scalar_lea.vmem %s3, %s265
      %p267 = scmp.lt.s32.totalorder %s20, 1
      %s268 = scalar_select %p267, %s20, 1
      %p269 = scmp.lt.s32.totalorder %s21, 1
      %s270 = scalar_select %p269, %s21, 1
      %s271 = smul.addr %s268, 2
      %s272 = sadd.s32 %s270, %s271
      %s273 = scalar_lea.vmem %s4, %s272
      %v275 = vld [vmem:[%s248] sm:$0xf]
      %v276 = vld [vmem:[%s248 + $0x4] sm:$0xf]
      %v277 = vld [vmem:[%s248 + $0x8] sm:$0xf]
      %v278 = vld [vmem:[%s248 + $0xc] sm:$0xf]
      %v279 = vld [vmem:[%s248 + $0x10] sm:$0xf]
      %v280 = vld [vmem:[%s248 + $0x14] sm:$0xf]
      %v281 = vld [vmem:[%s248 + $0x18] sm:$0xf]
      %v282 = vld [vmem:[%s248 + $0x1c] sm:$0xf]
      %v283 = vld [vmem:[%s248 + $0x20] sm:$0xf]
      %v284 = vld [vmem:[%s248 + $0x24] sm:$0xf]
      %v285 = vld [vmem:[%s248 + $0x28] sm:$0xf]
      %v286 = vld [vmem:[%s248 + $0x2c] sm:$0xf]
      %v287 = vld [vmem:[%s248 + $0x30] sm:$0xf]
      %v288 = vld [vmem:[%s248 + $0x34] sm:$0xf]
      %v289 = vld [vmem:[%s248 + $0x38] sm:$0xf]
      %v290 = vld [vmem:[%s248 + $0x3c] sm:$0xf]
      %v291 = vld [vmem:[%s248 + $0x40] sm:$0xf]
      %v292 = vld [vmem:[%s248 + $0x44] sm:$0xf]
      %v293 = vld [vmem:[%s248 + $0x48] sm:$0xf]
      %v294 = vld [vmem:[%s248 + $0x4c] sm:$0xf]
      %v295 = vld [vmem:[%s248 + $0x50] sm:$0xf]
      %v296 = vld [vmem:[%s248 + $0x54] sm:$0xf]
      %v297 = vld [vmem:[%s248 + $0x58] sm:$0xf]
      %v298 = vld [vmem:[%s248 + $0x5c] sm:$0xf]
      %v299 = vld [vmem:[%s1] sm:$0xff]
      %v300 = vld [vmem:[%s1 + $0x8] sm:$0xf]
      %v301 = vld [vmem:[%s1 + $0xc] sm:$0xff]
      %v302 = vld [vmem:[%s1 + $0x14] sm:$0xf]
      %v303 = vld [vmem:[%s1 + $0x18] sm:$0xff]
      %v304 = vld [vmem:[%s1 + $0x20] sm:$0xf]
      %v305 = vld [vmem:[%s1 + $0x24] sm:$0xff]
      %v306 = vld [vmem:[%s1 + $0x2c] sm:$0xf]
      %v307 = vld [vmem:[%s1 + $0x30] sm:$0xff]
      %v308 = vld [vmem:[%s1 + $0x38] sm:$0xf]
      %v309 = vld [vmem:[%s1 + $0x3c] sm:$0xff]
      %v310 = vld [vmem:[%s1 + $0x44] sm:$0xf]
      %v311 = vld [vmem:[%s1 + $0x48] sm:$0xff]
      %v312 = vld [vmem:[%s1 + $0x50] sm:$0xf]
      %v313 = vld [vmem:[%s1 + $0x54] sm:$0xff]
      %v314 = vld [vmem:[%s1 + $0x5c] sm:$0xf]
      %v315 = vld [vmem:[%s1 + $0x60] sm:$0xff]
      %v316 = vld [vmem:[%s1 + $0x68] sm:$0xf]
      %v317 = vld [vmem:[%s1 + $0x6c] sm:$0xff]
      %v318 = vld [vmem:[%s1 + $0x74] sm:$0xf]
      %v319 = vld [vmem:[%s1 + $0x78] sm:$0xff]
      %v320 = vld [vmem:[%s1 + $0x80] sm:$0xf]
      %v321 = vld [vmem:[%s1 + $0x84] sm:$0xff]
      %v322 = vld [vmem:[%s1 + $0x8c] sm:$0xf]
      %v323 = vld [vmem:[%s1 + $0x90] sm:$0xff]
      %v324 = vld [vmem:[%s1 + $0x98] sm:$0xf]
      %v325 = vld [vmem:[%s1 + $0x9c] sm:$0xff]
      %v326 = vld [vmem:[%s1 + $0xa4] sm:$0xf]
      %v327 = vld [vmem:[%s1 + $0xa8] sm:$0xff]
      %v328 = vld [vmem:[%s1 + $0xb0] sm:$0xf]
      %v329 = vld [vmem:[%s1 + $0xb4] sm:$0xff]
      %v330 = vld [vmem:[%s1 + $0xbc] sm:$0xf]
      %v355 = vunpack.c.l.b16 %v275
      %v356 = vunpack.c.l.b16 %v276
      %v357 = vunpack.c.l.b16 %v277
      %v358 = vunpack.c.l.b16 %v278
      %v359 = vunpack.c.l.b16 %v279
      %v360 = vunpack.c.l.b16 %v280
      %v361 = vunpack.c.l.b16 %v281
      %v362 = vunpack.c.l.b16 %v282
      %v363 = vunpack.c.l.b16 %v283
      %v364 = vunpack.c.l.b16 %v284
      %v365 = vunpack.c.l.b16 %v285
      %v366 = vunpack.c.l.b16 %v286
      %v367 = vunpack.c.l.b16 %v287
      %v368 = vunpack.c.l.b16 %v288
      %v369 = vunpack.c.l.b16 %v289
      %v370 = vunpack.c.l.b16 %v290
      %v371 = vunpack.c.l.b16 %v291
      %v372 = vunpack.c.l.b16 %v292
      %v373 = vunpack.c.l.b16 %v293
      %v374 = vunpack.c.l.b16 %v294
      %v375 = vunpack.c.l.b16 %v295
      %v376 = vunpack.c.l.b16 %v296
      %v377 = vunpack.c.l.b16 %v297
      %v378 = vunpack.c.l.b16 %v298
      %v379 = vpack.c.b16 %v356, %v355
      %v380 = vpack.c.b16 %v358, %v357
      %v381 = vpack.c.b16 %v360, %v359
      %v382 = vpack.c.b16 %v362, %v361
      %v383 = vpack.c.b16 %v364, %v363
      %v384 = vpack.c.b16 %v366, %v365
      %v385 = vpack.c.b16 %v368, %v367
      %v386 = vpack.c.b16 %v370, %v369
      %v387 = vpack.c.b16 %v372, %v371
      %v388 = vpack.c.b16 %v374, %v373
      %v389 = vpack.c.b16 %v376, %v375
      %v390 = vpack.c.b16 %v378, %v377
      %v435 = vunpack.c.l.b16 %v299
      %v436 = vunpack.c.h.b16 %v299
      %v437 = vunpack.c.l.b16 %v300
      %v438 = vunpack.c.l.b16 %v301
      %v439 = vunpack.c.h.b16 %v301
      %v440 = vunpack.c.l.b16 %v302
      %v441 = vunpack.c.l.b16 %v303
      %v442 = vunpack.c.h.b16 %v303
      %v443 = vunpack.c.l.b16 %v304
      %v444 = vunpack.c.l.b16 %v305
      %v445 = vunpack.c.h.b16 %v305
      %v446 = vunpack.c.l.b16 %v306
      %v447 = vunpack.c.l.b16 %v307
      %v448 = vunpack.c.h.b16 %v307
      %v449 = vunpack.c.l.b16 %v308
      %v450 = vunpack.c.l.b16 %v309
      %v451 = vunpack.c.h.b16 %v309
      %v452 = vunpack.c.l.b16 %v310
      %v453 = vunpack.c.l.b16 %v311
      %v454 = vunpack.c.h.b16 %v311
      %v455 = vunpack.c.l.b16 %v312
      %v456 = vunpack.c.l.b16 %v313
      %v457 = vunpack.c.h.b16 %v313
      %v458 = vunpack.c.l.b16 %v314
      %v459 = vunpack.c.l.b16 %v315
      %v460 = vunpack.c.h.b16 %v315
      %v461 = vunpack.c.l.b16 %v316
      %v462 = vunpack.c.l.b16 %v317
      %v463 = vunpack.c.h.b16 %v317
      %v464 = vunpack.c.l.b16 %v318
      %v465 = vunpack.c.l.b16 %v319
      %v466 = vunpack.c.h.b16 %v319
      %v467 = vunpack.c.l.b16 %v320
      %v468 = vunpack.c.l.b16 %v321
      %v469 = vunpack.c.h.b16 %v321
      %v470 = vunpack.c.l.b16 %v322
      %v471 = vunpack.c.l.b16 %v323
      %v472 = vunpack.c.h.b16 %v323
      %v473 = vunpack.c.l.b16 %v324
      %v474 = vunpack.c.l.b16 %v325
      %v475 = vunpack.c.h.b16 %v325
      %v476 = vunpack.c.l.b16 %v326
      %v477 = vunpack.c.l.b16 %v327
      %v478 = vunpack.c.h.b16 %v327
      %v479 = vunpack.c.l.b16 %v328
      %v480 = vunpack.c.l.b16 %v329
      %v481 = vunpack.c.h.b16 %v329
      %v482 = vunpack.c.l.b16 %v330
      %v483 = vpack.c.b16 %v438, %v435
      %v484 = vpack.c.b16 %v439, %v436
      %v485 = vpack.c.b16 %v440, %v437
      %v486 = vpack.c.b16 %v444, %v441
      %v487 = vpack.c.b16 %v445, %v442
      %v488 = vpack.c.b16 %v446, %v443
      %v489 = vpack.c.b16 %v450, %v447
      %v490 = vpack.c.b16 %v451, %v448
      %v491 = vpack.c.b16 %v452, %v449
      %v492 = vpack.c.b16 %v456, %v453
      %v493 = vpack.c.b16 %v457, %v454
      %v494 = vpack.c.b16 %v458, %v455
      %v495 = vpack.c.b16 %v462, %v459
      %v496 = vpack.c.b16 %v463, %v460
      %v497 = vpack.c.b16 %v464, %v461
      %v498 = vpack.c.b16 %v468, %v465
      %v499 = vpack.c.b16 %v469, %v466
      %v500 = vpack.c.b16 %v470, %v467
      %v501 = vpack.c.b16 %v474, %v471
      %v502 = vpack.c.b16 %v475, %v472
      %v503 = vpack.c.b16 %v476, %v473
      %v504 = vpack.c.b16 %v480, %v477
      %v505 = vpack.c.b16 %v481, %v478
      %v506 = vpack.c.b16 %v482, %v479
      %531 = vmatprep.subr.bf16.mxu0 %v484
      %532 = vmatpush1.bf16.msra.mxu0 %v483
      %533 = vmatprep.subr.bf16.mxu0 %v487
      %534 = vmatpush1.bf16.msra.mxu0 %v486
      %535 = vmatprep.subr.bf16.mxu0 %v490
      %536 = vmatpush1.bf16.msra.mxu0 %v489
      %537 = vmatprep.subr.bf16.mxu0 %v493
      %538 = vmatpush1.bf16.msra.mxu0 %v492
      %539 = vmatprep.subr.bf16.mxu0 %v496
      %540 = vmatpush1.bf16.msra.mxu0 %v495
      %541 = vmatprep.subr.bf16.mxu0 %v499
      %542 = vmatpush1.bf16.msra.mxu0 %v498
      %543 = vmatprep.subr.bf16.mxu0 %v502
      %544 = vmatpush1.bf16.msra.mxu0 %v501
      %545 = vmatprep.subr.bf16.mxu0 %v505
      %546 = vmatpush1.bf16.msra.mxu0 %v504
      %547 = vmatprep.subr.bf16.mxu0 0
      %548 = vmatpush1.bf16.msra.mxu0 0
      %549 = vmatprep.subr.bf16.mxu0 0
      %550 = vmatpush1.bf16.msra.mxu0 0
      %551 = vmatprep.subr.bf16.mxu0 0
      %552 = vmatpush1.bf16.msra.mxu0 0
      %553 = vmatprep.subr.bf16.mxu0 0
      %554 = vmatpush1.bf16.msra.mxu0 0
      %555 = vmatprep.subr.bf16.mxu0 0
      %556 = vmatpush1.bf16.msra.mxu0 0
      %557 = vmatprep.subr.bf16.mxu0 0
      %558 = vmatpush1.bf16.msra.mxu0 0
      %559 = vmatprep.subr.bf16.mxu0 0
      %560 = vmatpush1.bf16.msra.mxu0 0
      %561 = vmatprep.subr.bf16.mxu0 0
      %562 = vmatpush1.bf16.msra.mxu0 0
      %563 = vmatprep.mubr.bf16.mxu0 0
      %564 = vmatmul.mubr.bf16.gmra.mrb[0].mxu0 %v379
      %v565 = vpop.f32.mrb[0].mxu0
      %v566 = vadd.f32 0.0, %v565
      %v567 = vpop.f32.mrb[0].mxu0
      %v568 = vadd.f32 0.0, %v567
      %v569 = vpop.f32.mrb[0].mxu0
      %v570 = vadd.f32 0.0, %v569
      %v571 = vpop.f32.mrb[0].mxu0
      %v572 = vadd.f32 0.0, %v571
      %573 = vmatprep.mubr.bf16.mxu0 0
      %574 = vmatmul.mubr.bf16.gmra.mrb[0].mxu0 %v380
      %v575 = vpop.f32.mrb[0].mxu0
      %v576 = vadd.f32 0.0, %v575
      %v577 = vpop.f32.mrb[0].mxu0
      %v578 = vadd.f32 0.0, %v577
      %v579 = vpop.f32.mrb[0].mxu0
      %v580 = vadd.f32 0.0, %v579
      %v581 = vpop.f32.mrb[0].mxu0
      %v582 = vadd.f32 0.0, %v581
      %583 = vmatprep.mubr.bf16.mxu0 0
      %584 = vmatmul.mubr.bf16.gmra.mrb[0].mxu0 %v381
      %v585 = vpop.f32.mrb[0].mxu0
      %v586 = vadd.f32 0.0, %v585
      %v587 = vpop.f32.mrb[0].mxu0
      %v588 = vadd.f32 0.0, %v587
      %v589 = vpop.f32.mrb[0].mxu0
      %v590 = vadd.f32 0.0, %v589
      %v591 = vpop.f32.mrb[0].mxu0
      %v592 = vadd.f32 0.0, %v591
      %593 = vmatprep.mubr.bf16.mxu0 0
      %594 = vmatmul.mubr.bf16.gmra.mrb[0].mxu0 %v382
      %v595 = vpop.f32.mrb[0].mxu0
      %v596 = vadd.f32 0.0, %v595
      %v597 = vpop.f32.mrb[0].mxu0
      %v598 = vadd.f32 0.0, %v597
      %v599 = vpop.f32.mrb[0].mxu0
      %v600 = vadd.f32 0.0, %v599
      %v601 = vpop.f32.mrb[0].mxu0
      %v602 = vadd.f32 0.0, %v601
      %603 = vmatprep.mubr.bf16.mxu0 0
      %604 = vmatmul.mubr.bf16.gmra.mrb[0].mxu0 %v383
      %v605 = vpop.f32.mrb[0].mxu0
      %v606 = vadd.f32 0.0, %v605
      %v607 = vpop.f32.mrb[0].mxu0
      %v608 = vadd.f32 0.0, %v607
      %v609 = vpop.f32.mrb[0].mxu0
      %v610 = vadd.f32 0.0, %v609
      %v611 = vpop.f32.mrb[0].mxu0
      %v612 = vadd.f32 0.0, %v611
      %613 = vmatprep.mubr.bf16.mxu0 0
      %614 = vmatmul.mubr.bf16.gmra.mrb[0].mxu0 %v384
      %v615 = vpop.f32.mrb[0].mxu0
      %v616 = vadd.f32 0.0, %v615
      %v617 = vpop.f32.mrb[0].mxu0
      %v618 = vadd.f32 0.0, %v617
      %v619 = vpop.f32.mrb[0].mxu0
      %v620 = vadd.f32 0.0, %v619
      %v621 = vpop.f32.mrb[0].mxu0
      %v622 = vadd.f32 0.0, %v621
      %623 = vmatprep.mubr.bf16.mxu0 0
      %624 = vmatmul.mubr.bf16.gmra.mrb[0].mxu0 %v385
      %v625 = vpop.f32.mrb[0].mxu0
      %v626 = vadd.f32 0.0, %v625
      %v627 = vpop.f32.mrb[0].mxu0
      %v628 = vadd.f32 0.0, %v627
      %v629 = vpop.f32.mrb[0].mxu0
      %v630 = vadd.f32 0.0, %v629
      %v631 = vpop.f32.mrb[0].mxu0
      %v632 = vadd.f32 0.0, %v631
      %633 = vmatprep.mubr.bf16.mxu0 0
      %634 = vmatmul.mubr.bf16.gmra.mrb[0].mxu0 %v386
      %v635 = vpop.f32.mrb[0].mxu0
      %v636 = vadd.f32 0.0, %v635
      %v637 = vpop.f32.mrb[0].mxu0
      %v638 = vadd.f32 0.0, %v637
      %v639 = vpop.f32.mrb[0].mxu0
      %v640 = vadd.f32 0.0, %v639
      %v641 = vpop.f32.mrb[0].mxu0
      %v642 = vadd.f32 0.0, %v641
      %643 = vmatprep.mubr.bf16.mxu0 0
      %644 = vmatmul.mubr.bf16.gmra.mrb[0].mxu0 %v387
      %v645 = vpop.f32.mrb[0].mxu0
      %v646 = vadd.f32 0.0, %v645
      %v647 = vpop.f32.mrb[0].mxu0
      %v648 = vadd.f32 0.0, %v647
      %v649 = vpop.f32.mrb[0].mxu0
      %v650 = vadd.f32 0.0, %v649
      %v651 = vpop.f32.mrb[0].mxu0
      %v652 = vadd.f32 0.0, %v651
      %653 = vmatprep.mubr.bf16.mxu0 0
      %654 = vmatmul.mubr.bf16.gmra.mrb[0].mxu0 %v388
      %v655 = vpop.f32.mrb[0].mxu0
      %v656 = vadd.f32 0.0, %v655
      %v657 = vpop.f32.mrb[0].mxu0
      %v658 = vadd.f32 0.0, %v657
      %v659 = vpop.f32.mrb[0].mxu0
      %v660 = vadd.f32 0.0, %v659
      %v661 = vpop.f32.mrb[0].mxu0
      %v662 = vadd.f32 0.0, %v661
      %663 = vmatprep.mubr.bf16.mxu0 0
      %664 = vmatmul.mubr.bf16.gmra.mrb[0].mxu0 %v389
      %v665 = vpop.f32.mrb[0].mxu0
      %v666 = vadd.f32 0.0, %v665
      %v667 = vpop.f32.mrb[0].mxu0
      %v668 = vadd.f32 0.0, %v667
      %v669 = vpop.f32.mrb[0].mxu0
      %v670 = vadd.f32 0.0, %v669
      %v671 = vpop.f32.mrb[0].mxu0
      %v672 = vadd.f32 0.0, %v671
      %673 = vmatprep.mubr.bf16.mxu0 0
      %674 = vmatmul.mubr.bf16.gmra.mrb[0].mxu0 %v390
      %v675 = vpop.f32.mrb[0].mxu0
      %v676 = vadd.f32 0.0, %v675
      %v677 = vpop.f32.mrb[0].mxu0
      %v678 = vadd.f32 0.0, %v677
      %v679 = vpop.f32.mrb[0].mxu0
      %v680 = vadd.f32 0.0, %v679
      %v681 = vpop.f32.mrb[0].mxu0
      %v682 = vadd.f32 0.0, %v681
      %683 = vdwg.mxu0
      %684 = vmatprep.subr.bf16.mxu0 0
      %685 = vmatpush1.bf16.msra.mxu0 %v485
      %686 = vmatprep.subr.bf16.mxu0 0
      %687 = vmatpush1.bf16.msra.mxu0 %v488
      %688 = vmatprep.subr.bf16.mxu0 0
      %689 = vmatpush1.bf16.msra.mxu0 %v491
      %690 = vmatprep.subr.bf16.mxu0 0
      %691 = vmatpush1.bf16.msra.mxu0 %v494
      %692 = vmatprep.subr.bf16.mxu0 0
      %693 = vmatpush1.bf16.msra.mxu0 %v497
      %694 = vmatprep.subr.bf16.mxu0 0
      %695 = vmatpush1.bf16.msra.mxu0 %v500
      %696 = vmatprep.subr.bf16.mxu0 0
      %697 = vmatpush1.bf16.msra.mxu0 %v503
      %698 = vmatprep.subr.bf16.mxu0 0
      %699 = vmatpush1.bf16.msra.mxu0 %v506
      %700 = vmatprep.subr.bf16.mxu0 0
      %701 = vmatpush1.bf16.msra.mxu0 0
      %702 = vmatprep.subr.bf16.mxu0 0
      %703 = vmatpush1.bf16.msra.mxu0 0
      %704 = vmatprep.subr.bf16.mxu0 0
      %705 = vmatpush1.bf16.msra.mxu0 0
      %706 = vmatprep.subr.bf16.mxu0 0
      %707 = vmatpush1.bf16.msra.mxu0 0
      %708 = vmatprep.subr.bf16.mxu0 0
      %709 = vmatpush1.bf16.msra.mxu0 0
      %710 = vmatprep.subr.bf16.mxu0 0
      %711 = vmatpush1.bf16.msra.mxu0 0
      %712 = vmatprep.subr.bf16.mxu0 0
      %713 = vmatpush1.bf16.msra.mxu0 0
      %714 = vmatprep.subr.bf16.mxu0 0
      %715 = vmatpush1.bf16.msra.mxu0 0
      %716 = vmatprep.mubr.bf16.mxu0 0
      %717 = vmatmul.mubr.bf16.gmra.mrb[0].mxu0 %v379
      %v718 = vpop.f32.mrb[0].mxu0
      %v719 = vadd.f32 0.0, %v718
      %v720 = vpop.f32.mrb[0].mxu0
      %v721 = vpop.f32.mrb[0].mxu0
      %v722 = vadd.f32 0.0, %v721
      %v723 = vpop.f32.mrb[0].mxu0
      %724 = vmatprep.mubr.bf16.mxu0 0
      %725 = vmatmul.mubr.bf16.gmra.mrb[0].mxu0 %v380
      %v726 = vpop.f32.mrb[0].mxu0
      %v727 = vadd.f32 0.0, %v726
      %v728 = vpop.f32.mrb[0].mxu0
      %v729 = vpop.f32.mrb[0].mxu0
      %v730 = vadd.f32 0.0, %v729
      %v731 = vpop.f32.mrb[0].mxu0
      %732 = vmatprep.mubr.bf16.mxu0 0
      %733 = vmatmul.mubr.bf16.gmra.mrb[0].mxu0 %v381
      %v734 = vpop.f32.mrb[0].mxu0
      %v735 = vadd.f32 0.0, %v734
      %v736 = vpop.f32.mrb[0].mxu0
      %v737 = vpop.f32.mrb[0].mxu0
      %v738 = vadd.f32 0.0, %v737
      %v739 = vpop.f32.mrb[0].mxu0
      %740 = vmatprep.mubr.bf16.mxu0 0
      %741 = vmatmul.mubr.bf16.gmra.mrb[0].mxu0 %v382
      %v742 = vpop.f32.mrb[0].mxu0
      %v743 = vadd.f32 0.0, %v742
      %v744 = vpop.f32.mrb[0].mxu0
      %v745 = vpop.f32.mrb[0].mxu0
      %v746 = vadd.f32 0.0, %v745
      %v747 = vpop.f32.mrb[0].mxu0
      %748 = vmatprep.mubr.bf16.mxu0 0
      %749 = vmatmul.mubr.bf16.gmra.mrb[0].mxu0 %v383
      %v750 = vpop.f32.mrb[0].mxu0
      %v751 = vadd.f32 0.0, %v750
      %v752 = vpop.f32.mrb[0].mxu0
      %v753 = vpop.f32.mrb[0].mxu0
      %v754 = vadd.f32 0.0, %v753
      %v755 = vpop.f32.mrb[0].mxu0
      %756 = vmatprep.mubr.bf16.mxu0 0
      %757 = vmatmul.mubr.bf16.gmra.mrb[0].mxu0 %v384
      %v758 = vpop.f32.mrb[0].mxu0
      %v759 = vadd.f32 0.0, %v758
      %v760 = vpop.f32.mrb[0].mxu0
      %v761 = vpop.f32.mrb[0].mxu0
      %v762 = vadd.f32 0.0, %v761
      %v763 = vpop.f32.mrb[0].mxu0
      %764 = vmatprep.mubr.bf16.mxu0 0
      %765 = vmatmul.mubr.bf16.gmra.mrb[0].mxu0 %v385
      %v766 = vpop.f32.mrb[0].mxu0
      %v767 = vadd.f32 0.0, %v766
      %v768 = vpop.f32.mrb[0].mxu0
      %v769 = vpop.f32.mrb[0].mxu0
      %v770 = vadd.f32 0.0, %v769
      %v771 = vpop.f32.mrb[0].mxu0
      %772 = vmatprep.mubr.bf16.mxu0 0
      %773 = vmatmul.mubr.bf16.gmra.mrb[0].mxu0 %v386
      %v774 = vpop.f32.mrb[0].mxu0
      %v775 = vadd.f32 0.0, %v774
      %v776 = vpop.f32.mrb[0].mxu0
      %v777 = vpop.f32.mrb[0].mxu0
      %v778 = vadd.f32 0.0, %v777
      %v779 = vpop.f32.mrb[0].mxu0
      %780 = vmatprep.mubr.bf16.mxu0 0
      %781 = vmatmul.mubr.bf16.gmra.mrb[0].mxu0 %v387
      %v782 = vpop.f32.mrb[0].mxu0
      %v783 = vadd.f32 0.0, %v782
      %v784 = vpop.f32.mrb[0].mxu0
      %v785 = vpop.f32.mrb[0].mxu0
      %v786 = vadd.f32 0.0, %v785
      %v787 = vpop.f32.mrb[0].mxu0
      %788 = vmatprep.mubr.bf16.mxu0 0
      %789 = vmatmul.mubr.bf16.gmra.mrb[0].mxu0 %v388
      %v790 = vpop.f32.mrb[0].mxu0
      %v791 = vadd.f32 0.0, %v790
      %v792 = vpop.f32.mrb[0].mxu0
      %v793 = vpop.f32.mrb[0].mxu0
      %v794 = vadd.f32 0.0, %v793
      %v795 = vpop.f32.mrb[0].mxu0
      %796 = vmatprep.mubr.bf16.mxu0 0
      %797 = vmatmul.mubr.bf16.gmra.mrb[0].mxu0 %v389
      %v798 = vpop.f32.mrb[0].mxu0
      %v799 = vadd.f32 0.0, %v798
      %v800 = vpop.f32.mrb[0].mxu0
      %v801 = vpop.f32.mrb[0].mxu0
      %v802 = vadd.f32 0.0, %v801
      %v803 = vpop.f32.mrb[0].mxu0
      %804 = vmatprep.mubr.bf16.mxu0 0
      %805 = vmatmul.mubr.bf16.gmra.mrb[0].mxu0 %v390
      %v806 = vpop.f32.mrb[0].mxu0
      %v807 = vadd.f32 0.0, %v806
      %v808 = vpop.f32.mrb[0].mxu0
      %v809 = vpop.f32.mrb[0].mxu0
      %v810 = vadd.f32 0.0, %v809
      %v811 = vpop.f32.mrb[0].mxu0
      %812 = vdwg.mxu0
      %813 = vst [vmem:[#allocation2] sm:$0xff] %v566
      %814 = vst [vmem:[#allocation2 + $0x8] sm:$0xff] %v568
      %815 = vst [vmem:[#allocation2 + $0x10] sm:$0xff] %v719
      %816 = vst [vmem:[#allocation2 + $0x18] sm:$0xff] %v570
      %817 = vst [vmem:[#allocation2 + $0x20] sm:$0xff] %v572
      %818 = vst [vmem:[#allocation2 + $0x28] sm:$0xff] %v722
      %819 = vst [vmem:[#allocation2 + $0x30] sm:$0xff] %v576
      %820 = vst [vmem:[#allocation2 + $0x38] sm:$0xff] %v578
      %821 = vst [vmem:[#allocation2 + $0x40] sm:$0xff] %v727
      %822 = vst [vmem:[#allocation2 + $0x48] sm:$0xff] %v580
      %823 = vst [vmem:[#allocation2 + $0x50] sm:$0xff] %v582
      %824 = vst [vmem:[#allocation2 + $0x58] sm:$0xff] %v730
      %825 = vst [vmem:[#allocation2 + $0x60] sm:$0xff] %v586
      %826 = vst [vmem:[#allocation2 + $0x68] sm:$0xff] %v588
      %827 = vst [vmem:[#allocation2 + $0x70] sm:$0xff] %v735
      %828 = vst [vmem:[#allocation2 + $0x78] sm:$0xff] %v590
      %829 = vst [vmem:[#allocation2 + $0x80] sm:$0xff] %v592
      %830 = vst [vmem:[#allocation2 + $0x88] sm:$0xff] %v738
      %831 = vst [vmem:[#allocation2 + $0x90] sm:$0xff] %v596
      %832 = vst [vmem:[#allocation2 + $0x98] sm:$0xff] %v598
      %833 = vst [vmem:[#allocation2 + $0xa0] sm:$0xff] %v743
      %834 = vst [vmem:[#allocation2 + $0xa8] sm:$0xff] %v600
      %835 = vst [vmem:[#allocation2 + $0xb0] sm:$0xff] %v602
      %836 = vst [vmem:[#allocation2 + $0xb8] sm:$0xff] %v746
      %837 = vst [vmem:[#allocation2 + $0xc0] sm:$0xff] %v606
      %838 = vst [vmem:[#allocation2 + $0xc8] sm:$0xff] %v608
      %839 = vst [vmem:[#allocation2 + $0xd0] sm:$0xff] %v751
      %840 = vst [vmem:[#allocation2 + $0xd8] sm:$0xff] %v610
      %841 = vst [vmem:[#allocation2 + $0xe0] sm:$0xff] %v612
      %842 = vst [vmem:[#allocation2 + $0xe8] sm:$0xff] %v754
      %843 = vst [vmem:[#allocation2 + $0xf0] sm:$0xff] %v616
      %844 = vst [vmem:[#allocation2 + $0xf8] sm:$0xff] %v618
      %845 = vst [vmem:[#allocation2 + $0x100] sm:$0xff] %v759
      %846 = vst [vmem:[#allocation2 + $0x108] sm:$0xff] %v620
      %847 = vst [vmem:[#allocation2 + $0x110] sm:$0xff] %v622
      %848 = vst [vmem:[#allocation2 + $0x118] sm:$0xff] %v762
      %849 = vst [vmem:[#allocation2 + $0x120] sm:$0xff] %v626
      %850 = vst [vmem:[#allocation2 + $0x128] sm:$0xff] %v628
      %851 = vst [vmem:[#allocation2 + $0x130] sm:$0xff] %v767
      %852 = vst [vmem:[#allocation2 + $0x138] sm:$0xff] %v630
      %853 = vst [vmem:[#allocation2 + $0x140] sm:$0xff] %v632
      %854 = vst [vmem:[#allocation2 + $0x148] sm:$0xff] %v770
      %855 = vst [vmem:[#allocation2 + $0x150] sm:$0xff] %v636
      %856 = vst [vmem:[#allocation2 + $0x158] sm:$0xff] %v638
      %857 = vst [vmem:[#allocation2 + $0x160] sm:$0xff] %v775
      %858 = vst [vmem:[#allocation2 + $0x168] sm:$0xff] %v640
      %859 = vst [vmem:[#allocation2 + $0x170] sm:$0xff] %v642
      %860 = vst [vmem:[#allocation2 + $0x178] sm:$0xff] %v778
      %861 = vst [vmem:[#allocation2 + $0x180] sm:$0xff] %v646
      %862 = vst [vmem:[#allocation2 + $0x188] sm:$0xff] %v648
      %863 = vst [vmem:[#allocation2 + $0x190] sm:$0xff] %v783
      %864 = vst [vmem:[#allocation2 + $0x198] sm:$0xff] %v650
      %865 = vst [vmem:[#allocation2 + $0x1a0] sm:$0xff] %v652
      %866 = vst [vmem:[#allocation2 + $0x1a8] sm:$0xff] %v786
      %867 = vst [vmem:[#allocation2 + $0x1b0] sm:$0xff] %v656
      %868 = vst [vmem:[#allocation2 + $0x1b8] sm:$0xff] %v658
      %869 = vst [vmem:[#allocation2 + $0x1c0] sm:$0xff] %v791
      %870 = vst [vmem:[#allocation2 + $0x1c8] sm:$0xff] %v660
      %871 = vst [vmem:[#allocation2 + $0x1d0] sm:$0xff] %v662
      %872 = vst [vmem:[#allocation2 + $0x1d8] sm:$0xff] %v794
      %873 = vst [vmem:[#allocation2 + $0x1e0] sm:$0xff] %v666
      %874 = vst [vmem:[#allocation2 + $0x1e8] sm:$0xff] %v668
      %875 = vst [vmem:[#allocation2 + $0x1f0] sm:$0xff] %v799
      %876 = vst [vmem:[#allocation2 + $0x1f8] sm:$0xff] %v670
      %877 = vst [vmem:[#allocation2 + $0x200] sm:$0xff] %v672
      %878 = vst [vmem:[#allocation2 + $0x208] sm:$0xff] %v802
      %879 = vst [vmem:[#allocation2 + $0x210] sm:$0xff] %v676
      %880 = vst [vmem:[#allocation2 + $0x218] sm:$0xff] %v678
      %881 = vst [vmem:[#allocation2 + $0x220] sm:$0xff] %v807
      %882 = vst [vmem:[#allocation2 + $0x228] sm:$0xff] %v680
      %883 = vst [vmem:[#allocation2 + $0x230] sm:$0xff] %v682
      %884 = vst [vmem:[#allocation2 + $0x238] sm:$0xff] %v810
      %s885 = scalar_lea.vmem %s248, 12
      %v886 = vld [vmem:[%s885] sm:$0xf]
      %v887 = vld [vmem:[%s885 + $0x4] sm:$0xf]
      %v888 = vld [vmem:[%s885 + $0x8] sm:$0xf]
      %v889 = vld [vmem:[%s885 + $0xc] sm:$0xf]
      %v890 = vld [vmem:[%s885 + $0x10] sm:$0xf]
      %v891 = vld [vmem:[%s885 + $0x14] sm:$0xf]
      %v892 = vld [vmem:[%s885 + $0x18] sm:$0xf]
      %v893 = vld [vmem:[%s885 + $0x1c] sm:$0xf]
      %v894 = vld [vmem:[%s885 + $0x20] sm:$0xf]
      %v895 = vld [vmem:[%s885 + $0x24] sm:$0xf]
      %v896 = vld [vmem:[%s885 + $0x28] sm:$0xf]
      %v897 = vld [vmem:[%s885 + $0x2c] sm:$0xf]
      %v898 = vld [vmem:[%s885 + $0x30] sm:$0xf]
      %v899 = vld [vmem:[%s885 + $0x34] sm:$0xf]
      %v900 = vld [vmem:[%s885 + $0x38] sm:$0xf]
      %v901 = vld [vmem:[%s885 + $0x3c] sm:$0xf]
      %v902 = vld [vmem:[%s885 + $0x40] sm:$0xf]
      %v903 = vld [vmem:[%s885 + $0x44] sm:$0xf]
      %v904 = vld [vmem:[%s885 + $0x48] sm:$0xf]
      %v905 = vld [vmem:[%s885 + $0x4c] sm:$0xf]
      %v906 = vld [vmem:[%s885 + $0x50] sm:$0xf]
      %v907 = vld [vmem:[%s885 + $0x54] sm:$0xf]
      %v908 = vld [vmem:[%s885 + $0x58] sm:$0xf]
      %v909 = vld [vmem:[%s885 + $0x5c] sm:$0xf]
      %s910 = scalar_lea.vmem %s1, 192
      %v911 = vld [vmem:[%s910] sm:$0xff]
      %v912 = vld [vmem:[%s910 + $0x8] sm:$0xf]
      %v913 = vld [vmem:[%s910 + $0xc] sm:$0xff]
      %v914 = vld [vmem:[%s910 + $0x14] sm:$0xf]
      %v915 = vld [vmem:[%s910 + $0x18] sm:$0xff]
      %v916 = vld [vmem:[%s910 + $0x20] sm:$0xf]
      %v917 = vld [vmem:[%s910 + $0x24] sm:$0xff]
      %v918 = vld [vmem:[%s910 + $0x2c] sm:$0xf]
      %v919 = vld [vmem:[%s910 + $0x30] sm:$0xff]
      %v920 = vld [vmem:[%s910 + $0x38] sm:$0xf]
      %v921 = vld [vmem:[%s910 + $0x3c] sm:$0xff]
      %v922 = vld [vmem:[%s910 + $0x44] sm:$0xf]
      %v923 = vld [vmem:[%s910 + $0x48] sm:$0xff]
      %v924 = vld [vmem:[%s910 + $0x50] sm:$0xf]
      %v925 = vld [vmem:[%s910 + $0x54] sm:$0xff]
      %v926 = vld [vmem:[%s910 + $0x5c] sm:$0xf]
      %v927 = vld [vmem:[%s910 + $0x60] sm:$0xff]
      %v928 = vld [vmem:[%s910 + $0x68] sm:$0xf]
      %v929 = vld [vmem:[%s910 + $0x6c] sm:$0xff]
      %v930 = vld [vmem:[%s910 + $0x74] sm:$0xf]
      %v931 = vld [vmem:[%s910 + $0x78] sm:$0xff]
      %v932 = vld [vmem:[%s910 + $0x80] sm:$0xf]
      %v933 = vld [vmem:[%s910 + $0x84] sm:$0xff]
      %v934 = vld [vmem:[%s910 + $0x8c] sm:$0xf]
      %v935 = vld [vmem:[%s910 + $0x90] sm:$0xff]
      %v936 = vld [vmem:[%s910 + $0x98] sm:$0xf]
      %v937 = vld [vmem:[%s910 + $0x9c] sm:$0xff]
      %v938 = vld [vmem:[%s910 + $0xa4] sm:$0xf]
      %v939 = vld [vmem:[%s910 + $0xa8] sm:$0xff]
      %v940 = vld [vmem:[%s910 + $0xb0] sm:$0xf]
      %v941 = vld [vmem:[%s910 + $0xb4] sm:$0xff]
      %v942 = vld [vmem:[%s910 + $0xbc] sm:$0xf]
      %v967 = vunpack.c.l.b16 %v886
      %v968 = vunpack.c.l.b16 %v887
      %v969 = vunpack.c.l.b16 %v888
      %v970 = vunpack.c.l.b16 %v889
      %v971 = vunpack.c.l.b16 %v890
      %v972 = vunpack.c.l.b16 %v891
      %v973 = vunpack.c.l.b16 %v892
      %v974 = vunpack.c.l.b16 %v893
      %v975 = vunpack.c.l.b16 %v894
      %v976 = vunpack.c.l.b16 %v895
      %v977 = vunpack.c.l.b16 %v896
      %v978 = vunpack.c.l.b16 %v897
      %v979 = vunpack.c.l.b16 %v898
      %v980 = vunpack.c.l.b16 %v899
      %v981 = vunpack.c.l.b16 %v900
      %v982 = vunpack.c.l.b16 %v901
      %v983 = vunpack.c.l.b16 %v902
      %v984 = vunpack.c.l.b16 %v903
      %v985 = vunpack.c.l.b16 %v904
      %v986 = vunpack.c.l.b16 %v905
      %v987 = vunpack.c.l.b16 %v906
      %v988 = vunpack.c.l.b16 %v907
      %v989 = vunpack.c.l.b16 %v908
      %v990 = vunpack.c.l.b16 %v909
      %v991 = vpack.c.b16 %v968, %v967
      %v992 = vpack.c.b16 %v970, %v969
      %v993 = vpack.c.b16 %v972, %v971
      %v994 = vpack.c.b16 %v974, %v973
      %v995 = vpack.c.b16 %v976, %v975
      %v996 = vpack.c.b16 %v978, %v977
      %v997 = vpack.c.b16 %v980, %v979
      %v998 = vpack.c.b16 %v982, %v981
      %v999 = vpack.c.b16 %v984, %v983
      %v1000 = vpack.c.b16 %v986, %v985
      %v1001 = vpack.c.b16 %v988, %v987
      %v1002 = vpack.c.b16 %v990, %v989
      %v1047 = vunpack.c.l.b16 %v911
      %v1048 = vunpack.c.h.b16 %v911
      %v1049 = vunpack.c.l.b16 %v912
      %v1050 = vunpack.c.l.b16 %v913
      %v1051 = vunpack.c.h.b16 %v913
      %v1052 = vunpack.c.l.b16 %v914
      %v1053 = vunpack.c.l.b16 %v915
      %v1054 = vunpack.c.h.b16 %v915
      %v1055 = vunpack.c.l.b16 %v916
      %v1056 = vunpack.c.l.b16 %v917
      %v1057 = vunpack.c.h.b16 %v917
      %v1058 = vunpack.c.l.b16 %v918
      %v1059 = vunpack.c.l.b16 %v919
      %v1060 = vunpack.c.h.b16 %v919
      %v1061 = vunpack.c.l.b16 %v920
      %v1062 = vunpack.c.l.b16 %v921
      %v1063 = vunpack.c.h.b16 %v921
      %v1064 = vunpack.c.l.b16 %v922
      %v1065 = vunpack.c.l.b16 %v923
      %v1066 = vunpack.c.h.b16 %v923
      %v1067 = vunpack.c.l.b16 %v924
      %v1068 = vunpack.c.l.b16 %v925
      %v1069 = vunpack.c.h.b16 %v925
      %v1070 = vunpack.c.l.b16 %v926
      %v1071 = vunpack.c.l.b16 %v927
      %v1072 = vunpack.c.h.b16 %v927
      %v1073 = vunpack.c.l.b16 %v928
      %v1074 = vunpack.c.l.b16 %v929
      %v1075 = vunpack.c.h.b16 %v929
      %v1076 = vunpack.c.l.b16 %v930
      %v1077 = vunpack.c.l.b16 %v931
      %v1078 = vunpack.c.h.b16 %v931
      %v1079 = vunpack.c.l.b16 %v932
      %v1080 = vunpack.c.l.b16 %v933
      %v1081 = vunpack.c.h.b16 %v933
      %v1082 = vunpack.c.l.b16 %v934
      %v1083 = vunpack.c.l.b16 %v935
      %v1084 = vunpack.c.h.b16 %v935
      %v1085 = vunpack.c.l.b16 %v936
      %v1086 = vunpack.c.l.b16 %v937
      %v1087 = vunpack.c.h.b16 %v937
      %v1088 = vunpack.c.l.b16 %v938
      %v1089 = vunpack.c.l.b16 %v939
      %v1090 = vunpack.c.h.b16 %v939
      %v1091 = vunpack.c.l.b16 %v940
      %v1092 = vunpack.c.l.b16 %v941
      %v1093 = vunpack.c.h.b16 %v941
      %v1094 = vunpack.c.l.b16 %v942
      %v1095 = vpack.c.b16 %v1050, %v1047
      %v1096 = vpack.c.b16 %v1051, %v1048
      %v1097 = vpack.c.b16 %v1052, %v1049
      %v1098 = vpack.c.b16 %v1056, %v1053
      %v1099 = vpack.c.b16 %v1057, %v1054
      %v1100 = vpack.c.b16 %v1058, %v1055
      %v1101 = vpack.c.b16 %v1062, %v1059
      %v1102 = vpack.c.b16 %v1063, %v1060
      %v1103 = vpack.c.b16 %v1064, %v1061
      %v1104 = vpack.c.b16 %v1068, %v1065
      %v1105 = vpack.c.b16 %v1069, %v1066
      %v1106 = vpack.c.b16 %v1070, %v1067
      %v1107 = vpack.c.b16 %v1074, %v1071
      %v1108 = vpack.c.b16 %v1075, %v1072
      %v1109 = vpack.c.b16 %v1076, %v1073
      %v1110 = vpack.c.b16 %v1080, %v1077
      %v1111 = vpack.c.b16 %v1081, %v1078
      %v1112 = vpack.c.b16 %v1082, %v1079
      %v1113 = vpack.c.b16 %v1086, %v1083
      %v1114 = vpack.c.b16 %v1087, %v1084
      %v1115 = vpack.c.b16 %v1088, %v1085
      %v1116 = vpack.c.b16 %v1092, %v1089
      %v1117 = vpack.c.b16 %v1093, %v1090
      %v1118 = vpack.c.b16 %v1094, %v1091
      %1143 = vmatprep.subr.bf16.mxu0 %v1096
      %1144 = vmatpush1.bf16.msra.mxu0 %v1095
      %1145 = vmatprep.subr.bf16.mxu0 %v1099
      %1146 = vmatpush1.bf16.msra.mxu0 %v1098
      %1147 = vmatprep.subr.bf16.mxu0 %v1102
      %1148 = vmatpush1.bf16.msra.mxu0 %v1101
      %1149 = vmatprep.subr.bf16.mxu0 %v1105
      %1150 = vmatpush1.bf16.msra.mxu0 %v1104
      %1151 = vmatprep.subr.bf16.mxu0 %v1108
      %1152 = vmatpush1.bf16.msra.mxu0 %v1107
      %1153 = vmatprep.subr.bf16.mxu0 %v1111
      %1154 = vmatpush1.bf16.msra.mxu0 %v1110
      %1155 = vmatprep.subr.bf16.mxu0 %v1114
      %1156 = vmatpush1.bf16.msra.mxu0 %v1113
      %1157 = vmatprep.subr.bf16.mxu0 %v1117
      %1158 = vmatpush1.bf16.msra.mxu0 %v1116
      %1159 = vmatprep.subr.bf16.mxu0 0
      %1160 = vmatpush1.bf16.msra.mxu0 0
      %1161 = vmatprep.subr.bf16.mxu0 0
      %1162 = vmatpush1.bf16.msra.mxu0 0
      %1163 = vmatprep.subr.bf16.mxu0 0
      %1164 = vmatpush1.bf16.msra.mxu0 0
      %1165 = vmatprep.subr.bf16.mxu0 0
      %1166 = vmatpush1.bf16.msra.mxu0 0
      %1167 = vmatprep.subr.bf16.mxu0 0
      %1168 = vmatpush1.bf16.msra.mxu0 0
      %1169 = vmatprep.subr.bf16.mxu0 0
      %1170 = vmatpush1.bf16.msra.mxu0 0
      %1171 = vmatprep.subr.bf16.mxu0 0
      %1172 = vmatpush1.bf16.msra.mxu0 0
      %1173 = vmatprep.subr.bf16.mxu0 0
      %1174 = vmatpush1.bf16.msra.mxu0 0
      %1175 = vmatprep.mubr.bf16.mxu0 0
      %1176 = vmatmul.mubr.bf16.gmra.mrb[0].mxu0 %v991
      %v1177 = vpop.f32.mrb[0].mxu0
      %v1178 = vadd.f32 0.0, %v1177
      %v1179 = vpop.f32.mrb[0].mxu0
      %v1180 = vadd.f32 0.0, %v1179
      %v1181 = vpop.f32.mrb[0].mxu0
      %v1182 = vadd.f32 0.0, %v1181
      %v1183 = vpop.f32.mrb[0].mxu0
      %v1184 = vadd.f32 0.0, %v1183
      %1185 = vmatprep.mubr.bf16.mxu0 0
      %1186 = vmatmul.mubr.bf16.gmra.mrb[0].mxu0 %v992
      %v1187 = vpop.f32.mrb[0].mxu0
      %v1188 = vadd.f32 0.0, %v1187
      %v1189 = vpop.f32.mrb[0].mxu0
      %v1190 = vadd.f32 0.0, %v1189
      %v1191 = vpop.f32.mrb[0].mxu0
      %v1192 = vadd.f32 0.0, %v1191
      %v1193 = vpop.f32.mrb[0].mxu0
      %v1194 = vadd.f32 0.0, %v1193
      %1195 = vmatprep.mubr.bf16.mxu0 0
      %1196 = vmatmul.mubr.bf16.gmra.mrb[0].mxu0 %v993
      %v1197 = vpop.f32.mrb[0].mxu0
      %v1198 = vadd.f32 0.0, %v1197
      %v1199 = vpop.f32.mrb[0].mxu0
      %v1200 = vadd.f32 0.0, %v1199
      %v1201 = vpop.f32.mrb[0].mxu0
      %v1202 = vadd.f32 0.0, %v1201
      %v1203 = vpop.f32.mrb[0].mxu0
      %v1204 = vadd.f32 0.0, %v1203
      %1205 = vmatprep.mubr.bf16.mxu0 0
      %1206 = vmatmul.mubr.bf16.gmra.mrb[0].mxu0 %v994
      %v1207 = vpop.f32.mrb[0].mxu0
      %v1208 = vadd.f32 0.0, %v1207
      %v1209 = vpop.f32.mrb[0].mxu0
      %v1210 = vadd.f32 0.0, %v1209
      %v1211 = vpop.f32.mrb[0].mxu0
      %v1212 = vadd.f32 0.0, %v1211
      %v1213 = vpop.f32.mrb[0].mxu0
      %v1214 = vadd.f32 0.0, %v1213
      %1215 = vmatprep.mubr.bf16.mxu0 0
      %1216 = vmatmul.mubr.bf16.gmra.mrb[0].mxu0 %v995
      %v1217 = vpop.f32.mrb[0].mxu0
      %v1218 = vadd.f32 0.0, %v1217
      %v1219 = vpop.f32.mrb[0].mxu0
      %v1220 = vadd.f32 0.0, %v1219
      %v1221 = vpop.f32.mrb[0].mxu0
      %v1222 = vadd.f32 0.0, %v1221
      %v1223 = vpop.f32.mrb[0].mxu0
      %v1224 = vadd.f32 0.0, %v1223
      %1225 = vmatprep.mubr.bf16.mxu0 0
      %1226 = vmatmul.mubr.bf16.gmra.mrb[0].mxu0 %v996
      %v1227 = vpop.f32.mrb[0].mxu0
      %v1228 = vadd.f32 0.0, %v1227
      %v1229 = vpop.f32.mrb[0].mxu0
      %v1230 = vadd.f32 0.0, %v1229
      %v1231 = vpop.f32.mrb[0].mxu0
      %v1232 = vadd.f32 0.0, %v1231
      %v1233 = vpop.f32.mrb[0].mxu0
      %v1234 = vadd.f32 0.0, %v1233
      %1235 = vmatprep.mubr.bf16.mxu0 0
      %1236 = vmatmul.mubr.bf16.gmra.mrb[0].mxu0 %v997
      %v1237 = vpop.f32.mrb[0].mxu0
      %v1238 = vadd.f32 0.0, %v1237
      %v1239 = vpop.f32.mrb[0].mxu0
      %v1240 = vadd.f32 0.0, %v1239
      %v1241 = vpop.f32.mrb[0].mxu0
      %v1242 = vadd.f32 0.0, %v1241
      %v1243 = vpop.f32.mrb[0].mxu0
      %v1244 = vadd.f32 0.0, %v1243
      %1245 = vmatprep.mubr.bf16.mxu0 0
      %1246 = vmatmul.mubr.bf16.gmra.mrb[0].mxu0 %v998
      %v1247 = vpop.f32.mrb[0].mxu0
      %v1248 = vadd.f32 0.0, %v1247
      %v1249 = vpop.f32.mrb[0].mxu0
      %v1250 = vadd.f32 0.0, %v1249
      %v1251 = vpop.f32.mrb[0].mxu0
      %v1252 = vadd.f32 0.0, %v1251
      %v1253 = vpop.f32.mrb[0].mxu0
      %v1254 = vadd.f32 0.0, %v1253
      %1255 = vmatprep.mubr.bf16.mxu0 0
      %1256 = vmatmul.mubr.bf16.gmra.mrb[0].mxu0 %v999
      %v1257 = vpop.f32.mrb[0].mxu0
      %v1258 = vadd.f32 0.0, %v1257
      %v1259 = vpop.f32.mrb[0].mxu0
      %v1260 = vadd.f32 0.0, %v1259
      %v1261 = vpop.f32.mrb[0].mxu0
      %v1262 = vadd.f32 0.0, %v1261
      %v1263 = vpop.f32.mrb[0].mxu0
      %v1264 = vadd.f32 0.0, %v1263
      %1265 = vmatprep.mubr.bf16.mxu0 0
      %1266 = vmatmul.mubr.bf16.gmra.mrb[0].mxu0 %v1000
      %v1267 = vpop.f32.mrb[0].mxu0
      %v1268 = vadd.f32 0.0, %v1267
      %v1269 = vpop.f32.mrb[0].mxu0
      %v1270 = vadd.f32 0.0, %v1269
      %v1271 = vpop.f32.mrb[0].mxu0
      %v1272 = vadd.f32 0.0, %v1271
      %v1273 = vpop.f32.mrb[0].mxu0
      %v1274 = vadd.f32 0.0, %v1273
      %1275 = vmatprep.mubr.bf16.mxu0 0
      %1276 = vmatmul.mubr.bf16.gmra.mrb[0].mxu0 %v1001
      %v1277 = vpop.f32.mrb[0].mxu0
      %v1278 = vadd.f32 0.0, %v1277
      %v1279 = vpop.f32.mrb[0].mxu0
      %v1280 = vadd.f32 0.0, %v1279
      %v1281 = vpop.f32.mrb[0].mxu0
      %v1282 = vadd.f32 0.0, %v1281
      %v1283 = vpop.f32.mrb[0].mxu0
      %v1284 = vadd.f32 0.0, %v1283
      %1285 = vmatprep.mubr.bf16.mxu0 0
      %1286 = vmatmul.mubr.bf16.gmra.mrb[0].mxu0 %v1002
      %v1287 = vpop.f32.mrb[0].mxu0
      %v1288 = vadd.f32 0.0, %v1287
      %v1289 = vpop.f32.mrb[0].mxu0
      %v1290 = vadd.f32 0.0, %v1289
      %v1291 = vpop.f32.mrb[0].mxu0
      %v1292 = vadd.f32 0.0, %v1291
      %v1293 = vpop.f32.mrb[0].mxu0
      %v1294 = vadd.f32 0.0, %v1293
      %1295 = vdwg.mxu0
      %1296 = vmatprep.subr.bf16.mxu0 0
      %1297 = vmatpush1.bf16.msra.mxu0 %v1097
      %1298 = vmatprep.subr.bf16.mxu0 0
      %1299 = vmatpush1.bf16.msra.mxu0 %v1100
      %1300 = vmatprep.subr.bf16.mxu0 0
      %1301 = vmatpush1.bf16.msra.mxu0 %v1103
      %1302 = vmatprep.subr.bf16.mxu0 0
      %1303 = vmatpush1.bf16.msra.mxu0 %v1106
      %1304 = vmatprep.subr.bf16.mxu0 0
      %1305 = vmatpush1.bf16.msra.mxu0 %v1109
      %1306 = vmatprep.subr.bf16.mxu0 0
      %1307 = vmatpush1.bf16.msra.mxu0 %v1112
      %1308 = vmatprep.subr.bf16.mxu0 0
      %1309 = vmatpush1.bf16.msra.mxu0 %v1115
      %1310 = vmatprep.subr.bf16.mxu0 0
      %1311 = vmatpush1.bf16.msra.mxu0 %v1118
      %1312 = vmatprep.subr.bf16.mxu0 0
      %1313 = vmatpush1.bf16.msra.mxu0 0
      %1314 = vmatprep.subr.bf16.mxu0 0
      %1315 = vmatpush1.bf16.msra.mxu0 0
      %1316 = vmatprep.subr.bf16.mxu0 0
      %1317 = vmatpush1.bf16.msra.mxu0 0
      %1318 = vmatprep.subr.bf16.mxu0 0
      %1319 = vmatpush1.bf16.msra.mxu0 0
      %1320 = vmatprep.subr.bf16.mxu0 0
      %1321 = vmatpush1.bf16.msra.mxu0 0
      %1322 = vmatprep.subr.bf16.mxu0 0
      %1323 = vmatpush1.bf16.msra.mxu0 0
      %1324 = vmatprep.subr.bf16.mxu0 0
      %1325 = vmatpush1.bf16.msra.mxu0 0
      %1326 = vmatprep.subr.bf16.mxu0 0
      %1327 = vmatpush1.bf16.msra.mxu0 0
      %1328 = vmatprep.mubr.bf16.mxu0 0
      %1329 = vmatmul.mubr.bf16.gmra.mrb[0].mxu0 %v991
      %v1330 = vpop.f32.mrb[0].mxu0
      %v1331 = vadd.f32 0.0, %v1330
      %v1332 = vpop.f32.mrb[0].mxu0
      %v1333 = vpop.f32.mrb[0].mxu0
      %v1334 = vadd.f32 0.0, %v1333
      %v1335 = vpop.f32.mrb[0].mxu0
      %1336 = vmatprep.mubr.bf16.mxu0 0
      %1337 = vmatmul.mubr.bf16.gmra.mrb[0].mxu0 %v992
      %v1338 = vpop.f32.mrb[0].mxu0
      %v1339 = vadd.f32 0.0, %v1338
      %v1340 = vpop.f32.mrb[0].mxu0
      %v1341 = vpop.f32.mrb[0].mxu0
      %v1342 = vadd.f32 0.0, %v1341
      %v1343 = vpop.f32.mrb[0].mxu0
      %1344 = vmatprep.mubr.bf16.mxu0 0
      %1345 = vmatmul.mubr.bf16.gmra.mrb[0].mxu0 %v993
      %v1346 = vpop.f32.mrb[0].mxu0
      %v1347 = vadd.f32 0.0, %v1346
      %v1348 = vpop.f32.mrb[0].mxu0
      %v1349 = vpop.f32.mrb[0].mxu0
      %v1350 = vadd.f32 0.0, %v1349
      %v1351 = vpop.f32.mrb[0].mxu0
      %1352 = vmatprep.mubr.bf16.mxu0 0
      %1353 = vmatmul.mubr.bf16.gmra.mrb[0].mxu0 %v994
      %v1354 = vpop.f32.mrb[0].mxu0
      %v1355 = vadd.f32 0.0, %v1354
      %v1356 = vpop.f32.mrb[0].mxu0
      %v1357 = vpop.f32.mrb[0].mxu0
      %v1358 = vadd.f32 0.0, %v1357
      %v1359 = vpop.f32.mrb[0].mxu0
      %1360 = vmatprep.mubr.bf16.mxu0 0
      %1361 = vmatmul.mubr.bf16.gmra.mrb[0].mxu0 %v995
      %v1362 = vpop.f32.mrb[0].mxu0
      %v1363 = vadd.f32 0.0, %v1362
      %v1364 = vpop.f32.mrb[0].mxu0
      %v1365 = vpop.f32.mrb[0].mxu0
      %v1366 = vadd.f32 0.0, %v1365
      %v1367 = vpop.f32.mrb[0].mxu0
      %1368 = vmatprep.mubr.bf16.mxu0 0
      %1369 = vmatmul.mubr.bf16.gmra.mrb[0].mxu0 %v996
      %v1370 = vpop.f32.mrb[0].mxu0
      %v1371 = vadd.f32 0.0, %v1370
      %v1372 = vpop.f32.mrb[0].mxu0
      %v1373 = vpop.f32.mrb[0].mxu0
      %v1374 = vadd.f32 0.0, %v1373
      %v1375 = vpop.f32.mrb[0].mxu0
      %1376 = vmatprep.mubr.bf16.mxu0 0
      %1377 = vmatmul.mubr.bf16.gmra.mrb[0].mxu0 %v997
      %v1378 = vpop.f32.mrb[0].mxu0
      %v1379 = vadd.f32 0.0, %v1378
      %v1380 = vpop.f32.mrb[0].mxu0
      %v1381 = vpop.f32.mrb[0].mxu0
      %v1382 = vadd.f32 0.0, %v1381
      %v1383 = vpop.f32.mrb[0].mxu0
      %1384 = vmatprep.mubr.bf16.mxu0 0
      %1385 = vmatmul.mubr.bf16.gmra.mrb[0].mxu0 %v998
      %v1386 = vpop.f32.mrb[0].mxu0
      %v1387 = vadd.f32 0.0, %v1386
      %v1388 = vpop.f32.mrb[0].mxu0
      %v1389 = vpop.f32.mrb[0].mxu0
      %v1390 = vadd.f32 0.0, %v1389
      %v1391 = vpop.f32.mrb[0].mxu0
      %1392 = vmatprep.mubr.bf16.mxu0 0
      %1393 = vmatmul.mubr.bf16.gmra.mrb[0].mxu0 %v999
      %v1394 = vpop.f32.mrb[0].mxu0
      %v1395 = vadd.f32 0.0, %v1394
      %v1396 = vpop.f32.mrb[0].mxu0
      %v1397 = vpop.f32.mrb[0].mxu0
      %v1398 = vadd.f32 0.0, %v1397
      %v1399 = vpop.f32.mrb[0].mxu0
      %1400 = vmatprep.mubr.bf16.mxu0 0
      %1401 = vmatmul.mubr.bf16.gmra.mrb[0].mxu0 %v1000
      %v1402 = vpop.f32.mrb[0].mxu0
      %v1403 = vadd.f32 0.0, %v1402
      %v1404 = vpop.f32.mrb[0].mxu0
      %v1405 = vpop.f32.mrb[0].mxu0
      %v1406 = vadd.f32 0.0, %v1405
      %v1407 = vpop.f32.mrb[0].mxu0
      %1408 = vmatprep.mubr.bf16.mxu0 0
      %1409 = vmatmul.mubr.bf16.gmra.mrb[0].mxu0 %v1001
      %v1410 = vpop.f32.mrb[0].mxu0
      %v1411 = vadd.f32 0.0, %v1410
      %v1412 = vpop.f32.mrb[0].mxu0
      %v1413 = vpop.f32.mrb[0].mxu0
      %v1414 = vadd.f32 0.0, %v1413
      %v1415 = vpop.f32.mrb[0].mxu0
      %1416 = vmatprep.mubr.bf16.mxu0 0
      %1417 = vmatmul.mubr.bf16.gmra.mrb[0].mxu0 %v1002
      %v1418 = vpop.f32.mrb[0].mxu0
      %v1419 = vadd.f32 0.0, %v1418
      %v1420 = vpop.f32.mrb[0].mxu0
      %v1421 = vpop.f32.mrb[0].mxu0
      %v1422 = vadd.f32 0.0, %v1421
      %v1423 = vpop.f32.mrb[0].mxu0
      %1424 = vdwg.mxu0
      %v1425 = vld [vmem:[#allocation2] sm:$0xff]
      %v1426 = vld [vmem:[#allocation2 + $0x8] sm:$0xff]
      %v1427 = vld [vmem:[#allocation2 + $0x10] sm:$0xff]
      %v1428 = vld [vmem:[#allocation2 + $0x18] sm:$0xff]
      %v1429 = vld [vmem:[#allocation2 + $0x20] sm:$0xff]
      %v1430 = vld [vmem:[#allocation2 + $0x28] sm:$0xff]
      %v1431 = vld [vmem:[#allocation2 + $0x30] sm:$0xff]
      %v1432 = vld [vmem:[#allocation2 + $0x38] sm:$0xff]
      %v1433 = vld [vmem:[#allocation2 + $0x40] sm:$0xff]
      %v1434 = vld [vmem:[#allocation2 + $0x48] sm:$0xff]
      %v1435 = vld [vmem:[#allocation2 + $0x50] sm:$0xff]
      %v1436 = vld [vmem:[#allocation2 + $0x58] sm:$0xff]
      %v1437 = vld [vmem:[#allocation2 + $0x60] sm:$0xff]
      %v1438 = vld [vmem:[#allocation2 + $0x68] sm:$0xff]
      %v1439 = vld [vmem:[#allocation2 + $0x70] sm:$0xff]
      %v1440 = vld [vmem:[#allocation2 + $0x78] sm:$0xff]
      %v1441 = vld [vmem:[#allocation2 + $0x80] sm:$0xff]
      %v1442 = vld [vmem:[#allocation2 + $0x88] sm:$0xff]
      %v1443 = vld [vmem:[#allocation2 + $0x90] sm:$0xff]
      %v1444 = vld [vmem:[#allocation2 + $0x98] sm:$0xff]
      %v1445 = vld [vmem:[#allocation2 + $0xa0] sm:$0xff]
      %v1446 = vld [vmem:[#allocation2 + $0xa8] sm:$0xff]
      %v1447 = vld [vmem:[#allocation2 + $0xb0] sm:$0xff]
      %v1448 = vld [vmem:[#allocation2 + $0xb8] sm:$0xff]
      %v1449 = vld [vmem:[#allocation2 + $0xc0] sm:$0xff]
      %v1450 = vld [vmem:[#allocation2 + $0xc8] sm:$0xff]
      %v1451 = vld [vmem:[#allocation2 + $0xd0] sm:$0xff]
      %v1452 = vld [vmem:[#allocation2 + $0xd8] sm:$0xff]
      %v1453 = vld [vmem:[#allocation2 + $0xe0] sm:$0xff]
      %v1454 = vld [vmem:[#allocation2 + $0xe8] sm:$0xff]
      %v1455 = vld [vmem:[#allocation2 + $0xf0] sm:$0xff]
      %v1456 = vld [vmem:[#allocation2 + $0xf8] sm:$0xff]
      %v1457 = vld [vmem:[#allocation2 + $0x100] sm:$0xff]
      %v1458 = vld [vmem:[#allocation2 + $0x108] sm:$0xff]
      %v1459 = vld [vmem:[#allocation2 + $0x110] sm:$0xff]
      %v1460 = vld [vmem:[#allocation2 + $0x118] sm:$0xff]
      %v1461 = vld [vmem:[#allocation2 + $0x120] sm:$0xff]
      %v1462 = vld [vmem:[#allocation2 + $0x128] sm:$0xff]
      %v1463 = vld [vmem:[#allocation2 + $0x130] sm:$0xff]
      %v1464 = vld [vmem:[#allocation2 + $0x138] sm:$0xff]
      %v1465 = vld [vmem:[#allocation2 + $0x140] sm:$0xff]
      %v1466 = vld [vmem:[#allocation2 + $0x148] sm:$0xff]
      %v1467 = vld [vmem:[#allocation2 + $0x150] sm:$0xff]
      %v1468 = vld [vmem:[#allocation2 + $0x158] sm:$0xff]
      %v1469 = vld [vmem:[#allocation2 + $0x160] sm:$0xff]
      %v1470 = vld [vmem:[#allocation2 + $0x168] sm:$0xff]
      %v1471 = vld [vmem:[#allocation2 + $0x170] sm:$0xff]
      %v1472 = vld [vmem:[#allocation2 + $0x178] sm:$0xff]
      %v1473 = vld [vmem:[#allocation2 + $0x180] sm:$0xff]
      %v1474 = vld [vmem:[#allocation2 + $0x188] sm:$0xff]
      %v1475 = vld [vmem:[#allocation2 + $0x190] sm:$0xff]
      %v1476 = vld [vmem:[#allocation2 + $0x198] sm:$0xff]
      %v1477 = vld [vmem:[#allocation2 + $0x1a0] sm:$0xff]
      %v1478 = vld [vmem:[#allocation2 + $0x1a8] sm:$0xff]
      %v1479 = vld [vmem:[#allocation2 + $0x1b0] sm:$0xff]
      %v1480 = vld [vmem:[#allocation2 + $0x1b8] sm:$0xff]
      %v1481 = vld [vmem:[#allocation2 + $0x1c0] sm:$0xff]
      %v1482 = vld [vmem:[#allocation2 + $0x1c8] sm:$0xff]
      %v1483 = vld [vmem:[#allocation2 + $0x1d0] sm:$0xff]
      %v1484 = vld [vmem:[#allocation2 + $0x1d8] sm:$0xff]
      %v1485 = vld [vmem:[#allocation2 + $0x1e0] sm:$0xff]
      %v1486 = vld [vmem:[#allocation2 + $0x1e8] sm:$0xff]
      %v1487 = vld [vmem:[#allocation2 + $0x1f0] sm:$0xff]
      %v1488 = vld [vmem:[#allocation2 + $0x1f8] sm:$0xff]
      %v1489 = vld [vmem:[#allocation2 + $0x200] sm:$0xff]
      %v1490 = vld [vmem:[#allocation2 + $0x208] sm:$0xff]
      %v1491 = vld [vmem:[#allocation2 + $0x210] sm:$0xff]
      %v1492 = vld [vmem:[#allocation2 + $0x218] sm:$0xff]
      %v1493 = vld [vmem:[#allocation2 + $0x220] sm:$0xff]
      %v1494 = vld [vmem:[#allocation2 + $0x228] sm:$0xff]
      %v1495 = vld [vmem:[#allocation2 + $0x230] sm:$0xff]
      %v1496 = vld [vmem:[#allocation2 + $0x238] sm:$0xff]
      %v1497 = vadd.f32 %v1425, %v1178
      %v1498 = vadd.f32 %v1426, %v1180
      %v1499 = vadd.f32 %v1427, %v1331
      %v1500 = vadd.f32 %v1428, %v1182
      %v1501 = vadd.f32 %v1429, %v1184
      %v1502 = vadd.f32 %v1430, %v1334
      %v1503 = vadd.f32 %v1431, %v1188
      %v1504 = vadd.f32 %v1432, %v1190
      %v1505 = vadd.f32 %v1433, %v1339
      %v1506 = vadd.f32 %v1434, %v1192
      %v1507 = vadd.f32 %v1435, %v1194
      %v1508 = vadd.f32 %v1436, %v1342
      %v1509 = vadd.f32 %v1437, %v1198
      %v1510 = vadd.f32 %v1438, %v1200
      %v1511 = vadd.f32 %v1439, %v1347
      %v1512 = vadd.f32 %v1440, %v1202
      %v1513 = vadd.f32 %v1441, %v1204
      %v1514 = vadd.f32 %v1442, %v1350
      %v1515 = vadd.f32 %v1443, %v1208
      %v1516 = vadd.f32 %v1444, %v1210
      %v1517 = vadd.f32 %v1445, %v1355
      %v1518 = vadd.f32 %v1446, %v1212
      %v1519 = vadd.f32 %v1447, %v1214
      %v1520 = vadd.f32 %v1448, %v1358
      %v1521 = vadd.f32 %v1449, %v1218
      %v1522 = vadd.f32 %v1450, %v1220
      %v1523 = vadd.f32 %v1451, %v1363
      %v1524 = vadd.f32 %v1452, %v1222
      %v1525 = vadd.f32 %v1453, %v1224
      %v1526 = vadd.f32 %v1454, %v1366
      %v1527 = vadd.f32 %v1455, %v1228
      %v1528 = vadd.f32 %v1456, %v1230
      %v1529 = vadd.f32 %v1457, %v1371
      %v1530 = vadd.f32 %v1458, %v1232
      %v1531 = vadd.f32 %v1459, %v1234
      %v1532 = vadd.f32 %v1460, %v1374
      %v1533 = vadd.f32 %v1461, %v1238
      %v1534 = vadd.f32 %v1462, %v1240
      %v1535 = vadd.f32 %v1463, %v1379
      %v1536 = vadd.f32 %v1464, %v1242
      %v1537 = vadd.f32 %v1465, %v1244
      %v1538 = vadd.f32 %v1466, %v1382
      %v1539 = vadd.f32 %v1467, %v1248
      %v1540 = vadd.f32 %v1468, %v1250
      %v1541 = vadd.f32 %v1469, %v1387
      %v1542 = vadd.f32 %v1470, %v1252
      %v1543 = vadd.f32 %v1471, %v1254
      %v1544 = vadd.f32 %v1472, %v1390
      %v1545 = vadd.f32 %v1473, %v1258
      %v1546 = vadd.f32 %v1474, %v1260
      %v1547 = vadd.f32 %v1475, %v1395
      %v1548 = vadd.f32 %v1476, %v1262
      %v1549 = vadd.f32 %v1477, %v1264
      %v1550 = vadd.f32 %v1478, %v1398
      %v1551 = vadd.f32 %v1479, %v1268
      %v1552 = vadd.f32 %v1480, %v1270
      %v1553 = vadd.f32 %v1481, %v1403
      %v1554 = vadd.f32 %v1482, %v1272
      %v1555 = vadd.f32 %v1483, %v1274
      %v1556 = vadd.f32 %v1484, %v1406
      %v1557 = vadd.f32 %v1485, %v1278
      %v1558 = vadd.f32 %v1486, %v1280
      %v1559 = vadd.f32 %v1487, %v1411
      %v1560 = vadd.f32 %v1488, %v1282
      %v1561 = vadd.f32 %v1489, %v1284
      %v1562 = vadd.f32 %v1490, %v1414
      %v1563 = vadd.f32 %v1491, %v1288
      %v1564 = vadd.f32 %v1492, %v1290
      %v1565 = vadd.f32 %v1493, %v1419
      %v1566 = vadd.f32 %v1494, %v1292
      %v1567 = vadd.f32 %v1495, %v1294
      %v1568 = vadd.f32 %v1496, %v1422
      %1569 = vst [vmem:[#allocation2] sm:$0xff] %v1497
      %1570 = vst [vmem:[#allocation2 + $0x8] sm:$0xff] %v1498
      %1571 = vst [vmem:[#allocation2 + $0x10] sm:$0xff] %v1499
      %1572 = vst [vmem:[#allocation2 + $0x18] sm:$0xff] %v1500
      %1573 = vst [vmem:[#allocation2 + $0x20] sm:$0xff] %v1501
      %1574 = vst [vmem:[#allocation2 + $0x28] sm:$0xff] %v1502
      %1575 = vst [vmem:[#allocation2 + $0x30] sm:$0xff] %v1503
      %1576 = vst [vmem:[#allocation2 + $0x38] sm:$0xff] %v1504
      %1577 = vst [vmem:[#allocation2 + $0x40] sm:$0xff] %v1505
      %1578 = vst [vmem:[#allocation2 + $0x48] sm:$0xff] %v1506
      %1579 = vst [vmem:[#allocation2 + $0x50] sm:$0xff] %v1507
      %1580 = vst [vmem:[#allocation2 + $0x58] sm:$0xff] %v1508
      %1581 = vst [vmem:[#allocation2 + $0x60] sm:$0xff] %v1509
      %1582 = vst [vmem:[#allocation2 + $0x68] sm:$0xff] %v1510
      %1583 = vst [vmem:[#allocation2 + $0x70] sm:$0xff] %v1511
      %1584 = vst [vmem:[#allocation2 + $0x78] sm:$0xff] %v1512
      %1585 = vst [vmem:[#allocation2 + $0x80] sm:$0xff] %v1513
      %1586 = vst [vmem:[#allocation2 + $0x88] sm:$0xff] %v1514
      %1587 = vst [vmem:[#allocation2 + $0x90] sm:$0xff] %v1515
      %1588 = vst [vmem:[#allocation2 + $0x98] sm:$0xff] %v1516
      %1589 = vst [vmem:[#allocation2 + $0xa0] sm:$0xff] %v1517
      %1590 = vst [vmem:[#allocation2 + $0xa8] sm:$0xff] %v1518
      %1591 = vst [vmem:[#allocation2 + $0xb0] sm:$0xff] %v1519
      %1592 = vst [vmem:[#allocation2 + $0xb8] sm:$0xff] %v1520
      %1593 = vst [vmem:[#allocation2 + $0xc0] sm:$0xff] %v1521
      %1594 = vst [vmem:[#allocation2 + $0xc8] sm:$0xff] %v1522
      %1595 = vst [vmem:[#allocation2 + $0xd0] sm:$0xff] %v1523
      %1596 = vst [vmem:[#allocation2 + $0xd8] sm:$0xff] %v1524
      %1597 = vst [vmem:[#allocation2 + $0xe0] sm:$0xff] %v1525
      %1598 = vst [vmem:[#allocation2 + $0xe8] sm:$0xff] %v1526
      %1599 = vst [vmem:[#allocation2 + $0xf0] sm:$0xff] %v1527
      %1600 = vst [vmem:[#allocation2 + $0xf8] sm:$0xff] %v1528
      %1601 = vst [vmem:[#allocation2 + $0x100] sm:$0xff] %v1529
      %1602 = vst [vmem:[#allocation2 + $0x108] sm:$0xff] %v1530
      %1603 = vst [vmem:[#allocation2 + $0x110] sm:$0xff] %v1531
      %1604 = vst [vmem:[#allocation2 + $0x118] sm:$0xff] %v1532
      %1605 = vst [vmem:[#allocation2 + $0x120] sm:$0xff] %v1533
      %1606 = vst [vmem:[#allocation2 + $0x128] sm:$0xff] %v1534
      %1607 = vst [vmem:[#allocation2 + $0x130] sm:$0xff] %v1535
      %1608 = vst [vmem:[#allocation2 + $0x138] sm:$0xff] %v1536
      %1609 = vst [vmem:[#allocation2 + $0x140] sm:$0xff] %v1537
      %1610 = vst [vmem:[#allocation2 + $0x148] sm:$0xff] %v1538
      %1611 = vst [vmem:[#allocation2 + $0x150] sm:$0xff] %v1539
      %1612 = vst [vmem:[#allocation2 + $0x158] sm:$0xff] %v1540
      %1613 = vst [vmem:[#allocation2 + $0x160] sm:$0xff] %v1541
      %1614 = vst [vmem:[#allocation2 + $0x168] sm:$0xff] %v1542
      %1615 = vst [vmem:[#allocation2 + $0x170] sm:$0xff] %v1543
      %1616 = vst [vmem:[#allocation2 + $0x178] sm:$0xff] %v1544
      %1617 = vst [vmem:[#allocation2 + $0x180] sm:$0xff] %v1545
      %1618 = vst [vmem:[#allocation2 + $0x188] sm:$0xff] %v1546
      %1619 = vst [vmem:[#allocation2 + $0x190] sm:$0xff] %v1547
      %1620 = vst [vmem:[#allocation2 + $0x198] sm:$0xff] %v1548
      %1621 = vst [vmem:[#allocation2 + $0x1a0] sm:$0xff] %v1549
      %1622 = vst [vmem:[#allocation2 + $0x1a8] sm:$0xff] %v1550
      %1623 = vst [vmem:[#allocation2 + $0x1b0] sm:$0xff] %v1551
      %1624 = vst [vmem:[#allocation2 + $0x1b8] sm:$0xff] %v1552
      %1625 = vst [vmem:[#allocation2 + $0x1c0] sm:$0xff] %v1553
      %1626 = vst [vmem:[#allocation2 + $0x1c8] sm:$0xff] %v1554
      %1627 = vst [vmem:[#allocation2 + $0x1d0] sm:$0xff] %v1555
      %1628 = vst [vmem:[#allocation2 + $0x1d8] sm:$0xff] %v1556
      %1629 = vst [vmem:[#allocation2 + $0x1e0] sm:$0xff] %v1557
      %1630 = vst [vmem:[#allocation2 + $0x1e8] sm:$0xff] %v1558
      %1631 = vst [vmem:[#allocation2 + $0x1f0] sm:$0xff] %v1559
      %1632 = vst [vmem:[#allocation2 + $0x1f8] sm:$0xff] %v1560
      %1633 = vst [vmem:[#allocation2 + $0x200] sm:$0xff] %v1561
      %1634 = vst [vmem:[#allocation2 + $0x208] sm:$0xff] %v1562
      %1635 = vst [vmem:[#allocation2 + $0x210] sm:$0xff] %v1563
      %1636 = vst [vmem:[#allocation2 + $0x218] sm:$0xff] %v1564
      %1637 = vst [vmem:[#allocation2 + $0x220] sm:$0xff] %v1565
      %1638 = vst [vmem:[#allocation2 + $0x228] sm:$0xff] %v1566
      %1639 = vst [vmem:[#allocation2 + $0x230] sm:$0xff] %v1567
      %1640 = vst [vmem:[#allocation2 + $0x238] sm:$0xff] %v1568
      %s1641 = scalar_lea.vmem %s248, 24
      %v1642 = vld [vmem:[%s1641] sm:$0xf]
      %v1643 = vld [vmem:[%s1641 + $0x4] sm:$0xf]
      %v1644 = vld [vmem:[%s1641 + $0x8] sm:$0xf]
      %v1645 = vld [vmem:[%s1641 + $0xc] sm:$0xf]
      %v1646 = vld [vmem:[%s1641 + $0x10] sm:$0xf]
      %v1647 = vld [vmem:[%s1641 + $0x14] sm:$0xf]
      %v1648 = vld [vmem:[%s1641 + $0x18] sm:$0xf]
      %v1649 = vld [vmem:[%s1641 + $0x1c] sm:$0xf]
      %v1650 = vld [vmem:[%s1641 + $0x20] sm:$0xf]
      %v1651 = vld [vmem:[%s1641 + $0x24] sm:$0xf]
      %v1652 = vld [vmem:[%s1641 + $0x28] sm:$0xf]
      %v1653 = vld [vmem:[%s1641 + $0x2c] sm:$0xf]
      %v1654 = vld [vmem:[%s1641 + $0x30] sm:$0xf]
      %v1655 = vld [vmem:[%s1641 + $0x34] sm:$0xf]
      %v1656 = vld [vmem:[%s1641 + $0x38] sm:$0xf]
      %v1657 = vld [vmem:[%s1641 + $0x3c] sm:$0xf]
      %v1658 = vld [vmem:[%s1641 + $0x40] sm:$0xf]
      %v1659 = vld [vmem:[%s1641 + $0x44] sm:$0xf]
      %v1660 = vld [vmem:[%s1641 + $0x48] sm:$0xf]
      %v1661 = vld [vmem:[%s1641 + $0x4c] sm:$0xf]
      %v1662 = vld [vmem:[%s1641 + $0x50] sm:$0xf]
      %v1663 = vld [vmem:[%s1641 + $0x54] sm:$0xf]
      %v1664 = vld [vmem:[%s1641 + $0x58] sm:$0xf]
      %v1665 = vld [vmem:[%s1641 + $0x5c] sm:$0xf]
      %s1666 = scalar_lea.vmem %s1, 384
      %v1667 = vld [vmem:[%s1666] sm:$0xff]
      %v1668 = vld [vmem:[%s1666 + $0x8] sm:$0xf]
      %v1669 = vld [vmem:[%s1666 + $0xc] sm:$0xff]
      %v1670 = vld [vmem:[%s1666 + $0x14] sm:$0xf]
      %v1671 = vld [vmem:[%s1666 + $0x18] sm:$0xff]
      %v1672 = vld [vmem:[%s1666 + $0x20] sm:$0xf]
      %v1673 = vld [vmem:[%s1666 + $0x24] sm:$0xff]
      %v1674 = vld [vmem:[%s1666 + $0x2c] sm:$0xf]
      %v1675 = vld [vmem:[%s1666 + $0x30] sm:$0xff]
      %v1676 = vld [vmem:[%s1666 + $0x38] sm:$0xf]
      %v1677 = vld [vmem:[%s1666 + $0x3c] sm:$0xff]
      %v1678 = vld [vmem:[%s1666 + $0x44] sm:$0xf]
      %v1679 = vld [vmem:[%s1666 + $0x48] sm:$0xff]
      %v1680 = vld [vmem:[%s1666 + $0x50] sm:$0xf]
      %v1681 = vld [vmem:[%s1666 + $0x54] sm:$0xff]
      %v1682 = vld [vmem:[%s1666 + $0x5c] sm:$0xf]
      %v1683 = vld [vmem:[%s1666 + $0x60] sm:$0xff]
      %v1684 = vld [vmem:[%s1666 + $0x68] sm:$0xf]
      %v1685 = vld [vmem:[%s1666 + $0x6c] sm:$0xff]
      %v1686 = vld [vmem:[%s1666 + $0x74] sm:$0xf]
      %v1687 = vld [vmem:[%s1666 + $0x78] sm:$0xff]
      %v1688 = vld [vmem:[%s1666 + $0x80] sm:$0xf]
      %v1689 = vld [vmem:[%s1666 + $0x84] sm:$0xff]
      %v1690 = vld [vmem:[%s1666 + $0x8c] sm:$0xf]
      %v1691 = vld [vmem:[%s1666 + $0x90] sm:$0xff]
      %v1692 = vld [vmem:[%s1666 + $0x98] sm:$0xf]
      %v1693 = vld [vmem:[%s1666 + $0x9c] sm:$0xff]
      %v1694 = vld [vmem:[%s1666 + $0xa4] sm:$0xf]
      %v1695 = vld [vmem:[%s1666 + $0xa8] sm:$0xff]
      %v1696 = vld [vmem:[%s1666 + $0xb0] sm:$0xf]
      %v1697 = vld [vmem:[%s1666 + $0xb4] sm:$0xff]
      %v1698 = vld [vmem:[%s1666 + $0xbc] sm:$0xf]
      %v1723 = vunpack.c.l.b16 %v1642
      %v1724 = vunpack.c.l.b16 %v1643
      %v1725 = vunpack.c.l.b16 %v1644
      %v1726 = vunpack.c.l.b16 %v1645
      %v1727 = vunpack.c.l.b16 %v1646
      %v1728 = vunpack.c.l.b16 %v1647
      %v1729 = vunpack.c.l.b16 %v1648
      %v1730 = vunpack.c.l.b16 %v1649
      %v1731 = vunpack.c.l.b16 %v1650
      %v1732 = vunpack.c.l.b16 %v1651
      %v1733 = vunpack.c.l.b16 %v1652
      %v1734 = vunpack.c.l.b16 %v1653
      %v1735 = vunpack.c.l.b16 %v1654
      %v1736 = vunpack.c.l.b16 %v1655
      %v1737 = vunpack.c.l.b16 %v1656
      %v1738 = vunpack.c.l.b16 %v1657
      %v1739 = vunpack.c.l.b16 %v1658
      %v1740 = vunpack.c.l.b16 %v1659
      %v1741 = vunpack.c.l.b16 %v1660
      %v1742 = vunpack.c.l.b16 %v1661
      %v1743 = vunpack.c.l.b16 %v1662
      %v1744 = vunpack.c.l.b16 %v1663
      %v1745 = vunpack.c.l.b16 %v1664
      %v1746 = vunpack.c.l.b16 %v1665
      %v1747 = vpack.c.b16 %v1724, %v1723
      %v1748 = vpack.c.b16 %v1726, %v1725
      %v1749 = vpack.c.b16 %v1728, %v1727
      %v1750 = vpack.c.b16 %v1730, %v1729
      %v1751 = vpack.c.b16 %v1732, %v1731
      %v1752 = vpack.c.b16 %v1734, %v1733
      %v1753 = vpack.c.b16 %v1736, %v1735
      %v1754 = vpack.c.b16 %v1738, %v1737
      %v1755 = vpack.c.b16 %v1740, %v1739
      %v1756 = vpack.c.b16 %v1742, %v1741
      %v1757 = vpack.c.b16 %v1744, %v1743
      %v1758 = vpack.c.b16 %v1746, %v1745
      %v1803 = vunpack.c.l.b16 %v1667
      %v1804 = vunpack.c.h.b16 %v1667
      %v1805 = vunpack.c.l.b16 %v1668
      %v1806 = vunpack.c.l.b16 %v1669
      %v1807 = vunpack.c.h.b16 %v1669
      %v1808 = vunpack.c.l.b16 %v1670
      %v1809 = vunpack.c.l.b16 %v1671
      %v1810 = vunpack.c.h.b16 %v1671
      %v1811 = vunpack.c.l.b16 %v1672
      %v1812 = vunpack.c.l.b16 %v1673
      %v1813 = vunpack.c.h.b16 %v1673
      %v1814 = vunpack.c.l.b16 %v1674
      %v1815 = vunpack.c.l.b16 %v1675
      %v1816 = vunpack.c.h.b16 %v1675
      %v1817 = vunpack.c.l.b16 %v1676
      %v1818 = vunpack.c.l.b16 %v1677
      %v1819 = vunpack.c.h.b16 %v1677
      %v1820 = vunpack.c.l.b16 %v1678
      %v1821 = vunpack.c.l.b16 %v1679
      %v1822 = vunpack.c.h.b16 %v1679
      %v1823 = vunpack.c.l.b16 %v1680
      %v1824 = vunpack.c.l.b16 %v1681
      %v1825 = vunpack.c.h.b16 %v1681
      %v1826 = vunpack.c.l.b16 %v1682
      %v1827 = vunpack.c.l.b16 %v1683
      %v1828 = vunpack.c.h.b16 %v1683
      %v1829 = vunpack.c.l.b16 %v1684
      %v1830 = vunpack.c.l.b16 %v1685
      %v1831 = vunpack.c.h.b16 %v1685
      %v1832 = vunpack.c.l.b16 %v1686
      %v1833 = vunpack.c.l.b16 %v1687
      %v1834 = vunpack.c.h.b16 %v1687
      %v1835 = vunpack.c.l.b16 %v1688
      %v1836 = vunpack.c.l.b16 %v1689
      %v1837 = vunpack.c.h.b16 %v1689
      %v1838 = vunpack.c.l.b16 %v1690
      %v1839 = vunpack.c.l.b16 %v1691
      %v1840 = vunpack.c.h.b16 %v1691
      %v1841 = vunpack.c.l.b16 %v1692
      %v1842 = vunpack.c.l.b16 %v1693
      %v1843 = vunpack.c.h.b16 %v1693
      %v1844 = vunpack.c.l.b16 %v1694
      %v1845 = vunpack.c.l.b16 %v1695
      %v1846 = vunpack.c.h.b16 %v1695
      %v1847 = vunpack.c.l.b16 %v1696
      %v1848 = vunpack.c.l.b16 %v1697
      %v1849 = vunpack.c.h.b16 %v1697
      %v1850 = vunpack.c.l.b16 %v1698
      %v1851 = vpack.c.b16 %v1806, %v1803
      %v1852 = vpack.c.b16 %v1807, %v1804
      %v1853 = vpack.c.b16 %v1808, %v1805
      %v1854 = vpack.c.b16 %v1812, %v1809
      %v1855 = vpack.c.b16 %v1813, %v1810
      %v1856 = vpack.c.b16 %v1814, %v1811
      %v1857 = vpack.c.b16 %v1818, %v1815
      %v1858 = vpack.c.b16 %v1819, %v1816
      %v1859 = vpack.c.b16 %v1820, %v1817
      %v1860 = vpack.c.b16 %v1824, %v1821
      %v1861 = vpack.c.b16 %v1825, %v1822
      %v1862 = vpack.c.b16 %v1826, %v1823
      %v1863 = vpack.c.b16 %v1830, %v1827
      %v1864 = vpack.c.b16 %v1831, %v1828
      %v1865 = vpack.c.b16 %v1832, %v1829
      %v1866 = vpack.c.b16 %v1836, %v1833
      %v1867 = vpack.c.b16 %v1837, %v1834
      %v1868 = vpack.c.b16 %v1838, %v1835
      %v1869 = vpack.c.b16 %v1842, %v1839
      %v1870 = vpack.c.b16 %v1843, %v1840
      %v1871 = vpack.c.b16 %v1844, %v1841
      %v1872 = vpack.c.b16 %v1848, %v1845
      %v1873 = vpack.c.b16 %v1849, %v1846
      %v1874 = vpack.c.b16 %v1850, %v1847
      %1899 = vmatprep.subr.bf16.mxu0 %v1852
      %1900 = vmatpush1.bf16.msra.mxu0 %v1851
      %1901 = vmatprep.subr.bf16.mxu0 %v1855
      %1902 = vmatpush1.bf16.msra.mxu0 %v1854
      %1903 = vmatprep.subr.bf16.mxu0 %v1858
      %1904 = vmatpush1.bf16.msra.mxu0 %v1857
      %1905 = vmatprep.subr.bf16.mxu0 %v1861
      %1906 = vmatpush1.bf16.msra.mxu0 %v1860
      %1907 = vmatprep.subr.bf16.mxu0 %v1864
      %1908 = vmatpush1.bf16.msra.mxu0 %v1863
      %1909 = vmatprep.subr.bf16.mxu0 %v1867
      %1910 = vmatpush1.bf16.msra.mxu0 %v1866
      %1911 = vmatprep.subr.bf16.mxu0 %v1870
      %1912 = vmatpush1.bf16.msra.mxu0 %v1869
      %1913 = vmatprep.subr.bf16.mxu0 %v1873
      %1914 = vmatpush1.bf16.msra.mxu0 %v1872
      %1915 = vmatprep.subr.bf16.mxu0 0
      %1916 = vmatpush1.bf16.msra.mxu0 0
      %1917 = vmatprep.subr.bf16.mxu0 0
      %1918 = vmatpush1.bf16.msra.mxu0 0
      %1919 = vmatprep.subr.bf16.mxu0 0
      %1920 = vmatpush1.bf16.msra.mxu0 0
      %1921 = vmatprep.subr.bf16.mxu0 0
      %1922 = vmatpush1.bf16.msra.mxu0 0
      %1923 = vmatprep.subr.bf16.mxu0 0
      %1924 = vmatpush1.bf16.msra.mxu0 0
      %1925 = vmatprep.subr.bf16.mxu0 0
      %1926 = vmatpush1.bf16.msra.mxu0 0
      %1927 = vmatprep.subr.bf16.mxu0 0
      %1928 = vmatpush1.bf16.msra.mxu0 0
      %1929 = vmatprep.subr.bf16.mxu0 0
      %1930 = vmatpush1.bf16.msra.mxu0 0
      %1931 = vmatprep.mubr.bf16.mxu0 0
      %1932 = vmatmul.mubr.bf16.gmra.mrb[0].mxu0 %v1747
      %v1933 = vpop.f32.mrb[0].mxu0
      %v1934 = vadd.f32 0.0, %v1933
      %v1935 = vpop.f32.mrb[0].mxu0
      %v1936 = vadd.f32 0.0, %v1935
      %v1937 = vpop.f32.mrb[0].mxu0
      %v1938 = vadd.f32 0.0, %v1937
      %v1939 = vpop.f32.mrb[0].mxu0
      %v1940 = vadd.f32 0.0, %v1939
      %1941 = vmatprep.mubr.bf16.mxu0 0
      %1942 = vmatmul.mubr.bf16.gmra.mrb[0].mxu0 %v1748
      %v1943 = vpop.f32.mrb[0].mxu0
      %v1944 = vadd.f32 0.0, %v1943
      %v1945 = vpop.f32.mrb[0].mxu0
      %v1946 = vadd.f32 0.0, %v1945
      %v1947 = vpop.f32.mrb[0].mxu0
      %v1948 = vadd.f32 0.0, %v1947
      %v1949 = vpop.f32.mrb[0].mxu0
      %v1950 = vadd.f32 0.0, %v1949
      %1951 = vmatprep.mubr.bf16.mxu0 0
      %1952 = vmatmul.mubr.bf16.gmra.mrb[0].mxu0 %v1749
      %v1953 = vpop.f32.mrb[0].mxu0
      %v1954 = vadd.f32 0.0, %v1953
      %v1955 = vpop.f32.mrb[0].mxu0
      %v1956 = vadd.f32 0.0, %v1955
      %v1957 = vpop.f32.mrb[0].mxu0
      %v1958 = vadd.f32 0.0, %v1957
      %v1959 = vpop.f32.mrb[0].mxu0
      %v1960 = vadd.f32 0.0, %v1959
      %1961 = vmatprep.mubr.bf16.mxu0 0
      %1962 = vmatmul.mubr.bf16.gmra.mrb[0].mxu0 %v1750
      %v1963 = vpop.f32.mrb[0].mxu0
      %v1964 = vadd.f32 0.0, %v1963
      %v1965 = vpop.f32.mrb[0].mxu0
      %v1966 = vadd.f32 0.0, %v1965
      %v1967 = vpop.f32.mrb[0].mxu0
      %v1968 = vadd.f32 0.0, %v1967
      %v1969 = vpop.f32.mrb[0].mxu0
      %v1970 = vadd.f32 0.0, %v1969
      %1971 = vmatprep.mubr.bf16.mxu0 0
      %1972 = vmatmul.mubr.bf16.gmra.mrb[0].mxu0 %v1751
      %v1973 = vpop.f32.mrb[0].mxu0
      %v1974 = vadd.f32 0.0, %v1973
      %v1975 = vpop.f32.mrb[0].mxu0
      %v1976 = vadd.f32 0.0, %v1975
      %v1977 = vpop.f32.mrb[0].mxu0
      %v1978 = vadd.f32 0.0, %v1977
      %v1979 = vpop.f32.mrb[0].mxu0
      %v1980 = vadd.f32 0.0, %v1979
      %1981 = vmatprep.mubr.bf16.mxu0 0
      %1982 = vmatmul.mubr.bf16.gmra.mrb[0].mxu0 %v1752
      %v1983 = vpop.f32.mrb[0].mxu0
      %v1984 = vadd.f32 0.0, %v1983
      %v1985 = vpop.f32.mrb[0].mxu0
      %v1986 = vadd.f32 0.0, %v1985
      %v1987 = vpop.f32.mrb[0].mxu0
      %v1988 = vadd.f32 0.0, %v1987
      %v1989 = vpop.f32.mrb[0].mxu0
      %v1990 = vadd.f32 0.0, %v1989
      %1991 = vmatprep.mubr.bf16.mxu0 0
      %1992 = vmatmul.mubr.bf16.gmra.mrb[0].mxu0 %v1753
      %v1993 = vpop.f32.mrb[0].mxu0
      %v1994 = vadd.f32 0.0, %v1993
      %v1995 = vpop.f32.mrb[0].mxu0
      %v1996 = vadd.f32 0.0, %v1995
      %v1997 = vpop.f32.mrb[0].mxu0
      %v1998 = vadd.f32 0.0, %v1997
      %v1999 = vpop.f32.mrb[0].mxu0
      %v2000 = vadd.f32 0.0, %v1999
      %2001 = vmatprep.mubr.bf16.mxu0 0
      %2002 = vmatmul.mubr.bf16.gmra.mrb[0].mxu0 %v1754
      %v2003 = vpop.f32.mrb[0].mxu0
      %v2004 = vadd.f32 0.0, %v2003
      %v2005 = vpop.f32.mrb[0].mxu0
      %v2006 = vadd.f32 0.0, %v2005
      %v2007 = vpop.f32.mrb[0].mxu0
      %v2008 = vadd.f32 0.0, %v2007
      %v2009 = vpop.f32.mrb[0].mxu0
      %v2010 = vadd.f32 0.0, %v2009
      %2011 = vmatprep.mubr.bf16.mxu0 0
      %2012 = vmatmul.mubr.bf16.gmra.mrb[0].mxu0 %v1755
      %v2013 = vpop.f32.mrb[0].mxu0
      %v2014 = vadd.f32 0.0, %v2013
      %v2015 = vpop.f32.mrb[0].mxu0
      %v2016 = vadd.f32 0.0, %v2015
      %v2017 = vpop.f32.mrb[0].mxu0
      %v2018 = vadd.f32 0.0, %v2017
      %v2019 = vpop.f32.mrb[0].mxu0
      %v2020 = vadd.f32 0.0, %v2019
      %2021 = vmatprep.mubr.bf16.mxu0 0
      %2022 = vmatmul.mubr.bf16.gmra.mrb[0].mxu0 %v1756
      %v2023 = vpop.f32.mrb[0].mxu0
      %v2024 = vadd.f32 0.0, %v2023
      %v2025 = vpop.f32.mrb[0].mxu0
      %v2026 = vadd.f32 0.0, %v2025
      %v2027 = vpop.f32.mrb[0].mxu0
      %v2028 = vadd.f32 0.0, %v2027
      %v2029 = vpop.f32.mrb[0].mxu0
      %v2030 = vadd.f32 0.0, %v2029
      %2031 = vmatprep.mubr.bf16.mxu0 0
      %2032 = vmatmul.mubr.bf16.gmra.mrb[0].mxu0 %v1757
      %v2033 = vpop.f32.mrb[0].mxu0
      %v2034 = vadd.f32 0.0, %v2033
      %v2035 = vpop.f32.mrb[0].mxu0
      %v2036 = vadd.f32 0.0, %v2035
      %v2037 = vpop.f32.mrb[0].mxu0
      %v2038 = vadd.f32 0.0, %v2037
      %v2039 = vpop.f32.mrb[0].mxu0
      %v2040 = vadd.f32 0.0, %v2039
      %2041 = vmatprep.mubr.bf16.mxu0 0
      %2042 = vmatmul.mubr.bf16.gmra.mrb[0].mxu0 %v1758
      %v2043 = vpop.f32.mrb[0].mxu0
      %v2044 = vadd.f32 0.0, %v2043
      %v2045 = vpop.f32.mrb[0].mxu0
      %v2046 = vadd.f32 0.0, %v2045
      %v2047 = vpop.f32.mrb[0].mxu0
      %v2048 = vadd.f32 0.0, %v2047
      %v2049 = vpop.f32.mrb[0].mxu0
      %v2050 = vadd.f32 0.0, %v2049
      %2051 = vdwg.mxu0
      %2052 = vmatprep.subr.bf16.mxu0 0
      %2053 = vmatpush1.bf16.msra.mxu0 %v1853
      %2054 = vmatprep.subr.bf16.mxu0 0
      %2055 = vmatpush1.bf16.msra.mxu0 %v1856
      %2056 = vmatprep.subr.bf16.mxu0 0
      %2057 = vmatpush1.bf16.msra.mxu0 %v1859
      %2058 = vmatprep.subr.bf16.mxu0 0
      %2059 = vmatpush1.bf16.msra.mxu0 %v1862
      %2060 = vmatprep.subr.bf16.mxu0 0
      %2061 = vmatpush1.bf16.msra.mxu0 %v1865
      %2062 = vmatprep.subr.bf16.mxu0 0
      %2063 = vmatpush1.bf16.msra.mxu0 %v1868
      %2064 = vmatprep.subr.bf16.mxu0 0
      %2065 = vmatpush1.bf16.msra.mxu0 %v1871
      %2066 = vmatprep.subr.bf16.mxu0 0
      %2067 = vmatpush1.bf16.msra.mxu0 %v1874
      %2068 = vmatprep.subr.bf16.mxu0 0
      %2069 = vmatpush1.bf16.msra.mxu0 0
      %2070 = vmatprep.subr.bf16.mxu0 0
      %2071 = vmatpush1.bf16.msra.mxu0 0
      %2072 = vmatprep.subr.bf16.mxu0 0
      %2073 = vmatpush1.bf16.msra.mxu0 0
      %2074 = vmatprep.subr.bf16.mxu0 0
      %2075 = vmatpush1.bf16.msra.mxu0 0
      %2076 = vmatprep.subr.bf16.mxu0 0
      %2077 = vmatpush1.bf16.msra.mxu0 0
      %2078 = vmatprep.subr.bf16.mxu0 0
      %2079 = vmatpush1.bf16.msra.mxu0 0
      %2080 = vmatprep.subr.bf16.mxu0 0
      %2081 = vmatpush1.bf16.msra.mxu0 0
      %2082 = vmatprep.subr.bf16.mxu0 0
      %2083 = vmatpush1.bf16.msra.mxu0 0
      %2084 = vmatprep.mubr.bf16.mxu0 0
      %2085 = vmatmul.mubr.bf16.gmra.mrb[0].mxu0 %v1747
      %v2086 = vpop.f32.mrb[0].mxu0
      %v2087 = vadd.f32 0.0, %v2086
      %v2088 = vpop.f32.mrb[0].mxu0
      %v2089 = vpop.f32.mrb[0].mxu0
      %v2090 = vadd.f32 0.0, %v2089
      %v2091 = vpop.f32.mrb[0].mxu0
      %2092 = vmatprep.mubr.bf16.mxu0 0
      %2093 = vmatmul.mubr.bf16.gmra.mrb[0].mxu0 %v1748
      %v2094 = vpop.f32.mrb[0].mxu0
      %v2095 = vadd.f32 0.0, %v2094
      %v2096 = vpop.f32.mrb[0].mxu0
      %v2097 = vpop.f32.mrb[0].mxu0
      %v2098 = vadd.f32 0.0, %v2097
      %v2099 = vpop.f32.mrb[0].mxu0
      %2100 = vmatprep.mubr.bf16.mxu0 0
      %2101 = vmatmul.mubr.bf16.gmra.mrb[0].mxu0 %v1749
      %v2102 = vpop.f32.mrb[0].mxu0
      %v2103 = vadd.f32 0.0, %v2102
      %v2104 = vpop.f32.mrb[0].mxu0
      %v2105 = vpop.f32.mrb[0].mxu0
      %v2106 = vadd.f32 0.0, %v2105
      %v2107 = vpop.f32.mrb[0].mxu0
      %2108 = vmatprep.mubr.bf16.mxu0 0
      %2109 = vmatmul.mubr.bf16.gmra.mrb[0].mxu0 %v1750
      %v2110 = vpop.f32.mrb[0].mxu0
      %v2111 = vadd.f32 0.0, %v2110
      %v2112 = vpop.f32.mrb[0].mxu0
      %v2113 = vpop.f32.mrb[0].mxu0
      %v2114 = vadd.f32 0.0, %v2113
      %v2115 = vpop.f32.mrb[0].mxu0
      %2116 = vmatprep.mubr.bf16.mxu0 0
      %2117 = vmatmul.mubr.bf16.gmra.mrb[0].mxu0 %v1751
      %v2118 = vpop.f32.mrb[0].mxu0
      %v2119 = vadd.f32 0.0, %v2118
      %v2120 = vpop.f32.mrb[0].mxu0
      %v2121 = vpop.f32.mrb[0].mxu0
      %v2122 = vadd.f32 0.0, %v2121
      %v2123 = vpop.f32.mrb[0].mxu0
      %2124 = vmatprep.mubr.bf16.mxu0 0
      %2125 = vmatmul.mubr.bf16.gmra.mrb[0].mxu0 %v1752
      %v2126 = vpop.f32.mrb[0].mxu0
      %v2127 = vadd.f32 0.0, %v2126
      %v2128 = vpop.f32.mrb[0].mxu0
      %v2129 = vpop.f32.mrb[0].mxu0
      %v2130 = vadd.f32 0.0, %v2129
      %v2131 = vpop.f32.mrb[0].mxu0
      %2132 = vmatprep.mubr.bf16.mxu0 0
      %2133 = vmatmul.mubr.bf16.gmra.mrb[0].mxu0 %v1753
      %v2134 = vpop.f32.mrb[0].mxu0
      %v2135 = vadd.f32 0.0, %v2134
      %v2136 = vpop.f32.mrb[0].mxu0
      %v2137 = vpop.f32.mrb[0].mxu0
      %v2138 = vadd.f32 0.0, %v2137
      %v2139 = vpop.f32.mrb[0].mxu0
      %2140 = vmatprep.mubr.bf16.mxu0 0
      %2141 = vmatmul.mubr.bf16.gmra.mrb[0].mxu0 %v1754
      %v2142 = vpop.f32.mrb[0].mxu0
      %v2143 = vadd.f32 0.0, %v2142
      %v2144 = vpop.f32.mrb[0].mxu0
      %v2145 = vpop.f32.mrb[0].mxu0
      %v2146 = vadd.f32 0.0, %v2145
      %v2147 = vpop.f32.mrb[0].mxu0
      %2148 = vmatprep.mubr.bf16.mxu0 0
      %2149 = vmatmul.mubr.bf16.gmra.mrb[0].mxu0 %v1755
      %v2150 = vpop.f32.mrb[0].mxu0
      %v2151 = vadd.f32 0.0, %v2150
      %v2152 = vpop.f32.mrb[0].mxu0
      %v2153 = vpop.f32.mrb[0].mxu0
      %v2154 = vadd.f32 0.0, %v2153
      %v2155 = vpop.f32.mrb[0].mxu0
      %2156 = vmatprep.mubr.bf16.mxu0 0
      %2157 = vmatmul.mubr.bf16.gmra.mrb[0].mxu0 %v1756
      %v2158 = vpop.f32.mrb[0].mxu0
      %v2159 = vadd.f32 0.0, %v2158
      %v2160 = vpop.f32.mrb[0].mxu0
      %v2161 = vpop.f32.mrb[0].mxu0
      %v2162 = vadd.f32 0.0, %v2161
      %v2163 = vpop.f32.mrb[0].mxu0
      %2164 = vmatprep.mubr.bf16.mxu0 0
      %2165 = vmatmul.mubr.bf16.gmra.mrb[0].mxu0 %v1757
      %v2166 = vpop.f32.mrb[0].mxu0
      %v2167 = vadd.f32 0.0, %v2166
      %v2168 = vpop.f32.mrb[0].mxu0
      %v2169 = vpop.f32.mrb[0].mxu0
      %v2170 = vadd.f32 0.0, %v2169
      %v2171 = vpop.f32.mrb[0].mxu0
      %2172 = vmatprep.mubr.bf16.mxu0 0
      %2173 = vmatmul.mubr.bf16.gmra.mrb[0].mxu0 %v1758
      %v2174 = vpop.f32.mrb[0].mxu0
      %v2175 = vadd.f32 0.0, %v2174
      %v2176 = vpop.f32.mrb[0].mxu0
      %v2177 = vpop.f32.mrb[0].mxu0
      %v2178 = vadd.f32 0.0, %v2177
      %v2179 = vpop.f32.mrb[0].mxu0
      %2180 = vdwg.mxu0
      %v2181 = vld [vmem:[#allocation2] sm:$0xff]
      %v2182 = vld [vmem:[#allocation2 + $0x8] sm:$0xff]
      %v2183 = vld [vmem:[#allocation2 + $0x10] sm:$0xff]
      %v2184 = vld [vmem:[#allocation2 + $0x18] sm:$0xff]
      %v2185 = vld [vmem:[#allocation2 + $0x20] sm:$0xff]
      %v2186 = vld [vmem:[#allocation2 + $0x28] sm:$0xff]
      %v2187 = vld [vmem:[#allocation2 + $0x30] sm:$0xff]
      %v2188 = vld [vmem:[#allocation2 + $0x38] sm:$0xff]
      %v2189 = vld [vmem:[#allocation2 + $0x40] sm:$0xff]
      %v2190 = vld [vmem:[#allocation2 + $0x48] sm:$0xff]
      %v2191 = vld [vmem:[#allocation2 + $0x50] sm:$0xff]
      %v2192 = vld [vmem:[#allocation2 + $0x58] sm:$0xff]
      %v2193 = vld [vmem:[#allocation2 + $0x60] sm:$0xff]
      %v2194 = vld [vmem:[#allocation2 + $0x68] sm:$0xff]
      %v2195 = vld [vmem:[#allocation2 + $0x70] sm:$0xff]
      %v2196 = vld [vmem:[#allocation2 + $0x78] sm:$0xff]
      %v2197 = vld [vmem:[#allocation2 + $0x80] sm:$0xff]
      %v2198 = vld [vmem:[#allocation2 + $0x88] sm:$0xff]
      %v2199 = vld [vmem:[#allocation2 + $0x90] sm:$0xff]
      %v2200 = vld [vmem:[#allocation2 + $0x98] sm:$0xff]
      %v2201 = vld [vmem:[#allocation2 + $0xa0] sm:$0xff]
      %v2202 = vld [vmem:[#allocation2 + $0xa8] sm:$0xff]
      %v2203 = vld [vmem:[#allocation2 + $0xb0] sm:$0xff]
      %v2204 = vld [vmem:[#allocation2 + $0xb8] sm:$0xff]
      %v2205 = vld [vmem:[#allocation2 + $0xc0] sm:$0xff]
      %v2206 = vld [vmem:[#allocation2 + $0xc8] sm:$0xff]
      %v2207 = vld [vmem:[#allocation2 + $0xd0] sm:$0xff]
      %v2208 = vld [vmem:[#allocation2 + $0xd8] sm:$0xff]
      %v2209 = vld [vmem:[#allocation2 + $0xe0] sm:$0xff]
      %v2210 = vld [vmem:[#allocation2 + $0xe8] sm:$0xff]
      %v2211 = vld [vmem:[#allocation2 + $0xf0] sm:$0xff]
      %v2212 = vld [vmem:[#allocation2 + $0xf8] sm:$0xff]
      %v2213 = vld [vmem:[#allocation2 + $0x100] sm:$0xff]
      %v2214 = vld [vmem:[#allocation2 + $0x108] sm:$0xff]
      %v2215 = vld [vmem:[#allocation2 + $0x110] sm:$0xff]
      %v2216 = vld [vmem:[#allocation2 + $0x118] sm:$0xff]
      %v2217 = vld [vmem:[#allocation2 + $0x120] sm:$0xff]
      %v2218 = vld [vmem:[#allocation2 + $0x128] sm:$0xff]
      %v2219 = vld [vmem:[#allocation2 + $0x130] sm:$0xff]
      %v2220 = vld [vmem:[#allocation2 + $0x138] sm:$0xff]
      %v2221 = vld [vmem:[#allocation2 + $0x140] sm:$0xff]
      %v2222 = vld [vmem:[#allocation2 + $0x148] sm:$0xff]
      %v2223 = vld [vmem:[#allocation2 + $0x150] sm:$0xff]
      %v2224 = vld [vmem:[#allocation2 + $0x158] sm:$0xff]
      %v2225 = vld [vmem:[#allocation2 + $0x160] sm:$0xff]
      %v2226 = vld [vmem:[#allocation2 + $0x168] sm:$0xff]
      %v2227 = vld [vmem:[#allocation2 + $0x170] sm:$0xff]
      %v2228 = vld [vmem:[#allocation2 + $0x178] sm:$0xff]
      %v2229 = vld [vmem:[#allocation2 + $0x180] sm:$0xff]
      %v2230 = vld [vmem:[#allocation2 + $0x188] sm:$0xff]
      %v2231 = vld [vmem:[#allocation2 + $0x190] sm:$0xff]
      %v2232 = vld [vmem:[#allocation2 + $0x198] sm:$0xff]
      %v2233 = vld [vmem:[#allocation2 + $0x1a0] sm:$0xff]
      %v2234 = vld [vmem:[#allocation2 + $0x1a8] sm:$0xff]
      %v2235 = vld [vmem:[#allocation2 + $0x1b0] sm:$0xff]
      %v2236 = vld [vmem:[#allocation2 + $0x1b8] sm:$0xff]
      %v2237 = vld [vmem:[#allocation2 + $0x1c0] sm:$0xff]
      %v2238 = vld [vmem:[#allocation2 + $0x1c8] sm:$0xff]
      %v2239 = vld [vmem:[#allocation2 + $0x1d0] sm:$0xff]
      %v2240 = vld [vmem:[#allocation2 + $0x1d8] sm:$0xff]
      %v2241 = vld [vmem:[#allocation2 + $0x1e0] sm:$0xff]
      %v2242 = vld [vmem:[#allocation2 + $0x1e8] sm:$0xff]
      %v2243 = vld [vmem:[#allocation2 + $0x1f0] sm:$0xff]
      %v2244 = vld [vmem:[#allocation2 + $0x1f8] sm:$0xff]
      %v2245 = vld [vmem:[#allocation2 + $0x200] sm:$0xff]
      %v2246 = vld [vmem:[#allocation2 + $0x208] sm:$0xff]
      %v2247 = vld [vmem:[#allocation2 + $0x210] sm:$0xff]
      %v2248 = vld [vmem:[#allocation2 + $0x218] sm:$0xff]
      %v2249 = vld [vmem:[#allocation2 + $0x220] sm:$0xff]
      %v2250 = vld [vmem:[#allocation2 + $0x228] sm:$0xff]
      %v2251 = vld [vmem:[#allocation2 + $0x230] sm:$0xff]
      %v2252 = vld [vmem:[#allocation2 + $0x238] sm:$0xff]
      %v2253 = vadd.f32 %v2181, %v1934
      %v2254 = vadd.f32 %v2182, %v1936
      %v2255 = vadd.f32 %v2183, %v2087
      %v2256 = vadd.f32 %v2184, %v1938
      %v2257 = vadd.f32 %v2185, %v1940
      %v2258 = vadd.f32 %v2186, %v2090
      %v2259 = vadd.f32 %v2187, %v1944
      %v2260 = vadd.f32 %v2188, %v1946
      %v2261 = vadd.f32 %v2189, %v2095
      %v2262 = vadd.f32 %v2190, %v1948
      %v2263 = vadd.f32 %v2191, %v1950
      %v2264 = vadd.f32 %v2192, %v2098
      %v2265 = vadd.f32 %v2193, %v1954
      %v2266 = vadd.f32 %v2194, %v1956
      %v2267 = vadd.f32 %v2195, %v2103
      %v2268 = vadd.f32 %v2196, %v1958
      %v2269 = vadd.f32 %v2197, %v1960
      %v2270 = vadd.f32 %v2198, %v2106
      %v2271 = vadd.f32 %v2199, %v1964
      %v2272 = vadd.f32 %v2200, %v1966
      %v2273 = vadd.f32 %v2201, %v2111
      %v2274 = vadd.f32 %v2202, %v1968
      %v2275 = vadd.f32 %v2203, %v1970
      %v2276 = vadd.f32 %v2204, %v2114
      %v2277 = vadd.f32 %v2205, %v1974
      %v2278 = vadd.f32 %v2206, %v1976
      %v2279 = vadd.f32 %v2207, %v2119
      %v2280 = vadd.f32 %v2208, %v1978
      %v2281 = vadd.f32 %v2209, %v1980
      %v2282 = vadd.f32 %v2210, %v2122
      %v2283 = vadd.f32 %v2211, %v1984
      %v2284 = vadd.f32 %v2212, %v1986
      %v2285 = vadd.f32 %v2213, %v2127
      %v2286 = vadd.f32 %v2214, %v1988
      %v2287 = vadd.f32 %v2215, %v1990
      %v2288 = vadd.f32 %v2216, %v2130
      %v2289 = vadd.f32 %v2217, %v1994
      %v2290 = vadd.f32 %v2218, %v1996
      %v2291 = vadd.f32 %v2219, %v2135
      %v2292 = vadd.f32 %v2220, %v1998
      %v2293 = vadd.f32 %v2221, %v2000
      %v2294 = vadd.f32 %v2222, %v2138
      %v2295 = vadd.f32 %v2223, %v2004
      %v2296 = vadd.f32 %v2224, %v2006
      %v2297 = vadd.f32 %v2225, %v2143
      %v2298 = vadd.f32 %v2226, %v2008
      %v2299 = vadd.f32 %v2227, %v2010
      %v2300 = vadd.f32 %v2228, %v2146
      %v2301 = vadd.f32 %v2229, %v2014
      %v2302 = vadd.f32 %v2230, %v2016
      %v2303 = vadd.f32 %v2231, %v2151
      %v2304 = vadd.f32 %v2232, %v2018
      %v2305 = vadd.f32 %v2233, %v2020
      %v2306 = vadd.f32 %v2234, %v2154
      %v2307 = vadd.f32 %v2235, %v2024
      %v2308 = vadd.f32 %v2236, %v2026
      %v2309 = vadd.f32 %v2237, %v2159
      %v2310 = vadd.f32 %v2238, %v2028
      %v2311 = vadd.f32 %v2239, %v2030
      %v2312 = vadd.f32 %v2240, %v2162
      %v2313 = vadd.f32 %v2241, %v2034
      %v2314 = vadd.f32 %v2242, %v2036
      %v2315 = vadd.f32 %v2243, %v2167
      %v2316 = vadd.f32 %v2244, %v2038
      %v2317 = vadd.f32 %v2245, %v2040
      %v2318 = vadd.f32 %v2246, %v2170
      %v2319 = vadd.f32 %v2247, %v2044
      %v2320 = vadd.f32 %v2248, %v2046
      %v2321 = vadd.f32 %v2249, %v2175
      %v2322 = vadd.f32 %v2250, %v2048
      %v2323 = vadd.f32 %v2251, %v2050
      %v2324 = vadd.f32 %v2252, %v2178
      %2325 = vst [vmem:[#allocation2] sm:$0xff] %v2253
      %2326 = vst [vmem:[#allocation2 + $0x8] sm:$0xff] %v2254
      %2327 = vst [vmem:[#allocation2 + $0x10] sm:$0xff] %v2255
      %2328 = vst [vmem:[#allocation2 + $0x18] sm:$0xff] %v2256
      %2329 = vst [vmem:[#allocation2 + $0x20] sm:$0xff] %v2257
      %2330 = vst [vmem:[#allocation2 + $0x28] sm:$0xff] %v2258
      %2331 = vst [vmem:[#allocation2 + $0x30] sm:$0xff] %v2259
      %2332 = vst [vmem:[#allocation2 + $0x38] sm:$0xff] %v2260
      %2333 = vst [vmem:[#allocation2 + $0x40] sm:$0xff] %v2261
      %2334 = vst [vmem:[#allocation2 + $0x48] sm:$0xff] %v2262
      %2335 = vst [vmem:[#allocation2 + $0x50] sm:$0xff] %v2263
      %2336 = vst [vmem:[#allocation2 + $0x58] sm:$0xff] %v2264
      %2337 = vst [vmem:[#allocation2 + $0x60] sm:$0xff] %v2265
      %2338 = vst [vmem:[#allocation2 + $0x68] sm:$0xff] %v2266
      %2339 = vst [vmem:[#allocation2 + $0x70] sm:$0xff] %v2267
      %2340 = vst [vmem:[#allocation2 + $0x78] sm:$0xff] %v2268
      %2341 = vst [vmem:[#allocation2 + $0x80] sm:$0xff] %v2269
      %2342 = vst [vmem:[#allocation2 + $0x88] sm:$0xff] %v2270
      %2343 = vst [vmem:[#allocation2 + $0x90] sm:$0xff] %v2271
      %2344 = vst [vmem:[#allocation2 + $0x98] sm:$0xff] %v2272
      %2345 = vst [vmem:[#allocation2 + $0xa0] sm:$0xff] %v2273
      %2346 = vst [vmem:[#allocation2 + $0xa8] sm:$0xff] %v2274
      %2347 = vst [vmem:[#allocation2 + $0xb0] sm:$0xff] %v2275
      %2348 = vst [vmem:[#allocation2 + $0xb8] sm:$0xff] %v2276
      %2349 = vst [vmem:[#allocation2 + $0xc0] sm:$0xff] %v2277
      %2350 = vst [vmem:[#allocation2 + $0xc8] sm:$0xff] %v2278
      %2351 = vst [vmem:[#allocation2 + $0xd0] sm:$0xff] %v2279
      %2352 = vst [vmem:[#allocation2 + $0xd8] sm:$0xff] %v2280
      %2353 = vst [vmem:[#allocation2 + $0xe0] sm:$0xff] %v2281
      %2354 = vst [vmem:[#allocation2 + $0xe8] sm:$0xff] %v2282
      %2355 = vst [vmem:[#allocation2 + $0xf0] sm:$0xff] %v2283
      %2356 = vst [vmem:[#allocation2 + $0xf8] sm:$0xff] %v2284
      %2357 = vst [vmem:[#allocation2 + $0x100] sm:$0xff] %v2285
      %2358 = vst [vmem:[#allocation2 + $0x108] sm:$0xff] %v2286
      %2359 = vst [vmem:[#allocation2 + $0x110] sm:$0xff] %v2287
      %2360 = vst [vmem:[#allocation2 + $0x118] sm:$0xff] %v2288
      %2361 = vst [vmem:[#allocation2 + $0x120] sm:$0xff] %v2289
      %2362 = vst [vmem:[#allocation2 + $0x128] sm:$0xff] %v2290
      %2363 = vst [vmem:[#allocation2 + $0x130] sm:$0xff] %v2291
      %2364 = vst [vmem:[#allocation2 + $0x138] sm:$0xff] %v2292
      %2365 = vst [vmem:[#allocation2 + $0x140] sm:$0xff] %v2293
      %2366 = vst [vmem:[#allocation2 + $0x148] sm:$0xff] %v2294
      %2367 = vst [vmem:[#allocation2 + $0x150] sm:$0xff] %v2295
      %2368 = vst [vmem:[#allocation2 + $0x158] sm:$0xff] %v2296
      %2369 = vst [vmem:[#allocation2 + $0x160] sm:$0xff] %v2297
      %2370 = vst [vmem:[#allocation2 + $0x168] sm:$0xff] %v2298
      %2371 = vst [vmem:[#allocation2 + $0x170] sm:$0xff] %v2299
      %2372 = vst [vmem:[#allocation2 + $0x178] sm:$0xff] %v2300
      %2373 = vst [vmem:[#allocation2 + $0x180] sm:$0xff] %v2301
      %2374 = vst [vmem:[#allocation2 + $0x188] sm:$0xff] %v2302
      %2375 = vst [vmem:[#allocation2 + $0x190] sm:$0xff] %v2303
      %2376 = vst [vmem:[#allocation2 + $0x198] sm:$0xff] %v2304
      %2377 = vst [vmem:[#allocation2 + $0x1a0] sm:$0xff] %v2305
      %2378 = vst [vmem:[#allocation2 + $0x1a8] sm:$0xff] %v2306
      %2379 = vst [vmem:[#allocation2 + $0x1b0] sm:$0xff] %v2307
      %2380 = vst [vmem:[#allocation2 + $0x1b8] sm:$0xff] %v2308
      %2381 = vst [vmem:[#allocation2 + $0x1c0] sm:$0xff] %v2309
      %2382 = vst [vmem:[#allocation2 + $0x1c8] sm:$0xff] %v2310
      %2383 = vst [vmem:[#allocation2 + $0x1d0] sm:$0xff] %v2311
      %2384 = vst [vmem:[#allocation2 + $0x1d8] sm:$0xff] %v2312
      %2385 = vst [vmem:[#allocation2 + $0x1e0] sm:$0xff] %v2313
      %2386 = vst [vmem:[#allocation2 + $0x1e8] sm:$0xff] %v2314
      %2387 = vst [vmem:[#allocation2 + $0x1f0] sm:$0xff] %v2315
      %2388 = vst [vmem:[#allocation2 + $0x1f8] sm:$0xff] %v2316
      %2389 = vst [vmem:[#allocation2 + $0x200] sm:$0xff] %v2317
      %2390 = vst [vmem:[#allocation2 + $0x208] sm:$0xff] %v2318
      %2391 = vst [vmem:[#allocation2 + $0x210] sm:$0xff] %v2319
      %2392 = vst [vmem:[#allocation2 + $0x218] sm:$0xff] %v2320
      %2393 = vst [vmem:[#allocation2 + $0x220] sm:$0xff] %v2321
      %2394 = vst [vmem:[#allocation2 + $0x228] sm:$0xff] %v2322
      %2395 = vst [vmem:[#allocation2 + $0x230] sm:$0xff] %v2323
      %2396 = vst [vmem:[#allocation2 + $0x238] sm:$0xff] %v2324
      %v2397 = vld [vmem:[#allocation2] sm:$0xff]
      %v2398 = vld [vmem:[#allocation2 + $0x8] sm:$0xff]
      %v2399 = vld [vmem:[#allocation2 + $0x10] sm:$0xff]
      %v2400 = vld [vmem:[#allocation2 + $0x18] sm:$0xff]
      %v2401 = vld [vmem:[#allocation2 + $0x20] sm:$0xff]
      %v2402 = vld [vmem:[#allocation2 + $0x28] sm:$0xff]
      %v2403 = vld [vmem:[#allocation2 + $0x38] sm:$0xff]
      %v2404 = vld [vmem:[#allocation2 + $0x40] sm:$0xff]
      %v2405 = vld [vmem:[#allocation2 + $0x48] sm:$0xff]
      %v2406 = vld [vmem:[#allocation2 + $0x50] sm:$0xff]
      %v2407 = vld [vmem:[#allocation2 + $0x58] sm:$0xff]
      %v2408 = vld [vmem:[#allocation2 + $0x60] sm:$0xff]
      %v2409 = vld [vmem:[#allocation2 + $0x68] sm:$0xff]
      %v2410 = vld [vmem:[#allocation2 + $0x70] sm:$0xff]
      %v2411 = vld [vmem:[#allocation2 + $0x80] sm:$0xff]
      %v2412 = vld [vmem:[#allocation2 + $0x88] sm:$0xff]
      %v2413 = vld [vmem:[#allocation2 + $0x90] sm:$0xff]
      %v2414 = vld [vmem:[#allocation2 + $0x98] sm:$0xff]
      %v2415 = vld [vmem:[#allocation2 + $0xa0] sm:$0xff]
      %v2416 = vld [vmem:[#allocation2 + $0xa8] sm:$0xff]
      %v2417 = vld [vmem:[#allocation2 + $0xb0] sm:$0xff]
      %v2418 = vld [vmem:[#allocation2 + $0xb8] sm:$0xff]
      %v2419 = vld [vmem:[#allocation2 + $0xc8] sm:$0xff]
      %v2420 = vld [vmem:[#allocation2 + $0xd0] sm:$0xff]
      %v2421 = vld [vmem:[#allocation2 + $0xd8] sm:$0xff]
      %v2422 = vld [vmem:[#allocation2 + $0xe0] sm:$0xff]
      %v2423 = vld [vmem:[#allocation2 + $0xe8] sm:$0xff]
      %v2424 = vld [vmem:[#allocation2 + $0xf0] sm:$0xff]
      %v2425 = vld [vmem:[#allocation2 + $0xf8] sm:$0xff]
      %v2426 = vld [vmem:[#allocation2 + $0x100] sm:$0xff]
      %v2427 = vld [vmem:[#allocation2 + $0x110] sm:$0xff]
      %v2428 = vld [vmem:[#allocation2 + $0x118] sm:$0xff]
      %v2429 = vld [vmem:[#allocation2 + $0x120] sm:$0xff]
      %v2430 = vld [vmem:[#allocation2 + $0x128] sm:$0xff]
      %v2431 = vld [vmem:[#allocation2 + $0x130] sm:$0xff]
      %v2432 = vld [vmem:[#allocation2 + $0x138] sm:$0xff]
      %v2433 = vld [vmem:[#allocation2 + $0x140] sm:$0xff]
      %v2434 = vld [vmem:[#allocation2 + $0x148] sm:$0xff]
      %v2435 = vld [vmem:[#allocation2 + $0x158] sm:$0xff]
      %v2436 = vld [vmem:[#allocation2 + $0x160] sm:$0xff]
      %v2437 = vld [vmem:[#allocation2 + $0x168] sm:$0xff]
      %v2438 = vld [vmem:[#allocation2 + $0x170] sm:$0xff]
      %v2439 = vld [vmem:[#allocation2 + $0x178] sm:$0xff]
      %v2440 = vld [vmem:[#allocation2 + $0x180] sm:$0xff]
      %v2441 = vld [vmem:[#allocation2 + $0x188] sm:$0xff]
      %v2442 = vld [vmem:[#allocation2 + $0x190] sm:$0xff]
      %v2443 = vld [vmem:[#allocation2 + $0x1a0] sm:$0xff]
      %v2444 = vld [vmem:[#allocation2 + $0x1a8] sm:$0xff]
      %v2445 = vld [vmem:[#allocation2 + $0x1b0] sm:$0xff]
      %v2446 = vld [vmem:[#allocation2 + $0x1b8] sm:$0xff]
      %v2447 = vld [vmem:[#allocation2 + $0x1c0] sm:$0xff]
      %v2448 = vld [vmem:[#allocation2 + $0x1c8] sm:$0xff]
      %v2449 = vld [vmem:[#allocation2 + $0x1d0] sm:$0xff]
      %v2450 = vld [vmem:[#allocation2 + $0x1d8] sm:$0xff]
      %v2451 = vld [vmem:[#allocation2 + $0x1e8] sm:$0xff]
      %v2452 = vld [vmem:[#allocation2 + $0x1f0] sm:$0xff]
      %v2453 = vld [vmem:[#allocation2 + $0x1f8] sm:$0xff]
      %v2454 = vld [vmem:[#allocation2 + $0x200] sm:$0xff]
      %v2455 = vld [vmem:[#allocation2 + $0x208] sm:$0xff]
      %v2456 = vld [vmem:[#allocation2 + $0x210] sm:$0xff]
      %v2457 = vld [vmem:[#allocation2 + $0x218] sm:$0xff]
      %v2458 = vld [vmem:[#allocation2 + $0x220] sm:$0xff]
      %v2459 = vld [vmem:[#allocation2 + $0x230] sm:$0xff]
      %v2460 = vld [vmem:[#allocation2 + $0x238] sm:$0xff]
      %vm2485 = vcmask 1046528
      %v2486 = vrot.slane %v2398, 1
      %v2487 = vrot.slane %v2401, 1
      %v2488 = vsel %vm2485, %v2486, %v2487
      %v2489 = vrot.slane %v2403, 1
      %v2490 = vsel %vm2485, %v2487, %v2489
      %v2491 = vrot.slane %v2406, 1
      %v2492 = vrot.slane %v2409, 1
      %v2493 = vsel %vm2485, %v2491, %v2492
      %v2494 = vrot.slane %v2411, 1
      %v2495 = vsel %vm2485, %v2492, %v2494
      %v2496 = vrot.slane %v2414, 1
      %v2497 = vrot.slane %v2417, 1
      %v2498 = vsel %vm2485, %v2496, %v2497
      %v2499 = vrot.slane %v2419, 1
      %v2500 = vsel %vm2485, %v2497, %v2499
      %v2501 = vrot.slane %v2422, 1
      %v2502 = vrot.slane %v2425, 1
      %v2503 = vsel %vm2485, %v2501, %v2502
      %v2504 = vrot.slane %v2427, 1
      %v2505 = vsel %vm2485, %v2502, %v2504
      %v2506 = vrot.slane %v2430, 1
      %v2507 = vrot.slane %v2433, 1
      %v2508 = vsel %vm2485, %v2506, %v2507
      %v2509 = vrot.slane %v2435, 1
      %v2510 = vsel %vm2485, %v2507, %v2509
      %v2511 = vrot.slane %v2438, 1
      %v2512 = vrot.slane %v2441, 1
      %v2513 = vsel %vm2485, %v2511, %v2512
      %v2514 = vrot.slane %v2443, 1
      %v2515 = vsel %vm2485, %v2512, %v2514
      %v2516 = vrot.slane %v2446, 1
      %v2517 = vrot.slane %v2449, 1
      %v2518 = vsel %vm2485, %v2516, %v2517
      %v2519 = vrot.slane %v2451, 1
      %v2520 = vsel %vm2485, %v2517, %v2519
      %v2521 = vrot.slane %v2454, 1
      %v2522 = vrot.slane %v2457, 1
      %v2523 = vsel %vm2485, %v2521, %v2522
      %v2524 = vrot.slane %v2459, 1
      %v2525 = vsel %vm2485, %v2522, %v2524
      %v2542 = vadd.f32 %v2397, %v2488
      %v2543 = vadd.f32 %v2400, %v2490
      %v2544 = vadd.f32 %v2405, %v2493
      %v2545 = vadd.f32 %v2408, %v2495
      %v2546 = vadd.f32 %v2413, %v2498
      %v2547 = vadd.f32 %v2416, %v2500
      %v2548 = vadd.f32 %v2421, %v2503
      %v2549 = vadd.f32 %v2424, %v2505
      %v2550 = vadd.f32 %v2429, %v2508
      %v2551 = vadd.f32 %v2432, %v2510
      %v2552 = vadd.f32 %v2437, %v2513
      %v2553 = vadd.f32 %v2440, %v2515
      %v2554 = vadd.f32 %v2445, %v2518
      %v2555 = vadd.f32 %v2448, %v2520
      %v2556 = vadd.f32 %v2453, %v2523
      %v2557 = vadd.f32 %v2456, %v2525
      %vm2582 = vcmask 1045504
      %v2583 = vrot.slane %v2399, 2
      %v2584 = vrot.slane %v2402, 2
      %v2585 = vsel %vm2582, %v2583, %v2584
      %v2586 = vrot.slane %v2404, 2
      %v2587 = vsel %vm2582, %v2584, %v2586
      %v2588 = vrot.slane %v2407, 2
      %v2589 = vrot.slane %v2410, 2
      %v2590 = vsel %vm2582, %v2588, %v2589
      %v2591 = vrot.slane %v2412, 2
      %v2592 = vsel %vm2582, %v2589, %v2591
      %v2593 = vrot.slane %v2415, 2
      %v2594 = vrot.slane %v2418, 2
      %v2595 = vsel %vm2582, %v2593, %v2594
      %v2596 = vrot.slane %v2420, 2
      %v2597 = vsel %vm2582, %v2594, %v2596
      %v2598 = vrot.slane %v2423, 2
      %v2599 = vrot.slane %v2426, 2
      %v2600 = vsel %vm2582, %v2598, %v2599
      %v2601 = vrot.slane %v2428, 2
      %v2602 = vsel %vm2582, %v2599, %v2601
      %v2603 = vrot.slane %v2431, 2
      %v2604 = vrot.slane %v2434, 2
      %v2605 = vsel %vm2582, %v2603, %v2604
      %v2606 = vrot.slane %v2436, 2
      %v2607 = vsel %vm2582, %v2604, %v2606
      %v2608 = vrot.slane %v2439, 2
      %v2609 = vrot.slane %v2442, 2
      %v2610 = vsel %vm2582, %v2608, %v2609
      %v2611 = vrot.slane %v2444, 2
      %v2612 = vsel %vm2582, %v2609, %v2611
      %v2613 = vrot.slane %v2447, 2
      %v2614 = vrot.slane %v2450, 2
      %v2615 = vsel %vm2582, %v2613, %v2614
      %v2616 = vrot.slane %v2452, 2
      %v2617 = vsel %vm2582, %v2614, %v2616
      %v2618 = vrot.slane %v2455, 2
      %v2619 = vrot.slane %v2458, 2
      %v2620 = vsel %vm2582, %v2618, %v2619
      %v2621 = vrot.slane %v2460, 2
      %v2622 = vsel %vm2582, %v2619, %v2621
      %v2639 = vadd.f32 %v2542, %v2585
      %v2640 = vadd.f32 %v2543, %v2587
      %v2641 = vadd.f32 %v2544, %v2590
      %v2642 = vadd.f32 %v2545, %v2592
      %v2643 = vadd.f32 %v2546, %v2595
      %v2644 = vadd.f32 %v2547, %v2597
      %v2645 = vadd.f32 %v2548, %v2600
      %v2646 = vadd.f32 %v2549, %v2602
      %v2647 = vadd.f32 %v2550, %v2605
      %v2648 = vadd.f32 %v2551, %v2607
      %v2649 = vadd.f32 %v2552, %v2610
      %v2650 = vadd.f32 %v2553, %v2612
      %v2651 = vadd.f32 %v2554, %v2615
      %v2652 = vadd.f32 %v2555, %v2617
      %v2653 = vadd.f32 %v2556, %v2620
      %v2654 = vadd.f32 %v2557, %v2622
      %2655 = vst [vmem:[%s258] sm:$0xff] %v2639
      %2656 = vst [vmem:[%s258 + $0x8] sm:$0xff] %v2640
      %2657 = vst [vmem:[%s258 + $0x10] sm:$0xff] %v2641
      %2658 = vst [vmem:[%s258 + $0x18] sm:$0xff] %v2642
      %2659 = vst [vmem:[%s258 + $0x20] sm:$0xff] %v2643
      %2660 = vst [vmem:[%s258 + $0x28] sm:$0xff] %v2644
      %2661 = vst [vmem:[%s258 + $0x30] sm:$0xff] %v2645
      %2662 = vst [vmem:[%s258 + $0x38] sm:$0xff] %v2646
      %2663 = vst [vmem:[%s258 + $0x40] sm:$0xff] %v2647
      %2664 = vst [vmem:[%s258 + $0x48] sm:$0xff] %v2648
      %2665 = vst [vmem:[%s258 + $0x50] sm:$0xff] %v2649
      %2666 = vst [vmem:[%s258 + $0x58] sm:$0xff] %v2650
      %2667 = vst [vmem:[%s258 + $0x60] sm:$0xff] %v2651
      %2668 = vst [vmem:[%s258 + $0x68] sm:$0xff] %v2652
      %2669 = vst [vmem:[%s258 + $0x70] sm:$0xff] %v2653
      %2670 = vst [vmem:[%s258 + $0x78] sm:$0xff] %v2654
      %v2671 = vadd.f32 %v2639, %v2641
      %v2672 = vadd.f32 %v2671, %v2643
      %v2673 = vadd.f32 %v2672, %v2645
      %v2674 = vadd.f32 %v2673, %v2647
      %v2675 = vadd.f32 %v2674, %v2649
      %v2676 = vadd.f32 %v2675, %v2651
      %v2677 = vadd.f32 %v2676, %v2653
      %v2678 = vadd.f32 %v2640, %v2642
      %v2679 = vadd.f32 %v2678, %v2644
      %v2680 = vadd.f32 %v2679, %v2646
      %v2681 = vadd.f32 %v2680, %v2648
      %v2682 = vadd.f32 %v2681, %v2650
      %v2683 = vadd.f32 %v2682, %v2652
      %v2684 = vadd.f32 %v2683, %v2654
      %v2685 = vadd.f32 %v2677, %v2684
      %v2686 = vrot.slane %v2685, 4
      %v2687 = vadd.f32 %v2685, %v2686
      %v2688 = vrot.slane %v2687, 2
      %v2689 = vadd.f32 %v2687, %v2688
      %v2690 = vrot.slane %v2689, 1
      %v2691 = vadd.f32 %v2689, %v2690
      %2692 = vst [vmem:[%s266] sm:$0x1] %v2691
      %v2693 = vmul.f32 %v2639, %v2639
      %v2694 = vmul.f32 %v2640, %v2640
      %v2695 = vmul.f32 %v2641, %v2641
      %v2696 = vmul.f32 %v2642, %v2642
      %v2697 = vmul.f32 %v2643, %v2643
      %v2698 = vmul.f32 %v2644, %v2644
      %v2699 = vmul.f32 %v2645, %v2645
      %v2700 = vmul.f32 %v2646, %v2646
      %v2701 = vmul.f32 %v2647, %v2647
      %v2702 = vmul.f32 %v2648, %v2648
      %v2703 = vmul.f32 %v2649, %v2649
      %v2704 = vmul.f32 %v2650, %v2650
      %v2705 = vmul.f32 %v2651, %v2651
      %v2706 = vmul.f32 %v2652, %v2652
      %v2707 = vmul.f32 %v2653, %v2653
      %v2708 = vmul.f32 %v2654, %v2654
      %v2709 = vadd.f32 %v2693, %v2695
      %v2710 = vadd.f32 %v2709, %v2697
      %v2711 = vadd.f32 %v2710, %v2699
      %v2712 = vadd.f32 %v2711, %v2701
      %v2713 = vadd.f32 %v2712, %v2703
      %v2714 = vadd.f32 %v2713, %v2705
      %v2715 = vadd.f32 %v2714, %v2707
      %v2716 = vadd.f32 %v2694, %v2696
      %v2717 = vadd.f32 %v2716, %v2698
      %v2718 = vadd.f32 %v2717, %v2700
      %v2719 = vadd.f32 %v2718, %v2702
      %v2720 = vadd.f32 %v2719, %v2704
      %v2721 = vadd.f32 %v2720, %v2706
      %v2722 = vadd.f32 %v2721, %v2708
      %v2723 = vadd.f32 %v2715, %v2722
      %v2724 = vrot.slane %v2723, 4
      %v2725 = vadd.f32 %v2723, %v2724
      %v2726 = vrot.slane %v2725, 2
      %v2727 = vadd.f32 %v2725, %v2726
      %v2728 = vrot.slane %v2727, 1
      %v2729 = vadd.f32 %v2727, %v2728
      %2730 = vst [vmem:[%s273] sm:$0x1] %v2729
      %s2731 = smul.u32 8, %s21
      %p2732 = scmp.lt.s32.totalorder %s20, 1
      %s2733 = scalar_select %p2732, %s20, 1
      %p2734 = scmp.lt.s32.totalorder %s2731, 15
      %s2735 = scalar_select %p2734, %s2731, 15
      %s2736 = smul.addr %s2735, 2
      %s2737 = smul.addr %s2733, 32
      %s2738 = sadd.s32 %s2736, %s2737
      %s2739 = smul.addr %s2738, 8
      %s2740 = scalar_lea.vmem %s2, %s2739
      %p2741 = scmp.lt.s32.totalorder %s20, 1
      %s2742 = scalar_select %p2741, %s20, 1
      %p2743 = scmp.lt.s32.totalorder %s21, 1
      %s2744 = scalar_select %p2743, %s21, 1
      %s2745 = smul.addr %s2742, 2
      %s2746 = sadd.s32 %s2744, %s2745
      %s2747 = scalar_lea.vmem %s3, %s2746
      %p2748 = scmp.lt.s32.totalorder %s20, 1
      %s2749 = scalar_select %p2748, %s20, 1
      %p2750 = scmp.lt.s32.totalorder %s21, 1
      %s2751 = scalar_select %p2750, %s21, 1
      %s2752 = smul.addr %s2749, 2
      %s2753 = sadd.s32 %s2751, %s2752
      %s2754 = scalar_lea.vmem %s4, %s2753
      // Predicated region
      $region29: #{_lambda_.6} parent=27 // pred_check
        %p2755 = pneg %p97
      $region30: #{_lambda_.6} parent=27 // pred_check_branch
        %2757 = sbr.rel (%p2755) target = $region32
      $region31: #{_lambda_.6} parent=27 // pred_region
        %s2758 = smul.u32 8, %s21
      $region32: #{_lambda_.6} parent=27 // pred_fallthru
        _
      // Predicated region
      $region33: #{_lambda_.6} parent=27 // pred_check
        %p2759 = pneg %p125
      $region34: #{_lambda_.6} parent=27 // pred_check_branch
        %2761 = sbr.rel (%p2759) target = $region36
      $region35: #{_lambda_.6} parent=27 // pred_region
        _
      $region36: #{_lambda_.6} parent=27 // pred_fallthru
        _
      // Predicated region
      $region37: #{_lambda_.6} parent=27 // pred_check
        %p2762 = pneg %p153
      $region38: #{_lambda_.6} parent=27 // pred_check_branch
        %2764 = sbr.rel (%p2762) target = $region40
      $region39: #{_lambda_.6} parent=27 // pred_region
        _
      $region40: #{_lambda_.6} parent=27 // pred_fallthru
        _
    $region28: #{_lambda_.6} parent=5 // pred_fallthru
      _
    %p2765 = scmp.le.s32.totalorder 2, %s11
    // Predicated region
    $region41: #{_lambda_.6} parent=5 // pred_check
      %p2766 = pneg %p2765
    $region42: #{_lambda_.6} parent=5 // pred_check_branch
      %2768 = sbr.rel (%p2766) target = $region44
    $region43: #{_lambda_.6} parent=5 // pred_region
      %s2769 = ssub.s32 %s11, 2
      // Predicated region
      $region45: #{_lambda_.6} parent=43 // pred_check
        %p2770 = pneg %p103
      $region46: #{_lambda_.6} parent=43 // pred_check_branch
        %2772 = sbr.rel (%p2770) target = $region48
      $region47: #{_lambda_.6} parent=43 // pred_region
        %s2773 = smul.u32 8, %s23
        %p2774 = scmp.lt.s32.totalorder %s22, 1
        %s2775 = scalar_select %p2774, %s22, 1
        %p2776 = scmp.lt.s32.totalorder %s2773, 15
        %s2777 = scalar_select %p2776, %s2773, 15
        %s2778 = smul.addr %s2777, 2
        %s2779 = smul.addr %s2775, 32
        %s2780 = sadd.s32 %s2778, %s2779
        %s2781 = smul.addr %s2780, 8
        %s2782 = scalar_lea.vmem %s2, %s2781
      $region48: #{_lambda_.6} parent=43 // pred_fallthru
        _
      // Predicated region
      $region49: #{_lambda_.6} parent=43 // pred_check
        %p2783 = pneg %p131
      $region50: #{_lambda_.6} parent=43 // pred_check_branch
        %2785 = sbr.rel (%p2783) target = $region52
      $region51: #{_lambda_.6} parent=43 // pred_region
        %p2786 = scmp.lt.s32.totalorder %s22, 1
        %s2787 = scalar_select %p2786, %s22, 1
        %p2788 = scmp.lt.s32.totalorder %s23, 1
        %s2789 = scalar_select %p2788, %s23, 1
        %s2790 = smul.addr %s2787, 2
        %s2791 = sadd.s32 %s2789, %s2790
        %s2792 = scalar_lea.vmem %s3, %s2791
      $region52: #{_lambda_.6} parent=43 // pred_fallthru
        _
      // Predicated region
      $region53: #{_lambda_.6} parent=43 // pred_check
        %p2793 = pneg %p159
      $region54: #{_lambda_.6} parent=43 // pred_check_branch
        %2795 = sbr.rel (%p2793) target = $region56
      $region55: #{_lambda_.6} parent=43 // pred_region
        %p2796 = scmp.lt.s32.totalorder %s22, 1
        %s2797 = scalar_select %p2796, %s22, 1
        %p2798 = scmp.lt.s32.totalorder %s23, 1
        %s2799 = scalar_select %p2798, %s23, 1
        %s2800 = smul.addr %s2797, 2
        %s2801 = sadd.s32 %s2799, %s2800
        %s2802 = scalar_lea.vmem %s4, %s2801
      $region56: #{_lambda_.6} parent=43 // pred_fallthru
        _
    $region44: #{_lambda_.6} parent=5 // pred_fallthru
      _
  $region6: #{_lambda_.6} parent=0 // loop_footer
    %s15 = sadd.s32 1, %s11
  $region7: #{_lambda_.6} parent=0 // loop_footer_branch
    %10 = sbr.rel target = $region3
  $region8: #{_lambda_.6} parent=0 // loop_exit
    _

// kernel: _lambda_.4
$region0: #{_lambda_.4}
  #allocation0 [shape = 'u32[]', space=smem, size = 0x4, offset = 0x4, fixed_abs, tag = 'smem constant byte address 0x4 - core index']
  #allocation1 [shape = 'u32[144,128]{1,0:T(1,128)}', space=vmem, size = 0x12000, scoped, tag = 'internal scratch']
  #allocation2 [shape = 'f32[192,384]{1,0:T(8,128)}', space=vmem, size = 0x48000, scoped, tag = 'scratch operand']
  %s0 = inlined_call_operand.vmem [shape: bf16[2,2,10,24,128], index: 0, kind: input, shape index: {}]
  %s1 = inlined_call_operand.vmem [shape: bf16[3,128,384], index: 1, kind: input, shape index: {}]
  %s2 = inlined_call_operand.vmem [shape: bf16[2,16,16,128], index: 2, kind: output, shape index: {0}]
  %s3 = inlined_call_operand.vmem [shape: f32[2,2,1,128], index: 3, kind: output, shape index: {1}]
  %s4 = inlined_call_operand.vmem [shape: f32[2,2,1,128], index: 4, kind: output, shape index: {2}]
  %5 = xla_tuple %s2, %s3, %s4
  %s6 = sld [smem:[#allocation0]]
  $region57: #{_lambda_.4} parent=0
    _
  %s8 = ssub.s32 1, %s6
  %s9 = scalar_select 0, %s8, %s6
  loop: start=0, step=1, limit=6
  $region2: #{_lambda_.4} parent=0 // loop_pre_header
    _
  $region3: #{_lambda_.4} parent=0 // loop_header
    %s11 = sphi 0, %s15
    %p12 = scmp.ge.s32.totalorder %s11, 6
    %s18 = sphi 0, %s30
    %s19 = sphi 0, %s26
    %s20 = sphi 0, %s18
    %s21 = sphi 0, %s19
    %s22 = sphi 0, %s20
    %s23 = sphi 0, %s21
    %s35 = sphi 0, %s37
    %s38 = sphi 0, %s35
    %s39 = sphi 0, %s38
    %s55 = sphi 0, %s39
    %s59 = sphi 0, %s59
    %s61 = sphi 0, %s59
    %s62 = sphi 0, %s61
    %s76 = sphi 0, %s62
    %s84 = sphi 0, %s86
    %s87 = sphi 0, %s84
    %s88 = sphi 0, %s87
    %s104 = sphi 0, %s88
    %s112 = sphi 0, %s114
    %s115 = sphi 0, %s112
    %s116 = sphi 0, %s115
    %s132 = sphi 0, %s116
    %s140 = sphi 0, %s142
    %s143 = sphi 0, %s140
    %s144 = sphi 0, %s143
    %s160 = sphi 0, %s144
  $region4: #{_lambda_.4} parent=0 // loop_header_branch
    %14 = sbr.rel (%p12) target = $region8
  $region5: #{_lambda_.4} parent=0 // loop_body
    %s16 = ssub.s32 %s11, 1
    %s17 = ssub.s32 %s11, 2
    %s24 = sadd.s32 1, %s19
    %p25 = scmp.ge.s32.totalorder %s24, 2
    %s26 = scalar_select %p25, 0, %s24
    %s27 = sadd.s32 1, %s18
    %s28 = scalar_select %p25, %s27, %s18
    %p29 = scmp.ge.s32.totalorder %s28, 2
    %s30 = scalar_select %p29, 0, %s28
    %s31 = ssub.s32 %s18, %s30
    %s32 = ssub.s32 %s19, %s26
    %s33 = sor.u32 %s31, %s32
    %p34 = scmp.eq.s32.totalorder %s33, 0
    %s36 = sadd.s32 %s35, 1
    %s37 = scalar_select %p34, %s35, %s36
    %p40 = pneg %p34
    %p41 = scmp.eq.s32.totalorder %s11, 3
    %p42 = por %p40, %p41
    %p43 = scmp.ne.s32.totalorder %s35, %s38
    %p44 = scmp.eq.s32.totalorder %s11, 0
    %p45 = por %p43, %p44
    %p46 = scmp.ne.s32.totalorder %s35, %s38
    %p47 = scmp.eq.s32.totalorder %s16, 3
    %p48 = por %p46, %p47
    %p49 = scmp.ne.s32.totalorder %s38, %s39
    %p50 = scmp.eq.s32.totalorder %s16, 0
    %p51 = por %p49, %p50
    %p52 = scmp.ne.s32.totalorder %s38, %s39
    %p53 = scmp.eq.s32.totalorder %s17, 3
    %p54 = por %p52, %p53
    %p56 = scmp.ne.s32.totalorder %s39, %s55
    %p57 = scmp.eq.s32.totalorder %s17, 0
    %p58 = por %p56, %p57
    %s60 = sadd.s32 %s59, 1
    %p63 = scmp.eq.s32.totalorder %s11, 3
    %p64 = scmp.ne.s32.totalorder %s59, %s61
    %p65 = scmp.eq.s32.totalorder %s11, 0
    %p66 = por %p64, %p65
    %p67 = scmp.ne.s32.totalorder %s59, %s61
    %p68 = scmp.eq.s32.totalorder %s16, 3
    %p69 = por %p67, %p68
    %p70 = scmp.ne.s32.totalorder %s61, %s62
    %p71 = scmp.eq.s32.totalorder %s16, 0
    %p72 = por %p70, %p71
    %p73 = scmp.ne.s32.totalorder %s61, %s62
    %p74 = scmp.eq.s32.totalorder %s17, 3
    %p75 = por %p73, %p74
    %p77 = scmp.ne.s32.totalorder %s62, %s76
    %p78 = scmp.eq.s32.totalorder %s17, 0
    %p79 = por %p77, %p78
    %s80 = ssub.s32 %s18, %s30
    %s81 = ssub.s32 %s19, %s26
    %s82 = sor.u32 %s80, %s81
    %p83 = scmp.eq.s32.totalorder %s82, 0
    %s85 = sadd.s32 %s84, 1
    %s86 = scalar_select %p83, %s84, %s85
    %p89 = pneg %p83
    %p90 = scmp.eq.s32.totalorder %s11, 3
    %p91 = por %p89, %p90
    %p92 = scmp.ne.s32.totalorder %s84, %s87
    %p93 = scmp.eq.s32.totalorder %s11, 0
    %p94 = por %p92, %p93
    %p95 = scmp.ne.s32.totalorder %s84, %s87
    %p96 = scmp.eq.s32.totalorder %s16, 3
    %p97 = por %p95, %p96
    %p98 = scmp.ne.s32.totalorder %s87, %s88
    %p99 = scmp.eq.s32.totalorder %s16, 0
    %p100 = por %p98, %p99
    %p101 = scmp.ne.s32.totalorder %s87, %s88
    %p102 = scmp.eq.s32.totalorder %s17, 3
    %p103 = por %p101, %p102
    %p105 = scmp.ne.s32.totalorder %s88, %s104
    %p106 = scmp.eq.s32.totalorder %s17, 0
    %p107 = por %p105, %p106
    %s108 = ssub.s32 %s18, %s30
    %s109 = ssub.s32 %s19, %s26
    %s110 = sor.u32 %s108, %s109
    %p111 = scmp.eq.s32.totalorder %s110, 0
    %s113 = sadd.s32 %s112, 1
    %s114 = scalar_select %p111, %s112, %s113
    %p117 = pneg %p111
    %p118 = scmp.eq.s32.totalorder %s11, 3
    %p119 = por %p117, %p118
    %p120 = scmp.ne.s32.totalorder %s112, %s115
    %p121 = scmp.eq.s32.totalorder %s11, 0
    %p122 = por %p120, %p121
    %p123 = scmp.ne.s32.totalorder %s112, %s115
    %p124 = scmp.eq.s32.totalorder %s16, 3
    %p125 = por %p123, %p124
    %p126 = scmp.ne.s32.totalorder %s115, %s116
    %p127 = scmp.eq.s32.totalorder %s16, 0
    %p128 = por %p126, %p127
    %p129 = scmp.ne.s32.totalorder %s115, %s116
    %p130 = scmp.eq.s32.totalorder %s17, 3
    %p131 = por %p129, %p130
    %p133 = scmp.ne.s32.totalorder %s116, %s132
    %p134 = scmp.eq.s32.totalorder %s17, 0
    %p135 = por %p133, %p134
    %s136 = ssub.s32 %s18, %s30
    %s137 = ssub.s32 %s19, %s26
    %s138 = sor.u32 %s136, %s137
    %p139 = scmp.eq.s32.totalorder %s138, 0
    %s141 = sadd.s32 %s140, 1
    %s142 = scalar_select %p139, %s140, %s141
    %p145 = pneg %p139
    %p146 = scmp.eq.s32.totalorder %s11, 3
    %p147 = por %p145, %p146
    %p148 = scmp.ne.s32.totalorder %s140, %s143
    %p149 = scmp.eq.s32.totalorder %s11, 0
    %p150 = por %p148, %p149
    %p151 = scmp.ne.s32.totalorder %s140, %s143
    %p152 = scmp.eq.s32.totalorder %s16, 3
    %p153 = por %p151, %p152
    %p154 = scmp.ne.s32.totalorder %s143, %s144
    %p155 = scmp.eq.s32.totalorder %s16, 0
    %p156 = por %p154, %p155
    %p157 = scmp.ne.s32.totalorder %s143, %s144
    %p158 = scmp.eq.s32.totalorder %s17, 3
    %p159 = por %p157, %p158
    %p161 = scmp.ne.s32.totalorder %s144, %s160
    %p162 = scmp.eq.s32.totalorder %s17, 0
    %p163 = por %p161, %p162
    %p164 = scmp.le.s32.totalorder 1, %s11
    %p165 = scmp.lt.s32.totalorder %s11, 5
    %p166 = pnand %p164, %p165
    %p167 = pneg %p166
    // Predicated region
    $region9: #{_lambda_.4} parent=5 // pred_check
      _
    $region10: #{_lambda_.4} parent=5 // pred_check_branch
      %169 = sbr.rel (%p166) target = $region12
    $region11: #{_lambda_.4} parent=5 // pred_region
      %s170 = ssub.s32 %s11, 1
      // Predicated region
      $region13: #{_lambda_.4} parent=11 // pred_check
        %p171 = pneg %p72
      $region14: #{_lambda_.4} parent=11 // pred_check_branch
        %173 = sbr.rel (%p171) target = $region16
      $region15: #{_lambda_.4} parent=11 // pred_region
        _
      $region16: #{_lambda_.4} parent=11 // pred_fallthru
        _
    $region12: #{_lambda_.4} parent=5 // pred_fallthru
      _
    %p174 = scmp.lt.s32.totalorder %s11, 4
    // Predicated region
    $region17: #{_lambda_.4} parent=5 // pred_check
      %p175 = pneg %p174
    $region18: #{_lambda_.4} parent=5 // pred_check_branch
      %177 = sbr.rel (%p175) target = $region20
    $region19: #{_lambda_.4} parent=5 // pred_region
      // Predicated region
      $region21: #{_lambda_.4} parent=19 // pred_check
        %p178 = pneg %p45
      $region22: #{_lambda_.4} parent=19 // pred_check_branch
        %180 = sbr.rel (%p178) target = $region24
      $region23: #{_lambda_.4} parent=19 // pred_region
        %p181 = scmp.lt.s32.totalorder %s18, 1
        %s182 = scalar_select %p181, %s18, 1
        %p183 = scmp.lt.s32.totalorder %s19, 1
        %s184 = scalar_select %p183, %s19, 1
        %s185 = smul.addr %s184, 30
        %s186 = smul.addr %s182, 60
        %s187 = sadd.s32 %s185, %s186
        %s188 = smul.addr %s187, 4
        %s189 = scalar_lea.vmem %s0, %s188
      $region24: #{_lambda_.4} parent=19 // pred_fallthru
        _
    $region20: #{_lambda_.4} parent=5 // pred_fallthru
      _
    %p190 = scmp.le.s32.totalorder 1, %s11
    %p191 = scmp.lt.s32.totalorder %s11, 5
    %p192 = pnand %p190, %p191
    %p193 = pneg %p192
    // Predicated region
    $region25: #{_lambda_.4} parent=5 // pred_check
      _
    $region26: #{_lambda_.4} parent=5 // pred_check_branch
      %195 = sbr.rel (%p192) target = $region28
    $region27: #{_lambda_.4} parent=5 // pred_region
      %s196 = ssub.s32 %s11, 1
      %p197 = scmp.lt.s32.totalorder %s20, 1
      %s198 = scalar_select %p197, %s20, 1
      %p199 = scmp.lt.s32.totalorder %s21, 1
      %s200 = scalar_select %p199, %s21, 1
      %s201 = smul.addr %s200, 30
      %s202 = smul.addr %s198, 60
      %s203 = sadd.s32 %s201, %s202
      %s204 = smul.addr %s203, 4
      %s205 = scalar_lea.vmem %s0, %s204
      %p206 = pneg %p51
      %p207 = pneg %p48
      %p208 = pneg %p72
      %p209 = pneg %p69
      %p210 = pneg %p100
      %p211 = pneg %p97
      %s212 = smul.u32 8, %s21
      %p213 = scmp.lt.s32.totalorder %s20, 1
      %s214 = scalar_select %p213, %s20, 1
      %p215 = scmp.lt.s32.totalorder %s212, 15
      %s216 = scalar_select %p215, %s212, 15
      %s217 = smul.addr %s216, 2
      %s218 = smul.addr %s214, 32
      %s219 = sadd.s32 %s217, %s218
      %s220 = smul.addr %s219, 4
      %s221 = scalar_lea.vmem %s2, %s220
      %p222 = pneg %p128
      %p223 = pneg %p125
      %p224 = scmp.lt.s32.totalorder %s20, 1
      %s225 = scalar_select %p224, %s20, 1
      %p226 = scmp.lt.s32.totalorder %s21, 1
      %s227 = scalar_select %p226, %s21, 1
      %s228 = smul.addr %s225, 2
      %s229 = sadd.s32 %s227, %s228
      %s230 = scalar_lea.vmem %s3, %s229
      %p231 = pneg %p156
      %p232 = pneg %p153
      %p233 = scmp.lt.s32.totalorder %s20, 1
      %s234 = scalar_select %p233, %s20, 1
      %p235 = scmp.lt.s32.totalorder %s21, 1
      %s236 = scalar_select %p235, %s21, 1
      %s237 = smul.addr %s234, 2
      %s238 = sadd.s32 %s236, %s237
      %s239 = scalar_lea.vmem %s4, %s238
      %p240 = scmp.lt.s32.totalorder %s20, 1
      %s241 = scalar_select %p240, %s20, 1
      %p242 = scmp.lt.s32.totalorder %s21, 1
      %s243 = scalar_select %p242, %s21, 1
      %s244 = smul.addr %s243, 30
      %s245 = smul.addr %s241, 60
      %s246 = sadd.s32 %s244, %s245
      %s247 = smul.addr %s246, 4
      %s248 = scalar_lea.vmem %s0, %s247
      %s249 = smul.u32 8, %s21
      %p250 = scmp.lt.s32.totalorder %s20, 1
      %s251 = scalar_select %p250, %s20, 1
      %p252 = scmp.lt.s32.totalorder %s249, 15
      %s253 = scalar_select %p252, %s249, 15
      %s254 = smul.addr %s253, 2
      %s255 = smul.addr %s251, 32
      %s256 = sadd.s32 %s254, %s255
      %s257 = smul.addr %s256, 4
      %s258 = scalar_lea.vmem %s2, %s257
      %s259 = smul.u32 8, %s21
      %p260 = scmp.lt.s32.totalorder %s20, 1
      %s261 = scalar_select %p260, %s20, 1
      %p262 = scmp.lt.s32.totalorder %s21, 1
      %s263 = scalar_select %p262, %s21, 1
      %s264 = smul.addr %s261, 2
      %s265 = sadd.s32 %s263, %s264
      %s266 = scalar_lea.vmem %s3, %s265
      %p267 = scmp.lt.s32.totalorder %s20, 1
      %s268 = scalar_select %p267, %s20, 1
      %p269 = scmp.lt.s32.totalorder %s21, 1
      %s270 = scalar_select %p269, %s21, 1
      %s271 = smul.addr %s268, 2
      %s272 = sadd.s32 %s270, %s271
      %s273 = scalar_lea.vmem %s4, %s272
      %v275 = vld [vmem:[%s248] sm:$0xf]
      %v276 = vld [vmem:[%s248 + $0x4] sm:$0xf]
      %v277 = vld [vmem:[%s248 + $0x8] sm:$0xf]
      %v278 = vld [vmem:[%s248 + $0xc] sm:$0xf]
      %v279 = vld [vmem:[%s248 + $0x10] sm:$0xf]
      %v280 = vld [vmem:[%s248 + $0x14] sm:$0xf]
      %v281 = vld [vmem:[%s248 + $0x18] sm:$0xf]
      %v282 = vld [vmem:[%s248 + $0x1c] sm:$0xf]
      %v283 = vld [vmem:[%s248 + $0x20] sm:$0xf]
      %v284 = vld [vmem:[%s248 + $0x24] sm:$0xf]
      %v285 = vld [vmem:[%s248 + $0x28] sm:$0xf]
      %v286 = vld [vmem:[%s248 + $0x2c] sm:$0xf]
      %v287 = vld [vmem:[%s248 + $0x30] sm:$0xf]
      %v288 = vld [vmem:[%s248 + $0x34] sm:$0xf]
      %v289 = vld [vmem:[%s248 + $0x38] sm:$0xf]
      %v290 = vld [vmem:[%s248 + $0x3c] sm:$0xf]
      %v291 = vld [vmem:[%s248 + $0x40] sm:$0xf]
      %v292 = vld [vmem:[%s248 + $0x44] sm:$0xf]
      %v293 = vld [vmem:[%s248 + $0x48] sm:$0xf]
      %v294 = vld [vmem:[%s248 + $0x4c] sm:$0xf]
      %v295 = vld [vmem:[%s248 + $0x50] sm:$0xf]
      %v296 = vld [vmem:[%s248 + $0x54] sm:$0xf]
      %v297 = vld [vmem:[%s248 + $0x58] sm:$0xf]
      %v298 = vld [vmem:[%s248 + $0x5c] sm:$0xf]
      %v299 = vld [vmem:[%s1] sm:$0xff]
      %v300 = vld [vmem:[%s1 + $0x8] sm:$0xf]
      %v301 = vld [vmem:[%s1 + $0xc] sm:$0xff]
      %v302 = vld [vmem:[%s1 + $0x14] sm:$0xf]
      %v303 = vld [vmem:[%s1 + $0x18] sm:$0xff]
      %v304 = vld [vmem:[%s1 + $0x20] sm:$0xf]
      %v305 = vld [vmem:[%s1 + $0x24] sm:$0xff]
      %v306 = vld [vmem:[%s1 + $0x2c] sm:$0xf]
      %v307 = vld [vmem:[%s1 + $0x30] sm:$0xff]
      %v308 = vld [vmem:[%s1 + $0x38] sm:$0xf]
      %v309 = vld [vmem:[%s1 + $0x3c] sm:$0xff]
      %v310 = vld [vmem:[%s1 + $0x44] sm:$0xf]
      %v311 = vld [vmem:[%s1 + $0x48] sm:$0xff]
      %v312 = vld [vmem:[%s1 + $0x50] sm:$0xf]
      %v313 = vld [vmem:[%s1 + $0x54] sm:$0xff]
      %v314 = vld [vmem:[%s1 + $0x5c] sm:$0xf]
      %v315 = vld [vmem:[%s1 + $0x60] sm:$0xff]
      %v316 = vld [vmem:[%s1 + $0x68] sm:$0xf]
      %v317 = vld [vmem:[%s1 + $0x6c] sm:$0xff]
      %v318 = vld [vmem:[%s1 + $0x74] sm:$0xf]
      %v319 = vld [vmem:[%s1 + $0x78] sm:$0xff]
      %v320 = vld [vmem:[%s1 + $0x80] sm:$0xf]
      %v321 = vld [vmem:[%s1 + $0x84] sm:$0xff]
      %v322 = vld [vmem:[%s1 + $0x8c] sm:$0xf]
      %v323 = vld [vmem:[%s1 + $0x90] sm:$0xff]
      %v324 = vld [vmem:[%s1 + $0x98] sm:$0xf]
      %v325 = vld [vmem:[%s1 + $0x9c] sm:$0xff]
      %v326 = vld [vmem:[%s1 + $0xa4] sm:$0xf]
      %v327 = vld [vmem:[%s1 + $0xa8] sm:$0xff]
      %v328 = vld [vmem:[%s1 + $0xb0] sm:$0xf]
      %v329 = vld [vmem:[%s1 + $0xb4] sm:$0xff]
      %v330 = vld [vmem:[%s1 + $0xbc] sm:$0xf]
      %v355 = vunpack.c.l.b16 %v275
      %v356 = vunpack.c.l.b16 %v276
      %v357 = vunpack.c.l.b16 %v277
      %v358 = vunpack.c.l.b16 %v278
      %v359 = vunpack.c.l.b16 %v279
      %v360 = vunpack.c.l.b16 %v280
      %v361 = vunpack.c.l.b16 %v281
      %v362 = vunpack.c.l.b16 %v282
      %v363 = vunpack.c.l.b16 %v283
      %v364 = vunpack.c.l.b16 %v284
      %v365 = vunpack.c.l.b16 %v285
      %v366 = vunpack.c.l.b16 %v286
      %v367 = vunpack.c.l.b16 %v287
      %v368 = vunpack.c.l.b16 %v288
      %v369 = vunpack.c.l.b16 %v289
      %v370 = vunpack.c.l.b16 %v290
      %v371 = vunpack.c.l.b16 %v291
      %v372 = vunpack.c.l.b16 %v292
      %v373 = vunpack.c.l.b16 %v293
      %v374 = vunpack.c.l.b16 %v294
      %v375 = vunpack.c.l.b16 %v295
      %v376 = vunpack.c.l.b16 %v296
      %v377 = vunpack.c.l.b16 %v297
      %v378 = vunpack.c.l.b16 %v298
      %v379 = vpack.c.b16 %v356, %v355
      %v380 = vpack.c.b16 %v358, %v357
      %v381 = vpack.c.b16 %v360, %v359
      %v382 = vpack.c.b16 %v362, %v361
      %v383 = vpack.c.b16 %v364, %v363
      %v384 = vpack.c.b16 %v366, %v365
      %v385 = vpack.c.b16 %v368, %v367
      %v386 = vpack.c.b16 %v370, %v369
      %v387 = vpack.c.b16 %v372, %v371
      %v388 = vpack.c.b16 %v374, %v373
      %v389 = vpack.c.b16 %v376, %v375
      %v390 = vpack.c.b16 %v378, %v377
      %v435 = vunpack.c.l.b16 %v299
      %v436 = vunpack.c.h.b16 %v299
      %v437 = vunpack.c.l.b16 %v300
      %v438 = vunpack.c.l.b16 %v301
      %v439 = vunpack.c.h.b16 %v301
      %v440 = vunpack.c.l.b16 %v302
      %v441 = vunpack.c.l.b16 %v303
      %v442 = vunpack.c.h.b16 %v303
      %v443 = vunpack.c.l.b16 %v304
      %v444 = vunpack.c.l.b16 %v305
      %v445 = vunpack.c.h.b16 %v305
      %v446 = vunpack.c.l.b16 %v306
      %v447 = vunpack.c.l.b16 %v307
      %v448 = vunpack.c.h.b16 %v307
      %v449 = vunpack.c.l.b16 %v308
      %v450 = vunpack.c.l.b16 %v309
      %v451 = vunpack.c.h.b16 %v309
      %v452 = vunpack.c.l.b16 %v310
      %v453 = vunpack.c.l.b16 %v311
      %v454 = vunpack.c.h.b16 %v311
      %v455 = vunpack.c.l.b16 %v312
      %v456 = vunpack.c.l.b16 %v313
      %v457 = vunpack.c.h.b16 %v313
      %v458 = vunpack.c.l.b16 %v314
      %v459 = vunpack.c.l.b16 %v315
      %v460 = vunpack.c.h.b16 %v315
      %v461 = vunpack.c.l.b16 %v316
      %v462 = vunpack.c.l.b16 %v317
      %v463 = vunpack.c.h.b16 %v317
      %v464 = vunpack.c.l.b16 %v318
      %v465 = vunpack.c.l.b16 %v319
      %v466 = vunpack.c.h.b16 %v319
      %v467 = vunpack.c.l.b16 %v320
      %v468 = vunpack.c.l.b16 %v321
      %v469 = vunpack.c.h.b16 %v321
      %v470 = vunpack.c.l.b16 %v322
      %v471 = vunpack.c.l.b16 %v323
      %v472 = vunpack.c.h.b16 %v323
      %v473 = vunpack.c.l.b16 %v324
      %v474 = vunpack.c.l.b16 %v325
      %v475 = vunpack.c.h.b16 %v325
      %v476 = vunpack.c.l.b16 %v326
      %v477 = vunpack.c.l.b16 %v327
      %v478 = vunpack.c.h.b16 %v327
      %v479 = vunpack.c.l.b16 %v328
      %v480 = vunpack.c.l.b16 %v329
      %v481 = vunpack.c.h.b16 %v329
      %v482 = vunpack.c.l.b16 %v330
      %v483 = vpack.c.b16 %v438, %v435
      %v484 = vpack.c.b16 %v439, %v436
      %v485 = vpack.c.b16 %v440, %v437
      %v486 = vpack.c.b16 %v444, %v441
      %v487 = vpack.c.b16 %v445, %v442
      %v488 = vpack.c.b16 %v446, %v443
      %v489 = vpack.c.b16 %v450, %v447
      %v490 = vpack.c.b16 %v451, %v448
      %v491 = vpack.c.b16 %v452, %v449
      %v492 = vpack.c.b16 %v456, %v453
      %v493 = vpack.c.b16 %v457, %v454
      %v494 = vpack.c.b16 %v458, %v455
      %v495 = vpack.c.b16 %v462, %v459
      %v496 = vpack.c.b16 %v463, %v460
      %v497 = vpack.c.b16 %v464, %v461
      %v498 = vpack.c.b16 %v468, %v465
      %v499 = vpack.c.b16 %v469, %v466
      %v500 = vpack.c.b16 %v470, %v467
      %v501 = vpack.c.b16 %v474, %v471
      %v502 = vpack.c.b16 %v475, %v472
      %v503 = vpack.c.b16 %v476, %v473
      %v504 = vpack.c.b16 %v480, %v477
      %v505 = vpack.c.b16 %v481, %v478
      %v506 = vpack.c.b16 %v482, %v479
      %531 = vmatprep.subr.bf16.mxu0 %v484
      %532 = vmatpush1.bf16.msra.mxu0 %v483
      %533 = vmatprep.subr.bf16.mxu0 %v487
      %534 = vmatpush1.bf16.msra.mxu0 %v486
      %535 = vmatprep.subr.bf16.mxu0 %v490
      %536 = vmatpush1.bf16.msra.mxu0 %v489
      %537 = vmatprep.subr.bf16.mxu0 %v493
      %538 = vmatpush1.bf16.msra.mxu0 %v492
      %539 = vmatprep.subr.bf16.mxu0 %v496
      %540 = vmatpush1.bf16.msra.mxu0 %v495
      %541 = vmatprep.subr.bf16.mxu0 %v499
      %542 = vmatpush1.bf16.msra.mxu0 %v498
      %543 = vmatprep.subr.bf16.mxu0 %v502
      %544 = vmatpush1.bf16.msra.mxu0 %v501
      %545 = vmatprep.subr.bf16.mxu0 %v505
      %546 = vmatpush1.bf16.msra.mxu0 %v504
      %547 = vmatprep.subr.bf16.mxu0 0
      %548 = vmatpush1.bf16.msra.mxu0 0
      %549 = vmatprep.subr.bf16.mxu0 0
      %550 = vmatpush1.bf16.msra.mxu0 0
      %551 = vmatprep.subr.bf16.mxu0 0
      %552 = vmatpush1.bf16.msra.mxu0 0
      %553 = vmatprep.subr.bf16.mxu0 0
      %554 = vmatpush1.bf16.msra.mxu0 0
      %555 = vmatprep.subr.bf16.mxu0 0
      %556 = vmatpush1.bf16.msra.mxu0 0
      %557 = vmatprep.subr.bf16.mxu0 0
      %558 = vmatpush1.bf16.msra.mxu0 0
      %559 = vmatprep.subr.bf16.mxu0 0
      %560 = vmatpush1.bf16.msra.mxu0 0
      %561 = vmatprep.subr.bf16.mxu0 0
      %562 = vmatpush1.bf16.msra.mxu0 0
      %563 = vmatprep.mubr.bf16.mxu0 0
      %564 = vmatmul.mubr.bf16.gmra.mrb[0].mxu0 %v379
      %v565 = vpop.f32.mrb[0].mxu0
      %v566 = vadd.f32 0.0, %v565
      %v567 = vpop.f32.mrb[0].mxu0
      %v568 = vadd.f32 0.0, %v567
      %v569 = vpop.f32.mrb[0].mxu0
      %v570 = vadd.f32 0.0, %v569
      %v571 = vpop.f32.mrb[0].mxu0
      %v572 = vadd.f32 0.0, %v571
      %573 = vmatprep.mubr.bf16.mxu0 0
      %574 = vmatmul.mubr.bf16.gmra.mrb[0].mxu0 %v380
      %v575 = vpop.f32.mrb[0].mxu0
      %v576 = vadd.f32 0.0, %v575
      %v577 = vpop.f32.mrb[0].mxu0
      %v578 = vadd.f32 0.0, %v577
      %v579 = vpop.f32.mrb[0].mxu0
      %v580 = vadd.f32 0.0, %v579
      %v581 = vpop.f32.mrb[0].mxu0
      %v582 = vadd.f32 0.0, %v581
      %583 = vmatprep.mubr.bf16.mxu0 0
      %584 = vmatmul.mubr.bf16.gmra.mrb[0].mxu0 %v381
      %v585 = vpop.f32.mrb[0].mxu0
      %v586 = vadd.f32 0.0, %v585
      %v587 = vpop.f32.mrb[0].mxu0
      %v588 = vadd.f32 0.0, %v587
      %v589 = vpop.f32.mrb[0].mxu0
      %v590 = vadd.f32 0.0, %v589
      %v591 = vpop.f32.mrb[0].mxu0
      %v592 = vadd.f32 0.0, %v591
      %593 = vmatprep.mubr.bf16.mxu0 0
      %594 = vmatmul.mubr.bf16.gmra.mrb[0].mxu0 %v382
      %v595 = vpop.f32.mrb[0].mxu0
      %v596 = vadd.f32 0.0, %v595
      %v597 = vpop.f32.mrb[0].mxu0
      %v598 = vadd.f32 0.0, %v597
      %v599 = vpop.f32.mrb[0].mxu0
      %v600 = vadd.f32 0.0, %v599
      %v601 = vpop.f32.mrb[0].mxu0
      %v602 = vadd.f32 0.0, %v601
      %603 = vmatprep.mubr.bf16.mxu0 0
      %604 = vmatmul.mubr.bf16.gmra.mrb[0].mxu0 %v383
      %v605 = vpop.f32.mrb[0].mxu0
      %v606 = vadd.f32 0.0, %v605
      %v607 = vpop.f32.mrb[0].mxu0
      %v608 = vadd.f32 0.0, %v607
      %v609 = vpop.f32.mrb[0].mxu0
      %v610 = vadd.f32 0.0, %v609
      %v611 = vpop.f32.mrb[0].mxu0
      %v612 = vadd.f32 0.0, %v611
      %613 = vmatprep.mubr.bf16.mxu0 0
      %614 = vmatmul.mubr.bf16.gmra.mrb[0].mxu0 %v384
      %v615 = vpop.f32.mrb[0].mxu0
      %v616 = vadd.f32 0.0, %v615
      %v617 = vpop.f32.mrb[0].mxu0
      %v618 = vadd.f32 0.0, %v617
      %v619 = vpop.f32.mrb[0].mxu0
      %v620 = vadd.f32 0.0, %v619
      %v621 = vpop.f32.mrb[0].mxu0
      %v622 = vadd.f32 0.0, %v621
      %623 = vmatprep.mubr.bf16.mxu0 0
      %624 = vmatmul.mubr.bf16.gmra.mrb[0].mxu0 %v385
      %v625 = vpop.f32.mrb[0].mxu0
      %v626 = vadd.f32 0.0, %v625
      %v627 = vpop.f32.mrb[0].mxu0
      %v628 = vadd.f32 0.0, %v627
      %v629 = vpop.f32.mrb[0].mxu0
      %v630 = vadd.f32 0.0, %v629
      %v631 = vpop.f32.mrb[0].mxu0
      %v632 = vadd.f32 0.0, %v631
      %633 = vmatprep.mubr.bf16.mxu0 0
      %634 = vmatmul.mubr.bf16.gmra.mrb[0].mxu0 %v386
      %v635 = vpop.f32.mrb[0].mxu0
      %v636 = vadd.f32 0.0, %v635
      %v637 = vpop.f32.mrb[0].mxu0
      %v638 = vadd.f32 0.0, %v637
      %v639 = vpop.f32.mrb[0].mxu0
      %v640 = vadd.f32 0.0, %v639
      %v641 = vpop.f32.mrb[0].mxu0
      %v642 = vadd.f32 0.0, %v641
      %643 = vmatprep.mubr.bf16.mxu0 0
      %644 = vmatmul.mubr.bf16.gmra.mrb[0].mxu0 %v387
      %v645 = vpop.f32.mrb[0].mxu0
      %v646 = vadd.f32 0.0, %v645
      %v647 = vpop.f32.mrb[0].mxu0
      %v648 = vadd.f32 0.0, %v647
      %v649 = vpop.f32.mrb[0].mxu0
      %v650 = vadd.f32 0.0, %v649
      %v651 = vpop.f32.mrb[0].mxu0
      %v652 = vadd.f32 0.0, %v651
      %653 = vmatprep.mubr.bf16.mxu0 0
      %654 = vmatmul.mubr.bf16.gmra.mrb[0].mxu0 %v388
      %v655 = vpop.f32.mrb[0].mxu0
      %v656 = vadd.f32 0.0, %v655
      %v657 = vpop.f32.mrb[0].mxu0
      %v658 = vadd.f32 0.0, %v657
      %v659 = vpop.f32.mrb[0].mxu0
      %v660 = vadd.f32 0.0, %v659
      %v661 = vpop.f32.mrb[0].mxu0
      %v662 = vadd.f32 0.0, %v661
      %663 = vmatprep.mubr.bf16.mxu0 0
      %664 = vmatmul.mubr.bf16.gmra.mrb[0].mxu0 %v389
      %v665 = vpop.f32.mrb[0].mxu0
      %v666 = vadd.f32 0.0, %v665
      %v667 = vpop.f32.mrb[0].mxu0
      %v668 = vadd.f32 0.0, %v667
      %v669 = vpop.f32.mrb[0].mxu0
      %v670 = vadd.f32 0.0, %v669
      %v671 = vpop.f32.mrb[0].mxu0
      %v672 = vadd.f32 0.0, %v671
      %673 = vmatprep.mubr.bf16.mxu0 0
      %674 = vmatmul.mubr.bf16.gmra.mrb[0].mxu0 %v390
      %v675 = vpop.f32.mrb[0].mxu0
      %v676 = vadd.f32 0.0, %v675
      %v677 = vpop.f32.mrb[0].mxu0
      %v678 = vadd.f32 0.0, %v677
      %v679 = vpop.f32.mrb[0].mxu0
      %v680 = vadd.f32 0.0, %v679
      %v681 = vpop.f32.mrb[0].mxu0
      %v682 = vadd.f32 0.0, %v681
      %683 = vdwg.mxu0
      %684 = vmatprep.subr.bf16.mxu0 0
      %685 = vmatpush1.bf16.msra.mxu0 %v485
      %686 = vmatprep.subr.bf16.mxu0 0
      %687 = vmatpush1.bf16.msra.mxu0 %v488
      %688 = vmatprep.subr.bf16.mxu0 0
      %689 = vmatpush1.bf16.msra.mxu0 %v491
      %690 = vmatprep.subr.bf16.mxu0 0
      %691 = vmatpush1.bf16.msra.mxu0 %v494
      %692 = vmatprep.subr.bf16.mxu0 0
      %693 = vmatpush1.bf16.msra.mxu0 %v497
      %694 = vmatprep.subr.bf16.mxu0 0
      %695 = vmatpush1.bf16.msra.mxu0 %v500
      %696 = vmatprep.subr.bf16.mxu0 0
      %697 = vmatpush1.bf16.msra.mxu0 %v503
      %698 = vmatprep.subr.bf16.mxu0 0
      %699 = vmatpush1.bf16.msra.mxu0 %v506
      %700 = vmatprep.subr.bf16.mxu0 0
      %701 = vmatpush1.bf16.msra.mxu0 0
      %702 = vmatprep.subr.bf16.mxu0 0
      %703 = vmatpush1.bf16.msra.mxu0 0
      %704 = vmatprep.subr.bf16.mxu0 0
      %705 = vmatpush1.bf16.msra.mxu0 0
      %706 = vmatprep.subr.bf16.mxu0 0
      %707 = vmatpush1.bf16.msra.mxu0 0
      %708 = vmatprep.subr.bf16.mxu0 0
      %709 = vmatpush1.bf16.msra.mxu0 0
      %710 = vmatprep.subr.bf16.mxu0 0
      %711 = vmatpush1.bf16.msra.mxu0 0
      %712 = vmatprep.subr.bf16.mxu0 0
      %713 = vmatpush1.bf16.msra.mxu0 0
      %714 = vmatprep.subr.bf16.mxu0 0
      %715 = vmatpush1.bf16.msra.mxu0 0
      %716 = vmatprep.mubr.bf16.mxu0 0
      %717 = vmatmul.mubr.bf16.gmra.mrb[0].mxu0 %v379
      %v718 = vpop.f32.mrb[0].mxu0
      %v719 = vadd.f32 0.0, %v718
      %v720 = vpop.f32.mrb[0].mxu0
      %v721 = vpop.f32.mrb[0].mxu0
      %v722 = vadd.f32 0.0, %v721
      %v723 = vpop.f32.mrb[0].mxu0
      %724 = vmatprep.mubr.bf16.mxu0 0
      %725 = vmatmul.mubr.bf16.gmra.mrb[0].mxu0 %v380
      %v726 = vpop.f32.mrb[0].mxu0
      %v727 = vadd.f32 0.0, %v726
      %v728 = vpop.f32.mrb[0].mxu0
      %v729 = vpop.f32.mrb[0].mxu0
      %v730 = vadd.f32 0.0, %v729
      %v731 = vpop.f32.mrb[0].mxu0
      %732 = vmatprep.mubr.bf16.mxu0 0
      %733 = vmatmul.mubr.bf16.gmra.mrb[0].mxu0 %v381
      %v734 = vpop.f32.mrb[0].mxu0
      %v735 = vadd.f32 0.0, %v734
      %v736 = vpop.f32.mrb[0].mxu0
      %v737 = vpop.f32.mrb[0].mxu0
      %v738 = vadd.f32 0.0, %v737
      %v739 = vpop.f32.mrb[0].mxu0
      %740 = vmatprep.mubr.bf16.mxu0 0
      %741 = vmatmul.mubr.bf16.gmra.mrb[0].mxu0 %v382
      %v742 = vpop.f32.mrb[0].mxu0
      %v743 = vadd.f32 0.0, %v742
      %v744 = vpop.f32.mrb[0].mxu0
      %v745 = vpop.f32.mrb[0].mxu0
      %v746 = vadd.f32 0.0, %v745
      %v747 = vpop.f32.mrb[0].mxu0
      %748 = vmatprep.mubr.bf16.mxu0 0
      %749 = vmatmul.mubr.bf16.gmra.mrb[0].mxu0 %v383
      %v750 = vpop.f32.mrb[0].mxu0
      %v751 = vadd.f32 0.0, %v750
      %v752 = vpop.f32.mrb[0].mxu0
      %v753 = vpop.f32.mrb[0].mxu0
      %v754 = vadd.f32 0.0, %v753
      %v755 = vpop.f32.mrb[0].mxu0
      %756 = vmatprep.mubr.bf16.mxu0 0
      %757 = vmatmul.mubr.bf16.gmra.mrb[0].mxu0 %v384
      %v758 = vpop.f32.mrb[0].mxu0
      %v759 = vadd.f32 0.0, %v758
      %v760 = vpop.f32.mrb[0].mxu0
      %v761 = vpop.f32.mrb[0].mxu0
      %v762 = vadd.f32 0.0, %v761
      %v763 = vpop.f32.mrb[0].mxu0
      %764 = vmatprep.mubr.bf16.mxu0 0
      %765 = vmatmul.mubr.bf16.gmra.mrb[0].mxu0 %v385
      %v766 = vpop.f32.mrb[0].mxu0
      %v767 = vadd.f32 0.0, %v766
      %v768 = vpop.f32.mrb[0].mxu0
      %v769 = vpop.f32.mrb[0].mxu0
      %v770 = vadd.f32 0.0, %v769
      %v771 = vpop.f32.mrb[0].mxu0
      %772 = vmatprep.mubr.bf16.mxu0 0
      %773 = vmatmul.mubr.bf16.gmra.mrb[0].mxu0 %v386
      %v774 = vpop.f32.mrb[0].mxu0
      %v775 = vadd.f32 0.0, %v774
      %v776 = vpop.f32.mrb[0].mxu0
      %v777 = vpop.f32.mrb[0].mxu0
      %v778 = vadd.f32 0.0, %v777
      %v779 = vpop.f32.mrb[0].mxu0
      %780 = vmatprep.mubr.bf16.mxu0 0
      %781 = vmatmul.mubr.bf16.gmra.mrb[0].mxu0 %v387
      %v782 = vpop.f32.mrb[0].mxu0
      %v783 = vadd.f32 0.0, %v782
      %v784 = vpop.f32.mrb[0].mxu0
      %v785 = vpop.f32.mrb[0].mxu0
      %v786 = vadd.f32 0.0, %v785
      %v787 = vpop.f32.mrb[0].mxu0
      %788 = vmatprep.mubr.bf16.mxu0 0
      %789 = vmatmul.mubr.bf16.gmra.mrb[0].mxu0 %v388
      %v790 = vpop.f32.mrb[0].mxu0
      %v791 = vadd.f32 0.0, %v790
      %v792 = vpop.f32.mrb[0].mxu0
      %v793 = vpop.f32.mrb[0].mxu0
      %v794 = vadd.f32 0.0, %v793
      %v795 = vpop.f32.mrb[0].mxu0
      %796 = vmatprep.mubr.bf16.mxu0 0
      %797 = vmatmul.mubr.bf16.gmra.mrb[0].mxu0 %v389
      %v798 = vpop.f32.mrb[0].mxu0
      %v799 = vadd.f32 0.0, %v798
      %v800 = vpop.f32.mrb[0].mxu0
      %v801 = vpop.f32.mrb[0].mxu0
      %v802 = vadd.f32 0.0, %v801
      %v803 = vpop.f32.mrb[0].mxu0
      %804 = vmatprep.mubr.bf16.mxu0 0
      %805 = vmatmul.mubr.bf16.gmra.mrb[0].mxu0 %v390
      %v806 = vpop.f32.mrb[0].mxu0
      %v807 = vadd.f32 0.0, %v806
      %v808 = vpop.f32.mrb[0].mxu0
      %v809 = vpop.f32.mrb[0].mxu0
      %v810 = vadd.f32 0.0, %v809
      %v811 = vpop.f32.mrb[0].mxu0
      %812 = vdwg.mxu0
      %813 = vst [vmem:[#allocation2] sm:$0xff] %v566
      %814 = vst [vmem:[#allocation2 + $0x8] sm:$0xff] %v568
      %815 = vst [vmem:[#allocation2 + $0x10] sm:$0xff] %v719
      %816 = vst [vmem:[#allocation2 + $0x18] sm:$0xff] %v570
      %817 = vst [vmem:[#allocation2 + $0x20] sm:$0xff] %v572
      %818 = vst [vmem:[#allocation2 + $0x28] sm:$0xff] %v722
      %819 = vst [vmem:[#allocation2 + $0x30] sm:$0xff] %v576
      %820 = vst [vmem:[#allocation2 + $0x38] sm:$0xff] %v578
      %821 = vst [vmem:[#allocation2 + $0x40] sm:$0xff] %v727
      %822 = vst [vmem:[#allocation2 + $0x48] sm:$0xff] %v580
      %823 = vst [vmem:[#allocation2 + $0x50] sm:$0xff] %v582
      %824 = vst [vmem:[#allocation2 + $0x58] sm:$0xff] %v730
      %825 = vst [vmem:[#allocation2 + $0x60] sm:$0xff] %v586
      %826 = vst [vmem:[#allocation2 + $0x68] sm:$0xff] %v588
      %827 = vst [vmem:[#allocation2 + $0x70] sm:$0xff] %v735
      %828 = vst [vmem:[#allocation2 + $0x78] sm:$0xff] %v590
      %829 = vst [vmem:[#allocation2 + $0x80] sm:$0xff] %v592
      %830 = vst [vmem:[#allocation2 + $0x88] sm:$0xff] %v738
      %831 = vst [vmem:[#allocation2 + $0x90] sm:$0xff] %v596
      %832 = vst [vmem:[#allocation2 + $0x98] sm:$0xff] %v598
      %833 = vst [vmem:[#allocation2 + $0xa0] sm:$0xff] %v743
      %834 = vst [vmem:[#allocation2 + $0xa8] sm:$0xff] %v600
      %835 = vst [vmem:[#allocation2 + $0xb0] sm:$0xff] %v602
      %836 = vst [vmem:[#allocation2 + $0xb8] sm:$0xff] %v746
      %837 = vst [vmem:[#allocation2 + $0xc0] sm:$0xff] %v606
      %838 = vst [vmem:[#allocation2 + $0xc8] sm:$0xff] %v608
      %839 = vst [vmem:[#allocation2 + $0xd0] sm:$0xff] %v751
      %840 = vst [vmem:[#allocation2 + $0xd8] sm:$0xff] %v610
      %841 = vst [vmem:[#allocation2 + $0xe0] sm:$0xff] %v612
      %842 = vst [vmem:[#allocation2 + $0xe8] sm:$0xff] %v754
      %843 = vst [vmem:[#allocation2 + $0xf0] sm:$0xff] %v616
      %844 = vst [vmem:[#allocation2 + $0xf8] sm:$0xff] %v618
      %845 = vst [vmem:[#allocation2 + $0x100] sm:$0xff] %v759
      %846 = vst [vmem:[#allocation2 + $0x108] sm:$0xff] %v620
      %847 = vst [vmem:[#allocation2 + $0x110] sm:$0xff] %v622
      %848 = vst [vmem:[#allocation2 + $0x118] sm:$0xff] %v762
      %849 = vst [vmem:[#allocation2 + $0x120] sm:$0xff] %v626
      %850 = vst [vmem:[#allocation2 + $0x128] sm:$0xff] %v628
      %851 = vst [vmem:[#allocation2 + $0x130] sm:$0xff] %v767
      %852 = vst [vmem:[#allocation2 + $0x138] sm:$0xff] %v630
      %853 = vst [vmem:[#allocation2 + $0x140] sm:$0xff] %v632
      %854 = vst [vmem:[#allocation2 + $0x148] sm:$0xff] %v770
      %855 = vst [vmem:[#allocation2 + $0x150] sm:$0xff] %v636
      %856 = vst [vmem:[#allocation2 + $0x158] sm:$0xff] %v638
      %857 = vst [vmem:[#allocation2 + $0x160] sm:$0xff] %v775
      %858 = vst [vmem:[#allocation2 + $0x168] sm:$0xff] %v640
      %859 = vst [vmem:[#allocation2 + $0x170] sm:$0xff] %v642
      %860 = vst [vmem:[#allocation2 + $0x178] sm:$0xff] %v778
      %861 = vst [vmem:[#allocation2 + $0x180] sm:$0xff] %v646
      %862 = vst [vmem:[#allocation2 + $0x188] sm:$0xff] %v648
      %863 = vst [vmem:[#allocation2 + $0x190] sm:$0xff] %v783
      %864 = vst [vmem:[#allocation2 + $0x198] sm:$0xff] %v650
      %865 = vst [vmem:[#allocation2 + $0x1a0] sm:$0xff] %v652
      %866 = vst [vmem:[#allocation2 + $0x1a8] sm:$0xff] %v786
      %867 = vst [vmem:[#allocation2 + $0x1b0] sm:$0xff] %v656
      %868 = vst [vmem:[#allocation2 + $0x1b8] sm:$0xff] %v658
      %869 = vst [vmem:[#allocation2 + $0x1c0] sm:$0xff] %v791
      %870 = vst [vmem:[#allocation2 + $0x1c8] sm:$0xff] %v660
      %871 = vst [vmem:[#allocation2 + $0x1d0] sm:$0xff] %v662
      %872 = vst [vmem:[#allocation2 + $0x1d8] sm:$0xff] %v794
      %873 = vst [vmem:[#allocation2 + $0x1e0] sm:$0xff] %v666
      %874 = vst [vmem:[#allocation2 + $0x1e8] sm:$0xff] %v668
      %875 = vst [vmem:[#allocation2 + $0x1f0] sm:$0xff] %v799
      %876 = vst [vmem:[#allocation2 + $0x1f8] sm:$0xff] %v670
      %877 = vst [vmem:[#allocation2 + $0x200] sm:$0xff] %v672
      %878 = vst [vmem:[#allocation2 + $0x208] sm:$0xff] %v802
      %879 = vst [vmem:[#allocation2 + $0x210] sm:$0xff] %v676
      %880 = vst [vmem:[#allocation2 + $0x218] sm:$0xff] %v678
      %881 = vst [vmem:[#allocation2 + $0x220] sm:$0xff] %v807
      %882 = vst [vmem:[#allocation2 + $0x228] sm:$0xff] %v680
      %883 = vst [vmem:[#allocation2 + $0x230] sm:$0xff] %v682
      %884 = vst [vmem:[#allocation2 + $0x238] sm:$0xff] %v810
      %s885 = scalar_lea.vmem %s248, 12
      %v886 = vld [vmem:[%s885] sm:$0xf]
      %v887 = vld [vmem:[%s885 + $0x4] sm:$0xf]
      %v888 = vld [vmem:[%s885 + $0x8] sm:$0xf]
      %v889 = vld [vmem:[%s885 + $0xc] sm:$0xf]
      %v890 = vld [vmem:[%s885 + $0x10] sm:$0xf]
      %v891 = vld [vmem:[%s885 + $0x14] sm:$0xf]
      %v892 = vld [vmem:[%s885 + $0x18] sm:$0xf]
      %v893 = vld [vmem:[%s885 + $0x1c] sm:$0xf]
      %v894 = vld [vmem:[%s885 + $0x20] sm:$0xf]
      %v895 = vld [vmem:[%s885 + $0x24] sm:$0xf]
      %v896 = vld [vmem:[%s885 + $0x28] sm:$0xf]
      %v897 = vld [vmem:[%s885 + $0x2c] sm:$0xf]
      %v898 = vld [vmem:[%s885 + $0x30] sm:$0xf]
      %v899 = vld [vmem:[%s885 + $0x34] sm:$0xf]
      %v900 = vld [vmem:[%s885 + $0x38] sm:$0xf]
      %v901 = vld [vmem:[%s885 + $0x3c] sm:$0xf]
      %v902 = vld [vmem:[%s885 + $0x40] sm:$0xf]
      %v903 = vld [vmem:[%s885 + $0x44] sm:$0xf]
      %v904 = vld [vmem:[%s885 + $0x48] sm:$0xf]
      %v905 = vld [vmem:[%s885 + $0x4c] sm:$0xf]
      %v906 = vld [vmem:[%s885 + $0x50] sm:$0xf]
      %v907 = vld [vmem:[%s885 + $0x54] sm:$0xf]
      %v908 = vld [vmem:[%s885 + $0x58] sm:$0xf]
      %v909 = vld [vmem:[%s885 + $0x5c] sm:$0xf]
      %s910 = scalar_lea.vmem %s1, 192
      %v911 = vld [vmem:[%s910] sm:$0xff]
      %v912 = vld [vmem:[%s910 + $0x8] sm:$0xf]
      %v913 = vld [vmem:[%s910 + $0xc] sm:$0xff]
      %v914 = vld [vmem:[%s910 + $0x14] sm:$0xf]
      %v915 = vld [vmem:[%s910 + $0x18] sm:$0xff]
      %v916 = vld [vmem:[%s910 + $0x20] sm:$0xf]
      %v917 = vld [vmem:[%s910 + $0x24] sm:$0xff]
      %v918 = vld [vmem:[%s910 + $0x2c] sm:$0xf]
      %v919 = vld [vmem:[%s910 + $0x30] sm:$0xff]
      %v920 = vld [vmem:[%s910 + $0x38] sm:$0xf]
      %v921 = vld [vmem:[%s910 + $0x3c] sm:$0xff]
      %v922 = vld [vmem:[%s910 + $0x44] sm:$0xf]
      %v923 = vld [vmem:[%s910 + $0x48] sm:$0xff]
      %v924 = vld [vmem:[%s910 + $0x50] sm:$0xf]
      %v925 = vld [vmem:[%s910 + $0x54] sm:$0xff]
      %v926 = vld [vmem:[%s910 + $0x5c] sm:$0xf]
      %v927 = vld [vmem:[%s910 + $0x60] sm:$0xff]
      %v928 = vld [vmem:[%s910 + $0x68] sm:$0xf]
      %v929 = vld [vmem:[%s910 + $0x6c] sm:$0xff]
      %v930 = vld [vmem:[%s910 + $0x74] sm:$0xf]
      %v931 = vld [vmem:[%s910 + $0x78] sm:$0xff]
      %v932 = vld [vmem:[%s910 + $0x80] sm:$0xf]
      %v933 = vld [vmem:[%s910 + $0x84] sm:$0xff]
      %v934 = vld [vmem:[%s910 + $0x8c] sm:$0xf]
      %v935 = vld [vmem:[%s910 + $0x90] sm:$0xff]
      %v936 = vld [vmem:[%s910 + $0x98] sm:$0xf]
      %v937 = vld [vmem:[%s910 + $0x9c] sm:$0xff]
      %v938 = vld [vmem:[%s910 + $0xa4] sm:$0xf]
      %v939 = vld [vmem:[%s910 + $0xa8] sm:$0xff]
      %v940 = vld [vmem:[%s910 + $0xb0] sm:$0xf]
      %v941 = vld [vmem:[%s910 + $0xb4] sm:$0xff]
      %v942 = vld [vmem:[%s910 + $0xbc] sm:$0xf]
      %v967 = vunpack.c.l.b16 %v886
      %v968 = vunpack.c.l.b16 %v887
      %v969 = vunpack.c.l.b16 %v888
      %v970 = vunpack.c.l.b16 %v889
      %v971 = vunpack.c.l.b16 %v890
      %v972 = vunpack.c.l.b16 %v891
      %v973 = vunpack.c.l.b16 %v892
      %v974 = vunpack.c.l.b16 %v893
      %v975 = vunpack.c.l.b16 %v894
      %v976 = vunpack.c.l.b16 %v895
      %v977 = vunpack.c.l.b16 %v896
      %v978 = vunpack.c.l.b16 %v897
      %v979 = vunpack.c.l.b16 %v898
      %v980 = vunpack.c.l.b16 %v899
      %v981 = vunpack.c.l.b16 %v900
      %v982 = vunpack.c.l.b16 %v901
      %v983 = vunpack.c.l.b16 %v902
      %v984 = vunpack.c.l.b16 %v903
      %v985 = vunpack.c.l.b16 %v904
      %v986 = vunpack.c.l.b16 %v905
      %v987 = vunpack.c.l.b16 %v906
      %v988 = vunpack.c.l.b16 %v907
      %v989 = vunpack.c.l.b16 %v908
      %v990 = vunpack.c.l.b16 %v909
      %v991 = vpack.c.b16 %v968, %v967
      %v992 = vpack.c.b16 %v970, %v969
      %v993 = vpack.c.b16 %v972, %v971
      %v994 = vpack.c.b16 %v974, %v973
      %v995 = vpack.c.b16 %v976, %v975
      %v996 = vpack.c.b16 %v978, %v977
      %v997 = vpack.c.b16 %v980, %v979
      %v998 = vpack.c.b16 %v982, %v981
      %v999 = vpack.c.b16 %v984, %v983
      %v1000 = vpack.c.b16 %v986, %v985
      %v1001 = vpack.c.b16 %v988, %v987
      %v1002 = vpack.c.b16 %v990, %v989
      %v1047 = vunpack.c.l.b16 %v911
      %v1048 = vunpack.c.h.b16 %v911
      %v1049 = vunpack.c.l.b16 %v912
      %v1050 = vunpack.c.l.b16 %v913
      %v1051 = vunpack.c.h.b16 %v913
      %v1052 = vunpack.c.l.b16 %v914
      %v1053 = vunpack.c.l.b16 %v915
      %v1054 = vunpack.c.h.b16 %v915
      %v1055 = vunpack.c.l.b16 %v916
      %v1056 = vunpack.c.l.b16 %v917
      %v1057 = vunpack.c.h.b16 %v917
      %v1058 = vunpack.c.l.b16 %v918
      %v1059 = vunpack.c.l.b16 %v919
      %v1060 = vunpack.c.h.b16 %v919
      %v1061 = vunpack.c.l.b16 %v920
      %v1062 = vunpack.c.l.b16 %v921
      %v1063 = vunpack.c.h.b16 %v921
      %v1064 = vunpack.c.l.b16 %v922
      %v1065 = vunpack.c.l.b16 %v923
      %v1066 = vunpack.c.h.b16 %v923
      %v1067 = vunpack.c.l.b16 %v924
      %v1068 = vunpack.c.l.b16 %v925
      %v1069 = vunpack.c.h.b16 %v925
      %v1070 = vunpack.c.l.b16 %v926
      %v1071 = vunpack.c.l.b16 %v927
      %v1072 = vunpack.c.h.b16 %v927
      %v1073 = vunpack.c.l.b16 %v928
      %v1074 = vunpack.c.l.b16 %v929
      %v1075 = vunpack.c.h.b16 %v929
      %v1076 = vunpack.c.l.b16 %v930
      %v1077 = vunpack.c.l.b16 %v931
      %v1078 = vunpack.c.h.b16 %v931
      %v1079 = vunpack.c.l.b16 %v932
      %v1080 = vunpack.c.l.b16 %v933
      %v1081 = vunpack.c.h.b16 %v933
      %v1082 = vunpack.c.l.b16 %v934
      %v1083 = vunpack.c.l.b16 %v935
      %v1084 = vunpack.c.h.b16 %v935
      %v1085 = vunpack.c.l.b16 %v936
      %v1086 = vunpack.c.l.b16 %v937
      %v1087 = vunpack.c.h.b16 %v937
      %v1088 = vunpack.c.l.b16 %v938
      %v1089 = vunpack.c.l.b16 %v939
      %v1090 = vunpack.c.h.b16 %v939
      %v1091 = vunpack.c.l.b16 %v940
      %v1092 = vunpack.c.l.b16 %v941
      %v1093 = vunpack.c.h.b16 %v941
      %v1094 = vunpack.c.l.b16 %v942
      %v1095 = vpack.c.b16 %v1050, %v1047
      %v1096 = vpack.c.b16 %v1051, %v1048
      %v1097 = vpack.c.b16 %v1052, %v1049
      %v1098 = vpack.c.b16 %v1056, %v1053
      %v1099 = vpack.c.b16 %v1057, %v1054
      %v1100 = vpack.c.b16 %v1058, %v1055
      %v1101 = vpack.c.b16 %v1062, %v1059
      %v1102 = vpack.c.b16 %v1063, %v1060
      %v1103 = vpack.c.b16 %v1064, %v1061
      %v1104 = vpack.c.b16 %v1068, %v1065
      %v1105 = vpack.c.b16 %v1069, %v1066
      %v1106 = vpack.c.b16 %v1070, %v1067
      %v1107 = vpack.c.b16 %v1074, %v1071
      %v1108 = vpack.c.b16 %v1075, %v1072
      %v1109 = vpack.c.b16 %v1076, %v1073
      %v1110 = vpack.c.b16 %v1080, %v1077
      %v1111 = vpack.c.b16 %v1081, %v1078
      %v1112 = vpack.c.b16 %v1082, %v1079
      %v1113 = vpack.c.b16 %v1086, %v1083
      %v1114 = vpack.c.b16 %v1087, %v1084
      %v1115 = vpack.c.b16 %v1088, %v1085
      %v1116 = vpack.c.b16 %v1092, %v1089
      %v1117 = vpack.c.b16 %v1093, %v1090
      %v1118 = vpack.c.b16 %v1094, %v1091
      %1143 = vmatprep.subr.bf16.mxu0 %v1096
      %1144 = vmatpush1.bf16.msra.mxu0 %v1095
      %1145 = vmatprep.subr.bf16.mxu0 %v1099
      %1146 = vmatpush1.bf16.msra.mxu0 %v1098
      %1147 = vmatprep.subr.bf16.mxu0 %v1102
      %1148 = vmatpush1.bf16.msra.mxu0 %v1101
      %1149 = vmatprep.subr.bf16.mxu0 %v1105
      %1150 = vmatpush1.bf16.msra.mxu0 %v1104
      %1151 = vmatprep.subr.bf16.mxu0 %v1108
      %1152 = vmatpush1.bf16.msra.mxu0 %v1107
      %1153 = vmatprep.subr.bf16.mxu0 %v1111
      %1154 = vmatpush1.bf16.msra.mxu0 %v1110
      %1155 = vmatprep.subr.bf16.mxu0 %v1114
      %1156 = vmatpush1.bf16.msra.mxu0 %v1113
      %1157 = vmatprep.subr.bf16.mxu0 %v1117
      %1158 = vmatpush1.bf16.msra.mxu0 %v1116
      %1159 = vmatprep.subr.bf16.mxu0 0
      %1160 = vmatpush1.bf16.msra.mxu0 0
      %1161 = vmatprep.subr.bf16.mxu0 0
      %1162 = vmatpush1.bf16.msra.mxu0 0
      %1163 = vmatprep.subr.bf16.mxu0 0
      %1164 = vmatpush1.bf16.msra.mxu0 0
      %1165 = vmatprep.subr.bf16.mxu0 0
      %1166 = vmatpush1.bf16.msra.mxu0 0
      %1167 = vmatprep.subr.bf16.mxu0 0
      %1168 = vmatpush1.bf16.msra.mxu0 0
      %1169 = vmatprep.subr.bf16.mxu0 0
      %1170 = vmatpush1.bf16.msra.mxu0 0
      %1171 = vmatprep.subr.bf16.mxu0 0
      %1172 = vmatpush1.bf16.msra.mxu0 0
      %1173 = vmatprep.subr.bf16.mxu0 0
      %1174 = vmatpush1.bf16.msra.mxu0 0
      %1175 = vmatprep.mubr.bf16.mxu0 0
      %1176 = vmatmul.mubr.bf16.gmra.mrb[0].mxu0 %v991
      %v1177 = vpop.f32.mrb[0].mxu0
      %v1178 = vadd.f32 0.0, %v1177
      %v1179 = vpop.f32.mrb[0].mxu0
      %v1180 = vadd.f32 0.0, %v1179
      %v1181 = vpop.f32.mrb[0].mxu0
      %v1182 = vadd.f32 0.0, %v1181
      %v1183 = vpop.f32.mrb[0].mxu0
      %v1184 = vadd.f32 0.0, %v1183
      %1185 = vmatprep.mubr.bf16.mxu0 0
      %1186 = vmatmul.mubr.bf16.gmra.mrb[0].mxu0 %v992
      %v1187 = vpop.f32.mrb[0].mxu0
      %v1188 = vadd.f32 0.0, %v1187
      %v1189 = vpop.f32.mrb[0].mxu0
      %v1190 = vadd.f32 0.0, %v1189
      %v1191 = vpop.f32.mrb[0].mxu0
      %v1192 = vadd.f32 0.0, %v1191
      %v1193 = vpop.f32.mrb[0].mxu0
      %v1194 = vadd.f32 0.0, %v1193
      %1195 = vmatprep.mubr.bf16.mxu0 0
      %1196 = vmatmul.mubr.bf16.gmra.mrb[0].mxu0 %v993
      %v1197 = vpop.f32.mrb[0].mxu0
      %v1198 = vadd.f32 0.0, %v1197
      %v1199 = vpop.f32.mrb[0].mxu0
      %v1200 = vadd.f32 0.0, %v1199
      %v1201 = vpop.f32.mrb[0].mxu0
      %v1202 = vadd.f32 0.0, %v1201
      %v1203 = vpop.f32.mrb[0].mxu0
      %v1204 = vadd.f32 0.0, %v1203
      %1205 = vmatprep.mubr.bf16.mxu0 0
      %1206 = vmatmul.mubr.bf16.gmra.mrb[0].mxu0 %v994
      %v1207 = vpop.f32.mrb[0].mxu0
      %v1208 = vadd.f32 0.0, %v1207
      %v1209 = vpop.f32.mrb[0].mxu0
      %v1210 = vadd.f32 0.0, %v1209
      %v1211 = vpop.f32.mrb[0].mxu0
      %v1212 = vadd.f32 0.0, %v1211
      %v1213 = vpop.f32.mrb[0].mxu0
      %v1214 = vadd.f32 0.0, %v1213
      %1215 = vmatprep.mubr.bf16.mxu0 0
      %1216 = vmatmul.mubr.bf16.gmra.mrb[0].mxu0 %v995
      %v1217 = vpop.f32.mrb[0].mxu0
      %v1218 = vadd.f32 0.0, %v1217
      %v1219 = vpop.f32.mrb[0].mxu0
      %v1220 = vadd.f32 0.0, %v1219
      %v1221 = vpop.f32.mrb[0].mxu0
      %v1222 = vadd.f32 0.0, %v1221
      %v1223 = vpop.f32.mrb[0].mxu0
      %v1224 = vadd.f32 0.0, %v1223
      %1225 = vmatprep.mubr.bf16.mxu0 0
      %1226 = vmatmul.mubr.bf16.gmra.mrb[0].mxu0 %v996
      %v1227 = vpop.f32.mrb[0].mxu0
      %v1228 = vadd.f32 0.0, %v1227
      %v1229 = vpop.f32.mrb[0].mxu0
      %v1230 = vadd.f32 0.0, %v1229
      %v1231 = vpop.f32.mrb[0].mxu0
      %v1232 = vadd.f32 0.0, %v1231
      %v1233 = vpop.f32.mrb[0].mxu0
      %v1234 = vadd.f32 0.0, %v1233
      %1235 = vmatprep.mubr.bf16.mxu0 0
      %1236 = vmatmul.mubr.bf16.gmra.mrb[0].mxu0 %v997
      %v1237 = vpop.f32.mrb[0].mxu0
      %v1238 = vadd.f32 0.0, %v1237
      %v1239 = vpop.f32.mrb[0].mxu0
      %v1240 = vadd.f32 0.0, %v1239
      %v1241 = vpop.f32.mrb[0].mxu0
      %v1242 = vadd.f32 0.0, %v1241
      %v1243 = vpop.f32.mrb[0].mxu0
      %v1244 = vadd.f32 0.0, %v1243
      %1245 = vmatprep.mubr.bf16.mxu0 0
      %1246 = vmatmul.mubr.bf16.gmra.mrb[0].mxu0 %v998
      %v1247 = vpop.f32.mrb[0].mxu0
      %v1248 = vadd.f32 0.0, %v1247
      %v1249 = vpop.f32.mrb[0].mxu0
      %v1250 = vadd.f32 0.0, %v1249
      %v1251 = vpop.f32.mrb[0].mxu0
      %v1252 = vadd.f32 0.0, %v1251
      %v1253 = vpop.f32.mrb[0].mxu0
      %v1254 = vadd.f32 0.0, %v1253
      %1255 = vmatprep.mubr.bf16.mxu0 0
      %1256 = vmatmul.mubr.bf16.gmra.mrb[0].mxu0 %v999
      %v1257 = vpop.f32.mrb[0].mxu0
      %v1258 = vadd.f32 0.0, %v1257
      %v1259 = vpop.f32.mrb[0].mxu0
      %v1260 = vadd.f32 0.0, %v1259
      %v1261 = vpop.f32.mrb[0].mxu0
      %v1262 = vadd.f32 0.0, %v1261
      %v1263 = vpop.f32.mrb[0].mxu0
      %v1264 = vadd.f32 0.0, %v1263
      %1265 = vmatprep.mubr.bf16.mxu0 0
      %1266 = vmatmul.mubr.bf16.gmra.mrb[0].mxu0 %v1000
      %v1267 = vpop.f32.mrb[0].mxu0
      %v1268 = vadd.f32 0.0, %v1267
      %v1269 = vpop.f32.mrb[0].mxu0
      %v1270 = vadd.f32 0.0, %v1269
      %v1271 = vpop.f32.mrb[0].mxu0
      %v1272 = vadd.f32 0.0, %v1271
      %v1273 = vpop.f32.mrb[0].mxu0
      %v1274 = vadd.f32 0.0, %v1273
      %1275 = vmatprep.mubr.bf16.mxu0 0
      %1276 = vmatmul.mubr.bf16.gmra.mrb[0].mxu0 %v1001
      %v1277 = vpop.f32.mrb[0].mxu0
      %v1278 = vadd.f32 0.0, %v1277
      %v1279 = vpop.f32.mrb[0].mxu0
      %v1280 = vadd.f32 0.0, %v1279
      %v1281 = vpop.f32.mrb[0].mxu0
      %v1282 = vadd.f32 0.0, %v1281
      %v1283 = vpop.f32.mrb[0].mxu0
      %v1284 = vadd.f32 0.0, %v1283
      %1285 = vmatprep.mubr.bf16.mxu0 0
      %1286 = vmatmul.mubr.bf16.gmra.mrb[0].mxu0 %v1002
      %v1287 = vpop.f32.mrb[0].mxu0
      %v1288 = vadd.f32 0.0, %v1287
      %v1289 = vpop.f32.mrb[0].mxu0
      %v1290 = vadd.f32 0.0, %v1289
      %v1291 = vpop.f32.mrb[0].mxu0
      %v1292 = vadd.f32 0.0, %v1291
      %v1293 = vpop.f32.mrb[0].mxu0
      %v1294 = vadd.f32 0.0, %v1293
      %1295 = vdwg.mxu0
      %1296 = vmatprep.subr.bf16.mxu0 0
      %1297 = vmatpush1.bf16.msra.mxu0 %v1097
      %1298 = vmatprep.subr.bf16.mxu0 0
      %1299 = vmatpush1.bf16.msra.mxu0 %v1100
      %1300 = vmatprep.subr.bf16.mxu0 0
      %1301 = vmatpush1.bf16.msra.mxu0 %v1103
      %1302 = vmatprep.subr.bf16.mxu0 0
      %1303 = vmatpush1.bf16.msra.mxu0 %v1106
      %1304 = vmatprep.subr.bf16.mxu0 0
      %1305 = vmatpush1.bf16.msra.mxu0 %v1109
      %1306 = vmatprep.subr.bf16.mxu0 0
      %1307 = vmatpush1.bf16.msra.mxu0 %v1112
      %1308 = vmatprep.subr.bf16.mxu0 0
      %1309 = vmatpush1.bf16.msra.mxu0 %v1115
      %1310 = vmatprep.subr.bf16.mxu0 0
      %1311 = vmatpush1.bf16.msra.mxu0 %v1118
      %1312 = vmatprep.subr.bf16.mxu0 0
      %1313 = vmatpush1.bf16.msra.mxu0 0
      %1314 = vmatprep.subr.bf16.mxu0 0
      %1315 = vmatpush1.bf16.msra.mxu0 0
      %1316 = vmatprep.subr.bf16.mxu0 0
      %1317 = vmatpush1.bf16.msra.mxu0 0
      %1318 = vmatprep.subr.bf16.mxu0 0
      %1319 = vmatpush1.bf16.msra.mxu0 0
      %1320 = vmatprep.subr.bf16.mxu0 0
      %1321 = vmatpush1.bf16.msra.mxu0 0
      %1322 = vmatprep.subr.bf16.mxu0 0
      %1323 = vmatpush1.bf16.msra.mxu0 0
      %1324 = vmatprep.subr.bf16.mxu0 0
      %1325 = vmatpush1.bf16.msra.mxu0 0
      %1326 = vmatprep.subr.bf16.mxu0 0
      %1327 = vmatpush1.bf16.msra.mxu0 0
      %1328 = vmatprep.mubr.bf16.mxu0 0
      %1329 = vmatmul.mubr.bf16.gmra.mrb[0].mxu0 %v991
      %v1330 = vpop.f32.mrb[0].mxu0
      %v1331 = vadd.f32 0.0, %v1330
      %v1332 = vpop.f32.mrb[0].mxu0
      %v1333 = vpop.f32.mrb[0].mxu0
      %v1334 = vadd.f32 0.0, %v1333
      %v1335 = vpop.f32.mrb[0].mxu0
      %1336 = vmatprep.mubr.bf16.mxu0 0
      %1337 = vmatmul.mubr.bf16.gmra.mrb[0].mxu0 %v992
      %v1338 = vpop.f32.mrb[0].mxu0
      %v1339 = vadd.f32 0.0, %v1338
      %v1340 = vpop.f32.mrb[0].mxu0
      %v1341 = vpop.f32.mrb[0].mxu0
      %v1342 = vadd.f32 0.0, %v1341
      %v1343 = vpop.f32.mrb[0].mxu0
      %1344 = vmatprep.mubr.bf16.mxu0 0
      %1345 = vmatmul.mubr.bf16.gmra.mrb[0].mxu0 %v993
      %v1346 = vpop.f32.mrb[0].mxu0
      %v1347 = vadd.f32 0.0, %v1346
      %v1348 = vpop.f32.mrb[0].mxu0
      %v1349 = vpop.f32.mrb[0].mxu0
      %v1350 = vadd.f32 0.0, %v1349
      %v1351 = vpop.f32.mrb[0].mxu0
      %1352 = vmatprep.mubr.bf16.mxu0 0
      %1353 = vmatmul.mubr.bf16.gmra.mrb[0].mxu0 %v994
      %v1354 = vpop.f32.mrb[0].mxu0
      %v1355 = vadd.f32 0.0, %v1354
      %v1356 = vpop.f32.mrb[0].mxu0
      %v1357 = vpop.f32.mrb[0].mxu0
      %v1358 = vadd.f32 0.0, %v1357
      %v1359 = vpop.f32.mrb[0].mxu0
      %1360 = vmatprep.mubr.bf16.mxu0 0
      %1361 = vmatmul.mubr.bf16.gmra.mrb[0].mxu0 %v995
      %v1362 = vpop.f32.mrb[0].mxu0
      %v1363 = vadd.f32 0.0, %v1362
      %v1364 = vpop.f32.mrb[0].mxu0
      %v1365 = vpop.f32.mrb[0].mxu0
      %v1366 = vadd.f32 0.0, %v1365
      %v1367 = vpop.f32.mrb[0].mxu0
      %1368 = vmatprep.mubr.bf16.mxu0 0
      %1369 = vmatmul.mubr.bf16.gmra.mrb[0].mxu0 %v996
      %v1370 = vpop.f32.mrb[0].mxu0
      %v1371 = vadd.f32 0.0, %v1370
      %v1372 = vpop.f32.mrb[0].mxu0
      %v1373 = vpop.f32.mrb[0].mxu0
      %v1374 = vadd.f32 0.0, %v1373
      %v1375 = vpop.f32.mrb[0].mxu0
      %1376 = vmatprep.mubr.bf16.mxu0 0
      %1377 = vmatmul.mubr.bf16.gmra.mrb[0].mxu0 %v997
      %v1378 = vpop.f32.mrb[0].mxu0
      %v1379 = vadd.f32 0.0, %v1378
      %v1380 = vpop.f32.mrb[0].mxu0
      %v1381 = vpop.f32.mrb[0].mxu0
      %v1382 = vadd.f32 0.0, %v1381
      %v1383 = vpop.f32.mrb[0].mxu0
      %1384 = vmatprep.mubr.bf16.mxu0 0
      %1385 = vmatmul.mubr.bf16.gmra.mrb[0].mxu0 %v998
      %v1386 = vpop.f32.mrb[0].mxu0
      %v1387 = vadd.f32 0.0, %v1386
      %v1388 = vpop.f32.mrb[0].mxu0
      %v1389 = vpop.f32.mrb[0].mxu0
      %v1390 = vadd.f32 0.0, %v1389
      %v1391 = vpop.f32.mrb[0].mxu0
      %1392 = vmatprep.mubr.bf16.mxu0 0
      %1393 = vmatmul.mubr.bf16.gmra.mrb[0].mxu0 %v999
      %v1394 = vpop.f32.mrb[0].mxu0
      %v1395 = vadd.f32 0.0, %v1394
      %v1396 = vpop.f32.mrb[0].mxu0
      %v1397 = vpop.f32.mrb[0].mxu0
      %v1398 = vadd.f32 0.0, %v1397
      %v1399 = vpop.f32.mrb[0].mxu0
      %1400 = vmatprep.mubr.bf16.mxu0 0
      %1401 = vmatmul.mubr.bf16.gmra.mrb[0].mxu0 %v1000
      %v1402 = vpop.f32.mrb[0].mxu0
      %v1403 = vadd.f32 0.0, %v1402
      %v1404 = vpop.f32.mrb[0].mxu0
      %v1405 = vpop.f32.mrb[0].mxu0
      %v1406 = vadd.f32 0.0, %v1405
      %v1407 = vpop.f32.mrb[0].mxu0
      %1408 = vmatprep.mubr.bf16.mxu0 0
      %1409 = vmatmul.mubr.bf16.gmra.mrb[0].mxu0 %v1001
      %v1410 = vpop.f32.mrb[0].mxu0
      %v1411 = vadd.f32 0.0, %v1410
      %v1412 = vpop.f32.mrb[0].mxu0
      %v1413 = vpop.f32.mrb[0].mxu0
      %v1414 = vadd.f32 0.0, %v1413
      %v1415 = vpop.f32.mrb[0].mxu0
      %1416 = vmatprep.mubr.bf16.mxu0 0
      %1417 = vmatmul.mubr.bf16.gmra.mrb[0].mxu0 %v1002
      %v1418 = vpop.f32.mrb[0].mxu0
      %v1419 = vadd.f32 0.0, %v1418
      %v1420 = vpop.f32.mrb[0].mxu0
      %v1421 = vpop.f32.mrb[0].mxu0
      %v1422 = vadd.f32 0.0, %v1421
      %v1423 = vpop.f32.mrb[0].mxu0
      %1424 = vdwg.mxu0
      %v1425 = vld [vmem:[#allocation2] sm:$0xff]
      %v1426 = vld [vmem:[#allocation2 + $0x8] sm:$0xff]
      %v1427 = vld [vmem:[#allocation2 + $0x10] sm:$0xff]
      %v1428 = vld [vmem:[#allocation2 + $0x18] sm:$0xff]
      %v1429 = vld [vmem:[#allocation2 + $0x20] sm:$0xff]
      %v1430 = vld [vmem:[#allocation2 + $0x28] sm:$0xff]
      %v1431 = vld [vmem:[#allocation2 + $0x30] sm:$0xff]
      %v1432 = vld [vmem:[#allocation2 + $0x38] sm:$0xff]
      %v1433 = vld [vmem:[#allocation2 + $0x40] sm:$0xff]
      %v1434 = vld [vmem:[#allocation2 + $0x48] sm:$0xff]
      %v1435 = vld [vmem:[#allocation2 + $0x50] sm:$0xff]
      %v1436 = vld [vmem:[#allocation2 + $0x58] sm:$0xff]
      %v1437 = vld [vmem:[#allocation2 + $0x60] sm:$0xff]
      %v1438 = vld [vmem:[#allocation2 + $0x68] sm:$0xff]
      %v1439 = vld [vmem:[#allocation2 + $0x70] sm:$0xff]
      %v1440 = vld [vmem:[#allocation2 + $0x78] sm:$0xff]
      %v1441 = vld [vmem:[#allocation2 + $0x80] sm:$0xff]
      %v1442 = vld [vmem:[#allocation2 + $0x88] sm:$0xff]
      %v1443 = vld [vmem:[#allocation2 + $0x90] sm:$0xff]
      %v1444 = vld [vmem:[#allocation2 + $0x98] sm:$0xff]
      %v1445 = vld [vmem:[#allocation2 + $0xa0] sm:$0xff]
      %v1446 = vld [vmem:[#allocation2 + $0xa8] sm:$0xff]
      %v1447 = vld [vmem:[#allocation2 + $0xb0] sm:$0xff]
      %v1448 = vld [vmem:[#allocation2 + $0xb8] sm:$0xff]
      %v1449 = vld [vmem:[#allocation2 + $0xc0] sm:$0xff]
      %v1450 = vld [vmem:[#allocation2 + $0xc8] sm:$0xff]
      %v1451 = vld [vmem:[#allocation2 + $0xd0] sm:$0xff]
      %v1452 = vld [vmem:[#allocation2 + $0xd8] sm:$0xff]
      %v1453 = vld [vmem:[#allocation2 + $0xe0] sm:$0xff]
      %v1454 = vld [vmem:[#allocation2 + $0xe8] sm:$0xff]
      %v1455 = vld [vmem:[#allocation2 + $0xf0] sm:$0xff]
      %v1456 = vld [vmem:[#allocation2 + $0xf8] sm:$0xff]
      %v1457 = vld [vmem:[#allocation2 + $0x100] sm:$0xff]
      %v1458 = vld [vmem:[#allocation2 + $0x108] sm:$0xff]
      %v1459 = vld [vmem:[#allocation2 + $0x110] sm:$0xff]
      %v1460 = vld [vmem:[#allocation2 + $0x118] sm:$0xff]
      %v1461 = vld [vmem:[#allocation2 + $0x120] sm:$0xff]
      %v1462 = vld [vmem:[#allocation2 + $0x128] sm:$0xff]
      %v1463 = vld [vmem:[#allocation2 + $0x130] sm:$0xff]
      %v1464 = vld [vmem:[#allocation2 + $0x138] sm:$0xff]
      %v1465 = vld [vmem:[#allocation2 + $0x140] sm:$0xff]
      %v1466 = vld [vmem:[#allocation2 + $0x148] sm:$0xff]
      %v1467 = vld [vmem:[#allocation2 + $0x150] sm:$0xff]
      %v1468 = vld [vmem:[#allocation2 + $0x158] sm:$0xff]
      %v1469 = vld [vmem:[#allocation2 + $0x160] sm:$0xff]
      %v1470 = vld [vmem:[#allocation2 + $0x168] sm:$0xff]
      %v1471 = vld [vmem:[#allocation2 + $0x170] sm:$0xff]
      %v1472 = vld [vmem:[#allocation2 + $0x178] sm:$0xff]
      %v1473 = vld [vmem:[#allocation2 + $0x180] sm:$0xff]
      %v1474 = vld [vmem:[#allocation2 + $0x188] sm:$0xff]
      %v1475 = vld [vmem:[#allocation2 + $0x190] sm:$0xff]
      %v1476 = vld [vmem:[#allocation2 + $0x198] sm:$0xff]
      %v1477 = vld [vmem:[#allocation2 + $0x1a0] sm:$0xff]
      %v1478 = vld [vmem:[#allocation2 + $0x1a8] sm:$0xff]
      %v1479 = vld [vmem:[#allocation2 + $0x1b0] sm:$0xff]
      %v1480 = vld [vmem:[#allocation2 + $0x1b8] sm:$0xff]
      %v1481 = vld [vmem:[#allocation2 + $0x1c0] sm:$0xff]
      %v1482 = vld [vmem:[#allocation2 + $0x1c8] sm:$0xff]
      %v1483 = vld [vmem:[#allocation2 + $0x1d0] sm:$0xff]
      %v1484 = vld [vmem:[#allocation2 + $0x1d8] sm:$0xff]
      %v1485 = vld [vmem:[#allocation2 + $0x1e0] sm:$0xff]
      %v1486 = vld [vmem:[#allocation2 + $0x1e8] sm:$0xff]
      %v1487 = vld [vmem:[#allocation2 + $0x1f0] sm:$0xff]
      %v1488 = vld [vmem:[#allocation2 + $0x1f8] sm:$0xff]
      %v1489 = vld [vmem:[#allocation2 + $0x200] sm:$0xff]
      %v1490 = vld [vmem:[#allocation2 + $0x208] sm:$0xff]
      %v1491 = vld [vmem:[#allocation2 + $0x210] sm:$0xff]
      %v1492 = vld [vmem:[#allocation2 + $0x218] sm:$0xff]
      %v1493 = vld [vmem:[#allocation2 + $0x220] sm:$0xff]
      %v1494 = vld [vmem:[#allocation2 + $0x228] sm:$0xff]
      %v1495 = vld [vmem:[#allocation2 + $0x230] sm:$0xff]
      %v1496 = vld [vmem:[#allocation2 + $0x238] sm:$0xff]
      %v1497 = vadd.f32 %v1425, %v1178
      %v1498 = vadd.f32 %v1426, %v1180
      %v1499 = vadd.f32 %v1427, %v1331
      %v1500 = vadd.f32 %v1428, %v1182
      %v1501 = vadd.f32 %v1429, %v1184
      %v1502 = vadd.f32 %v1430, %v1334
      %v1503 = vadd.f32 %v1431, %v1188
      %v1504 = vadd.f32 %v1432, %v1190
      %v1505 = vadd.f32 %v1433, %v1339
      %v1506 = vadd.f32 %v1434, %v1192
      %v1507 = vadd.f32 %v1435, %v1194
      %v1508 = vadd.f32 %v1436, %v1342
      %v1509 = vadd.f32 %v1437, %v1198
      %v1510 = vadd.f32 %v1438, %v1200
      %v1511 = vadd.f32 %v1439, %v1347
      %v1512 = vadd.f32 %v1440, %v1202
      %v1513 = vadd.f32 %v1441, %v1204
      %v1514 = vadd.f32 %v1442, %v1350
      %v1515 = vadd.f32 %v1443, %v1208
      %v1516 = vadd.f32 %v1444, %v1210
      %v1517 = vadd.f32 %v1445, %v1355
      %v1518 = vadd.f32 %v1446, %v1212
      %v1519 = vadd.f32 %v1447, %v1214
      %v1520 = vadd.f32 %v1448, %v1358
      %v1521 = vadd.f32 %v1449, %v1218
      %v1522 = vadd.f32 %v1450, %v1220
      %v1523 = vadd.f32 %v1451, %v1363
      %v1524 = vadd.f32 %v1452, %v1222
      %v1525 = vadd.f32 %v1453, %v1224
      %v1526 = vadd.f32 %v1454, %v1366
      %v1527 = vadd.f32 %v1455, %v1228
      %v1528 = vadd.f32 %v1456, %v1230
      %v1529 = vadd.f32 %v1457, %v1371
      %v1530 = vadd.f32 %v1458, %v1232
      %v1531 = vadd.f32 %v1459, %v1234
      %v1532 = vadd.f32 %v1460, %v1374
      %v1533 = vadd.f32 %v1461, %v1238
      %v1534 = vadd.f32 %v1462, %v1240
      %v1535 = vadd.f32 %v1463, %v1379
      %v1536 = vadd.f32 %v1464, %v1242
      %v1537 = vadd.f32 %v1465, %v1244
      %v1538 = vadd.f32 %v1466, %v1382
      %v1539 = vadd.f32 %v1467, %v1248
      %v1540 = vadd.f32 %v1468, %v1250
      %v1541 = vadd.f32 %v1469, %v1387
      %v1542 = vadd.f32 %v1470, %v1252
      %v1543 = vadd.f32 %v1471, %v1254
      %v1544 = vadd.f32 %v1472, %v1390
      %v1545 = vadd.f32 %v1473, %v1258
      %v1546 = vadd.f32 %v1474, %v1260
      %v1547 = vadd.f32 %v1475, %v1395
      %v1548 = vadd.f32 %v1476, %v1262
      %v1549 = vadd.f32 %v1477, %v1264
      %v1550 = vadd.f32 %v1478, %v1398
      %v1551 = vadd.f32 %v1479, %v1268
      %v1552 = vadd.f32 %v1480, %v1270
      %v1553 = vadd.f32 %v1481, %v1403
      %v1554 = vadd.f32 %v1482, %v1272
      %v1555 = vadd.f32 %v1483, %v1274
      %v1556 = vadd.f32 %v1484, %v1406
      %v1557 = vadd.f32 %v1485, %v1278
      %v1558 = vadd.f32 %v1486, %v1280
      %v1559 = vadd.f32 %v1487, %v1411
      %v1560 = vadd.f32 %v1488, %v1282
      %v1561 = vadd.f32 %v1489, %v1284
      %v1562 = vadd.f32 %v1490, %v1414
      %v1563 = vadd.f32 %v1491, %v1288
      %v1564 = vadd.f32 %v1492, %v1290
      %v1565 = vadd.f32 %v1493, %v1419
      %v1566 = vadd.f32 %v1494, %v1292
      %v1567 = vadd.f32 %v1495, %v1294
      %v1568 = vadd.f32 %v1496, %v1422
      %1569 = vst [vmem:[#allocation2] sm:$0xff] %v1497
      %1570 = vst [vmem:[#allocation2 + $0x8] sm:$0xff] %v1498
      %1571 = vst [vmem:[#allocation2 + $0x10] sm:$0xff] %v1499
      %1572 = vst [vmem:[#allocation2 + $0x18] sm:$0xff] %v1500
      %1573 = vst [vmem:[#allocation2 + $0x20] sm:$0xff] %v1501
      %1574 = vst [vmem:[#allocation2 + $0x28] sm:$0xff] %v1502
      %1575 = vst [vmem:[#allocation2 + $0x30] sm:$0xff] %v1503
      %1576 = vst [vmem:[#allocation2 + $0x38] sm:$0xff] %v1504
      %1577 = vst [vmem:[#allocation2 + $0x40] sm:$0xff] %v1505
      %1578 = vst [vmem:[#allocation2 + $0x48] sm:$0xff] %v1506
      %1579 = vst [vmem:[#allocation2 + $0x50] sm:$0xff] %v1507
      %1580 = vst [vmem:[#allocation2 + $0x58] sm:$0xff] %v1508
      %1581 = vst [vmem:[#allocation2 + $0x60] sm:$0xff] %v1509
      %1582 = vst [vmem:[#allocation2 + $0x68] sm:$0xff] %v1510
      %1583 = vst [vmem:[#allocation2 + $0x70] sm:$0xff] %v1511
      %1584 = vst [vmem:[#allocation2 + $0x78] sm:$0xff] %v1512
      %1585 = vst [vmem:[#allocation2 + $0x80] sm:$0xff] %v1513
      %1586 = vst [vmem:[#allocation2 + $0x88] sm:$0xff] %v1514
      %1587 = vst [vmem:[#allocation2 + $0x90] sm:$0xff] %v1515
      %1588 = vst [vmem:[#allocation2 + $0x98] sm:$0xff] %v1516
      %1589 = vst [vmem:[#allocation2 + $0xa0] sm:$0xff] %v1517
      %1590 = vst [vmem:[#allocation2 + $0xa8] sm:$0xff] %v1518
      %1591 = vst [vmem:[#allocation2 + $0xb0] sm:$0xff] %v1519
      %1592 = vst [vmem:[#allocation2 + $0xb8] sm:$0xff] %v1520
      %1593 = vst [vmem:[#allocation2 + $0xc0] sm:$0xff] %v1521
      %1594 = vst [vmem:[#allocation2 + $0xc8] sm:$0xff] %v1522
      %1595 = vst [vmem:[#allocation2 + $0xd0] sm:$0xff] %v1523
      %1596 = vst [vmem:[#allocation2 + $0xd8] sm:$0xff] %v1524
      %1597 = vst [vmem:[#allocation2 + $0xe0] sm:$0xff] %v1525
      %1598 = vst [vmem:[#allocation2 + $0xe8] sm:$0xff] %v1526
      %1599 = vst [vmem:[#allocation2 + $0xf0] sm:$0xff] %v1527
      %1600 = vst [vmem:[#allocation2 + $0xf8] sm:$0xff] %v1528
      %1601 = vst [vmem:[#allocation2 + $0x100] sm:$0xff] %v1529
      %1602 = vst [vmem:[#allocation2 + $0x108] sm:$0xff] %v1530
      %1603 = vst [vmem:[#allocation2 + $0x110] sm:$0xff] %v1531
      %1604 = vst [vmem:[#allocation2 + $0x118] sm:$0xff] %v1532
      %1605 = vst [vmem:[#allocation2 + $0x120] sm:$0xff] %v1533
      %1606 = vst [vmem:[#allocation2 + $0x128] sm:$0xff] %v1534
      %1607 = vst [vmem:[#allocation2 + $0x130] sm:$0xff] %v1535
      %1608 = vst [vmem:[#allocation2 + $0x138] sm:$0xff] %v1536
      %1609 = vst [vmem:[#allocation2 + $0x140] sm:$0xff] %v1537
      %1610 = vst [vmem:[#allocation2 + $0x148] sm:$0xff] %v1538
      %1611 = vst [vmem:[#allocation2 + $0x150] sm:$0xff] %v1539
      %1612 = vst [vmem:[#allocation2 + $0x158] sm:$0xff] %v1540
      %1613 = vst [vmem:[#allocation2 + $0x160] sm:$0xff] %v1541
      %1614 = vst [vmem:[#allocation2 + $0x168] sm:$0xff] %v1542
      %1615 = vst [vmem:[#allocation2 + $0x170] sm:$0xff] %v1543
      %1616 = vst [vmem:[#allocation2 + $0x178] sm:$0xff] %v1544
      %1617 = vst [vmem:[#allocation2 + $0x180] sm:$0xff] %v1545
      %1618 = vst [vmem:[#allocation2 + $0x188] sm:$0xff] %v1546
      %1619 = vst [vmem:[#allocation2 + $0x190] sm:$0xff] %v1547
      %1620 = vst [vmem:[#allocation2 + $0x198] sm:$0xff] %v1548
      %1621 = vst [vmem:[#allocation2 + $0x1a0] sm:$0xff] %v1549
      %1622 = vst [vmem:[#allocation2 + $0x1a8] sm:$0xff] %v1550
      %1623 = vst [vmem:[#allocation2 + $0x1b0] sm:$0xff] %v1551
      %1624 = vst [vmem:[#allocation2 + $0x1b8] sm:$0xff] %v1552
      %1625 = vst [vmem:[#allocation2 + $0x1c0] sm:$0xff] %v1553
      %1626 = vst [vmem:[#allocation2 + $0x1c8] sm:$0xff] %v1554
      %1627 = vst [vmem:[#allocation2 + $0x1d0] sm:$0xff] %v1555
      %1628 = vst [vmem:[#allocation2 + $0x1d8] sm:$0xff] %v1556
      %1629 = vst [vmem:[#allocation2 + $0x1e0] sm:$0xff] %v1557
      %1630 = vst [vmem:[#allocation2 + $0x1e8] sm:$0xff] %v1558
      %1631 = vst [vmem:[#allocation2 + $0x1f0] sm:$0xff] %v1559
      %1632 = vst [vmem:[#allocation2 + $0x1f8] sm:$0xff] %v1560
      %1633 = vst [vmem:[#allocation2 + $0x200] sm:$0xff] %v1561
      %1634 = vst [vmem:[#allocation2 + $0x208] sm:$0xff] %v1562
      %1635 = vst [vmem:[#allocation2 + $0x210] sm:$0xff] %v1563
      %1636 = vst [vmem:[#allocation2 + $0x218] sm:$0xff] %v1564
      %1637 = vst [vmem:[#allocation2 + $0x220] sm:$0xff] %v1565
      %1638 = vst [vmem:[#allocation2 + $0x228] sm:$0xff] %v1566
      %1639 = vst [vmem:[#allocation2 + $0x230] sm:$0xff] %v1567
      %1640 = vst [vmem:[#allocation2 + $0x238] sm:$0xff] %v1568
      %s1641 = scalar_lea.vmem %s248, 24
      %v1642 = vld [vmem:[%s1641] sm:$0xf]
      %v1643 = vld [vmem:[%s1641 + $0x4] sm:$0xf]
      %v1644 = vld [vmem:[%s1641 + $0x8] sm:$0xf]
      %v1645 = vld [vmem:[%s1641 + $0xc] sm:$0xf]
      %v1646 = vld [vmem:[%s1641 + $0x10] sm:$0xf]
      %v1647 = vld [vmem:[%s1641 + $0x14] sm:$0xf]
      %v1648 = vld [vmem:[%s1641 + $0x18] sm:$0xf]
      %v1649 = vld [vmem:[%s1641 + $0x1c] sm:$0xf]
      %v1650 = vld [vmem:[%s1641 + $0x20] sm:$0xf]
      %v1651 = vld [vmem:[%s1641 + $0x24] sm:$0xf]
      %v1652 = vld [vmem:[%s1641 + $0x28] sm:$0xf]
      %v1653 = vld [vmem:[%s1641 + $0x2c] sm:$0xf]
      %v1654 = vld [vmem:[%s1641 + $0x30] sm:$0xf]
      %v1655 = vld [vmem:[%s1641 + $0x34] sm:$0xf]
      %v1656 = vld [vmem:[%s1641 + $0x38] sm:$0xf]
      %v1657 = vld [vmem:[%s1641 + $0x3c] sm:$0xf]
      %v1658 = vld [vmem:[%s1641 + $0x40] sm:$0xf]
      %v1659 = vld [vmem:[%s1641 + $0x44] sm:$0xf]
      %v1660 = vld [vmem:[%s1641 + $0x48] sm:$0xf]
      %v1661 = vld [vmem:[%s1641 + $0x4c] sm:$0xf]
      %v1662 = vld [vmem:[%s1641 + $0x50] sm:$0xf]
      %v1663 = vld [vmem:[%s1641 + $0x54] sm:$0xf]
      %v1664 = vld [vmem:[%s1641 + $0x58] sm:$0xf]
      %v1665 = vld [vmem:[%s1641 + $0x5c] sm:$0xf]
      %s1666 = scalar_lea.vmem %s1, 384
      %v1667 = vld [vmem:[%s1666] sm:$0xff]
      %v1668 = vld [vmem:[%s1666 + $0x8] sm:$0xf]
      %v1669 = vld [vmem:[%s1666 + $0xc] sm:$0xff]
      %v1670 = vld [vmem:[%s1666 + $0x14] sm:$0xf]
      %v1671 = vld [vmem:[%s1666 + $0x18] sm:$0xff]
      %v1672 = vld [vmem:[%s1666 + $0x20] sm:$0xf]
      %v1673 = vld [vmem:[%s1666 + $0x24] sm:$0xff]
      %v1674 = vld [vmem:[%s1666 + $0x2c] sm:$0xf]
      %v1675 = vld [vmem:[%s1666 + $0x30] sm:$0xff]
      %v1676 = vld [vmem:[%s1666 + $0x38] sm:$0xf]
      %v1677 = vld [vmem:[%s1666 + $0x3c] sm:$0xff]
      %v1678 = vld [vmem:[%s1666 + $0x44] sm:$0xf]
      %v1679 = vld [vmem:[%s1666 + $0x48] sm:$0xff]
      %v1680 = vld [vmem:[%s1666 + $0x50] sm:$0xf]
      %v1681 = vld [vmem:[%s1666 + $0x54] sm:$0xff]
      %v1682 = vld [vmem:[%s1666 + $0x5c] sm:$0xf]
      %v1683 = vld [vmem:[%s1666 + $0x60] sm:$0xff]
      %v1684 = vld [vmem:[%s1666 + $0x68] sm:$0xf]
      %v1685 = vld [vmem:[%s1666 + $0x6c] sm:$0xff]
      %v1686 = vld [vmem:[%s1666 + $0x74] sm:$0xf]
      %v1687 = vld [vmem:[%s1666 + $0x78] sm:$0xff]
      %v1688 = vld [vmem:[%s1666 + $0x80] sm:$0xf]
      %v1689 = vld [vmem:[%s1666 + $0x84] sm:$0xff]
      %v1690 = vld [vmem:[%s1666 + $0x8c] sm:$0xf]
      %v1691 = vld [vmem:[%s1666 + $0x90] sm:$0xff]
      %v1692 = vld [vmem:[%s1666 + $0x98] sm:$0xf]
      %v1693 = vld [vmem:[%s1666 + $0x9c] sm:$0xff]
      %v1694 = vld [vmem:[%s1666 + $0xa4] sm:$0xf]
      %v1695 = vld [vmem:[%s1666 + $0xa8] sm:$0xff]
      %v1696 = vld [vmem:[%s1666 + $0xb0] sm:$0xf]
      %v1697 = vld [vmem:[%s1666 + $0xb4] sm:$0xff]
      %v1698 = vld [vmem:[%s1666 + $0xbc] sm:$0xf]
      %v1723 = vunpack.c.l.b16 %v1642
      %v1724 = vunpack.c.l.b16 %v1643
      %v1725 = vunpack.c.l.b16 %v1644
      %v1726 = vunpack.c.l.b16 %v1645
      %v1727 = vunpack.c.l.b16 %v1646
      %v1728 = vunpack.c.l.b16 %v1647
      %v1729 = vunpack.c.l.b16 %v1648
      %v1730 = vunpack.c.l.b16 %v1649
      %v1731 = vunpack.c.l.b16 %v1650
      %v1732 = vunpack.c.l.b16 %v1651
      %v1733 = vunpack.c.l.b16 %v1652
      %v1734 = vunpack.c.l.b16 %v1653
      %v1735 = vunpack.c.l.b16 %v1654
      %v1736 = vunpack.c.l.b16 %v1655
      %v1737 = vunpack.c.l.b16 %v1656
      %v1738 = vunpack.c.l.b16 %v1657
      %v1739 = vunpack.c.l.b16 %v1658
      %v1740 = vunpack.c.l.b16 %v1659
      %v1741 = vunpack.c.l.b16 %v1660
      %v1742 = vunpack.c.l.b16 %v1661
      %v1743 = vunpack.c.l.b16 %v1662
      %v1744 = vunpack.c.l.b16 %v1663
      %v1745 = vunpack.c.l.b16 %v1664
      %v1746 = vunpack.c.l.b16 %v1665
      %v1747 = vpack.c.b16 %v1724, %v1723
      %v1748 = vpack.c.b16 %v1726, %v1725
      %v1749 = vpack.c.b16 %v1728, %v1727
      %v1750 = vpack.c.b16 %v1730, %v1729
      %v1751 = vpack.c.b16 %v1732, %v1731
      %v1752 = vpack.c.b16 %v1734, %v1733
      %v1753 = vpack.c.b16 %v1736, %v1735
      %v1754 = vpack.c.b16 %v1738, %v1737
      %v1755 = vpack.c.b16 %v1740, %v1739
      %v1756 = vpack.c.b16 %v1742, %v1741
      %v1757 = vpack.c.b16 %v1744, %v1743
      %v1758 = vpack.c.b16 %v1746, %v1745
      %v1803 = vunpack.c.l.b16 %v1667
      %v1804 = vunpack.c.h.b16 %v1667
      %v1805 = vunpack.c.l.b16 %v1668
      %v1806 = vunpack.c.l.b16 %v1669
      %v1807 = vunpack.c.h.b16 %v1669
      %v1808 = vunpack.c.l.b16 %v1670
      %v1809 = vunpack.c.l.b16 %v1671
      %v1810 = vunpack.c.h.b16 %v1671
      %v1811 = vunpack.c.l.b16 %v1672
      %v1812 = vunpack.c.l.b16 %v1673
      %v1813 = vunpack.c.h.b16 %v1673
      %v1814 = vunpack.c.l.b16 %v1674
      %v1815 = vunpack.c.l.b16 %v1675
      %v1816 = vunpack.c.h.b16 %v1675
      %v1817 = vunpack.c.l.b16 %v1676
      %v1818 = vunpack.c.l.b16 %v1677
      %v1819 = vunpack.c.h.b16 %v1677
      %v1820 = vunpack.c.l.b16 %v1678
      %v1821 = vunpack.c.l.b16 %v1679
      %v1822 = vunpack.c.h.b16 %v1679
      %v1823 = vunpack.c.l.b16 %v1680
      %v1824 = vunpack.c.l.b16 %v1681
      %v1825 = vunpack.c.h.b16 %v1681
      %v1826 = vunpack.c.l.b16 %v1682
      %v1827 = vunpack.c.l.b16 %v1683
      %v1828 = vunpack.c.h.b16 %v1683
      %v1829 = vunpack.c.l.b16 %v1684
      %v1830 = vunpack.c.l.b16 %v1685
      %v1831 = vunpack.c.h.b16 %v1685
      %v1832 = vunpack.c.l.b16 %v1686
      %v1833 = vunpack.c.l.b16 %v1687
      %v1834 = vunpack.c.h.b16 %v1687
      %v1835 = vunpack.c.l.b16 %v1688
      %v1836 = vunpack.c.l.b16 %v1689
      %v1837 = vunpack.c.h.b16 %v1689
      %v1838 = vunpack.c.l.b16 %v1690
      %v1839 = vunpack.c.l.b16 %v1691
      %v1840 = vunpack.c.h.b16 %v1691
      %v1841 = vunpack.c.l.b16 %v1692
      %v1842 = vunpack.c.l.b16 %v1693
      %v1843 = vunpack.c.h.b16 %v1693
      %v1844 = vunpack.c.l.b16 %v1694
      %v1845 = vunpack.c.l.b16 %v1695
      %v1846 = vunpack.c.h.b16 %v1695
      %v1847 = vunpack.c.l.b16 %v1696
      %v1848 = vunpack.c.l.b16 %v1697
      %v1849 = vunpack.c.h.b16 %v1697
      %v1850 = vunpack.c.l.b16 %v1698
      %v1851 = vpack.c.b16 %v1806, %v1803
      %v1852 = vpack.c.b16 %v1807, %v1804
      %v1853 = vpack.c.b16 %v1808, %v1805
      %v1854 = vpack.c.b16 %v1812, %v1809
      %v1855 = vpack.c.b16 %v1813, %v1810
      %v1856 = vpack.c.b16 %v1814, %v1811
      %v1857 = vpack.c.b16 %v1818, %v1815
      %v1858 = vpack.c.b16 %v1819, %v1816
      %v1859 = vpack.c.b16 %v1820, %v1817
      %v1860 = vpack.c.b16 %v1824, %v1821
      %v1861 = vpack.c.b16 %v1825, %v1822
      %v1862 = vpack.c.b16 %v1826, %v1823
      %v1863 = vpack.c.b16 %v1830, %v1827
      %v1864 = vpack.c.b16 %v1831, %v1828
      %v1865 = vpack.c.b16 %v1832, %v1829
      %v1866 = vpack.c.b16 %v1836, %v1833
      %v1867 = vpack.c.b16 %v1837, %v1834
      %v1868 = vpack.c.b16 %v1838, %v1835
      %v1869 = vpack.c.b16 %v1842, %v1839
      %v1870 = vpack.c.b16 %v1843, %v1840
      %v1871 = vpack.c.b16 %v1844, %v1841
      %v1872 = vpack.c.b16 %v1848, %v1845
      %v1873 = vpack.c.b16 %v1849, %v1846
      %v1874 = vpack.c.b16 %v1850, %v1847
      %1899 = vmatprep.subr.bf16.mxu0 %v1852
      %1900 = vmatpush1.bf16.msra.mxu0 %v1851
      %1901 = vmatprep.subr.bf16.mxu0 %v1855
      %1902 = vmatpush1.bf16.msra.mxu0 %v1854
      %1903 = vmatprep.subr.bf16.mxu0 %v1858
      %1904 = vmatpush1.bf16.msra.mxu0 %v1857
      %1905 = vmatprep.subr.bf16.mxu0 %v1861
      %1906 = vmatpush1.bf16.msra.mxu0 %v1860
      %1907 = vmatprep.subr.bf16.mxu0 %v1864
      %1908 = vmatpush1.bf16.msra.mxu0 %v1863
      %1909 = vmatprep.subr.bf16.mxu0 %v1867
      %1910 = vmatpush1.bf16.msra.mxu0 %v1866
      %1911 = vmatprep.subr.bf16.mxu0 %v1870
      %1912 = vmatpush1.bf16.msra.mxu0 %v1869
      %1913 = vmatprep.subr.bf16.mxu0 %v1873
      %1914 = vmatpush1.bf16.msra.mxu0 %v1872
      %1915 = vmatprep.subr.bf16.mxu0 0
      %1916 = vmatpush1.bf16.msra.mxu0 0
      %1917 = vmatprep.subr.bf16.mxu0 0
      %1918 = vmatpush1.bf16.msra.mxu0 0
      %1919 = vmatprep.subr.bf16.mxu0 0
      %1920 = vmatpush1.bf16.msra.mxu0 0
      %1921 = vmatprep.subr.bf16.mxu0 0
      %1922 = vmatpush1.bf16.msra.mxu0 0
      %1923 = vmatprep.subr.bf16.mxu0 0
      %1924 = vmatpush1.bf16.msra.mxu0 0
      %1925 = vmatprep.subr.bf16.mxu0 0
      %1926 = vmatpush1.bf16.msra.mxu0 0
      %1927 = vmatprep.subr.bf16.mxu0 0
      %1928 = vmatpush1.bf16.msra.mxu0 0
      %1929 = vmatprep.subr.bf16.mxu0 0
      %1930 = vmatpush1.bf16.msra.mxu0 0
      %1931 = vmatprep.mubr.bf16.mxu0 0
      %1932 = vmatmul.mubr.bf16.gmra.mrb[0].mxu0 %v1747
      %v1933 = vpop.f32.mrb[0].mxu0
      %v1934 = vadd.f32 0.0, %v1933
      %v1935 = vpop.f32.mrb[0].mxu0
      %v1936 = vadd.f32 0.0, %v1935
      %v1937 = vpop.f32.mrb[0].mxu0
      %v1938 = vadd.f32 0.0, %v1937
      %v1939 = vpop.f32.mrb[0].mxu0
      %v1940 = vadd.f32 0.0, %v1939
      %1941 = vmatprep.mubr.bf16.mxu0 0
      %1942 = vmatmul.mubr.bf16.gmra.mrb[0].mxu0 %v1748
      %v1943 = vpop.f32.mrb[0].mxu0
      %v1944 = vadd.f32 0.0, %v1943
      %v1945 = vpop.f32.mrb[0].mxu0
      %v1946 = vadd.f32 0.0, %v1945
      %v1947 = vpop.f32.mrb[0].mxu0
      %v1948 = vadd.f32 0.0, %v1947
      %v1949 = vpop.f32.mrb[0].mxu0
      %v1950 = vadd.f32 0.0, %v1949
      %1951 = vmatprep.mubr.bf16.mxu0 0
      %1952 = vmatmul.mubr.bf16.gmra.mrb[0].mxu0 %v1749
      %v1953 = vpop.f32.mrb[0].mxu0
      %v1954 = vadd.f32 0.0, %v1953
      %v1955 = vpop.f32.mrb[0].mxu0
      %v1956 = vadd.f32 0.0, %v1955
      %v1957 = vpop.f32.mrb[0].mxu0
      %v1958 = vadd.f32 0.0, %v1957
      %v1959 = vpop.f32.mrb[0].mxu0
      %v1960 = vadd.f32 0.0, %v1959
      %1961 = vmatprep.mubr.bf16.mxu0 0
      %1962 = vmatmul.mubr.bf16.gmra.mrb[0].mxu0 %v1750
      %v1963 = vpop.f32.mrb[0].mxu0
      %v1964 = vadd.f32 0.0, %v1963
      %v1965 = vpop.f32.mrb[0].mxu0
      %v1966 = vadd.f32 0.0, %v1965
      %v1967 = vpop.f32.mrb[0].mxu0
      %v1968 = vadd.f32 0.0, %v1967
      %v1969 = vpop.f32.mrb[0].mxu0
      %v1970 = vadd.f32 0.0, %v1969
      %1971 = vmatprep.mubr.bf16.mxu0 0
      %1972 = vmatmul.mubr.bf16.gmra.mrb[0].mxu0 %v1751
      %v1973 = vpop.f32.mrb[0].mxu0
      %v1974 = vadd.f32 0.0, %v1973
      %v1975 = vpop.f32.mrb[0].mxu0
      %v1976 = vadd.f32 0.0, %v1975
      %v1977 = vpop.f32.mrb[0].mxu0
      %v1978 = vadd.f32 0.0, %v1977
      %v1979 = vpop.f32.mrb[0].mxu0
      %v1980 = vadd.f32 0.0, %v1979
      %1981 = vmatprep.mubr.bf16.mxu0 0
      %1982 = vmatmul.mubr.bf16.gmra.mrb[0].mxu0 %v1752
      %v1983 = vpop.f32.mrb[0].mxu0
      %v1984 = vadd.f32 0.0, %v1983
      %v1985 = vpop.f32.mrb[0].mxu0
      %v1986 = vadd.f32 0.0, %v1985
      %v1987 = vpop.f32.mrb[0].mxu0
      %v1988 = vadd.f32 0.0, %v1987
      %v1989 = vpop.f32.mrb[0].mxu0
      %v1990 = vadd.f32 0.0, %v1989
      %1991 = vmatprep.mubr.bf16.mxu0 0
      %1992 = vmatmul.mubr.bf16.gmra.mrb[0].mxu0 %v1753
      %v1993 = vpop.f32.mrb[0].mxu0
      %v1994 = vadd.f32 0.0, %v1993
      %v1995 = vpop.f32.mrb[0].mxu0
      %v1996 = vadd.f32 0.0, %v1995
      %v1997 = vpop.f32.mrb[0].mxu0
      %v1998 = vadd.f32 0.0, %v1997
      %v1999 = vpop.f32.mrb[0].mxu0
      %v2000 = vadd.f32 0.0, %v1999
      %2001 = vmatprep.mubr.bf16.mxu0 0
      %2002 = vmatmul.mubr.bf16.gmra.mrb[0].mxu0 %v1754
      %v2003 = vpop.f32.mrb[0].mxu0
      %v2004 = vadd.f32 0.0, %v2003
      %v2005 = vpop.f32.mrb[0].mxu0
      %v2006 = vadd.f32 0.0, %v2005
      %v2007 = vpop.f32.mrb[0].mxu0
      %v2008 = vadd.f32 0.0, %v2007
      %v2009 = vpop.f32.mrb[0].mxu0
      %v2010 = vadd.f32 0.0, %v2009
      %2011 = vmatprep.mubr.bf16.mxu0 0
      %2012 = vmatmul.mubr.bf16.gmra.mrb[0].mxu0 %v1755
      %v2013 = vpop.f32.mrb[0].mxu0
      %v2014 = vadd.f32 0.0, %v2013
      %v2015 = vpop.f32.mrb[0].mxu0
      %v2016 = vadd.f32 0.0, %v2015
      %v2017 = vpop.f32.mrb[0].mxu0
      %v2018 = vadd.f32 0.0, %v2017
      %v2019 = vpop.f32.mrb[0].mxu0
      %v2020 = vadd.f32 0.0, %v2019
      %2021 = vmatprep.mubr.bf16.mxu0 0
      %2022 = vmatmul.mubr.bf16.gmra.mrb[0].mxu0 %v1756
      %v2023 = vpop.f32.mrb[0].mxu0
      %v2024 = vadd.f32 0.0, %v2023
      %v2025 = vpop.f32.mrb[0].mxu0
      %v2026 = vadd.f32 0.0, %v2025
      %v2027 = vpop.f32.mrb[0].mxu0
      %v2028 = vadd.f32 0.0, %v2027
      %v2029 = vpop.f32.mrb[0].mxu0
      %v2030 = vadd.f32 0.0, %v2029
      %2031 = vmatprep.mubr.bf16.mxu0 0
      %2032 = vmatmul.mubr.bf16.gmra.mrb[0].mxu0 %v1757
      %v2033 = vpop.f32.mrb[0].mxu0
      %v2034 = vadd.f32 0.0, %v2033
      %v2035 = vpop.f32.mrb[0].mxu0
      %v2036 = vadd.f32 0.0, %v2035
      %v2037 = vpop.f32.mrb[0].mxu0
      %v2038 = vadd.f32 0.0, %v2037
      %v2039 = vpop.f32.mrb[0].mxu0
      %v2040 = vadd.f32 0.0, %v2039
      %2041 = vmatprep.mubr.bf16.mxu0 0
      %2042 = vmatmul.mubr.bf16.gmra.mrb[0].mxu0 %v1758
      %v2043 = vpop.f32.mrb[0].mxu0
      %v2044 = vadd.f32 0.0, %v2043
      %v2045 = vpop.f32.mrb[0].mxu0
      %v2046 = vadd.f32 0.0, %v2045
      %v2047 = vpop.f32.mrb[0].mxu0
      %v2048 = vadd.f32 0.0, %v2047
      %v2049 = vpop.f32.mrb[0].mxu0
      %v2050 = vadd.f32 0.0, %v2049
      %2051 = vdwg.mxu0
      %2052 = vmatprep.subr.bf16.mxu0 0
      %2053 = vmatpush1.bf16.msra.mxu0 %v1853
      %2054 = vmatprep.subr.bf16.mxu0 0
      %2055 = vmatpush1.bf16.msra.mxu0 %v1856
      %2056 = vmatprep.subr.bf16.mxu0 0
      %2057 = vmatpush1.bf16.msra.mxu0 %v1859
      %2058 = vmatprep.subr.bf16.mxu0 0
      %2059 = vmatpush1.bf16.msra.mxu0 %v1862
      %2060 = vmatprep.subr.bf16.mxu0 0
      %2061 = vmatpush1.bf16.msra.mxu0 %v1865
      %2062 = vmatprep.subr.bf16.mxu0 0
      %2063 = vmatpush1.bf16.msra.mxu0 %v1868
      %2064 = vmatprep.subr.bf16.mxu0 0
      %2065 = vmatpush1.bf16.msra.mxu0 %v1871
      %2066 = vmatprep.subr.bf16.mxu0 0
      %2067 = vmatpush1.bf16.msra.mxu0 %v1874
      %2068 = vmatprep.subr.bf16.mxu0 0
      %2069 = vmatpush1.bf16.msra.mxu0 0
      %2070 = vmatprep.subr.bf16.mxu0 0
      %2071 = vmatpush1.bf16.msra.mxu0 0
      %2072 = vmatprep.subr.bf16.mxu0 0
      %2073 = vmatpush1.bf16.msra.mxu0 0
      %2074 = vmatprep.subr.bf16.mxu0 0
      %2075 = vmatpush1.bf16.msra.mxu0 0
      %2076 = vmatprep.subr.bf16.mxu0 0
      %2077 = vmatpush1.bf16.msra.mxu0 0
      %2078 = vmatprep.subr.bf16.mxu0 0
      %2079 = vmatpush1.bf16.msra.mxu0 0
      %2080 = vmatprep.subr.bf16.mxu0 0
      %2081 = vmatpush1.bf16.msra.mxu0 0
      %2082 = vmatprep.subr.bf16.mxu0 0
      %2083 = vmatpush1.bf16.msra.mxu0 0
      %2084 = vmatprep.mubr.bf16.mxu0 0
      %2085 = vmatmul.mubr.bf16.gmra.mrb[0].mxu0 %v1747
      %v2086 = vpop.f32.mrb[0].mxu0
      %v2087 = vadd.f32 0.0, %v2086
      %v2088 = vpop.f32.mrb[0].mxu0
      %v2089 = vpop.f32.mrb[0].mxu0
      %v2090 = vadd.f32 0.0, %v2089
      %v2091 = vpop.f32.mrb[0].mxu0
      %2092 = vmatprep.mubr.bf16.mxu0 0
      %2093 = vmatmul.mubr.bf16.gmra.mrb[0].mxu0 %v1748
      %v2094 = vpop.f32.mrb[0].mxu0
      %v2095 = vadd.f32 0.0, %v2094
      %v2096 = vpop.f32.mrb[0].mxu0
      %v2097 = vpop.f32.mrb[0].mxu0
      %v2098 = vadd.f32 0.0, %v2097
      %v2099 = vpop.f32.mrb[0].mxu0
      %2100 = vmatprep.mubr.bf16.mxu0 0
      %2101 = vmatmul.mubr.bf16.gmra.mrb[0].mxu0 %v1749
      %v2102 = vpop.f32.mrb[0].mxu0
      %v2103 = vadd.f32 0.0, %v2102
      %v2104 = vpop.f32.mrb[0].mxu0
      %v2105 = vpop.f32.mrb[0].mxu0
      %v2106 = vadd.f32 0.0, %v2105
      %v2107 = vpop.f32.mrb[0].mxu0
      %2108 = vmatprep.mubr.bf16.mxu0 0
      %2109 = vmatmul.mubr.bf16.gmra.mrb[0].mxu0 %v1750
      %v2110 = vpop.f32.mrb[0].mxu0
      %v2111 = vadd.f32 0.0, %v2110
      %v2112 = vpop.f32.mrb[0].mxu0
      %v2113 = vpop.f32.mrb[0].mxu0
      %v2114 = vadd.f32 0.0, %v2113
      %v2115 = vpop.f32.mrb[0].mxu0
      %2116 = vmatprep.mubr.bf16.mxu0 0
      %2117 = vmatmul.mubr.bf16.gmra.mrb[0].mxu0 %v1751
      %v2118 = vpop.f32.mrb[0].mxu0
      %v2119 = vadd.f32 0.0, %v2118
      %v2120 = vpop.f32.mrb[0].mxu0
      %v2121 = vpop.f32.mrb[0].mxu0
      %v2122 = vadd.f32 0.0, %v2121
      %v2123 = vpop.f32.mrb[0].mxu0
      %2124 = vmatprep.mubr.bf16.mxu0 0
      %2125 = vmatmul.mubr.bf16.gmra.mrb[0].mxu0 %v1752
      %v2126 = vpop.f32.mrb[0].mxu0
      %v2127 = vadd.f32 0.0, %v2126
      %v2128 = vpop.f32.mrb[0].mxu0
      %v2129 = vpop.f32.mrb[0].mxu0
      %v2130 = vadd.f32 0.0, %v2129
      %v2131 = vpop.f32.mrb[0].mxu0
      %2132 = vmatprep.mubr.bf16.mxu0 0
      %2133 = vmatmul.mubr.bf16.gmra.mrb[0].mxu0 %v1753
      %v2134 = vpop.f32.mrb[0].mxu0
      %v2135 = vadd.f32 0.0, %v2134
      %v2136 = vpop.f32.mrb[0].mxu0
      %v2137 = vpop.f32.mrb[0].mxu0
      %v2138 = vadd.f32 0.0, %v2137
      %v2139 = vpop.f32.mrb[0].mxu0
      %2140 = vmatprep.mubr.bf16.mxu0 0
      %2141 = vmatmul.mubr.bf16.gmra.mrb[0].mxu0 %v1754
      %v2142 = vpop.f32.mrb[0].mxu0
      %v2143 = vadd.f32 0.0, %v2142
      %v2144 = vpop.f32.mrb[0].mxu0
      %v2145 = vpop.f32.mrb[0].mxu0
      %v2146 = vadd.f32 0.0, %v2145
      %v2147 = vpop.f32.mrb[0].mxu0
      %2148 = vmatprep.mubr.bf16.mxu0 0
      %2149 = vmatmul.mubr.bf16.gmra.mrb[0].mxu0 %v1755
      %v2150 = vpop.f32.mrb[0].mxu0
      %v2151 = vadd.f32 0.0, %v2150
      %v2152 = vpop.f32.mrb[0].mxu0
      %v2153 = vpop.f32.mrb[0].mxu0
      %v2154 = vadd.f32 0.0, %v2153
      %v2155 = vpop.f32.mrb[0].mxu0
      %2156 = vmatprep.mubr.bf16.mxu0 0
      %2157 = vmatmul.mubr.bf16.gmra.mrb[0].mxu0 %v1756
      %v2158 = vpop.f32.mrb[0].mxu0
      %v2159 = vadd.f32 0.0, %v2158
      %v2160 = vpop.f32.mrb[0].mxu0
      %v2161 = vpop.f32.mrb[0].mxu0
      %v2162 = vadd.f32 0.0, %v2161
      %v2163 = vpop.f32.mrb[0].mxu0
      %2164 = vmatprep.mubr.bf16.mxu0 0
      %2165 = vmatmul.mubr.bf16.gmra.mrb[0].mxu0 %v1757
      %v2166 = vpop.f32.mrb[0].mxu0
      %v2167 = vadd.f32 0.0, %v2166
      %v2168 = vpop.f32.mrb[0].mxu0
      %v2169 = vpop.f32.mrb[0].mxu0
      %v2170 = vadd.f32 0.0, %v2169
      %v2171 = vpop.f32.mrb[0].mxu0
      %2172 = vmatprep.mubr.bf16.mxu0 0
      %2173 = vmatmul.mubr.bf16.gmra.mrb[0].mxu0 %v1758
      %v2174 = vpop.f32.mrb[0].mxu0
      %v2175 = vadd.f32 0.0, %v2174
      %v2176 = vpop.f32.mrb[0].mxu0
      %v2177 = vpop.f32.mrb[0].mxu0
      %v2178 = vadd.f32 0.0, %v2177
      %v2179 = vpop.f32.mrb[0].mxu0
      %2180 = vdwg.mxu0
      %v2181 = vld [vmem:[#allocation2] sm:$0xff]
      %v2182 = vld [vmem:[#allocation2 + $0x8] sm:$0xff]
      %v2183 = vld [vmem:[#allocation2 + $0x10] sm:$0xff]
      %v2184 = vld [vmem:[#allocation2 + $0x18] sm:$0xff]
      %v2185 = vld [vmem:[#allocation2 + $0x20] sm:$0xff]
      %v2186 = vld [vmem:[#allocation2 + $0x28] sm:$0xff]
      %v2187 = vld [vmem:[#allocation2 + $0x30] sm:$0xff]
      %v2188 = vld [vmem:[#allocation2 + $0x38] sm:$0xff]
      %v2189 = vld [vmem:[#allocation2 + $0x40] sm:$0xff]
      %v2190 = vld [vmem:[#allocation2 + $0x48] sm:$0xff]
      %v2191 = vld [vmem:[#allocation2 + $0x50] sm:$0xff]
      %v2192 = vld [vmem:[#allocation2 + $0x58] sm:$0xff]
      %v2193 = vld [vmem:[#allocation2 + $0x60] sm:$0xff]
      %v2194 = vld [vmem:[#allocation2 + $0x68] sm:$0xff]
      %v2195 = vld [vmem:[#allocation2 + $0x70] sm:$0xff]
      %v2196 = vld [vmem:[#allocation2 + $0x78] sm:$0xff]
      %v2197 = vld [vmem:[#allocation2 + $0x80] sm:$0xff]
      %v2198 = vld [vmem:[#allocation2 + $0x88] sm:$0xff]
      %v2199 = vld [vmem:[#allocation2 + $0x90] sm:$0xff]
      %v2200 = vld [vmem:[#allocation2 + $0x98] sm:$0xff]
      %v2201 = vld [vmem:[#allocation2 + $0xa0] sm:$0xff]
      %v2202 = vld [vmem:[#allocation2 + $0xa8] sm:$0xff]
      %v2203 = vld [vmem:[#allocation2 + $0xb0] sm:$0xff]
      %v2204 = vld [vmem:[#allocation2 + $0xb8] sm:$0xff]
      %v2205 = vld [vmem:[#allocation2 + $0xc0] sm:$0xff]
      %v2206 = vld [vmem:[#allocation2 + $0xc8] sm:$0xff]
      %v2207 = vld [vmem:[#allocation2 + $0xd0] sm:$0xff]
      %v2208 = vld [vmem:[#allocation2 + $0xd8] sm:$0xff]
      %v2209 = vld [vmem:[#allocation2 + $0xe0] sm:$0xff]
      %v2210 = vld [vmem:[#allocation2 + $0xe8] sm:$0xff]
      %v2211 = vld [vmem:[#allocation2 + $0xf0] sm:$0xff]
      %v2212 = vld [vmem:[#allocation2 + $0xf8] sm:$0xff]
      %v2213 = vld [vmem:[#allocation2 + $0x100] sm:$0xff]
      %v2214 = vld [vmem:[#allocation2 + $0x108] sm:$0xff]
      %v2215 = vld [vmem:[#allocation2 + $0x110] sm:$0xff]
      %v2216 = vld [vmem:[#allocation2 + $0x118] sm:$0xff]
      %v2217 = vld [vmem:[#allocation2 + $0x120] sm:$0xff]
      %v2218 = vld [vmem:[#allocation2 + $0x128] sm:$0xff]
      %v2219 = vld [vmem:[#allocation2 + $0x130] sm:$0xff]
      %v2220 = vld [vmem:[#allocation2 + $0x138] sm:$0xff]
      %v2221 = vld [vmem:[#allocation2 + $0x140] sm:$0xff]
      %v2222 = vld [vmem:[#allocation2 + $0x148] sm:$0xff]
      %v2223 = vld [vmem:[#allocation2 + $0x150] sm:$0xff]
      %v2224 = vld [vmem:[#allocation2 + $0x158] sm:$0xff]
      %v2225 = vld [vmem:[#allocation2 + $0x160] sm:$0xff]
      %v2226 = vld [vmem:[#allocation2 + $0x168] sm:$0xff]
      %v2227 = vld [vmem:[#allocation2 + $0x170] sm:$0xff]
      %v2228 = vld [vmem:[#allocation2 + $0x178] sm:$0xff]
      %v2229 = vld [vmem:[#allocation2 + $0x180] sm:$0xff]
      %v2230 = vld [vmem:[#allocation2 + $0x188] sm:$0xff]
      %v2231 = vld [vmem:[#allocation2 + $0x190] sm:$0xff]
      %v2232 = vld [vmem:[#allocation2 + $0x198] sm:$0xff]
      %v2233 = vld [vmem:[#allocation2 + $0x1a0] sm:$0xff]
      %v2234 = vld [vmem:[#allocation2 + $0x1a8] sm:$0xff]
      %v2235 = vld [vmem:[#allocation2 + $0x1b0] sm:$0xff]
      %v2236 = vld [vmem:[#allocation2 + $0x1b8] sm:$0xff]
      %v2237 = vld [vmem:[#allocation2 + $0x1c0] sm:$0xff]
      %v2238 = vld [vmem:[#allocation2 + $0x1c8] sm:$0xff]
      %v2239 = vld [vmem:[#allocation2 + $0x1d0] sm:$0xff]
      %v2240 = vld [vmem:[#allocation2 + $0x1d8] sm:$0xff]
      %v2241 = vld [vmem:[#allocation2 + $0x1e0] sm:$0xff]
      %v2242 = vld [vmem:[#allocation2 + $0x1e8] sm:$0xff]
      %v2243 = vld [vmem:[#allocation2 + $0x1f0] sm:$0xff]
      %v2244 = vld [vmem:[#allocation2 + $0x1f8] sm:$0xff]
      %v2245 = vld [vmem:[#allocation2 + $0x200] sm:$0xff]
      %v2246 = vld [vmem:[#allocation2 + $0x208] sm:$0xff]
      %v2247 = vld [vmem:[#allocation2 + $0x210] sm:$0xff]
      %v2248 = vld [vmem:[#allocation2 + $0x218] sm:$0xff]
      %v2249 = vld [vmem:[#allocation2 + $0x220] sm:$0xff]
      %v2250 = vld [vmem:[#allocation2 + $0x228] sm:$0xff]
      %v2251 = vld [vmem:[#allocation2 + $0x230] sm:$0xff]
      %v2252 = vld [vmem:[#allocation2 + $0x238] sm:$0xff]
      %v2253 = vadd.f32 %v2181, %v1934
      %v2254 = vadd.f32 %v2182, %v1936
      %v2255 = vadd.f32 %v2183, %v2087
      %v2256 = vadd.f32 %v2184, %v1938
      %v2257 = vadd.f32 %v2185, %v1940
      %v2258 = vadd.f32 %v2186, %v2090
      %v2259 = vadd.f32 %v2187, %v1944
      %v2260 = vadd.f32 %v2188, %v1946
      %v2261 = vadd.f32 %v2189, %v2095
      %v2262 = vadd.f32 %v2190, %v1948
      %v2263 = vadd.f32 %v2191, %v1950
      %v2264 = vadd.f32 %v2192, %v2098
      %v2265 = vadd.f32 %v2193, %v1954
      %v2266 = vadd.f32 %v2194, %v1956
      %v2267 = vadd.f32 %v2195, %v2103
      %v2268 = vadd.f32 %v2196, %v1958
      %v2269 = vadd.f32 %v2197, %v1960
      %v2270 = vadd.f32 %v2198, %v2106
      %v2271 = vadd.f32 %v2199, %v1964
      %v2272 = vadd.f32 %v2200, %v1966
      %v2273 = vadd.f32 %v2201, %v2111
      %v2274 = vadd.f32 %v2202, %v1968
      %v2275 = vadd.f32 %v2203, %v1970
      %v2276 = vadd.f32 %v2204, %v2114
      %v2277 = vadd.f32 %v2205, %v1974
      %v2278 = vadd.f32 %v2206, %v1976
      %v2279 = vadd.f32 %v2207, %v2119
      %v2280 = vadd.f32 %v2208, %v1978
      %v2281 = vadd.f32 %v2209, %v1980
      %v2282 = vadd.f32 %v2210, %v2122
      %v2283 = vadd.f32 %v2211, %v1984
      %v2284 = vadd.f32 %v2212, %v1986
      %v2285 = vadd.f32 %v2213, %v2127
      %v2286 = vadd.f32 %v2214, %v1988
      %v2287 = vadd.f32 %v2215, %v1990
      %v2288 = vadd.f32 %v2216, %v2130
      %v2289 = vadd.f32 %v2217, %v1994
      %v2290 = vadd.f32 %v2218, %v1996
      %v2291 = vadd.f32 %v2219, %v2135
      %v2292 = vadd.f32 %v2220, %v1998
      %v2293 = vadd.f32 %v2221, %v2000
      %v2294 = vadd.f32 %v2222, %v2138
      %v2295 = vadd.f32 %v2223, %v2004
      %v2296 = vadd.f32 %v2224, %v2006
      %v2297 = vadd.f32 %v2225, %v2143
      %v2298 = vadd.f32 %v2226, %v2008
      %v2299 = vadd.f32 %v2227, %v2010
      %v2300 = vadd.f32 %v2228, %v2146
      %v2301 = vadd.f32 %v2229, %v2014
      %v2302 = vadd.f32 %v2230, %v2016
      %v2303 = vadd.f32 %v2231, %v2151
      %v2304 = vadd.f32 %v2232, %v2018
      %v2305 = vadd.f32 %v2233, %v2020
      %v2306 = vadd.f32 %v2234, %v2154
      %v2307 = vadd.f32 %v2235, %v2024
      %v2308 = vadd.f32 %v2236, %v2026
      %v2309 = vadd.f32 %v2237, %v2159
      %v2310 = vadd.f32 %v2238, %v2028
      %v2311 = vadd.f32 %v2239, %v2030
      %v2312 = vadd.f32 %v2240, %v2162
      %v2313 = vadd.f32 %v2241, %v2034
      %v2314 = vadd.f32 %v2242, %v2036
      %v2315 = vadd.f32 %v2243, %v2167
      %v2316 = vadd.f32 %v2244, %v2038
      %v2317 = vadd.f32 %v2245, %v2040
      %v2318 = vadd.f32 %v2246, %v2170
      %v2319 = vadd.f32 %v2247, %v2044
      %v2320 = vadd.f32 %v2248, %v2046
      %v2321 = vadd.f32 %v2249, %v2175
      %v2322 = vadd.f32 %v2250, %v2048
      %v2323 = vadd.f32 %v2251, %v2050
      %v2324 = vadd.f32 %v2252, %v2178
      %2325 = vst [vmem:[#allocation2] sm:$0xff] %v2253
      %2326 = vst [vmem:[#allocation2 + $0x8] sm:$0xff] %v2254
      %2327 = vst [vmem:[#allocation2 + $0x10] sm:$0xff] %v2255
      %2328 = vst [vmem:[#allocation2 + $0x18] sm:$0xff] %v2256
      %2329 = vst [vmem:[#allocation2 + $0x20] sm:$0xff] %v2257
      %2330 = vst [vmem:[#allocation2 + $0x28] sm:$0xff] %v2258
      %2331 = vst [vmem:[#allocation2 + $0x30] sm:$0xff] %v2259
      %2332 = vst [vmem:[#allocation2 + $0x38] sm:$0xff] %v2260
      %2333 = vst [vmem:[#allocation2 + $0x40] sm:$0xff] %v2261
      %2334 = vst [vmem:[#allocation2 + $0x48] sm:$0xff] %v2262
      %2335 = vst [vmem:[#allocation2 + $0x50] sm:$0xff] %v2263
      %2336 = vst [vmem:[#allocation2 + $0x58] sm:$0xff] %v2264
      %2337 = vst [vmem:[#allocation2 + $0x60] sm:$0xff] %v2265
      %2338 = vst [vmem:[#allocation2 + $0x68] sm:$0xff] %v2266
      %2339 = vst [vmem:[#allocation2 + $0x70] sm:$0xff] %v2267
      %2340 = vst [vmem:[#allocation2 + $0x78] sm:$0xff] %v2268
      %2341 = vst [vmem:[#allocation2 + $0x80] sm:$0xff] %v2269
      %2342 = vst [vmem:[#allocation2 + $0x88] sm:$0xff] %v2270
      %2343 = vst [vmem:[#allocation2 + $0x90] sm:$0xff] %v2271
      %2344 = vst [vmem:[#allocation2 + $0x98] sm:$0xff] %v2272
      %2345 = vst [vmem:[#allocation2 + $0xa0] sm:$0xff] %v2273
      %2346 = vst [vmem:[#allocation2 + $0xa8] sm:$0xff] %v2274
      %2347 = vst [vmem:[#allocation2 + $0xb0] sm:$0xff] %v2275
      %2348 = vst [vmem:[#allocation2 + $0xb8] sm:$0xff] %v2276
      %2349 = vst [vmem:[#allocation2 + $0xc0] sm:$0xff] %v2277
      %2350 = vst [vmem:[#allocation2 + $0xc8] sm:$0xff] %v2278
      %2351 = vst [vmem:[#allocation2 + $0xd0] sm:$0xff] %v2279
      %2352 = vst [vmem:[#allocation2 + $0xd8] sm:$0xff] %v2280
      %2353 = vst [vmem:[#allocation2 + $0xe0] sm:$0xff] %v2281
      %2354 = vst [vmem:[#allocation2 + $0xe8] sm:$0xff] %v2282
      %2355 = vst [vmem:[#allocation2 + $0xf0] sm:$0xff] %v2283
      %2356 = vst [vmem:[#allocation2 + $0xf8] sm:$0xff] %v2284
      %2357 = vst [vmem:[#allocation2 + $0x100] sm:$0xff] %v2285
      %2358 = vst [vmem:[#allocation2 + $0x108] sm:$0xff] %v2286
      %2359 = vst [vmem:[#allocation2 + $0x110] sm:$0xff] %v2287
      %2360 = vst [vmem:[#allocation2 + $0x118] sm:$0xff] %v2288
      %2361 = vst [vmem:[#allocation2 + $0x120] sm:$0xff] %v2289
      %2362 = vst [vmem:[#allocation2 + $0x128] sm:$0xff] %v2290
      %2363 = vst [vmem:[#allocation2 + $0x130] sm:$0xff] %v2291
      %2364 = vst [vmem:[#allocation2 + $0x138] sm:$0xff] %v2292
      %2365 = vst [vmem:[#allocation2 + $0x140] sm:$0xff] %v2293
      %2366 = vst [vmem:[#allocation2 + $0x148] sm:$0xff] %v2294
      %2367 = vst [vmem:[#allocation2 + $0x150] sm:$0xff] %v2295
      %2368 = vst [vmem:[#allocation2 + $0x158] sm:$0xff] %v2296
      %2369 = vst [vmem:[#allocation2 + $0x160] sm:$0xff] %v2297
      %2370 = vst [vmem:[#allocation2 + $0x168] sm:$0xff] %v2298
      %2371 = vst [vmem:[#allocation2 + $0x170] sm:$0xff] %v2299
      %2372 = vst [vmem:[#allocation2 + $0x178] sm:$0xff] %v2300
      %2373 = vst [vmem:[#allocation2 + $0x180] sm:$0xff] %v2301
      %2374 = vst [vmem:[#allocation2 + $0x188] sm:$0xff] %v2302
      %2375 = vst [vmem:[#allocation2 + $0x190] sm:$0xff] %v2303
      %2376 = vst [vmem:[#allocation2 + $0x198] sm:$0xff] %v2304
      %2377 = vst [vmem:[#allocation2 + $0x1a0] sm:$0xff] %v2305
      %2378 = vst [vmem:[#allocation2 + $0x1a8] sm:$0xff] %v2306
      %2379 = vst [vmem:[#allocation2 + $0x1b0] sm:$0xff] %v2307
      %2380 = vst [vmem:[#allocation2 + $0x1b8] sm:$0xff] %v2308
      %2381 = vst [vmem:[#allocation2 + $0x1c0] sm:$0xff] %v2309
      %2382 = vst [vmem:[#allocation2 + $0x1c8] sm:$0xff] %v2310
      %2383 = vst [vmem:[#allocation2 + $0x1d0] sm:$0xff] %v2311
      %2384 = vst [vmem:[#allocation2 + $0x1d8] sm:$0xff] %v2312
      %2385 = vst [vmem:[#allocation2 + $0x1e0] sm:$0xff] %v2313
      %2386 = vst [vmem:[#allocation2 + $0x1e8] sm:$0xff] %v2314
      %2387 = vst [vmem:[#allocation2 + $0x1f0] sm:$0xff] %v2315
      %2388 = vst [vmem:[#allocation2 + $0x1f8] sm:$0xff] %v2316
      %2389 = vst [vmem:[#allocation2 + $0x200] sm:$0xff] %v2317
      %2390 = vst [vmem:[#allocation2 + $0x208] sm:$0xff] %v2318
      %2391 = vst [vmem:[#allocation2 + $0x210] sm:$0xff] %v2319
      %2392 = vst [vmem:[#allocation2 + $0x218] sm:$0xff] %v2320
      %2393 = vst [vmem:[#allocation2 + $0x220] sm:$0xff] %v2321
      %2394 = vst [vmem:[#allocation2 + $0x228] sm:$0xff] %v2322
      %2395 = vst [vmem:[#allocation2 + $0x230] sm:$0xff] %v2323
      %2396 = vst [vmem:[#allocation2 + $0x238] sm:$0xff] %v2324
      %v2397 = vld [vmem:[#allocation2] sm:$0xff]
      %v2398 = vld [vmem:[#allocation2 + $0x8] sm:$0xff]
      %v2399 = vld [vmem:[#allocation2 + $0x10] sm:$0xff]
      %v2400 = vld [vmem:[#allocation2 + $0x18] sm:$0xff]
      %v2401 = vld [vmem:[#allocation2 + $0x20] sm:$0xff]
      %v2402 = vld [vmem:[#allocation2 + $0x28] sm:$0xff]
      %v2403 = vld [vmem:[#allocation2 + $0x38] sm:$0xff]
      %v2404 = vld [vmem:[#allocation2 + $0x40] sm:$0xff]
      %v2405 = vld [vmem:[#allocation2 + $0x48] sm:$0xff]
      %v2406 = vld [vmem:[#allocation2 + $0x50] sm:$0xff]
      %v2407 = vld [vmem:[#allocation2 + $0x58] sm:$0xff]
      %v2408 = vld [vmem:[#allocation2 + $0x60] sm:$0xff]
      %v2409 = vld [vmem:[#allocation2 + $0x68] sm:$0xff]
      %v2410 = vld [vmem:[#allocation2 + $0x70] sm:$0xff]
      %v2411 = vld [vmem:[#allocation2 + $0x80] sm:$0xff]
      %v2412 = vld [vmem:[#allocation2 + $0x88] sm:$0xff]
      %v2413 = vld [vmem:[#allocation2 + $0x90] sm:$0xff]
      %v2414 = vld [vmem:[#allocation2 + $0x98] sm:$0xff]
      %v2415 = vld [vmem:[#allocation2 + $0xa0] sm:$0xff]
      %v2416 = vld [vmem:[#allocation2 + $0xa8] sm:$0xff]
      %v2417 = vld [vmem:[#allocation2 + $0xb0] sm:$0xff]
      %v2418 = vld [vmem:[#allocation2 + $0xb8] sm:$0xff]
      %v2419 = vld [vmem:[#allocation2 + $0xc8] sm:$0xff]
      %v2420 = vld [vmem:[#allocation2 + $0xd0] sm:$0xff]
      %v2421 = vld [vmem:[#allocation2 + $0xd8] sm:$0xff]
      %v2422 = vld [vmem:[#allocation2 + $0xe0] sm:$0xff]
      %v2423 = vld [vmem:[#allocation2 + $0xe8] sm:$0xff]
      %v2424 = vld [vmem:[#allocation2 + $0xf0] sm:$0xff]
      %v2425 = vld [vmem:[#allocation2 + $0xf8] sm:$0xff]
      %v2426 = vld [vmem:[#allocation2 + $0x100] sm:$0xff]
      %v2427 = vld [vmem:[#allocation2 + $0x110] sm:$0xff]
      %v2428 = vld [vmem:[#allocation2 + $0x118] sm:$0xff]
      %v2429 = vld [vmem:[#allocation2 + $0x120] sm:$0xff]
      %v2430 = vld [vmem:[#allocation2 + $0x128] sm:$0xff]
      %v2431 = vld [vmem:[#allocation2 + $0x130] sm:$0xff]
      %v2432 = vld [vmem:[#allocation2 + $0x138] sm:$0xff]
      %v2433 = vld [vmem:[#allocation2 + $0x140] sm:$0xff]
      %v2434 = vld [vmem:[#allocation2 + $0x148] sm:$0xff]
      %v2435 = vld [vmem:[#allocation2 + $0x158] sm:$0xff]
      %v2436 = vld [vmem:[#allocation2 + $0x160] sm:$0xff]
      %v2437 = vld [vmem:[#allocation2 + $0x168] sm:$0xff]
      %v2438 = vld [vmem:[#allocation2 + $0x170] sm:$0xff]
      %v2439 = vld [vmem:[#allocation2 + $0x178] sm:$0xff]
      %v2440 = vld [vmem:[#allocation2 + $0x180] sm:$0xff]
      %v2441 = vld [vmem:[#allocation2 + $0x188] sm:$0xff]
      %v2442 = vld [vmem:[#allocation2 + $0x190] sm:$0xff]
      %v2443 = vld [vmem:[#allocation2 + $0x1a0] sm:$0xff]
      %v2444 = vld [vmem:[#allocation2 + $0x1a8] sm:$0xff]
      %v2445 = vld [vmem:[#allocation2 + $0x1b0] sm:$0xff]
      %v2446 = vld [vmem:[#allocation2 + $0x1b8] sm:$0xff]
      %v2447 = vld [vmem:[#allocation2 + $0x1c0] sm:$0xff]
      %v2448 = vld [vmem:[#allocation2 + $0x1c8] sm:$0xff]
      %v2449 = vld [vmem:[#allocation2 + $0x1d0] sm:$0xff]
      %v2450 = vld [vmem:[#allocation2 + $0x1d8] sm:$0xff]
      %v2451 = vld [vmem:[#allocation2 + $0x1e8] sm:$0xff]
      %v2452 = vld [vmem:[#allocation2 + $0x1f0] sm:$0xff]
      %v2453 = vld [vmem:[#allocation2 + $0x1f8] sm:$0xff]
      %v2454 = vld [vmem:[#allocation2 + $0x200] sm:$0xff]
      %v2455 = vld [vmem:[#allocation2 + $0x208] sm:$0xff]
      %v2456 = vld [vmem:[#allocation2 + $0x210] sm:$0xff]
      %v2457 = vld [vmem:[#allocation2 + $0x218] sm:$0xff]
      %v2458 = vld [vmem:[#allocation2 + $0x220] sm:$0xff]
      %v2459 = vld [vmem:[#allocation2 + $0x230] sm:$0xff]
      %v2460 = vld [vmem:[#allocation2 + $0x238] sm:$0xff]
      %vm2485 = vcmask 1046528
      %v2486 = vrot.slane %v2398, 1
      %v2487 = vrot.slane %v2401, 1
      %v2488 = vsel %vm2485, %v2486, %v2487
      %v2489 = vrot.slane %v2403, 1
      %v2490 = vsel %vm2485, %v2487, %v2489
      %v2491 = vrot.slane %v2406, 1
      %v2492 = vrot.slane %v2409, 1
      %v2493 = vsel %vm2485, %v2491, %v2492
      %v2494 = vrot.slane %v2411, 1
      %v2495 = vsel %vm2485, %v2492, %v2494
      %v2496 = vrot.slane %v2414, 1
      %v2497 = vrot.slane %v2417, 1
      %v2498 = vsel %vm2485, %v2496, %v2497
      %v2499 = vrot.slane %v2419, 1
      %v2500 = vsel %vm2485, %v2497, %v2499
      %v2501 = vrot.slane %v2422, 1
      %v2502 = vrot.slane %v2425, 1
      %v2503 = vsel %vm2485, %v2501, %v2502
      %v2504 = vrot.slane %v2427, 1
      %v2505 = vsel %vm2485, %v2502, %v2504
      %v2506 = vrot.slane %v2430, 1
      %v2507 = vrot.slane %v2433, 1
      %v2508 = vsel %vm2485, %v2506, %v2507
      %v2509 = vrot.slane %v2435, 1
      %v2510 = vsel %vm2485, %v2507, %v2509
      %v2511 = vrot.slane %v2438, 1
      %v2512 = vrot.slane %v2441, 1
      %v2513 = vsel %vm2485, %v2511, %v2512
      %v2514 = vrot.slane %v2443, 1
      %v2515 = vsel %vm2485, %v2512, %v2514
      %v2516 = vrot.slane %v2446, 1
      %v2517 = vrot.slane %v2449, 1
      %v2518 = vsel %vm2485, %v2516, %v2517
      %v2519 = vrot.slane %v2451, 1
      %v2520 = vsel %vm2485, %v2517, %v2519
      %v2521 = vrot.slane %v2454, 1
      %v2522 = vrot.slane %v2457, 1
      %v2523 = vsel %vm2485, %v2521, %v2522
      %v2524 = vrot.slane %v2459, 1
      %v2525 = vsel %vm2485, %v2522, %v2524
      %v2542 = vadd.f32 %v2397, %v2488
      %v2543 = vadd.f32 %v2400, %v2490
      %v2544 = vadd.f32 %v2405, %v2493
      %v2545 = vadd.f32 %v2408, %v2495
      %v2546 = vadd.f32 %v2413, %v2498
      %v2547 = vadd.f32 %v2416, %v2500
      %v2548 = vadd.f32 %v2421, %v2503
      %v2549 = vadd.f32 %v2424, %v2505
      %v2550 = vadd.f32 %v2429, %v2508
      %v2551 = vadd.f32 %v2432, %v2510
      %v2552 = vadd.f32 %v2437, %v2513
      %v2553 = vadd.f32 %v2440, %v2515
      %v2554 = vadd.f32 %v2445, %v2518
      %v2555 = vadd.f32 %v2448, %v2520
      %v2556 = vadd.f32 %v2453, %v2523
      %v2557 = vadd.f32 %v2456, %v2525
      %vm2582 = vcmask 1045504
      %v2583 = vrot.slane %v2399, 2
      %v2584 = vrot.slane %v2402, 2
      %v2585 = vsel %vm2582, %v2583, %v2584
      %v2586 = vrot.slane %v2404, 2
      %v2587 = vsel %vm2582, %v2584, %v2586
      %v2588 = vrot.slane %v2407, 2
      %v2589 = vrot.slane %v2410, 2
      %v2590 = vsel %vm2582, %v2588, %v2589
      %v2591 = vrot.slane %v2412, 2
      %v2592 = vsel %vm2582, %v2589, %v2591
      %v2593 = vrot.slane %v2415, 2
      %v2594 = vrot.slane %v2418, 2
      %v2595 = vsel %vm2582, %v2593, %v2594
      %v2596 = vrot.slane %v2420, 2
      %v2597 = vsel %vm2582, %v2594, %v2596
      %v2598 = vrot.slane %v2423, 2
      %v2599 = vrot.slane %v2426, 2
      %v2600 = vsel %vm2582, %v2598, %v2599
      %v2601 = vrot.slane %v2428, 2
      %v2602 = vsel %vm2582, %v2599, %v2601
      %v2603 = vrot.slane %v2431, 2
      %v2604 = vrot.slane %v2434, 2
      %v2605 = vsel %vm2582, %v2603, %v2604
      %v2606 = vrot.slane %v2436, 2
      %v2607 = vsel %vm2582, %v2604, %v2606
      %v2608 = vrot.slane %v2439, 2
      %v2609 = vrot.slane %v2442, 2
      %v2610 = vsel %vm2582, %v2608, %v2609
      %v2611 = vrot.slane %v2444, 2
      %v2612 = vsel %vm2582, %v2609, %v2611
      %v2613 = vrot.slane %v2447, 2
      %v2614 = vrot.slane %v2450, 2
      %v2615 = vsel %vm2582, %v2613, %v2614
      %v2616 = vrot.slane %v2452, 2
      %v2617 = vsel %vm2582, %v2614, %v2616
      %v2618 = vrot.slane %v2455, 2
      %v2619 = vrot.slane %v2458, 2
      %v2620 = vsel %vm2582, %v2618, %v2619
      %v2621 = vrot.slane %v2460, 2
      %v2622 = vsel %vm2582, %v2619, %v2621
      %v2639 = vadd.f32 %v2542, %v2585
      %v2640 = vadd.f32 %v2543, %v2587
      %v2641 = vadd.f32 %v2544, %v2590
      %v2642 = vadd.f32 %v2545, %v2592
      %v2643 = vadd.f32 %v2546, %v2595
      %v2644 = vadd.f32 %v2547, %v2597
      %v2645 = vadd.f32 %v2548, %v2600
      %v2646 = vadd.f32 %v2549, %v2602
      %v2647 = vadd.f32 %v2550, %v2605
      %v2648 = vadd.f32 %v2551, %v2607
      %v2649 = vadd.f32 %v2552, %v2610
      %v2650 = vadd.f32 %v2553, %v2612
      %v2651 = vadd.f32 %v2554, %v2615
      %v2652 = vadd.f32 %v2555, %v2617
      %v2653 = vadd.f32 %v2556, %v2620
      %v2654 = vadd.f32 %v2557, %v2622
      %v2655 = vpack.c.bf16 %v2640, %v2639
      %v2656 = vpack.c.bf16 %v2642, %v2641
      %v2657 = vpack.c.bf16 %v2644, %v2643
      %v2658 = vpack.c.bf16 %v2646, %v2645
      %v2659 = vpack.c.bf16 %v2648, %v2647
      %v2660 = vpack.c.bf16 %v2650, %v2649
      %v2661 = vpack.c.bf16 %v2652, %v2651
      %v2662 = vpack.c.bf16 %v2654, %v2653
      %v2671 = vunpack.c.l.b16 %v2655
      %v2672 = vunpack.c.h.b16 %v2655
      %v2673 = vunpack.c.l.b16 %v2656
      %v2674 = vunpack.c.h.b16 %v2656
      %v2675 = vunpack.c.l.b16 %v2657
      %v2676 = vunpack.c.h.b16 %v2657
      %v2677 = vunpack.c.l.b16 %v2658
      %v2678 = vunpack.c.h.b16 %v2658
      %v2679 = vunpack.c.l.b16 %v2659
      %v2680 = vunpack.c.h.b16 %v2659
      %v2681 = vunpack.c.l.b16 %v2660
      %v2682 = vunpack.c.h.b16 %v2660
      %v2683 = vunpack.c.l.b16 %v2661
      %v2684 = vunpack.c.h.b16 %v2661
      %v2685 = vunpack.c.l.b16 %v2662
      %v2686 = vunpack.c.h.b16 %v2662
      %v2687 = vpack.c.b16 %v2671, %v2671
      %v2688 = vpack.c.b16 %v2672, %v2672
      %v2689 = vpack.c.b16 %v2673, %v2673
      %v2690 = vpack.c.b16 %v2674, %v2674
      %v2691 = vpack.c.b16 %v2675, %v2675
      %v2692 = vpack.c.b16 %v2676, %v2676
      %v2693 = vpack.c.b16 %v2677, %v2677
      %v2694 = vpack.c.b16 %v2678, %v2678
      %v2695 = vpack.c.b16 %v2679, %v2679
      %v2696 = vpack.c.b16 %v2680, %v2680
      %v2697 = vpack.c.b16 %v2681, %v2681
      %v2698 = vpack.c.b16 %v2682, %v2682
      %v2699 = vpack.c.b16 %v2683, %v2683
      %v2700 = vpack.c.b16 %v2684, %v2684
      %v2701 = vpack.c.b16 %v2685, %v2685
      %v2702 = vpack.c.b16 %v2686, %v2686
      %2719 = vst [vmem:[%s258] sm:$0xf] %v2687
      %2720 = vst [vmem:[%s258 + $0x4] sm:$0xf] %v2688
      %2721 = vst [vmem:[%s258 + $0x8] sm:$0xf] %v2689
      %2722 = vst [vmem:[%s258 + $0xc] sm:$0xf] %v2690
      %2723 = vst [vmem:[%s258 + $0x10] sm:$0xf] %v2691
      %2724 = vst [vmem:[%s258 + $0x14] sm:$0xf] %v2692
      %2725 = vst [vmem:[%s258 + $0x18] sm:$0xf] %v2693
      %2726 = vst [vmem:[%s258 + $0x1c] sm:$0xf] %v2694
      %2727 = vst [vmem:[%s258 + $0x20] sm:$0xf] %v2695
      %2728 = vst [vmem:[%s258 + $0x24] sm:$0xf] %v2696
      %2729 = vst [vmem:[%s258 + $0x28] sm:$0xf] %v2697
      %2730 = vst [vmem:[%s258 + $0x2c] sm:$0xf] %v2698
      %2731 = vst [vmem:[%s258 + $0x30] sm:$0xf] %v2699
      %2732 = vst [vmem:[%s258 + $0x34] sm:$0xf] %v2700
      %2733 = vst [vmem:[%s258 + $0x38] sm:$0xf] %v2701
      %2734 = vst [vmem:[%s258 + $0x3c] sm:$0xf] %v2702
      %v2735 = vadd.f32 %v2639, %v2641
      %v2736 = vadd.f32 %v2735, %v2643
      %v2737 = vadd.f32 %v2736, %v2645
      %v2738 = vadd.f32 %v2737, %v2647
      %v2739 = vadd.f32 %v2738, %v2649
      %v2740 = vadd.f32 %v2739, %v2651
      %v2741 = vadd.f32 %v2740, %v2653
      %v2742 = vadd.f32 %v2640, %v2642
      %v2743 = vadd.f32 %v2742, %v2644
      %v2744 = vadd.f32 %v2743, %v2646
      %v2745 = vadd.f32 %v2744, %v2648
      %v2746 = vadd.f32 %v2745, %v2650
      %v2747 = vadd.f32 %v2746, %v2652
      %v2748 = vadd.f32 %v2747, %v2654
      %v2749 = vadd.f32 %v2741, %v2748
      %v2750 = vrot.slane %v2749, 4
      %v2751 = vadd.f32 %v2749, %v2750
      %v2752 = vrot.slane %v2751, 2
      %v2753 = vadd.f32 %v2751, %v2752
      %v2754 = vrot.slane %v2753, 1
      %v2755 = vadd.f32 %v2753, %v2754
      %2756 = vst [vmem:[%s266] sm:$0x1] %v2755
      %v2757 = vmul.f32 %v2639, %v2639
      %v2758 = vmul.f32 %v2640, %v2640
      %v2759 = vmul.f32 %v2641, %v2641
      %v2760 = vmul.f32 %v2642, %v2642
      %v2761 = vmul.f32 %v2643, %v2643
      %v2762 = vmul.f32 %v2644, %v2644
      %v2763 = vmul.f32 %v2645, %v2645
      %v2764 = vmul.f32 %v2646, %v2646
      %v2765 = vmul.f32 %v2647, %v2647
      %v2766 = vmul.f32 %v2648, %v2648
      %v2767 = vmul.f32 %v2649, %v2649
      %v2768 = vmul.f32 %v2650, %v2650
      %v2769 = vmul.f32 %v2651, %v2651
      %v2770 = vmul.f32 %v2652, %v2652
      %v2771 = vmul.f32 %v2653, %v2653
      %v2772 = vmul.f32 %v2654, %v2654
      %v2773 = vadd.f32 %v2757, %v2759
      %v2774 = vadd.f32 %v2773, %v2761
      %v2775 = vadd.f32 %v2774, %v2763
      %v2776 = vadd.f32 %v2775, %v2765
      %v2777 = vadd.f32 %v2776, %v2767
      %v2778 = vadd.f32 %v2777, %v2769
      %v2779 = vadd.f32 %v2778, %v2771
      %v2780 = vadd.f32 %v2758, %v2760
      %v2781 = vadd.f32 %v2780, %v2762
      %v2782 = vadd.f32 %v2781, %v2764
      %v2783 = vadd.f32 %v2782, %v2766
      %v2784 = vadd.f32 %v2783, %v2768
      %v2785 = vadd.f32 %v2784, %v2770
      %v2786 = vadd.f32 %v2785, %v2772
      %v2787 = vadd.f32 %v2779, %v2786
      %v2788 = vrot.slane %v2787, 4
      %v2789 = vadd.f32 %v2787, %v2788
      %v2790 = vrot.slane %v2789, 2
      %v2791 = vadd.f32 %v2789, %v2790
      %v2792 = vrot.slane %v2791, 1
      %v2793 = vadd.f32 %v2791, %v2792
      %2794 = vst [vmem:[%s273] sm:$0x1] %v2793
      %s2795 = smul.u32 8, %s21
      %p2796 = scmp.lt.s32.totalorder %s20, 1
      %s2797 = scalar_select %p2796, %s20, 1
      %p2798 = scmp.lt.s32.totalorder %s2795, 15
      %s2799 = scalar_select %p2798, %s2795, 15
      %s2800 = smul.addr %s2799, 2
      %s2801 = smul.addr %s2797, 32
      %s2802 = sadd.s32 %s2800, %s2801
      %s2803 = smul.addr %s2802, 4
      %s2804 = scalar_lea.vmem %s2, %s2803
      %p2805 = scmp.lt.s32.totalorder %s20, 1
      %s2806 = scalar_select %p2805, %s20, 1
      %p2807 = scmp.lt.s32.totalorder %s21, 1
      %s2808 = scalar_select %p2807, %s21, 1
      %s2809 = smul.addr %s2806, 2
      %s2810 = sadd.s32 %s2808, %s2809
      %s2811 = scalar_lea.vmem %s3, %s2810
      %p2812 = scmp.lt.s32.totalorder %s20, 1
      %s2813 = scalar_select %p2812, %s20, 1
      %p2814 = scmp.lt.s32.totalorder %s21, 1
      %s2815 = scalar_select %p2814, %s21, 1
      %s2816 = smul.addr %s2813, 2
      %s2817 = sadd.s32 %s2815, %s2816
      %s2818 = scalar_lea.vmem %s4, %s2817
      // Predicated region
      $region29: #{_lambda_.4} parent=27 // pred_check
        %p2819 = pneg %p97
      $region30: #{_lambda_.4} parent=27 // pred_check_branch
        %2821 = sbr.rel (%p2819) target = $region32
      $region31: #{_lambda_.4} parent=27 // pred_region
        %s2822 = smul.u32 8, %s21
      $region32: #{_lambda_.4} parent=27 // pred_fallthru
        _
      // Predicated region
      $region33: #{_lambda_.4} parent=27 // pred_check
        %p2823 = pneg %p125
      $region34: #{_lambda_.4} parent=27 // pred_check_branch
        %2825 = sbr.rel (%p2823) target = $region36
      $region35: #{_lambda_.4} parent=27 // pred_region
        _
      $region36: #{_lambda_.4} parent=27 // pred_fallthru
        _
      // Predicated region
      $region37: #{_lambda_.4} parent=27 // pred_check
        %p2826 = pneg %p153
      $region38: #{_lambda_.4} parent=27 // pred_check_branch
        %2828 = sbr.rel (%p2826) target = $region40
      $region39: #{_lambda_.4} parent=27 // pred_region
        _
      $region40: #{_lambda_.4} parent=27 // pred_fallthru
        _
    $region28: #{_lambda_.4} parent=5 // pred_fallthru
      _
    %p2829 = scmp.le.s32.totalorder 2, %s11
    // Predicated region
    $region41: #{_lambda_.4} parent=5 // pred_check
      %p2830 = pneg %p2829
    $region42: #{_lambda_.4} parent=5 // pred_check_branch
      %2832 = sbr.rel (%p2830) target = $region44
    $region43: #{_lambda_.4} parent=5 // pred_region
      %s2833 = ssub.s32 %s11, 2
      // Predicated region
      $region45: #{_lambda_.4} parent=43 // pred_check
        %p2834 = pneg %p103
      $region46: #{_lambda_.4} parent=43 // pred_check_branch
        %2836 = sbr.rel (%p2834) target = $region48
      $region47: #{_lambda_.4} parent=43 // pred_region
        %s2837 = smul.u32 8, %s23
        %p2838 = scmp.lt.s32.totalorder %s22, 1
        %s2839 = scalar_select %p2838, %s22, 1
        %p2840 = scmp.lt.s32.totalorder %s2837, 15
        %s2841 = scalar_select %p2840, %s2837, 15
        %s2842 = smul.addr %s2841, 2
        %s2843 = smul.addr %s2839, 32
        %s2844 = sadd.s32 %s2842, %s2843
        %s2845 = smul.addr %s2844, 4
        %s2846 = scalar_lea.vmem %s2, %s2845
      $region48: #{_lambda_.4} parent=43 // pred_fallthru
        _
      // Predicated region
      $region49: #{_lambda_.4} parent=43 // pred_check
        %p2847 = pneg %p131
      $region50: #{_lambda_.4} parent=43 // pred_check_branch
        %2849 = sbr.rel (%p2847) target = $region52
      $region51: #{_lambda_.4} parent=43 // pred_region
        %p2850 = scmp.lt.s32.totalorder %s22, 1
        %s2851 = scalar_select %p2850, %s22, 1
        %p2852 = scmp.lt.s32.totalorder %s23, 1
        %s2853 = scalar_select %p2852, %s23, 1
        %s2854 = smul.addr %s2851, 2
        %s2855 = sadd.s32 %s2853, %s2854
        %s2856 = scalar_lea.vmem %s3, %s2855
      $region52: #{_lambda_.4} parent=43 // pred_fallthru
        _
      // Predicated region
      $region53: #{_lambda_.4} parent=43 // pred_check
        %p2857 = pneg %p159
      $region54: #{_lambda_.4} parent=43 // pred_check_branch
        %2859 = sbr.rel (%p2857) target = $region56
      $region55: #{_lambda_.4} parent=43 // pred_region
        %p2860 = scmp.lt.s32.totalorder %s22, 1
        %s2861 = scalar_select %p2860, %s22, 1
        %p2862 = scmp.lt.s32.totalorder %s23, 1
        %s2863 = scalar_select %p2862, %s23, 1
        %s2864 = smul.addr %s2861, 2
        %s2865 = sadd.s32 %s2863, %s2864
        %s2866 = scalar_lea.vmem %s4, %s2865
      $region56: #{_lambda_.4} parent=43 // pred_fallthru
        _
    $region44: #{_lambda_.4} parent=5 // pred_fallthru
      _
  $region6: #{_lambda_.4} parent=0 // loop_footer
    %s15 = sadd.s32 1, %s11
  $region7: #{_lambda_.4} parent=0 // loop_footer_branch
    %10 = sbr.rel target = $region3
  $region8: #{_lambda_.4} parent=0 // loop_exit
    _

</llo_original>
